<compile_context>
chip_gen: v7x
topology: tpu7x:2x2x1
jax: 0.10.0
libtpu: 0.0.40
codegen_flags: <defaults>
</compile_context>

<pallas_src>
import functools

import jax
import jax.numpy as jnp
from jax.experimental import pallas as pl
from jax.experimental.pallas import tpu as pltpu

LN_EPS = 1e-5
MXU_DTYPE = jnp.bfloat16   # matmul operand dtype (f32 accumulation); jnp.float32 for exact fp32
NEG_INF = -1e30


# --------------------------------------------------------------------------------------
# In-kernel helpers (all 2-D ops: safest / cheapest layouts on TPU)
# --------------------------------------------------------------------------------------
def _dot(a, b):
    """a @ b on the MXU (operands in MXU_DTYPE, f32 accumulation)."""
    return jnp.dot(a.astype(MXU_DTYPE), b.astype(MXU_DTYPE),
                   preferred_element_type=jnp.float32)


def _dot_nt(a, b):
    """a @ b.T on the MXU without materializing the transpose."""
    return jax.lax.dot_general(a.astype(MXU_DTYPE), b.astype(MXU_DTYPE),
                               (((1,), (1,)), ((), ())),
                               preferred_element_type=jnp.float32)


def _ln(x, g, b, eps=LN_EPS):
    """LayerNorm over last dim, f32 math. x: (M, C); g, b: (1, C)."""
    mu = jnp.mean(x, axis=-1, keepdims=True)
    xc = x - mu
    var = jnp.mean(xc * xc, axis=-1, keepdims=True)
    return xc * jax.lax.rsqrt(var + eps) * g + b


# --------------------------------------------------------------------------------------
# Fused per-stage kernel
#   ConvEmbed (im2col matmul + bias + LN) -> depth x [LN1 -> per-head QKV -> masked
#   asymmetric mixed attention -> proj -> +res -> LN2 -> MLP(GELU) -> +res]
# --------------------------------------------------------------------------------------
def _stage_kernel(p_ref, pw_ref, pb_ref, pg_ref, pbt_ref,
                  ln1g_ref, ln1b_ref, wq_ref, bq_ref, wk_ref, bk_ref,
                  wv_ref, bv_ref, wpr_ref, bpr_ref, ln2g_ref, ln2b_ref,
                  w1_ref, b1_ref, w2_ref, b2_ref, o_ref,
                  *, depth, num_heads, lt, scale):
    x = p_ref[0].astype(jnp.float32)                      # (T, K) im2col patches
    T = x.shape[0]

    # ---- ConvEmbed: Conv2d lowered to a matmul (stride == kernel, pad == 0) + LN ----
    x = _dot(x, pw_ref[...]) + pb_ref[...]
    x = _ln(x, pg_ref[...], pbt_ref[...])                 # (T, C)

    # Asymmetric mixed-attention mask, shared by all blocks & heads:
    # template / online-template rows (< 2*lt) attend only to the first 2*lt keys;
    # search rows attend to every key.
    row = jax.lax.broadcasted_iota(jnp.int32, (T, T), 0)
    col = jax.lax.broadcasted_iota(jnp.int32, (T, T), 1)
    banned = (row < 2 * lt) & (col >= 2 * lt)

    for j in range(depth):                                 # static unroll over blocks
        # ---------------- attention ----------------
        h = _ln(x, ln1g_ref[j], ln1b_ref[j])
        acc = None
        for hd in range(num_heads):                        # static unroll over heads
            qh = _dot(h, wq_ref[j, hd]) + bq_ref[j, hd]    # (T, Dh)
            kh = _dot(h, wk_ref[j, hd]) + bk_ref[j, hd]
            vh = _dot(h, wv_ref[j, hd]) + bv_ref[j, hd]
            s = _dot_nt(qh, kh) * scale                    # (T, T) f32 scores
            s = jnp.where(banned, NEG_INF, s)
            m = jnp.max(s, axis=-1, keepdims=True)
            e = jnp.exp(s - m)
            den = jnp.sum(e, axis=-1, keepdims=True)
            o = _dot(e, vh) / den                          # (T, Dh), exact normalize
            # concat(heads) @ W_proj == sum_h head_h @ W_proj[h]  (no lane concat)
            c = _dot(o, wpr_ref[j, hd])                    # (T, C)
            acc = c if acc is None else acc + c
        x = x + acc + bpr_ref[j]                           # residual + proj bias

        # ---------------- MLP ----------------
        h2 = _ln(x, ln2g_ref[j], ln2b_ref[j])
        z = _dot(h2, w1_ref[j]) + b1_ref[j]
        # TODO(synk): reference nn.GELU is exact erf; tanh approximation used per perf review.
        z = jax.nn.gelu(z, approximate=True)
        z = _dot(z, w2_ref[j]) + b2_ref[j]
        x = x + z

    o_ref[0] = x.astype(o_ref.dtype)


_PARAM_ORDER = ("patch_w", "patch_b", "patch_g", "patch_bt",
                "ln1_g", "ln1_b", "wq", "bq", "wk", "bk", "wv", "bv",
                "wpr", "bpr", "ln2_g", "ln2_b", "w_fc1", "b_fc1", "w_fc2", "b_fc2")


def _full_spec(a):
    """Whole-array BlockSpec (weights are tiny: <100 KiB per stage)."""
    return pl.BlockSpec(a.shape, lambda b, _r=a.ndim: (0,) * _r)


def stage_apply(sp, cfg, patches, lt):
    """Run one whole stage (embed + all blocks) as a single fused pallas_call."""
    B, T, K = patches.shape
    ed, heads, depth = cfg["embed_dim"], cfg["num_heads"], cfg["depth"]
    scale = float(ed) ** (-0.5)          # dim_out ** -0.5, as in the reference Attention
    args = [sp[k] for k in _PARAM_ORDER]
    return pl.pallas_call(
        functools.partial(_stage_kernel, depth=depth, num_heads=heads, lt=lt, scale=scale),
        out_shape=jax.ShapeDtypeStruct((B, T, ed), jnp.float32),
        grid=(B,),
        in_specs=[pl.BlockSpec((1, T, K), lambda b: (b, 0, 0))]
                 + [_full_spec(a) for a in args],
        out_specs=pl.BlockSpec((1, T, ed), lambda b: (b, 0, 0)),
        compiler_params=pltpu.CompilerParams(dimension_semantics=("parallel",)),
    )(patches, *args)


# --------------------------------------------------------------------------------------
# Pure-JAX layout glue
# --------------------------------------------------------------------------------------
def extract_patches(x_nchw, kk, st, pad):
    """NCHW image -> (B, Ho*Wo, kk*kk*C) im2col patches (feature order kh, kw, Cin)."""
    B, C, H, W = x_nchw.shape
    x = jnp.transpose(x_nchw, (0, 2, 3, 1))               # NHWC
    if pad > 0:
        x = jnp.pad(x, ((0, 0), (pad, pad), (pad, pad), (0, 0)))
    Hp, Wp = x.shape[1], x.shape[2]
    Ho = (Hp - kk) // st + 1
    Wo = (Wp - kk) // st + 1
    if st == kk and pad == 0 and Hp == Ho * kk and Wp == Wo * kk:
        # non-overlapping patches: plain space-to-depth reshape (no gathers)
        p = x.reshape(B, Ho, kk, Wo, kk, C).transpose(0, 1, 3, 2, 4, 5)
        p = p.reshape(B, Ho * Wo, kk * kk * C)
    else:
        # general (overlapping / padded) fallback
        ih = jnp.arange(Ho) * st
        iw = jnp.arange(Wo) * st
        cols = []
        for i in range(kk):
            for j in range(kk):
                cols.append(x[:, ih + i, :, :][:, :, iw + j, :])   # (B, Ho, Wo, C)
        p = jnp.stack(cols, axis=3).reshape(B, Ho * Wo, kk * kk * C)
    return p, Ho, Wo


def stage_forward(sp, cfg, template, online_template, search):
    kk, st, pad, ed = (cfg["patch_size"], cfg["patch_stride"],
                       cfg["patch_padding"], cfg["embed_dim"])
    p_t, tH, tW = extract_patches(template, kk, st, pad)
    p_ot, _, _ = extract_patches(online_template, kk, st, pad)
    p_s, sH, sW = extract_patches(search, kk, st, pad)
    lt = tH * tW

    # token order [template, online_template, search], as in the reference forward
    patches = jnp.concatenate([p_t, p_ot, p_s], axis=1)    # (B, 2*lt+ls, kk*kk*Cin)
    x = stage_apply(sp, cfg, patches, lt)                   # (B, T, ed)  — one fused kernel

    B = x.shape[0]
    to_map = lambda tok, h, w: tok.reshape(B, h, w, ed).transpose(0, 3, 1, 2)
    return (to_map(x[:, :lt], tH, tW),
            to_map(x[:, lt:2 * lt], tH, tW),
            to_map(x[:, 2 * lt:], sH, sW))


def cvt_forward(params, spec, template, online_template, search):
    for i in range(spec["NUM_STAGES"]):
        cfg = stage_cfg(spec, i)
        template, online_template, search = stage_forward(
            params[i], cfg, template, online_template, search)
    # TODO(synk): final self.norm / self.head of ConvolutionalVisionTransformer are not
    # applied in its forward (it returns (template, search) directly), so they are omitted.
    return template, search


# --------------------------------------------------------------------------------------
# Parameter init (deterministic, synthetic); weights pre-laid-out for the kernel
# --------------------------------------------------------------------------------------
def stage_cfg(spec, i):
    return {
        "patch_size": spec["PATCH_SIZE"][i],
        "patch_stride": spec["PATCH_STRIDE"][i],
        "patch_padding": spec["PATCH_PADDING"][i],
        "embed_dim": spec["DIM_EMBED"][i],
        "depth": spec["DEPTH"][i],
        "num_heads": spec["NUM_HEADS"][i],
        "mlp_ratio": spec["MLP_RATIO"][i],
    }


def init_stage(key, in_chans, cfg):
    d, H = cfg["embed_dim"], cfg["num_heads"]
    Dh = d // H
    hid = int(d * cfg["mlp_ratio"])
    depth = cfg["depth"]
    K = cfg["patch_size"] * cfg["patch_size"] * in_chans

    keys = jax.random.split(key, 1 + 6 * depth)
    rnd = lambda k, shp: 0.02 * jax.random.normal(k, shp, jnp.float32)

    wq, wk, wv, wpr, w1, w2 = [], [], [], [], [], []
    for j in range(depth):
        kq, kk_, kv, kp, k1, k2 = keys[1 + 6 * j: 1 + 6 * (j + 1)]
        # head-split layouts so the kernel never slices the lane axis:
        #   wq/wk/wv: (H, d, Dh) — output columns split per head
        #   wpr:      (H, Dh, d) — input rows split per head
        wq.append(rnd(kq, (d, d)).reshape(d, H, Dh).transpose(1, 0, 2))
        wk.append(rnd(kk_, (d, d)).reshape(d, H, Dh).transpose(1, 0, 2))
        wv.append(rnd(kv, (d, d)).reshape(d, H, Dh).transpose(1, 0, 2))
        wpr.append(rnd(kp, (d, d)).reshape(H, Dh, d))
        w1.append(rnd(k1, (d, hid)))
        w2.append(rnd(k2, (hid, d)))

    ones_c = jnp.ones((depth, 1, d), jnp.float32)
    zeros_c = jnp.zeros((depth, 1, d), jnp.float32)
    return {
        # patch embed (Conv2d as im2col matmul) + LayerNorm
        "patch_w": rnd(keys[0], (K, d)).astype(MXU_DTYPE),
        "patch_b": jnp.zeros((1, d), jnp.float32),
        "patch_g": jnp.ones((1, d), jnp.float32),
        "patch_bt": jnp.zeros((1, d), jnp.float32),
        # transformer blocks, stacked over depth; matmul weights stored in MXU_DTYPE (bf16)
        "ln1_g": ones_c, "ln1_b": zeros_c,
        "wq": jnp.stack(wq).astype(MXU_DTYPE),
        "bq": jnp.zeros((depth, H, 1, Dh), jnp.float32),
        "wk": jnp.stack(wk).astype(MXU_DTYPE),
        "bk": jnp.zeros((depth, H, 1, Dh), jnp.float32),
        "wv": jnp.stack(wv).astype(MXU_DTYPE),
        "bv": jnp.zeros((depth, H, 1, Dh), jnp.float32),
        "wpr": jnp.stack(wpr).astype(MXU_DTYPE), "bpr": zeros_c,
        "ln2_g": ones_c, "ln2_b": zeros_c,
        "w_fc1": jnp.stack(w1).astype(MXU_DTYPE),
        "b_fc1": jnp.zeros((depth, 1, hid), jnp.float32),
        "w_fc2": jnp.stack(w2).astype(MXU_DTYPE), "b_fc2": zeros_c,
    }


def init_params(key, spec, in_chans):
    params = []
    keys = jax.random.split(key, spec["NUM_STAGES"])
    for i in range(spec["NUM_STAGES"]):
        cfg = stage_cfg(spec, i)
        params.append(init_stage(keys[i], in_chans, cfg))
        in_chans = cfg["embed_dim"]
    return params


# --------------------------------------------------------------------------------------
if __name__ == "__main__":
    SPEC = {
        "NUM_STAGES": 2,
        "PATCH_SIZE": [4, 2],
        "PATCH_STRIDE": [4, 2],
        "PATCH_PADDING": [0, 0],
        "DIM_EMBED": [32, 64],
        "DEPTH": [2, 1],
        "NUM_HEADS": [2, 4],
        "MLP_RATIO": [2.0, 2.0],
        "QKV_BIAS": [True, True],
        "DROP_RATE": [0.0, 0.0],
        "ATTN_DROP_RATE": [0.0, 0.0],
        "DROP_PATH_RATE": [0.0, 0.0],
        "CLS_TOKEN": [False, False],
        "QKV_PROJ_METHOD": ["dw_bn", "dw_bn"],  # conv projections unused by this ablation's forward
        "KERNEL_QKV": [3, 3],
        "PADDING_Q": [1, 1],
        "PADDING_KV": [1, 1],
        "STRIDE_KV": [1, 1],
        "STRIDE_Q": [1, 1],
        "FREEZE_BN": True,
    }

    key = jax.random.PRNGKey(0)
    kp, kt, ko, ks = jax.random.split(key, 4)
    in_chans = 3
    params = init_params(kp, SPEC, in_chans)

    # Small NCHW inputs (template/online_template 16x16, search 32x32)
    template = jax.random.normal(kt, (2, in_chans, 16, 16), jnp.float32)
    online_template = jax.random.normal(ko, (2, in_chans, 16, 16), jnp.float32)
    search = jax.random.normal(ks, (2, in_chans, 32, 32), jnp.float32)

    fwd = jax.jit(functools.partial(cvt_forward, params, SPEC))
    out_template, out_search = fwd(template, online_template, search)
    jax.block_until_ready((out_template, out_search))

    assert out_template.shape == (2, 64, 2, 2), out_template.shape
    assert out_search.shape == (2, 64, 4, 4), out_search.shape
    assert jnp.all(jnp.isfinite(out_template)) and jnp.all(jnp.isfinite(out_search))
    print("KERNEL_OK")
</pallas_src>

<mosaic_0001>
module attributes {stable_mosaic.version = 11 : i64} {
  func.func @_stage_kernel(%arg0: i32, %arg1: memref<1x96x48xf32, #tpu.memory_space<vmem>>, %arg2: memref<48x32xbf16, #tpu.memory_space<vmem>>, %arg3: memref<1x32xf32, #tpu.memory_space<vmem>>, %arg4: memref<1x32xf32, #tpu.memory_space<vmem>>, %arg5: memref<1x32xf32, #tpu.memory_space<vmem>>, %arg6: memref<2x1x32xf32, #tpu.memory_space<vmem>>, %arg7: memref<2x1x32xf32, #tpu.memory_space<vmem>>, %arg8: memref<2x2x32x16xbf16, #tpu.memory_space<vmem>>, %arg9: memref<2x2x1x16xf32, #tpu.memory_space<vmem>>, %arg10: memref<2x2x32x16xbf16, #tpu.memory_space<vmem>>, %arg11: memref<2x2x1x16xf32, #tpu.memory_space<vmem>>, %arg12: memref<2x2x32x16xbf16, #tpu.memory_space<vmem>>, %arg13: memref<2x2x1x16xf32, #tpu.memory_space<vmem>>, %arg14: memref<2x2x16x32xbf16, #tpu.memory_space<vmem>>, %arg15: memref<2x1x32xf32, #tpu.memory_space<vmem>>, %arg16: memref<2x1x32xf32, #tpu.memory_space<vmem>>, %arg17: memref<2x1x32xf32, #tpu.memory_space<vmem>>, %arg18: memref<2x32x64xbf16, #tpu.memory_space<vmem>>, %arg19: memref<2x1x64xf32, #tpu.memory_space<vmem>>, %arg20: memref<2x64x32xbf16, #tpu.memory_space<vmem>>, %arg21: memref<2x1x32xf32, #tpu.memory_space<vmem>>, %arg22: memref<1x96x32xf32, #tpu.memory_space<vmem>>) attributes {dimension_semantics = [#tpu.dimension_semantics<parallel>], iteration_bounds = array<i64: 2>, scalar_prefetch = 0 : i64, scratch_operands = 0 : i64, tpu.core_type = #tpu.core_type<tc>, window_params = [{transform_indices = @transform_0, window_bounds = array<i64: 1, 96, 48>}, {pipeline_mode = #tpu.pipeline_mode<synchronous>, transform_indices = @transform_1, window_bounds = array<i64: 48, 32>}, {pipeline_mode = #tpu.pipeline_mode<synchronous>, transform_indices = @transform_2, window_bounds = array<i64: 1, 32>}, {pipeline_mode = #tpu.pipeline_mode<synchronous>, transform_indices = @transform_3, window_bounds = array<i64: 1, 32>}, {pipeline_mode = #tpu.pipeline_mode<synchronous>, transform_indices = @transform_4, window_bounds = array<i64: 1, 32>}, {pipeline_mode = #tpu.pipeline_mode<synchronous>, transform_indices = @transform_5, window_bounds = array<i64: 2, 1, 32>}, {pipeline_mode = #tpu.pipeline_mode<synchronous>, transform_indices = @transform_6, window_bounds = array<i64: 2, 1, 32>}, {pipeline_mode = #tpu.pipeline_mode<synchronous>, transform_indices = @transform_7, window_bounds = array<i64: 2, 2, 32, 16>}, {pipeline_mode = #tpu.pipeline_mode<synchronous>, transform_indices = @transform_8, window_bounds = array<i64: 2, 2, 1, 16>}, {pipeline_mode = #tpu.pipeline_mode<synchronous>, transform_indices = @transform_9, window_bounds = array<i64: 2, 2, 32, 16>}, {pipeline_mode = #tpu.pipeline_mode<synchronous>, transform_indices = @transform_10, window_bounds = array<i64: 2, 2, 1, 16>}, {pipeline_mode = #tpu.pipeline_mode<synchronous>, transform_indices = @transform_11, window_bounds = array<i64: 2, 2, 32, 16>}, {pipeline_mode = #tpu.pipeline_mode<synchronous>, transform_indices = @transform_12, window_bounds = array<i64: 2, 2, 1, 16>}, {pipeline_mode = #tpu.pipeline_mode<synchronous>, transform_indices = @transform_13, window_bounds = array<i64: 2, 2, 16, 32>}, {pipeline_mode = #tpu.pipeline_mode<synchronous>, transform_indices = @transform_14, window_bounds = array<i64: 2, 1, 32>}, {pipeline_mode = #tpu.pipeline_mode<synchronous>, transform_indices = @transform_15, window_bounds = array<i64: 2, 1, 32>}, {pipeline_mode = #tpu.pipeline_mode<synchronous>, transform_indices = @transform_16, window_bounds = array<i64: 2, 1, 32>}, {pipeline_mode = #tpu.pipeline_mode<synchronous>, transform_indices = @transform_17, window_bounds = array<i64: 2, 32, 64>}, {pipeline_mode = #tpu.pipeline_mode<synchronous>, transform_indices = @transform_18, window_bounds = array<i64: 2, 1, 64>}, {pipeline_mode = #tpu.pipeline_mode<synchronous>, transform_indices = @transform_19, window_bounds = array<i64: 2, 64, 32>}, {pipeline_mode = #tpu.pipeline_mode<synchronous>, transform_indices = @transform_20, window_bounds = array<i64: 2, 1, 32>}, {transform_indices = @transform_21, window_bounds = array<i64: 1, 96, 32>}]} {
    %c0 = arith.constant 0 : index
    %c0_0 = arith.constant 0 : index
    %c0_1 = arith.constant 0 : index
    %0 = vector.load %arg1[%c0, %c0_0, %c0_1] : memref<1x96x48xf32, #tpu.memory_space<vmem>>, vector<1x96x48xf32>
    %1 = vector.shape_cast %0 : vector<1x96x48xf32> to vector<96x48xf32>
    %c0_2 = arith.constant 0 : index
    %c0_3 = arith.constant 0 : index
    %2 = vector.load %arg2[%c0_2, %c0_3] : memref<48x32xbf16, #tpu.memory_space<vmem>>, vector<48x32xbf16>
    %3 = arith.truncf %1 : vector<96x48xf32> to vector<96x48xbf16>
    %cst = arith.constant dense<0.000000e+00> : vector<96x32xf32>
    %4 = tpu.matmul %3, %2, %cst {dimension_numbers = #tpu.dot_dimension_numbers<[1], [0], [0], [1], [0, 0, 1, 1], [], []>} : vector<96x48xbf16>, vector<48x32xbf16>, vector<96x32xf32> -> vector<96x32xf32>
    %c0_4 = arith.constant 0 : index
    %c0_5 = arith.constant 0 : index
    %5 = vector.load %arg3[%c0_4, %c0_5] : memref<1x32xf32, #tpu.memory_space<vmem>>, vector<1x32xf32>
    %6 = vector.broadcast %5 : vector<1x32xf32> to vector<96x32xf32>
    %7 = arith.addf %4, %6 : vector<96x32xf32>
    %c0_6 = arith.constant 0 : index
    %c0_7 = arith.constant 0 : index
    %8 = vector.load %arg4[%c0_6, %c0_7] : memref<1x32xf32, #tpu.memory_space<vmem>>, vector<1x32xf32>
    %c0_8 = arith.constant 0 : index
    %c0_9 = arith.constant 0 : index
    %9 = vector.load %arg5[%c0_8, %c0_9] : memref<1x32xf32, #tpu.memory_space<vmem>>, vector<1x32xf32>
    %cst_10 = arith.constant dense<0.000000e+00> : vector<96xf32>
    %10 = vector.multi_reduction <add>, %7, %cst_10 [1] : vector<96x32xf32> to vector<96xf32>
    %11 = vector.shape_cast %10 : vector<96xf32> to vector<96x1xf32>
    %cst_11 = arith.constant 3.200000e+01 : f32
    %12 = vector.broadcast %cst_11 : f32 to vector<96x1xf32>
    %13 = arith.divf %11, %12 : vector<96x1xf32>
    %14 = vector.broadcast %13 : vector<96x1xf32> to vector<96x32xf32>
    %15 = arith.subf %7, %14 : vector<96x32xf32>
    %16 = arith.mulf %15, %15 : vector<96x32xf32>
    %cst_12 = arith.constant dense<0.000000e+00> : vector<96xf32>
    %17 = vector.multi_reduction <add>, %16, %cst_12 [1] : vector<96x32xf32> to vector<96xf32>
    %18 = vector.shape_cast %17 : vector<96xf32> to vector<96x1xf32>
    %cst_13 = arith.constant 3.200000e+01 : f32
    %19 = vector.broadcast %cst_13 : f32 to vector<96x1xf32>
    %20 = arith.divf %18, %19 : vector<96x1xf32>
    %cst_14 = arith.constant 9.99999974E-6 : f32
    %21 = vector.broadcast %cst_14 : f32 to vector<96x1xf32>
    %22 = arith.addf %20, %21 : vector<96x1xf32>
    %23 = math.rsqrt %22 : vector<96x1xf32>
    %24 = vector.broadcast %23 : vector<96x1xf32> to vector<96x32xf32>
    %25 = arith.mulf %15, %24 : vector<96x32xf32>
    %26 = vector.broadcast %8 : vector<1x32xf32> to vector<96x32xf32>
    %27 = arith.mulf %25, %26 : vector<96x32xf32>
    %28 = vector.broadcast %9 : vector<1x32xf32> to vector<96x32xf32>
    %29 = arith.addf %27, %28 : vector<96x32xf32>
    %30 = tpu.iota {dimensions = array<i32: 0>} : vector<96x96xi32>
    %31 = tpu.iota {dimensions = array<i32: 1>} : vector<96x96xi32>
    %c32_i32 = arith.constant 32 : i32
    %32 = vector.broadcast %c32_i32 : i32 to vector<96x96xi32>
    %33 = arith.cmpi slt, %30, %32 : vector<96x96xi32>
    %c32_i32_15 = arith.constant 32 : i32
    %34 = vector.broadcast %c32_i32_15 : i32 to vector<96x96xi32>
    %35 = arith.cmpi sge, %31, %34 : vector<96x96xi32>
    %36 = arith.andi %33, %35 : vector<96x96xi1>
    %c0_16 = arith.constant 0 : index
    %c0_17 = arith.constant 0 : index
    %c0_18 = arith.constant 0 : index
    %37 = vector.load %arg6[%c0_16, %c0_17, %c0_18] : memref<2x1x32xf32, #tpu.memory_space<vmem>>, vector<1x1x32xf32>
    %38 = vector.shape_cast %37 : vector<1x1x32xf32> to vector<1x32xf32>
    %c0_19 = arith.constant 0 : index
    %c0_20 = arith.constant 0 : index
    %c0_21 = arith.constant 0 : index
    %39 = vector.load %arg7[%c0_19, %c0_20, %c0_21] : memref<2x1x32xf32, #tpu.memory_space<vmem>>, vector<1x1x32xf32>
    %40 = vector.shape_cast %39 : vector<1x1x32xf32> to vector<1x32xf32>
    %cst_22 = arith.constant dense<0.000000e+00> : vector<96xf32>
    %41 = vector.multi_reduction <add>, %29, %cst_22 [1] : vector<96x32xf32> to vector<96xf32>
    %42 = vector.shape_cast %41 : vector<96xf32> to vector<96x1xf32>
    %cst_23 = arith.constant 3.200000e+01 : f32
    %43 = vector.broadcast %cst_23 : f32 to vector<96x1xf32>
    %44 = arith.divf %42, %43 : vector<96x1xf32>
    %45 = vector.broadcast %44 : vector<96x1xf32> to vector<96x32xf32>
    %46 = arith.subf %29, %45 : vector<96x32xf32>
    %47 = arith.mulf %46, %46 : vector<96x32xf32>
    %cst_24 = arith.constant dense<0.000000e+00> : vector<96xf32>
    %48 = vector.multi_reduction <add>, %47, %cst_24 [1] : vector<96x32xf32> to vector<96xf32>
    %49 = vector.shape_cast %48 : vector<96xf32> to vector<96x1xf32>
    %cst_25 = arith.constant 3.200000e+01 : f32
    %50 = vector.broadcast %cst_25 : f32 to vector<96x1xf32>
    %51 = arith.divf %49, %50 : vector<96x1xf32>
    %cst_26 = arith.constant 9.99999974E-6 : f32
    %52 = vector.broadcast %cst_26 : f32 to vector<96x1xf32>
    %53 = arith.addf %51, %52 : vector<96x1xf32>
    %54 = math.rsqrt %53 : vector<96x1xf32>
    %55 = vector.broadcast %54 : vector<96x1xf32> to vector<96x32xf32>
    %56 = arith.mulf %46, %55 : vector<96x32xf32>
    %57 = vector.broadcast %38 : vector<1x32xf32> to vector<96x32xf32>
    %58 = arith.mulf %56, %57 : vector<96x32xf32>
    %59 = vector.broadcast %40 : vector<1x32xf32> to vector<96x32xf32>
    %60 = arith.addf %58, %59 : vector<96x32xf32>
    %c0_27 = arith.constant 0 : index
    %c0_28 = arith.constant 0 : index
    %c0_29 = arith.constant 0 : index
    %c0_30 = arith.constant 0 : index
    %61 = vector.load %arg8[%c0_27, %c0_28, %c0_29, %c0_30] : memref<2x2x32x16xbf16, #tpu.memory_space<vmem>>, vector<1x1x32x16xbf16>
    %62 = vector.shape_cast %61 : vector<1x1x32x16xbf16> to vector<32x16xbf16>
    %63 = arith.truncf %60 : vector<96x32xf32> to vector<96x32xbf16>
    %cst_31 = arith.constant dense<0.000000e+00> : vector<96x16xf32>
    %64 = tpu.matmul %63, %62, %cst_31 {dimension_numbers = #tpu.dot_dimension_numbers<[1], [0], [0], [1], [0, 0, 1, 1], [], []>} : vector<96x32xbf16>, vector<32x16xbf16>, vector<96x16xf32> -> vector<96x16xf32>
    %c0_32 = arith.constant 0 : index
    %c0_33 = arith.constant 0 : index
    %c0_34 = arith.constant 0 : index
    %c0_35 = arith.constant 0 : index
    %65 = vector.load %arg9[%c0_32, %c0_33, %c0_34, %c0_35] : memref<2x2x1x16xf32, #tpu.memory_space<vmem>>, vector<1x1x1x16xf32>
    %66 = vector.shape_cast %65 : vector<1x1x1x16xf32> to vector<1x16xf32>
    %67 = vector.broadcast %66 : vector<1x16xf32> to vector<96x16xf32>
    %68 = arith.addf %64, %67 : vector<96x16xf32>
    %c0_36 = arith.constant 0 : index
    %c0_37 = arith.constant 0 : index
    %c0_38 = arith.constant 0 : index
    %c0_39 = arith.constant 0 : index
    %69 = vector.load %arg10[%c0_36, %c0_37, %c0_38, %c0_39] : memref<2x2x32x16xbf16, #tpu.memory_space<vmem>>, vector<1x1x32x16xbf16>
    %70 = vector.shape_cast %69 : vector<1x1x32x16xbf16> to vector<32x16xbf16>
    %71 = arith.truncf %60 : vector<96x32xf32> to vector<96x32xbf16>
    %cst_40 = arith.constant dense<0.000000e+00> : vector<96x16xf32>
    %72 = tpu.matmul %71, %70, %cst_40 {dimension_numbers = #tpu.dot_dimension_numbers<[1], [0], [0], [1], [0, 0, 1, 1], [], []>} : vector<96x32xbf16>, vector<32x16xbf16>, vector<96x16xf32> -> vector<96x16xf32>
    %c0_41 = arith.constant 0 : index
    %c0_42 = arith.constant 0 : index
    %c0_43 = arith.constant 0 : index
    %c0_44 = arith.constant 0 : index
    %73 = vector.load %arg11[%c0_41, %c0_42, %c0_43, %c0_44] : memref<2x2x1x16xf32, #tpu.memory_space<vmem>>, vector<1x1x1x16xf32>
    %74 = vector.shape_cast %73 : vector<1x1x1x16xf32> to vector<1x16xf32>
    %75 = vector.broadcast %74 : vector<1x16xf32> to vector<96x16xf32>
    %76 = arith.addf %72, %75 : vector<96x16xf32>
    %c0_45 = arith.constant 0 : index
    %c0_46 = arith.constant 0 : index
    %c0_47 = arith.constant 0 : index
    %c0_48 = arith.constant 0 : index
    %77 = vector.load %arg12[%c0_45, %c0_46, %c0_47, %c0_48] : memref<2x2x32x16xbf16, #tpu.memory_space<vmem>>, vector<1x1x32x16xbf16>
    %78 = vector.shape_cast %77 : vector<1x1x32x16xbf16> to vector<32x16xbf16>
    %79 = arith.truncf %60 : vector<96x32xf32> to vector<96x32xbf16>
    %cst_49 = arith.constant dense<0.000000e+00> : vector<96x16xf32>
    %80 = tpu.matmul %79, %78, %cst_49 {dimension_numbers = #tpu.dot_dimension_numbers<[1], [0], [0], [1], [0, 0, 1, 1], [], []>} : vector<96x32xbf16>, vector<32x16xbf16>, vector<96x16xf32> -> vector<96x16xf32>
    %c0_50 = arith.constant 0 : index
    %c0_51 = arith.constant 0 : index
    %c0_52 = arith.constant 0 : index
    %c0_53 = arith.constant 0 : index
    %81 = vector.load %arg13[%c0_50, %c0_51, %c0_52, %c0_53] : memref<2x2x1x16xf32, #tpu.memory_space<vmem>>, vector<1x1x1x16xf32>
    %82 = vector.shape_cast %81 : vector<1x1x1x16xf32> to vector<1x16xf32>
    %83 = vector.broadcast %82 : vector<1x16xf32> to vector<96x16xf32>
    %84 = arith.addf %80, %83 : vector<96x16xf32>
    %85 = arith.truncf %68 : vector<96x16xf32> to vector<96x16xbf16>
    %86 = arith.truncf %76 : vector<96x16xf32> to vector<96x16xbf16>
    %cst_54 = arith.constant dense<0.000000e+00> : vector<96x96xf32>
    %87 = tpu.matmul %85, %86, %cst_54 {dimension_numbers = #tpu.dot_dimension_numbers<[1], [1], [0], [0], [0, 0, 1, 0], [], []>} : vector<96x16xbf16>, vector<96x16xbf16>, vector<96x96xf32> -> vector<96x96xf32>
    %cst_55 = arith.constant 0.176776692 : f32
    %88 = vector.broadcast %cst_55 : f32 to vector<96x96xf32>
    %89 = arith.mulf %87, %88 : vector<96x96xf32>
    %cst_56 = arith.constant -1.000000e+30 : f32
    %90 = vector.broadcast %cst_56 : f32 to vector<96x96xf32>
    %91 = arith.select %36, %90, %89 : vector<96x96xi1>, vector<96x96xf32>
    %cst_57 = arith.constant dense<0xFF800000> : vector<96xf32>
    %92 = vector.multi_reduction <maximumf>, %91, %cst_57 [1] : vector<96x96xf32> to vector<96xf32>
    %93 = vector.shape_cast %92 : vector<96xf32> to vector<96x1xf32>
    %94 = vector.broadcast %93 : vector<96x1xf32> to vector<96x96xf32>
    %95 = arith.subf %91, %94 : vector<96x96xf32>
    %96 = math.exp %95 : vector<96x96xf32>
    %cst_58 = arith.constant dense<0.000000e+00> : vector<96xf32>
    %97 = vector.multi_reduction <add>, %96, %cst_58 [1] : vector<96x96xf32> to vector<96xf32>
    %98 = vector.shape_cast %97 : vector<96xf32> to vector<96x1xf32>
    %99 = arith.truncf %96 : vector<96x96xf32> to vector<96x96xbf16>
    %100 = arith.truncf %84 : vector<96x16xf32> to vector<96x16xbf16>
    %cst_59 = arith.constant dense<0.000000e+00> : vector<96x16xf32>
    %101 = tpu.matmul %99, %100, %cst_59 {dimension_numbers = #tpu.dot_dimension_numbers<[1], [0], [0], [1], [0, 0, 1, 1], [], []>} : vector<96x96xbf16>, vector<96x16xbf16>, vector<96x16xf32> -> vector<96x16xf32>
    %102 = vector.broadcast %98 : vector<96x1xf32> to vector<96x16xf32>
    %103 = arith.divf %101, %102 : vector<96x16xf32>
    %c0_60 = arith.constant 0 : index
    %c0_61 = arith.constant 0 : index
    %c0_62 = arith.constant 0 : index
    %c0_63 = arith.constant 0 : index
    %104 = vector.load %arg14[%c0_60, %c0_61, %c0_62, %c0_63] : memref<2x2x16x32xbf16, #tpu.memory_space<vmem>>, vector<1x1x16x32xbf16>
    %105 = vector.shape_cast %104 : vector<1x1x16x32xbf16> to vector<16x32xbf16>
    %106 = arith.truncf %103 : vector<96x16xf32> to vector<96x16xbf16>
    %cst_64 = arith.constant dense<0.000000e+00> : vector<96x32xf32>
    %107 = tpu.matmul %106, %105, %cst_64 {dimension_numbers = #tpu.dot_dimension_numbers<[1], [0], [0], [1], [0, 0, 1, 1], [], []>} : vector<96x16xbf16>, vector<16x32xbf16>, vector<96x32xf32> -> vector<96x32xf32>
    %c0_65 = arith.constant 0 : index
    %c1 = arith.constant 1 : index
    %c0_66 = arith.constant 0 : index
    %c0_67 = arith.constant 0 : index
    %108 = vector.load %arg8[%c0_65, %c1, %c0_66, %c0_67] : memref<2x2x32x16xbf16, #tpu.memory_space<vmem>>, vector<1x1x32x16xbf16>
    %109 = vector.shape_cast %108 : vector<1x1x32x16xbf16> to vector<32x16xbf16>
    %110 = arith.truncf %60 : vector<96x32xf32> to vector<96x32xbf16>
    %cst_68 = arith.constant dense<0.000000e+00> : vector<96x16xf32>
    %111 = tpu.matmul %110, %109, %cst_68 {dimension_numbers = #tpu.dot_dimension_numbers<[1], [0], [0], [1], [0, 0, 1, 1], [], []>} : vector<96x32xbf16>, vector<32x16xbf16>, vector<96x16xf32> -> vector<96x16xf32>
    %c0_69 = arith.constant 0 : index
    %c1_70 = arith.constant 1 : index
    %c0_71 = arith.constant 0 : index
    %c0_72 = arith.constant 0 : index
    %112 = vector.load %arg9[%c0_69, %c1_70, %c0_71, %c0_72] : memref<2x2x1x16xf32, #tpu.memory_space<vmem>>, vector<1x1x1x16xf32>
    %113 = vector.shape_cast %112 : vector<1x1x1x16xf32> to vector<1x16xf32>
    %114 = vector.broadcast %113 : vector<1x16xf32> to vector<96x16xf32>
    %115 = arith.addf %111, %114 : vector<96x16xf32>
    %c0_73 = arith.constant 0 : index
    %c1_74 = arith.constant 1 : index
    %c0_75 = arith.constant 0 : index
    %c0_76 = arith.constant 0 : index
    %116 = vector.load %arg10[%c0_73, %c1_74, %c0_75, %c0_76] : memref<2x2x32x16xbf16, #tpu.memory_space<vmem>>, vector<1x1x32x16xbf16>
    %117 = vector.shape_cast %116 : vector<1x1x32x16xbf16> to vector<32x16xbf16>
    %118 = arith.truncf %60 : vector<96x32xf32> to vector<96x32xbf16>
    %cst_77 = arith.constant dense<0.000000e+00> : vector<96x16xf32>
    %119 = tpu.matmul %118, %117, %cst_77 {dimension_numbers = #tpu.dot_dimension_numbers<[1], [0], [0], [1], [0, 0, 1, 1], [], []>} : vector<96x32xbf16>, vector<32x16xbf16>, vector<96x16xf32> -> vector<96x16xf32>
    %c0_78 = arith.constant 0 : index
    %c1_79 = arith.constant 1 : index
    %c0_80 = arith.constant 0 : index
    %c0_81 = arith.constant 0 : index
    %120 = vector.load %arg11[%c0_78, %c1_79, %c0_80, %c0_81] : memref<2x2x1x16xf32, #tpu.memory_space<vmem>>, vector<1x1x1x16xf32>
    %121 = vector.shape_cast %120 : vector<1x1x1x16xf32> to vector<1x16xf32>
    %122 = vector.broadcast %121 : vector<1x16xf32> to vector<96x16xf32>
    %123 = arith.addf %119, %122 : vector<96x16xf32>
    %c0_82 = arith.constant 0 : index
    %c1_83 = arith.constant 1 : index
    %c0_84 = arith.constant 0 : index
    %c0_85 = arith.constant 0 : index
    %124 = vector.load %arg12[%c0_82, %c1_83, %c0_84, %c0_85] : memref<2x2x32x16xbf16, #tpu.memory_space<vmem>>, vector<1x1x32x16xbf16>
    %125 = vector.shape_cast %124 : vector<1x1x32x16xbf16> to vector<32x16xbf16>
    %126 = arith.truncf %60 : vector<96x32xf32> to vector<96x32xbf16>
    %cst_86 = arith.constant dense<0.000000e+00> : vector<96x16xf32>
    %127 = tpu.matmul %126, %125, %cst_86 {dimension_numbers = #tpu.dot_dimension_numbers<[1], [0], [0], [1], [0, 0, 1, 1], [], []>} : vector<96x32xbf16>, vector<32x16xbf16>, vector<96x16xf32> -> vector<96x16xf32>
    %c0_87 = arith.constant 0 : index
    %c1_88 = arith.constant 1 : index
    %c0_89 = arith.constant 0 : index
    %c0_90 = arith.constant 0 : index
    %128 = vector.load %arg13[%c0_87, %c1_88, %c0_89, %c0_90] : memref<2x2x1x16xf32, #tpu.memory_space<vmem>>, vector<1x1x1x16xf32>
    %129 = vector.shape_cast %128 : vector<1x1x1x16xf32> to vector<1x16xf32>
    %130 = vector.broadcast %129 : vector<1x16xf32> to vector<96x16xf32>
    %131 = arith.addf %127, %130 : vector<96x16xf32>
    %132 = arith.truncf %115 : vector<96x16xf32> to vector<96x16xbf16>
    %133 = arith.truncf %123 : vector<96x16xf32> to vector<96x16xbf16>
    %cst_91 = arith.constant dense<0.000000e+00> : vector<96x96xf32>
    %134 = tpu.matmul %132, %133, %cst_91 {dimension_numbers = #tpu.dot_dimension_numbers<[1], [1], [0], [0], [0, 0, 1, 0], [], []>} : vector<96x16xbf16>, vector<96x16xbf16>, vector<96x96xf32> -> vector<96x96xf32>
    %cst_92 = arith.constant 0.176776692 : f32
    %135 = vector.broadcast %cst_92 : f32 to vector<96x96xf32>
    %136 = arith.mulf %134, %135 : vector<96x96xf32>
    %cst_93 = arith.constant -1.000000e+30 : f32
    %137 = vector.broadcast %cst_93 : f32 to vector<96x96xf32>
    %138 = arith.select %36, %137, %136 : vector<96x96xi1>, vector<96x96xf32>
    %cst_94 = arith.constant dense<0xFF800000> : vector<96xf32>
    %139 = vector.multi_reduction <maximumf>, %138, %cst_94 [1] : vector<96x96xf32> to vector<96xf32>
    %140 = vector.shape_cast %139 : vector<96xf32> to vector<96x1xf32>
    %141 = vector.broadcast %140 : vector<96x1xf32> to vector<96x96xf32>
    %142 = arith.subf %138, %141 : vector<96x96xf32>
    %143 = math.exp %142 : vector<96x96xf32>
    %cst_95 = arith.constant dense<0.000000e+00> : vector<96xf32>
    %144 = vector.multi_reduction <add>, %143, %cst_95 [1] : vector<96x96xf32> to vector<96xf32>
    %145 = vector.shape_cast %144 : vector<96xf32> to vector<96x1xf32>
    %146 = arith.truncf %143 : vector<96x96xf32> to vector<96x96xbf16>
    %147 = arith.truncf %131 : vector<96x16xf32> to vector<96x16xbf16>
    %cst_96 = arith.constant dense<0.000000e+00> : vector<96x16xf32>
    %148 = tpu.matmul %146, %147, %cst_96 {dimension_numbers = #tpu.dot_dimension_numbers<[1], [0], [0], [1], [0, 0, 1, 1], [], []>} : vector<96x96xbf16>, vector<96x16xbf16>, vector<96x16xf32> -> vector<96x16xf32>
    %149 = vector.broadcast %145 : vector<96x1xf32> to vector<96x16xf32>
    %150 = arith.divf %148, %149 : vector<96x16xf32>
    %c0_97 = arith.constant 0 : index
    %c1_98 = arith.constant 1 : index
    %c0_99 = arith.constant 0 : index
    %c0_100 = arith.constant 0 : index
    %151 = vector.load %arg14[%c0_97, %c1_98, %c0_99, %c0_100] : memref<2x2x16x32xbf16, #tpu.memory_space<vmem>>, vector<1x1x16x32xbf16>
    %152 = vector.shape_cast %151 : vector<1x1x16x32xbf16> to vector<16x32xbf16>
    %153 = arith.truncf %150 : vector<96x16xf32> to vector<96x16xbf16>
    %cst_101 = arith.constant dense<0.000000e+00> : vector<96x32xf32>
    %154 = tpu.matmul %153, %152, %cst_101 {dimension_numbers = #tpu.dot_dimension_numbers<[1], [0], [0], [1], [0, 0, 1, 1], [], []>} : vector<96x16xbf16>, vector<16x32xbf16>, vector<96x32xf32> -> vector<96x32xf32>
    %155 = arith.addf %107, %154 : vector<96x32xf32>
    %156 = arith.addf %29, %155 : vector<96x32xf32>
    %c0_102 = arith.constant 0 : index
    %c0_103 = arith.constant 0 : index
    %c0_104 = arith.constant 0 : index
    %157 = vector.load %arg15[%c0_102, %c0_103, %c0_104] : memref<2x1x32xf32, #tpu.memory_space<vmem>>, vector<1x1x32xf32>
    %158 = vector.shape_cast %157 : vector<1x1x32xf32> to vector<1x32xf32>
    %159 = vector.broadcast %158 : vector<1x32xf32> to vector<96x32xf32>
    %160 = arith.addf %156, %159 : vector<96x32xf32>
    %c0_105 = arith.constant 0 : index
    %c0_106 = arith.constant 0 : index
    %c0_107 = arith.constant 0 : index
    %161 = vector.load %arg16[%c0_105, %c0_106, %c0_107] : memref<2x1x32xf32, #tpu.memory_space<vmem>>, vector<1x1x32xf32>
    %162 = vector.shape_cast %161 : vector<1x1x32xf32> to vector<1x32xf32>
    %c0_108 = arith.constant 0 : index
    %c0_109 = arith.constant 0 : index
    %c0_110 = arith.constant 0 : index
    %163 = vector.load %arg17[%c0_108, %c0_109, %c0_110] : memref<2x1x32xf32, #tpu.memory_space<vmem>>, vector<1x1x32xf32>
    %164 = vector.shape_cast %163 : vector<1x1x32xf32> to vector<1x32xf32>
    %cst_111 = arith.constant dense<0.000000e+00> : vector<96xf32>
    %165 = vector.multi_reduction <add>, %160, %cst_111 [1] : vector<96x32xf32> to vector<96xf32>
    %166 = vector.shape_cast %165 : vector<96xf32> to vector<96x1xf32>
    %cst_112 = arith.constant 3.200000e+01 : f32
    %167 = vector.broadcast %cst_112 : f32 to vector<96x1xf32>
    %168 = arith.divf %166, %167 : vector<96x1xf32>
    %169 = vector.broadcast %168 : vector<96x1xf32> to vector<96x32xf32>
    %170 = arith.subf %160, %169 : vector<96x32xf32>
    %171 = arith.mulf %170, %170 : vector<96x32xf32>
    %cst_113 = arith.constant dense<0.000000e+00> : vector<96xf32>
    %172 = vector.multi_reduction <add>, %171, %cst_113 [1] : vector<96x32xf32> to vector<96xf32>
    %173 = vector.shape_cast %172 : vector<96xf32> to vector<96x1xf32>
    %cst_114 = arith.constant 3.200000e+01 : f32
    %174 = vector.broadcast %cst_114 : f32 to vector<96x1xf32>
    %175 = arith.divf %173, %174 : vector<96x1xf32>
    %cst_115 = arith.constant 9.99999974E-6 : f32
    %176 = vector.broadcast %cst_115 : f32 to vector<96x1xf32>
    %177 = arith.addf %175, %176 : vector<96x1xf32>
    %178 = math.rsqrt %177 : vector<96x1xf32>
    %179 = vector.broadcast %178 : vector<96x1xf32> to vector<96x32xf32>
    %180 = arith.mulf %170, %179 : vector<96x32xf32>
    %181 = vector.broadcast %162 : vector<1x32xf32> to vector<96x32xf32>
    %182 = arith.mulf %180, %181 : vector<96x32xf32>
    %183 = vector.broadcast %164 : vector<1x32xf32> to vector<96x32xf32>
    %184 = arith.addf %182, %183 : vector<96x32xf32>
    %c0_116 = arith.constant 0 : index
    %c0_117 = arith.constant 0 : index
    %c0_118 = arith.constant 0 : index
    %185 = vector.load %arg18[%c0_116, %c0_117, %c0_118] : memref<2x32x64xbf16, #tpu.memory_space<vmem>>, vector<1x32x64xbf16>
    %186 = vector.shape_cast %185 : vector<1x32x64xbf16> to vector<32x64xbf16>
    %187 = arith.truncf %184 : vector<96x32xf32> to vector<96x32xbf16>
    %cst_119 = arith.constant dense<0.000000e+00> : vector<96x64xf32>
    %188 = tpu.matmul %187, %186, %cst_119 {dimension_numbers = #tpu.dot_dimension_numbers<[1], [0], [0], [1], [0, 0, 1, 1], [], []>} : vector<96x32xbf16>, vector<32x64xbf16>, vector<96x64xf32> -> vector<96x64xf32>
    %c0_120 = arith.constant 0 : index
    %c0_121 = arith.constant 0 : index
    %c0_122 = arith.constant 0 : index
    %189 = vector.load %arg19[%c0_120, %c0_121, %c0_122] : memref<2x1x64xf32, #tpu.memory_space<vmem>>, vector<1x1x64xf32>
    %190 = vector.shape_cast %189 : vector<1x1x64xf32> to vector<1x64xf32>
    %191 = vector.broadcast %190 : vector<1x64xf32> to vector<96x64xf32>
    %192 = arith.addf %188, %191 : vector<96x64xf32>
    %193 = arith.mulf %192, %192 : vector<96x64xf32>
    %194 = arith.mulf %192, %193 : vector<96x64xf32>
    %cst_123 = arith.constant 4.471500e-02 : f32
    %195 = vector.broadcast %cst_123 : f32 to vector<96x64xf32>
    %196 = arith.mulf %195, %194 : vector<96x64xf32>
    %197 = arith.addf %192, %196 : vector<96x64xf32>
    %cst_124 = arith.constant 0.797884583 : f32
    %198 = vector.broadcast %cst_124 : f32 to vector<96x64xf32>
    %199 = arith.mulf %198, %197 : vector<96x64xf32>
    %200 = math.tanh %199 : vector<96x64xf32>
    %cst_125 = arith.constant 1.000000e+00 : f32
    %201 = vector.broadcast %cst_125 : f32 to vector<96x64xf32>
    %202 = arith.addf %201, %200 : vector<96x64xf32>
    %cst_126 = arith.constant 5.000000e-01 : f32
    %203 = vector.broadcast %cst_126 : f32 to vector<96x64xf32>
    %204 = arith.mulf %203, %202 : vector<96x64xf32>
    %205 = arith.mulf %192, %204 : vector<96x64xf32>
    %c0_127 = arith.constant 0 : index
    %c0_128 = arith.constant 0 : index
    %c0_129 = arith.constant 0 : index
    %206 = vector.load %arg20[%c0_127, %c0_128, %c0_129] : memref<2x64x32xbf16, #tpu.memory_space<vmem>>, vector<1x64x32xbf16>
    %207 = vector.shape_cast %206 : vector<1x64x32xbf16> to vector<64x32xbf16>
    %208 = arith.truncf %205 : vector<96x64xf32> to vector<96x64xbf16>
    %cst_130 = arith.constant dense<0.000000e+00> : vector<96x32xf32>
    %209 = tpu.matmul %208, %207, %cst_130 {dimension_numbers = #tpu.dot_dimension_numbers<[1], [0], [0], [1], [0, 0, 1, 1], [], []>} : vector<96x64xbf16>, vector<64x32xbf16>, vector<96x32xf32> -> vector<96x32xf32>
    %c0_131 = arith.constant 0 : index
    %c0_132 = arith.constant 0 : index
    %c0_133 = arith.constant 0 : index
    %210 = vector.load %arg21[%c0_131, %c0_132, %c0_133] : memref<2x1x32xf32, #tpu.memory_space<vmem>>, vector<1x1x32xf32>
    %211 = vector.shape_cast %210 : vector<1x1x32xf32> to vector<1x32xf32>
    %212 = vector.broadcast %211 : vector<1x32xf32> to vector<96x32xf32>
    %213 = arith.addf %209, %212 : vector<96x32xf32>
    %214 = arith.addf %160, %213 : vector<96x32xf32>
    %c1_134 = arith.constant 1 : index
    %c0_135 = arith.constant 0 : index
    %c0_136 = arith.constant 0 : index
    %215 = vector.load %arg6[%c1_134, %c0_135, %c0_136] : memref<2x1x32xf32, #tpu.memory_space<vmem>>, vector<1x1x32xf32>
    %216 = vector.shape_cast %215 : vector<1x1x32xf32> to vector<1x32xf32>
    %c1_137 = arith.constant 1 : index
    %c0_138 = arith.constant 0 : index
    %c0_139 = arith.constant 0 : index
    %217 = vector.load %arg7[%c1_137, %c0_138, %c0_139] : memref<2x1x32xf32, #tpu.memory_space<vmem>>, vector<1x1x32xf32>
    %218 = vector.shape_cast %217 : vector<1x1x32xf32> to vector<1x32xf32>
    %cst_140 = arith.constant dense<0.000000e+00> : vector<96xf32>
    %219 = vector.multi_reduction <add>, %214, %cst_140 [1] : vector<96x32xf32> to vector<96xf32>
    %220 = vector.shape_cast %219 : vector<96xf32> to vector<96x1xf32>
    %cst_141 = arith.constant 3.200000e+01 : f32
    %221 = vector.broadcast %cst_141 : f32 to vector<96x1xf32>
    %222 = arith.divf %220, %221 : vector<96x1xf32>
    %223 = vector.broadcast %222 : vector<96x1xf32> to vector<96x32xf32>
    %224 = arith.subf %214, %223 : vector<96x32xf32>
    %225 = arith.mulf %224, %224 : vector<96x32xf32>
    %cst_142 = arith.constant dense<0.000000e+00> : vector<96xf32>
    %226 = vector.multi_reduction <add>, %225, %cst_142 [1] : vector<96x32xf32> to vector<96xf32>
    %227 = vector.shape_cast %226 : vector<96xf32> to vector<96x1xf32>
    %cst_143 = arith.constant 3.200000e+01 : f32
    %228 = vector.broadcast %cst_143 : f32 to vector<96x1xf32>
    %229 = arith.divf %227, %228 : vector<96x1xf32>
    %cst_144 = arith.constant 9.99999974E-6 : f32
    %230 = vector.broadcast %cst_144 : f32 to vector<96x1xf32>
    %231 = arith.addf %229, %230 : vector<96x1xf32>
    %232 = math.rsqrt %231 : vector<96x1xf32>
    %233 = vector.broadcast %232 : vector<96x1xf32> to vector<96x32xf32>
    %234 = arith.mulf %224, %233 : vector<96x32xf32>
    %235 = vector.broadcast %216 : vector<1x32xf32> to vector<96x32xf32>
    %236 = arith.mulf %234, %235 : vector<96x32xf32>
    %237 = vector.broadcast %218 : vector<1x32xf32> to vector<96x32xf32>
    %238 = arith.addf %236, %237 : vector<96x32xf32>
    %c1_145 = arith.constant 1 : index
    %c0_146 = arith.constant 0 : index
    %c0_147 = arith.constant 0 : index
    %c0_148 = arith.constant 0 : index
    %239 = vector.load %arg8[%c1_145, %c0_146, %c0_147, %c0_148] : memref<2x2x32x16xbf16, #tpu.memory_space<vmem>>, vector<1x1x32x16xbf16>
    %240 = vector.shape_cast %239 : vector<1x1x32x16xbf16> to vector<32x16xbf16>
    %241 = arith.truncf %238 : vector<96x32xf32> to vector<96x32xbf16>
    %cst_149 = arith.constant dense<0.000000e+00> : vector<96x16xf32>
    %242 = tpu.matmul %241, %240, %cst_149 {dimension_numbers = #tpu.dot_dimension_numbers<[1], [0], [0], [1], [0, 0, 1, 1], [], []>} : vector<96x32xbf16>, vector<32x16xbf16>, vector<96x16xf32> -> vector<96x16xf32>
    %c1_150 = arith.constant 1 : index
    %c0_151 = arith.constant 0 : index
    %c0_152 = arith.constant 0 : index
    %c0_153 = arith.constant 0 : index
    %243 = vector.load %arg9[%c1_150, %c0_151, %c0_152, %c0_153] : memref<2x2x1x16xf32, #tpu.memory_space<vmem>>, vector<1x1x1x16xf32>
    %244 = vector.shape_cast %243 : vector<1x1x1x16xf32> to vector<1x16xf32>
    %245 = vector.broadcast %244 : vector<1x16xf32> to vector<96x16xf32>
    %246 = arith.addf %242, %245 : vector<96x16xf32>
    %c1_154 = arith.constant 1 : index
    %c0_155 = arith.constant 0 : index
    %c0_156 = arith.constant 0 : index
    %c0_157 = arith.constant 0 : index
    %247 = vector.load %arg10[%c1_154, %c0_155, %c0_156, %c0_157] : memref<2x2x32x16xbf16, #tpu.memory_space<vmem>>, vector<1x1x32x16xbf16>
    %248 = vector.shape_cast %247 : vector<1x1x32x16xbf16> to vector<32x16xbf16>
    %249 = arith.truncf %238 : vector<96x32xf32> to vector<96x32xbf16>
    %cst_158 = arith.constant dense<0.000000e+00> : vector<96x16xf32>
    %250 = tpu.matmul %249, %248, %cst_158 {dimension_numbers = #tpu.dot_dimension_numbers<[1], [0], [0], [1], [0, 0, 1, 1], [], []>} : vector<96x32xbf16>, vector<32x16xbf16>, vector<96x16xf32> -> vector<96x16xf32>
    %c1_159 = arith.constant 1 : index
    %c0_160 = arith.constant 0 : index
    %c0_161 = arith.constant 0 : index
    %c0_162 = arith.constant 0 : index
    %251 = vector.load %arg11[%c1_159, %c0_160, %c0_161, %c0_162] : memref<2x2x1x16xf32, #tpu.memory_space<vmem>>, vector<1x1x1x16xf32>
    %252 = vector.shape_cast %251 : vector<1x1x1x16xf32> to vector<1x16xf32>
    %253 = vector.broadcast %252 : vector<1x16xf32> to vector<96x16xf32>
    %254 = arith.addf %250, %253 : vector<96x16xf32>
    %c1_163 = arith.constant 1 : index
    %c0_164 = arith.constant 0 : index
    %c0_165 = arith.constant 0 : index
    %c0_166 = arith.constant 0 : index
    %255 = vector.load %arg12[%c1_163, %c0_164, %c0_165, %c0_166] : memref<2x2x32x16xbf16, #tpu.memory_space<vmem>>, vector<1x1x32x16xbf16>
    %256 = vector.shape_cast %255 : vector<1x1x32x16xbf16> to vector<32x16xbf16>
    %257 = arith.truncf %238 : vector<96x32xf32> to vector<96x32xbf16>
    %cst_167 = arith.constant dense<0.000000e+00> : vector<96x16xf32>
    %258 = tpu.matmul %257, %256, %cst_167 {dimension_numbers = #tpu.dot_dimension_numbers<[1], [0], [0], [1], [0, 0, 1, 1], [], []>} : vector<96x32xbf16>, vector<32x16xbf16>, vector<96x16xf32> -> vector<96x16xf32>
    %c1_168 = arith.constant 1 : index
    %c0_169 = arith.constant 0 : index
    %c0_170 = arith.constant 0 : index
    %c0_171 = arith.constant 0 : index
    %259 = vector.load %arg13[%c1_168, %c0_169, %c0_170, %c0_171] : memref<2x2x1x16xf32, #tpu.memory_space<vmem>>, vector<1x1x1x16xf32>
    %260 = vector.shape_cast %259 : vector<1x1x1x16xf32> to vector<1x16xf32>
    %261 = vector.broadcast %260 : vector<1x16xf32> to vector<96x16xf32>
    %262 = arith.addf %258, %261 : vector<96x16xf32>
    %263 = arith.truncf %246 : vector<96x16xf32> to vector<96x16xbf16>
    %264 = arith.truncf %254 : vector<96x16xf32> to vector<96x16xbf16>
    %cst_172 = arith.constant dense<0.000000e+00> : vector<96x96xf32>
    %265 = tpu.matmul %263, %264, %cst_172 {dimension_numbers = #tpu.dot_dimension_numbers<[1], [1], [0], [0], [0, 0, 1, 0], [], []>} : vector<96x16xbf16>, vector<96x16xbf16>, vector<96x96xf32> -> vector<96x96xf32>
    %cst_173 = arith.constant 0.176776692 : f32
    %266 = vector.broadcast %cst_173 : f32 to vector<96x96xf32>
    %267 = arith.mulf %265, %266 : vector<96x96xf32>
    %cst_174 = arith.constant -1.000000e+30 : f32
    %268 = vector.broadcast %cst_174 : f32 to vector<96x96xf32>
    %269 = arith.select %36, %268, %267 : vector<96x96xi1>, vector<96x96xf32>
    %cst_175 = arith.constant dense<0xFF800000> : vector<96xf32>
    %270 = vector.multi_reduction <maximumf>, %269, %cst_175 [1] : vector<96x96xf32> to vector<96xf32>
    %271 = vector.shape_cast %270 : vector<96xf32> to vector<96x1xf32>
    %272 = vector.broadcast %271 : vector<96x1xf32> to vector<96x96xf32>
    %273 = arith.subf %269, %272 : vector<96x96xf32>
    %274 = math.exp %273 : vector<96x96xf32>
    %cst_176 = arith.constant dense<0.000000e+00> : vector<96xf32>
    %275 = vector.multi_reduction <add>, %274, %cst_176 [1] : vector<96x96xf32> to vector<96xf32>
    %276 = vector.shape_cast %275 : vector<96xf32> to vector<96x1xf32>
    %277 = arith.truncf %274 : vector<96x96xf32> to vector<96x96xbf16>
    %278 = arith.truncf %262 : vector<96x16xf32> to vector<96x16xbf16>
    %cst_177 = arith.constant dense<0.000000e+00> : vector<96x16xf32>
    %279 = tpu.matmul %277, %278, %cst_177 {dimension_numbers = #tpu.dot_dimension_numbers<[1], [0], [0], [1], [0, 0, 1, 1], [], []>} : vector<96x96xbf16>, vector<96x16xbf16>, vector<96x16xf32> -> vector<96x16xf32>
    %280 = vector.broadcast %276 : vector<96x1xf32> to vector<96x16xf32>
    %281 = arith.divf %279, %280 : vector<96x16xf32>
    %c1_178 = arith.constant 1 : index
    %c0_179 = arith.constant 0 : index
    %c0_180 = arith.constant 0 : index
    %c0_181 = arith.constant 0 : index
    %282 = vector.load %arg14[%c1_178, %c0_179, %c0_180, %c0_181] : memref<2x2x16x32xbf16, #tpu.memory_space<vmem>>, vector<1x1x16x32xbf16>
    %283 = vector.shape_cast %282 : vector<1x1x16x32xbf16> to vector<16x32xbf16>
    %284 = arith.truncf %281 : vector<96x16xf32> to vector<96x16xbf16>
    %cst_182 = arith.constant dense<0.000000e+00> : vector<96x32xf32>
    %285 = tpu.matmul %284, %283, %cst_182 {dimension_numbers = #tpu.dot_dimension_numbers<[1], [0], [0], [1], [0, 0, 1, 1], [], []>} : vector<96x16xbf16>, vector<16x32xbf16>, vector<96x32xf32> -> vector<96x32xf32>
    %c1_183 = arith.constant 1 : index
    %c1_184 = arith.constant 1 : index
    %c0_185 = arith.constant 0 : index
    %c0_186 = arith.constant 0 : index
    %286 = vector.load %arg8[%c1_183, %c1_184, %c0_185, %c0_186] : memref<2x2x32x16xbf16, #tpu.memory_space<vmem>>, vector<1x1x32x16xbf16>
    %287 = vector.shape_cast %286 : vector<1x1x32x16xbf16> to vector<32x16xbf16>
    %288 = arith.truncf %238 : vector<96x32xf32> to vector<96x32xbf16>
    %cst_187 = arith.constant dense<0.000000e+00> : vector<96x16xf32>
    %289 = tpu.matmul %288, %287, %cst_187 {dimension_numbers = #tpu.dot_dimension_numbers<[1], [0], [0], [1], [0, 0, 1, 1], [], []>} : vector<96x32xbf16>, vector<32x16xbf16>, vector<96x16xf32> -> vector<96x16xf32>
    %c1_188 = arith.constant 1 : index
    %c1_189 = arith.constant 1 : index
    %c0_190 = arith.constant 0 : index
    %c0_191 = arith.constant 0 : index
    %290 = vector.load %arg9[%c1_188, %c1_189, %c0_190, %c0_191] : memref<2x2x1x16xf32, #tpu.memory_space<vmem>>, vector<1x1x1x16xf32>
    %291 = vector.shape_cast %290 : vector<1x1x1x16xf32> to vector<1x16xf32>
    %292 = vector.broadcast %291 : vector<1x16xf32> to vector<96x16xf32>
    %293 = arith.addf %289, %292 : vector<96x16xf32>
    %c1_192 = arith.constant 1 : index
    %c1_193 = arith.constant 1 : index
    %c0_194 = arith.constant 0 : index
    %c0_195 = arith.constant 0 : index
    %294 = vector.load %arg10[%c1_192, %c1_193, %c0_194, %c0_195] : memref<2x2x32x16xbf16, #tpu.memory_space<vmem>>, vector<1x1x32x16xbf16>
    %295 = vector.shape_cast %294 : vector<1x1x32x16xbf16> to vector<32x16xbf16>
    %296 = arith.truncf %238 : vector<96x32xf32> to vector<96x32xbf16>
    %cst_196 = arith.constant dense<0.000000e+00> : vector<96x16xf32>
    %297 = tpu.matmul %296, %295, %cst_196 {dimension_numbers = #tpu.dot_dimension_numbers<[1], [0], [0], [1], [0, 0, 1, 1], [], []>} : vector<96x32xbf16>, vector<32x16xbf16>, vector<96x16xf32> -> vector<96x16xf32>
    %c1_197 = arith.constant 1 : index
    %c1_198 = arith.constant 1 : index
    %c0_199 = arith.constant 0 : index
    %c0_200 = arith.constant 0 : index
    %298 = vector.load %arg11[%c1_197, %c1_198, %c0_199, %c0_200] : memref<2x2x1x16xf32, #tpu.memory_space<vmem>>, vector<1x1x1x16xf32>
    %299 = vector.shape_cast %298 : vector<1x1x1x16xf32> to vector<1x16xf32>
    %300 = vector.broadcast %299 : vector<1x16xf32> to vector<96x16xf32>
    %301 = arith.addf %297, %300 : vector<96x16xf32>
    %c1_201 = arith.constant 1 : index
    %c1_202 = arith.constant 1 : index
    %c0_203 = arith.constant 0 : index
    %c0_204 = arith.constant 0 : index
    %302 = vector.load %arg12[%c1_201, %c1_202, %c0_203, %c0_204] : memref<2x2x32x16xbf16, #tpu.memory_space<vmem>>, vector<1x1x32x16xbf16>
    %303 = vector.shape_cast %302 : vector<1x1x32x16xbf16> to vector<32x16xbf16>
    %304 = arith.truncf %238 : vector<96x32xf32> to vector<96x32xbf16>
    %cst_205 = arith.constant dense<0.000000e+00> : vector<96x16xf32>
    %305 = tpu.matmul %304, %303, %cst_205 {dimension_numbers = #tpu.dot_dimension_numbers<[1], [0], [0], [1], [0, 0, 1, 1], [], []>} : vector<96x32xbf16>, vector<32x16xbf16>, vector<96x16xf32> -> vector<96x16xf32>
    %c1_206 = arith.constant 1 : index
    %c1_207 = arith.constant 1 : index
    %c0_208 = arith.constant 0 : index
    %c0_209 = arith.constant 0 : index
    %306 = vector.load %arg13[%c1_206, %c1_207, %c0_208, %c0_209] : memref<2x2x1x16xf32, #tpu.memory_space<vmem>>, vector<1x1x1x16xf32>
    %307 = vector.shape_cast %306 : vector<1x1x1x16xf32> to vector<1x16xf32>
    %308 = vector.broadcast %307 : vector<1x16xf32> to vector<96x16xf32>
    %309 = arith.addf %305, %308 : vector<96x16xf32>
    %310 = arith.truncf %293 : vector<96x16xf32> to vector<96x16xbf16>
    %311 = arith.truncf %301 : vector<96x16xf32> to vector<96x16xbf16>
    %cst_210 = arith.constant dense<0.000000e+00> : vector<96x96xf32>
    %312 = tpu.matmul %310, %311, %cst_210 {dimension_numbers = #tpu.dot_dimension_numbers<[1], [1], [0], [0], [0, 0, 1, 0], [], []>} : vector<96x16xbf16>, vector<96x16xbf16>, vector<96x96xf32> -> vector<96x96xf32>
    %cst_211 = arith.constant 0.176776692 : f32
    %313 = vector.broadcast %cst_211 : f32 to vector<96x96xf32>
    %314 = arith.mulf %312, %313 : vector<96x96xf32>
    %cst_212 = arith.constant -1.000000e+30 : f32
    %315 = vector.broadcast %cst_212 : f32 to vector<96x96xf32>
    %316 = arith.select %36, %315, %314 : vector<96x96xi1>, vector<96x96xf32>
    %cst_213 = arith.constant dense<0xFF800000> : vector<96xf32>
    %317 = vector.multi_reduction <maximumf>, %316, %cst_213 [1] : vector<96x96xf32> to vector<96xf32>
    %318 = vector.shape_cast %317 : vector<96xf32> to vector<96x1xf32>
    %319 = vector.broadcast %318 : vector<96x1xf32> to vector<96x96xf32>
    %320 = arith.subf %316, %319 : vector<96x96xf32>
    %321 = math.exp %320 : vector<96x96xf32>
    %cst_214 = arith.constant dense<0.000000e+00> : vector<96xf32>
    %322 = vector.multi_reduction <add>, %321, %cst_214 [1] : vector<96x96xf32> to vector<96xf32>
    %323 = vector.shape_cast %322 : vector<96xf32> to vector<96x1xf32>
    %324 = arith.truncf %321 : vector<96x96xf32> to vector<96x96xbf16>
    %325 = arith.truncf %309 : vector<96x16xf32> to vector<96x16xbf16>
    %cst_215 = arith.constant dense<0.000000e+00> : vector<96x16xf32>
    %326 = tpu.matmul %324, %325, %cst_215 {dimension_numbers = #tpu.dot_dimension_numbers<[1], [0], [0], [1], [0, 0, 1, 1], [], []>} : vector<96x96xbf16>, vector<96x16xbf16>, vector<96x16xf32> -> vector<96x16xf32>
    %327 = vector.broadcast %323 : vector<96x1xf32> to vector<96x16xf32>
    %328 = arith.divf %326, %327 : vector<96x16xf32>
    %c1_216 = arith.constant 1 : index
    %c1_217 = arith.constant 1 : index
    %c0_218 = arith.constant 0 : index
    %c0_219 = arith.constant 0 : index
    %329 = vector.load %arg14[%c1_216, %c1_217, %c0_218, %c0_219] : memref<2x2x16x32xbf16, #tpu.memory_space<vmem>>, vector<1x1x16x32xbf16>
    %330 = vector.shape_cast %329 : vector<1x1x16x32xbf16> to vector<16x32xbf16>
    %331 = arith.truncf %328 : vector<96x16xf32> to vector<96x16xbf16>
    %cst_220 = arith.constant dense<0.000000e+00> : vector<96x32xf32>
    %332 = tpu.matmul %331, %330, %cst_220 {dimension_numbers = #tpu.dot_dimension_numbers<[1], [0], [0], [1], [0, 0, 1, 1], [], []>} : vector<96x16xbf16>, vector<16x32xbf16>, vector<96x32xf32> -> vector<96x32xf32>
    %333 = arith.addf %285, %332 : vector<96x32xf32>
    %334 = arith.addf %214, %333 : vector<96x32xf32>
    %c1_221 = arith.constant 1 : index
    %c0_222 = arith.constant 0 : index
    %c0_223 = arith.constant 0 : index
    %335 = vector.load %arg15[%c1_221, %c0_222, %c0_223] : memref<2x1x32xf32, #tpu.memory_space<vmem>>, vector<1x1x32xf32>
    %336 = vector.shape_cast %335 : vector<1x1x32xf32> to vector<1x32xf32>
    %337 = vector.broadcast %336 : vector<1x32xf32> to vector<96x32xf32>
    %338 = arith.addf %334, %337 : vector<96x32xf32>
    %c1_224 = arith.constant 1 : index
    %c0_225 = arith.constant 0 : index
    %c0_226 = arith.constant 0 : index
    %339 = vector.load %arg16[%c1_224, %c0_225, %c0_226] : memref<2x1x32xf32, #tpu.memory_space<vmem>>, vector<1x1x32xf32>
    %340 = vector.shape_cast %339 : vector<1x1x32xf32> to vector<1x32xf32>
    %c1_227 = arith.constant 1 : index
    %c0_228 = arith.constant 0 : index
    %c0_229 = arith.constant 0 : index
    %341 = vector.load %arg17[%c1_227, %c0_228, %c0_229] : memref<2x1x32xf32, #tpu.memory_space<vmem>>, vector<1x1x32xf32>
    %342 = vector.shape_cast %341 : vector<1x1x32xf32> to vector<1x32xf32>
    %cst_230 = arith.constant dense<0.000000e+00> : vector<96xf32>
    %343 = vector.multi_reduction <add>, %338, %cst_230 [1] : vector<96x32xf32> to vector<96xf32>
    %344 = vector.shape_cast %343 : vector<96xf32> to vector<96x1xf32>
    %cst_231 = arith.constant 3.200000e+01 : f32
    %345 = vector.broadcast %cst_231 : f32 to vector<96x1xf32>
    %346 = arith.divf %344, %345 : vector<96x1xf32>
    %347 = vector.broadcast %346 : vector<96x1xf32> to vector<96x32xf32>
    %348 = arith.subf %338, %347 : vector<96x32xf32>
    %349 = arith.mulf %348, %348 : vector<96x32xf32>
    %cst_232 = arith.constant dense<0.000000e+00> : vector<96xf32>
    %350 = vector.multi_reduction <add>, %349, %cst_232 [1] : vector<96x32xf32> to vector<96xf32>
    %351 = vector.shape_cast %350 : vector<96xf32> to vector<96x1xf32>
    %cst_233 = arith.constant 3.200000e+01 : f32
    %352 = vector.broadcast %cst_233 : f32 to vector<96x1xf32>
    %353 = arith.divf %351, %352 : vector<96x1xf32>
    %cst_234 = arith.constant 9.99999974E-6 : f32
    %354 = vector.broadcast %cst_234 : f32 to vector<96x1xf32>
    %355 = arith.addf %353, %354 : vector<96x1xf32>
    %356 = math.rsqrt %355 : vector<96x1xf32>
    %357 = vector.broadcast %356 : vector<96x1xf32> to vector<96x32xf32>
    %358 = arith.mulf %348, %357 : vector<96x32xf32>
    %359 = vector.broadcast %340 : vector<1x32xf32> to vector<96x32xf32>
    %360 = arith.mulf %358, %359 : vector<96x32xf32>
    %361 = vector.broadcast %342 : vector<1x32xf32> to vector<96x32xf32>
    %362 = arith.addf %360, %361 : vector<96x32xf32>
    %c1_235 = arith.constant 1 : index
    %c0_236 = arith.constant 0 : index
    %c0_237 = arith.constant 0 : index
    %363 = vector.load %arg18[%c1_235, %c0_236, %c0_237] : memref<2x32x64xbf16, #tpu.memory_space<vmem>>, vector<1x32x64xbf16>
    %364 = vector.shape_cast %363 : vector<1x32x64xbf16> to vector<32x64xbf16>
    %365 = arith.truncf %362 : vector<96x32xf32> to vector<96x32xbf16>
    %cst_238 = arith.constant dense<0.000000e+00> : vector<96x64xf32>
    %366 = tpu.matmul %365, %364, %cst_238 {dimension_numbers = #tpu.dot_dimension_numbers<[1], [0], [0], [1], [0, 0, 1, 1], [], []>} : vector<96x32xbf16>, vector<32x64xbf16>, vector<96x64xf32> -> vector<96x64xf32>
    %c1_239 = arith.constant 1 : index
    %c0_240 = arith.constant 0 : index
    %c0_241 = arith.constant 0 : index
    %367 = vector.load %arg19[%c1_239, %c0_240, %c0_241] : memref<2x1x64xf32, #tpu.memory_space<vmem>>, vector<1x1x64xf32>
    %368 = vector.shape_cast %367 : vector<1x1x64xf32> to vector<1x64xf32>
    %369 = vector.broadcast %368 : vector<1x64xf32> to vector<96x64xf32>
    %370 = arith.addf %366, %369 : vector<96x64xf32>
    %371 = arith.mulf %370, %370 : vector<96x64xf32>
    %372 = arith.mulf %370, %371 : vector<96x64xf32>
    %cst_242 = arith.constant 4.471500e-02 : f32
    %373 = vector.broadcast %cst_242 : f32 to vector<96x64xf32>
    %374 = arith.mulf %373, %372 : vector<96x64xf32>
    %375 = arith.addf %370, %374 : vector<96x64xf32>
    %cst_243 = arith.constant 0.797884583 : f32
    %376 = vector.broadcast %cst_243 : f32 to vector<96x64xf32>
    %377 = arith.mulf %376, %375 : vector<96x64xf32>
    %378 = math.tanh %377 : vector<96x64xf32>
    %cst_244 = arith.constant 1.000000e+00 : f32
    %379 = vector.broadcast %cst_244 : f32 to vector<96x64xf32>
    %380 = arith.addf %379, %378 : vector<96x64xf32>
    %cst_245 = arith.constant 5.000000e-01 : f32
    %381 = vector.broadcast %cst_245 : f32 to vector<96x64xf32>
    %382 = arith.mulf %381, %380 : vector<96x64xf32>
    %383 = arith.mulf %370, %382 : vector<96x64xf32>
    %c1_246 = arith.constant 1 : index
    %c0_247 = arith.constant 0 : index
    %c0_248 = arith.constant 0 : index
    %384 = vector.load %arg20[%c1_246, %c0_247, %c0_248] : memref<2x64x32xbf16, #tpu.memory_space<vmem>>, vector<1x64x32xbf16>
    %385 = vector.shape_cast %384 : vector<1x64x32xbf16> to vector<64x32xbf16>
    %386 = arith.truncf %383 : vector<96x64xf32> to vector<96x64xbf16>
    %cst_249 = arith.constant dense<0.000000e+00> : vector<96x32xf32>
    %387 = tpu.matmul %386, %385, %cst_249 {dimension_numbers = #tpu.dot_dimension_numbers<[1], [0], [0], [1], [0, 0, 1, 1], [], []>} : vector<96x64xbf16>, vector<64x32xbf16>, vector<96x32xf32> -> vector<96x32xf32>
    %c1_250 = arith.constant 1 : index
    %c0_251 = arith.constant 0 : index
    %c0_252 = arith.constant 0 : index
    %388 = vector.load %arg21[%c1_250, %c0_251, %c0_252] : memref<2x1x32xf32, #tpu.memory_space<vmem>>, vector<1x1x32xf32>
    %389 = vector.shape_cast %388 : vector<1x1x32xf32> to vector<1x32xf32>
    %390 = vector.broadcast %389 : vector<1x32xf32> to vector<96x32xf32>
    %391 = arith.addf %387, %390 : vector<96x32xf32>
    %392 = arith.addf %338, %391 : vector<96x32xf32>
    %c0_253 = arith.constant 0 : index
    %c0_254 = arith.constant 0 : index
    %c0_255 = arith.constant 0 : index
    %393 = vector.load %arg22[%c0_253, %c0_254, %c0_255] : memref<1x96x32xf32, #tpu.memory_space<vmem>>, vector<1x96x32xf32>
    %394 = vector.shape_cast %393 : vector<1x96x32xf32> to vector<96x32xf32>
    %395 = vector.shape_cast %392 : vector<96x32xf32> to vector<1x96x32xf32>
    tpu.vector_store %arg22[%c0_253, %c0_254, %c0_255], %395 {strides = array<i32>} : memref<1x96x32xf32, #tpu.memory_space<vmem>>, vector<1x96x32xf32>,
    return
  }
  func.func @transform_0(%arg0: i32) -> (i32, i32, i32) {
    %c0_i32 = arith.constant 0 : i32
    %c0_i32_0 = arith.constant 0 : i32
    %c0_i32_1 = arith.constant 0 : i32
    return %arg0, %c0_i32, %c0_i32_0 : i32, i32, i32
  }
  func.func @transform_1(%arg0: i32) -> (i32, i32) {
    %c0_i32 = arith.constant 0 : i32
    %c0_i32_0 = arith.constant 0 : i32
    %c0_i32_1 = arith.constant 0 : i32
    return %c0_i32, %c0_i32_0 : i32, i32
  }
  func.func @transform_2(%arg0: i32) -> (i32, i32) {
    %c0_i32 = arith.constant 0 : i32
    %c0_i32_0 = arith.constant 0 : i32
    %c0_i32_1 = arith.constant 0 : i32
    return %c0_i32, %c0_i32_0 : i32, i32
  }
  func.func @transform_3(%arg0: i32) -> (i32, i32) {
    %c0_i32 = arith.constant 0 : i32
    %c0_i32_0 = arith.constant 0 : i32
    %c0_i32_1 = arith.constant 0 : i32
    return %c0_i32, %c0_i32_0 : i32, i32
  }
  func.func @transform_4(%arg0: i32) -> (i32, i32) {
    %c0_i32 = arith.constant 0 : i32
    %c0_i32_0 = arith.constant 0 : i32
    %c0_i32_1 = arith.constant 0 : i32
    return %c0_i32, %c0_i32_0 : i32, i32
  }
  func.func @transform_5(%arg0: i32) -> (i32, i32, i32) {
    %c0_i32 = arith.constant 0 : i32
    %c0_i32_0 = arith.constant 0 : i32
    %c0_i32_1 = arith.constant 0 : i32
    %c0_i32_2 = arith.constant 0 : i32
    return %c0_i32, %c0_i32_0, %c0_i32_1 : i32, i32, i32
  }
  func.func @transform_6(%arg0: i32) -> (i32, i32, i32) {
    %c0_i32 = arith.constant 0 : i32
    %c0_i32_0 = arith.constant 0 : i32
    %c0_i32_1 = arith.constant 0 : i32
    %c0_i32_2 = arith.constant 0 : i32
    return %c0_i32, %c0_i32_0, %c0_i32_1 : i32, i32, i32
  }
  func.func @transform_7(%arg0: i32) -> (i32, i32, i32, i32) {
    %c0_i32 = arith.constant 0 : i32
    %c0_i32_0 = arith.constant 0 : i32
    %c0_i32_1 = arith.constant 0 : i32
    %c0_i32_2 = arith.constant 0 : i32
    %c0_i32_3 = arith.constant 0 : i32
    return %c0_i32, %c0_i32_0, %c0_i32_1, %c0_i32_2 : i32, i32, i32, i32
  }
  func.func @transform_8(%arg0: i32) -> (i32, i32, i32, i32) {
    %c0_i32 = arith.constant 0 : i32
    %c0_i32_0 = arith.constant 0 : i32
    %c0_i32_1 = arith.constant 0 : i32
    %c0_i32_2 = arith.constant 0 : i32
    %c0_i32_3 = arith.constant 0 : i32
    return %c0_i32, %c0_i32_0, %c0_i32_1, %c0_i32_2 : i32, i32, i32, i32
  }
  func.func @transform_9(%arg0: i32) -> (i32, i32, i32, i32) {
    %c0_i32 = arith.constant 0 : i32
    %c0_i32_0 = arith.constant 0 : i32
    %c0_i32_1 = arith.constant 0 : i32
    %c0_i32_2 = arith.constant 0 : i32
    %c0_i32_3 = arith.constant 0 : i32
    return %c0_i32, %c0_i32_0, %c0_i32_1, %c0_i32_2 : i32, i32, i32, i32
  }
  func.func @transform_10(%arg0: i32) -> (i32, i32, i32, i32) {
    %c0_i32 = arith.constant 0 : i32
    %c0_i32_0 = arith.constant 0 : i32
    %c0_i32_1 = arith.constant 0 : i32
    %c0_i32_2 = arith.constant 0 : i32
    %c0_i32_3 = arith.constant 0 : i32
    return %c0_i32, %c0_i32_0, %c0_i32_1, %c0_i32_2 : i32, i32, i32, i32
  }
  func.func @transform_11(%arg0: i32) -> (i32, i32, i32, i32) {
    %c0_i32 = arith.constant 0 : i32
    %c0_i32_0 = arith.constant 0 : i32
    %c0_i32_1 = arith.constant 0 : i32
    %c0_i32_2 = arith.constant 0 : i32
    %c0_i32_3 = arith.constant 0 : i32
    return %c0_i32, %c0_i32_0, %c0_i32_1, %c0_i32_2 : i32, i32, i32, i32
  }
  func.func @transform_12(%arg0: i32) -> (i32, i32, i32, i32) {
    %c0_i32 = arith.constant 0 : i32
    %c0_i32_0 = arith.constant 0 : i32
    %c0_i32_1 = arith.constant 0 : i32
    %c0_i32_2 = arith.constant 0 : i32
    %c0_i32_3 = arith.constant 0 : i32
    return %c0_i32, %c0_i32_0, %c0_i32_1, %c0_i32_2 : i32, i32, i32, i32
  }
  func.func @transform_13(%arg0: i32) -> (i32, i32, i32, i32) {
    %c0_i32 = arith.constant 0 : i32
    %c0_i32_0 = arith.constant 0 : i32
    %c0_i32_1 = arith.constant 0 : i32
    %c0_i32_2 = arith.constant 0 : i32
    %c0_i32_3 = arith.constant 0 : i32
    return %c0_i32, %c0_i32_0, %c0_i32_1, %c0_i32_2 : i32, i32, i32, i32
  }
  func.func @transform_14(%arg0: i32) -> (i32, i32, i32) {
    %c0_i32 = arith.constant 0 : i32
    %c0_i32_0 = arith.constant 0 : i32
    %c0_i32_1 = arith.constant 0 : i32
    %c0_i32_2 = arith.constant 0 : i32
    return %c0_i32, %c0_i32_0, %c0_i32_1 : i32, i32, i32
  }
  func.func @transform_15(%arg0: i32) -> (i32, i32, i32) {
    %c0_i32 = arith.constant 0 : i32
    %c0_i32_0 = arith.constant 0 : i32
    %c0_i32_1 = arith.constant 0 : i32
    %c0_i32_2 = arith.constant 0 : i32
    return %c0_i32, %c0_i32_0, %c0_i32_1 : i32, i32, i32
  }
  func.func @transform_16(%arg0: i32) -> (i32, i32, i32) {
    %c0_i32 = arith.constant 0 : i32
    %c0_i32_0 = arith.constant 0 : i32
    %c0_i32_1 = arith.constant 0 : i32
    %c0_i32_2 = arith.constant 0 : i32
    return %c0_i32, %c0_i32_0, %c0_i32_1 : i32, i32, i32
  }
  func.func @transform_17(%arg0: i32) -> (i32, i32, i32) {
    %c0_i32 = arith.constant 0 : i32
    %c0_i32_0 = arith.constant 0 : i32
    %c0_i32_1 = arith.constant 0 : i32
    %c0_i32_2 = arith.constant 0 : i32
    return %c0_i32, %c0_i32_0, %c0_i32_1 : i32, i32, i32
  }
  func.func @transform_18(%arg0: i32) -> (i32, i32, i32) {
    %c0_i32 = arith.constant 0 : i32
    %c0_i32_0 = arith.constant 0 : i32
    %c0_i32_1 = arith.constant 0 : i32
    %c0_i32_2 = arith.constant 0 : i32
    return %c0_i32, %c0_i32_0, %c0_i32_1 : i32, i32, i32
  }
  func.func @transform_19(%arg0: i32) -> (i32, i32, i32) {
    %c0_i32 = arith.constant 0 : i32
    %c0_i32_0 = arith.constant 0 : i32
    %c0_i32_1 = arith.constant 0 : i32
    %c0_i32_2 = arith.constant 0 : i32
    return %c0_i32, %c0_i32_0, %c0_i32_1 : i32, i32, i32
  }
  func.func @transform_20(%arg0: i32) -> (i32, i32, i32) {
    %c0_i32 = arith.constant 0 : i32
    %c0_i32_0 = arith.constant 0 : i32
    %c0_i32_1 = arith.constant 0 : i32
    %c0_i32_2 = arith.constant 0 : i32
    return %c0_i32, %c0_i32_0, %c0_i32_1 : i32, i32, i32
  }
  func.func @transform_21(%arg0: i32) -> (i32, i32, i32) {
    %c0_i32 = arith.constant 0 : i32
    %c0_i32_0 = arith.constant 0 : i32
    %c0_i32_1 = arith.constant 0 : i32
    return %arg0, %c0_i32, %c0_i32_0 : i32, i32, i32
  }
}

module attributes {stable_mosaic.version = 11 : i64} {
  func.func @_stage_kernel(%arg0: i32, %arg1: memref<1x24x128xf32, #tpu.memory_space<vmem>>, %arg2: memref<128x64xbf16, #tpu.memory_space<vmem>>, %arg3: memref<1x64xf32, #tpu.memory_space<vmem>>, %arg4: memref<1x64xf32, #tpu.memory_space<vmem>>, %arg5: memref<1x64xf32, #tpu.memory_space<vmem>>, %arg6: memref<1x1x64xf32, #tpu.memory_space<vmem>>, %arg7: memref<1x1x64xf32, #tpu.memory_space<vmem>>, %arg8: memref<1x4x64x16xbf16, #tpu.memory_space<vmem>>, %arg9: memref<1x4x1x16xf32, #tpu.memory_space<vmem>>, %arg10: memref<1x4x64x16xbf16, #tpu.memory_space<vmem>>, %arg11: memref<1x4x1x16xf32, #tpu.memory_space<vmem>>, %arg12: memref<1x4x64x16xbf16, #tpu.memory_space<vmem>>, %arg13: memref<1x4x1x16xf32, #tpu.memory_space<vmem>>, %arg14: memref<1x4x16x64xbf16, #tpu.memory_space<vmem>>, %arg15: memref<1x1x64xf32, #tpu.memory_space<vmem>>, %arg16: memref<1x1x64xf32, #tpu.memory_space<vmem>>, %arg17: memref<1x1x64xf32, #tpu.memory_space<vmem>>, %arg18: memref<1x64x128xbf16, #tpu.memory_space<vmem>>, %arg19: memref<1x1x128xf32, #tpu.memory_space<vmem>>, %arg20: memref<1x128x64xbf16, #tpu.memory_space<vmem>>, %arg21: memref<1x1x64xf32, #tpu.memory_space<vmem>>, %arg22: memref<1x24x64xf32, #tpu.memory_space<vmem>>) attributes {dimension_semantics = [#tpu.dimension_semantics<parallel>], iteration_bounds = array<i64: 2>, scalar_prefetch = 0 : i64, scratch_operands = 0 : i64, tpu.core_type = #tpu.core_type<tc>, window_params = [{transform_indices = @transform_0, window_bounds = array<i64: 1, 24, 128>}, {pipeline_mode = #tpu.pipeline_mode<synchronous>, transform_indices = @transform_1, window_bounds = array<i64: 128, 64>}, {pipeline_mode = #tpu.pipeline_mode<synchronous>, transform_indices = @transform_2, window_bounds = array<i64: 1, 64>}, {pipeline_mode = #tpu.pipeline_mode<synchronous>, transform_indices = @transform_3, window_bounds = array<i64: 1, 64>}, {pipeline_mode = #tpu.pipeline_mode<synchronous>, transform_indices = @transform_4, window_bounds = array<i64: 1, 64>}, {pipeline_mode = #tpu.pipeline_mode<synchronous>, transform_indices = @transform_5, window_bounds = array<i64: 1, 1, 64>}, {pipeline_mode = #tpu.pipeline_mode<synchronous>, transform_indices = @transform_6, window_bounds = array<i64: 1, 1, 64>}, {pipeline_mode = #tpu.pipeline_mode<synchronous>, transform_indices = @transform_7, window_bounds = array<i64: 1, 4, 64, 16>}, {pipeline_mode = #tpu.pipeline_mode<synchronous>, transform_indices = @transform_8, window_bounds = array<i64: 1, 4, 1, 16>}, {pipeline_mode = #tpu.pipeline_mode<synchronous>, transform_indices = @transform_9, window_bounds = array<i64: 1, 4, 64, 16>}, {pipeline_mode = #tpu.pipeline_mode<synchronous>, transform_indices = @transform_10, window_bounds = array<i64: 1, 4, 1, 16>}, {pipeline_mode = #tpu.pipeline_mode<synchronous>, transform_indices = @transform_11, window_bounds = array<i64: 1, 4, 64, 16>}, {pipeline_mode = #tpu.pipeline_mode<synchronous>, transform_indices = @transform_12, window_bounds = array<i64: 1, 4, 1, 16>}, {pipeline_mode = #tpu.pipeline_mode<synchronous>, transform_indices = @transform_13, window_bounds = array<i64: 1, 4, 16, 64>}, {pipeline_mode = #tpu.pipeline_mode<synchronous>, transform_indices = @transform_14, window_bounds = array<i64: 1, 1, 64>}, {pipeline_mode = #tpu.pipeline_mode<synchronous>, transform_indices = @transform_15, window_bounds = array<i64: 1, 1, 64>}, {pipeline_mode = #tpu.pipeline_mode<synchronous>, transform_indices = @transform_16, window_bounds = array<i64: 1, 1, 64>}, {pipeline_mode = #tpu.pipeline_mode<synchronous>, transform_indices = @transform_17, window_bounds = array<i64: 1, 64, 128>}, {pipeline_mode = #tpu.pipeline_mode<synchronous>, transform_indices = @transform_18, window_bounds = array<i64: 1, 1, 128>}, {pipeline_mode = #tpu.pipeline_mode<synchronous>, transform_indices = @transform_19, window_bounds = array<i64: 1, 128, 64>}, {pipeline_mode = #tpu.pipeline_mode<synchronous>, transform_indices = @transform_20, window_bounds = array<i64: 1, 1, 64>}, {transform_indices = @transform_21, window_bounds = array<i64: 1, 24, 64>}]} {
    %c0 = arith.constant 0 : index
    %c0_0 = arith.constant 0 : index
    %c0_1 = arith.constant 0 : index
    %0 = vector.load %arg1[%c0, %c0_0, %c0_1] : memref<1x24x128xf32, #tpu.memory_space<vmem>>, vector<1x24x128xf32>
    %1 = vector.shape_cast %0 : vector<1x24x128xf32> to vector<24x128xf32>
    %c0_2 = arith.constant 0 : index
    %c0_3 = arith.constant 0 : index
    %2 = vector.load %arg2[%c0_2, %c0_3] : memref<128x64xbf16, #tpu.memory_space<vmem>>, vector<128x64xbf16>
    %3 = arith.truncf %1 : vector<24x128xf32> to vector<24x128xbf16>
    %cst = arith.constant dense<0.000000e+00> : vector<24x64xf32>
    %4 = tpu.matmul %3, %2, %cst {dimension_numbers = #tpu.dot_dimension_numbers<[1], [0], [0], [1], [0, 0, 1, 1], [], []>} : vector<24x128xbf16>, vector<128x64xbf16>, vector<24x64xf32> -> vector<24x64xf32>
    %c0_4 = arith.constant 0 : index
    %c0_5 = arith.constant 0 : index
    %5 = vector.load %arg3[%c0_4, %c0_5] : memref<1x64xf32, #tpu.memory_space<vmem>>, vector<1x64xf32>
    %6 = vector.broadcast %5 : vector<1x64xf32> to vector<24x64xf32>
    %7 = arith.addf %4, %6 : vector<24x64xf32>
    %c0_6 = arith.constant 0 : index
    %c0_7 = arith.constant 0 : index
    %8 = vector.load %arg4[%c0_6, %c0_7] : memref<1x64xf32, #tpu.memory_space<vmem>>, vector<1x64xf32>
    %c0_8 = arith.constant 0 : index
    %c0_9 = arith.constant 0 : index
    %9 = vector.load %arg5[%c0_8, %c0_9] : memref<1x64xf32, #tpu.memory_space<vmem>>, vector<1x64xf32>
    %cst_10 = arith.constant dense<0.000000e+00> : vector<24xf32>
    %10 = vector.multi_reduction <add>, %7, %cst_10 [1] : vector<24x64xf32> to vector<24xf32>
    %11 = vector.shape_cast %10 : vector<24xf32> to vector<24x1xf32>
    %cst_11 = arith.constant 6.400000e+01 : f32
    %12 = vector.broadcast %cst_11 : f32 to vector<24x1xf32>
    %13 = arith.divf %11, %12 : vector<24x1xf32>
    %14 = vector.broadcast %13 : vector<24x1xf32> to vector<24x64xf32>
    %15 = arith.subf %7, %14 : vector<24x64xf32>
    %16 = arith.mulf %15, %15 : vector<24x64xf32>
    %cst_12 = arith.constant dense<0.000000e+00> : vector<24xf32>
    %17 = vector.multi_reduction <add>, %16, %cst_12 [1] : vector<24x64xf32> to vector<24xf32>
    %18 = vector.shape_cast %17 : vector<24xf32> to vector<24x1xf32>
    %cst_13 = arith.constant 6.400000e+01 : f32
    %19 = vector.broadcast %cst_13 : f32 to vector<24x1xf32>
    %20 = arith.divf %18, %19 : vector<24x1xf32>
    %cst_14 = arith.constant 9.99999974E-6 : f32
    %21 = vector.broadcast %cst_14 : f32 to vector<24x1xf32>
    %22 = arith.addf %20, %21 : vector<24x1xf32>
    %23 = math.rsqrt %22 : vector<24x1xf32>
    %24 = vector.broadcast %23 : vector<24x1xf32> to vector<24x64xf32>
    %25 = arith.mulf %15, %24 : vector<24x64xf32>
    %26 = vector.broadcast %8 : vector<1x64xf32> to vector<24x64xf32>
    %27 = arith.mulf %25, %26 : vector<24x64xf32>
    %28 = vector.broadcast %9 : vector<1x64xf32> to vector<24x64xf32>
    %29 = arith.addf %27, %28 : vector<24x64xf32>
    %30 = tpu.iota {dimensions = array<i32: 0>} : vector<24x24xi32>
    %31 = tpu.iota {dimensions = array<i32: 1>} : vector<24x24xi32>
    %c8_i32 = arith.constant 8 : i32
    %32 = vector.broadcast %c8_i32 : i32 to vector<24x24xi32>
    %33 = arith.cmpi slt, %30, %32 : vector<24x24xi32>
    %c8_i32_15 = arith.constant 8 : i32
    %34 = vector.broadcast %c8_i32_15 : i32 to vector<24x24xi32>
    %35 = arith.cmpi sge, %31, %34 : vector<24x24xi32>
    %36 = arith.andi %33, %35 : vector<24x24xi1>
    %c0_16 = arith.constant 0 : index
    %c0_17 = arith.constant 0 : index
    %c0_18 = arith.constant 0 : index
    %37 = vector.load %arg6[%c0_16, %c0_17, %c0_18] : memref<1x1x64xf32, #tpu.memory_space<vmem>>, vector<1x1x64xf32>
    %38 = vector.shape_cast %37 : vector<1x1x64xf32> to vector<1x64xf32>
    %c0_19 = arith.constant 0 : index
    %c0_20 = arith.constant 0 : index
    %c0_21 = arith.constant 0 : index
    %39 = vector.load %arg7[%c0_19, %c0_20, %c0_21] : memref<1x1x64xf32, #tpu.memory_space<vmem>>, vector<1x1x64xf32>
    %40 = vector.shape_cast %39 : vector<1x1x64xf32> to vector<1x64xf32>
    %cst_22 = arith.constant dense<0.000000e+00> : vector<24xf32>
    %41 = vector.multi_reduction <add>, %29, %cst_22 [1] : vector<24x64xf32> to vector<24xf32>
    %42 = vector.shape_cast %41 : vector<24xf32> to vector<24x1xf32>
    %cst_23 = arith.constant 6.400000e+01 : f32
    %43 = vector.broadcast %cst_23 : f32 to vector<24x1xf32>
    %44 = arith.divf %42, %43 : vector<24x1xf32>
    %45 = vector.broadcast %44 : vector<24x1xf32> to vector<24x64xf32>
    %46 = arith.subf %29, %45 : vector<24x64xf32>
    %47 = arith.mulf %46, %46 : vector<24x64xf32>
    %cst_24 = arith.constant dense<0.000000e+00> : vector<24xf32>
    %48 = vector.multi_reduction <add>, %47, %cst_24 [1] : vector<24x64xf32> to vector<24xf32>
    %49 = vector.shape_cast %48 : vector<24xf32> to vector<24x1xf32>
    %cst_25 = arith.constant 6.400000e+01 : f32
    %50 = vector.broadcast %cst_25 : f32 to vector<24x1xf32>
    %51 = arith.divf %49, %50 : vector<24x1xf32>
    %cst_26 = arith.constant 9.99999974E-6 : f32
    %52 = vector.broadcast %cst_26 : f32 to vector<24x1xf32>
    %53 = arith.addf %51, %52 : vector<24x1xf32>
    %54 = math.rsqrt %53 : vector<24x1xf32>
    %55 = vector.broadcast %54 : vector<24x1xf32> to vector<24x64xf32>
    %56 = arith.mulf %46, %55 : vector<24x64xf32>
    %57 = vector.broadcast %38 : vector<1x64xf32> to vector<24x64xf32>
    %58 = arith.mulf %56, %57 : vector<24x64xf32>
    %59 = vector.broadcast %40 : vector<1x64xf32> to vector<24x64xf32>
    %60 = arith.addf %58, %59 : vector<24x64xf32>
    %c0_27 = arith.constant 0 : index
    %c0_28 = arith.constant 0 : index
    %c0_29 = arith.constant 0 : index
    %c0_30 = arith.constant 0 : index
    %61 = vector.load %arg8[%c0_27, %c0_28, %c0_29, %c0_30] : memref<1x4x64x16xbf16, #tpu.memory_space<vmem>>, vector<1x1x64x16xbf16>
    %62 = vector.shape_cast %61 : vector<1x1x64x16xbf16> to vector<64x16xbf16>
    %63 = arith.truncf %60 : vector<24x64xf32> to vector<24x64xbf16>
    %cst_31 = arith.constant dense<0.000000e+00> : vector<24x16xf32>
    %64 = tpu.matmul %63, %62, %cst_31 {dimension_numbers = #tpu.dot_dimension_numbers<[1], [0], [0], [1], [0, 0, 1, 1], [], []>} : vector<24x64xbf16>, vector<64x16xbf16>, vector<24x16xf32> -> vector<24x16xf32>
    %c0_32 = arith.constant 0 : index
    %c0_33 = arith.constant 0 : index
    %c0_34 = arith.constant 0 : index
    %c0_35 = arith.constant 0 : index
    %65 = vector.load %arg9[%c0_32, %c0_33, %c0_34, %c0_35] : memref<1x4x1x16xf32, #tpu.memory_space<vmem>>, vector<1x1x1x16xf32>
    %66 = vector.shape_cast %65 : vector<1x1x1x16xf32> to vector<1x16xf32>
    %67 = vector.broadcast %66 : vector<1x16xf32> to vector<24x16xf32>
    %68 = arith.addf %64, %67 : vector<24x16xf32>
    %c0_36 = arith.constant 0 : index
    %c0_37 = arith.constant 0 : index
    %c0_38 = arith.constant 0 : index
    %c0_39 = arith.constant 0 : index
    %69 = vector.load %arg10[%c0_36, %c0_37, %c0_38, %c0_39] : memref<1x4x64x16xbf16, #tpu.memory_space<vmem>>, vector<1x1x64x16xbf16>
    %70 = vector.shape_cast %69 : vector<1x1x64x16xbf16> to vector<64x16xbf16>
    %71 = arith.truncf %60 : vector<24x64xf32> to vector<24x64xbf16>
    %cst_40 = arith.constant dense<0.000000e+00> : vector<24x16xf32>
    %72 = tpu.matmul %71, %70, %cst_40 {dimension_numbers = #tpu.dot_dimension_numbers<[1], [0], [0], [1], [0, 0, 1, 1], [], []>} : vector<24x64xbf16>, vector<64x16xbf16>, vector<24x16xf32> -> vector<24x16xf32>
    %c0_41 = arith.constant 0 : index
    %c0_42 = arith.constant 0 : index
    %c0_43 = arith.constant 0 : index
    %c0_44 = arith.constant 0 : index
    %73 = vector.load %arg11[%c0_41, %c0_42, %c0_43, %c0_44] : memref<1x4x1x16xf32, #tpu.memory_space<vmem>>, vector<1x1x1x16xf32>
    %74 = vector.shape_cast %73 : vector<1x1x1x16xf32> to vector<1x16xf32>
    %75 = vector.broadcast %74 : vector<1x16xf32> to vector<24x16xf32>
    %76 = arith.addf %72, %75 : vector<24x16xf32>
    %c0_45 = arith.constant 0 : index
    %c0_46 = arith.constant 0 : index
    %c0_47 = arith.constant 0 : index
    %c0_48 = arith.constant 0 : index
    %77 = vector.load %arg12[%c0_45, %c0_46, %c0_47, %c0_48] : memref<1x4x64x16xbf16, #tpu.memory_space<vmem>>, vector<1x1x64x16xbf16>
    %78 = vector.shape_cast %77 : vector<1x1x64x16xbf16> to vector<64x16xbf16>
    %79 = arith.truncf %60 : vector<24x64xf32> to vector<24x64xbf16>
    %cst_49 = arith.constant dense<0.000000e+00> : vector<24x16xf32>
    %80 = tpu.matmul %79, %78, %cst_49 {dimension_numbers = #tpu.dot_dimension_numbers<[1], [0], [0], [1], [0, 0, 1, 1], [], []>} : vector<24x64xbf16>, vector<64x16xbf16>, vector<24x16xf32> -> vector<24x16xf32>
    %c0_50 = arith.constant 0 : index
    %c0_51 = arith.constant 0 : index
    %c0_52 = arith.constant 0 : index
    %c0_53 = arith.constant 0 : index
    %81 = vector.load %arg13[%c0_50, %c0_51, %c0_52, %c0_53] : memref<1x4x1x16xf32, #tpu.memory_space<vmem>>, vector<1x1x1x16xf32>
    %82 = vector.shape_cast %81 : vector<1x1x1x16xf32> to vector<1x16xf32>
    %83 = vector.broadcast %82 : vector<1x16xf32> to vector<24x16xf32>
    %84 = arith.addf %80, %83 : vector<24x16xf32>
    %85 = arith.truncf %68 : vector<24x16xf32> to vector<24x16xbf16>
    %86 = arith.truncf %76 : vector<24x16xf32> to vector<24x16xbf16>
    %cst_54 = arith.constant dense<0.000000e+00> : vector<24x24xf32>
    %87 = tpu.matmul %85, %86, %cst_54 {dimension_numbers = #tpu.dot_dimension_numbers<[1], [1], [0], [0], [0, 0, 1, 0], [], []>} : vector<24x16xbf16>, vector<24x16xbf16>, vector<24x24xf32> -> vector<24x24xf32>
    %cst_55 = arith.constant 1.250000e-01 : f32
    %88 = vector.broadcast %cst_55 : f32 to vector<24x24xf32>
    %89 = arith.mulf %87, %88 : vector<24x24xf32>
    %cst_56 = arith.constant -1.000000e+30 : f32
    %90 = vector.broadcast %cst_56 : f32 to vector<24x24xf32>
    %91 = arith.select %36, %90, %89 : vector<24x24xi1>, vector<24x24xf32>
    %cst_57 = arith.constant dense<0xFF800000> : vector<24xf32>
    %92 = vector.multi_reduction <maximumf>, %91, %cst_57 [1] : vector<24x24xf32> to vector<24xf32>
    %93 = vector.shape_cast %92 : vector<24xf32> to vector<24x1xf32>
    %94 = vector.broadcast %93 : vector<24x1xf32> to vector<24x24xf32>
    %95 = arith.subf %91, %94 : vector<24x24xf32>
    %96 = math.exp %95 : vector<24x24xf32>
    %cst_58 = arith.constant dense<0.000000e+00> : vector<24xf32>
    %97 = vector.multi_reduction <add>, %96, %cst_58 [1] : vector<24x24xf32> to vector<24xf32>
    %98 = vector.shape_cast %97 : vector<24xf32> to vector<24x1xf32>
    %99 = arith.truncf %96 : vector<24x24xf32> to vector<24x24xbf16>
    %100 = arith.truncf %84 : vector<24x16xf32> to vector<24x16xbf16>
    %cst_59 = arith.constant dense<0.000000e+00> : vector<24x16xf32>
    %101 = tpu.matmul %99, %100, %cst_59 {dimension_numbers = #tpu.dot_dimension_numbers<[1], [0], [0], [1], [0, 0, 1, 1], [], []>} : vector<24x24xbf16>, vector<24x16xbf16>, vector<24x16xf32> -> vector<24x16xf32>
    %102 = vector.broadcast %98 : vector<24x1xf32> to vector<24x16xf32>
    %103 = arith.divf %101, %102 : vector<24x16xf32>
    %c0_60 = arith.constant 0 : index
    %c0_61 = arith.constant 0 : index
    %c0_62 = arith.constant 0 : index
    %c0_63 = arith.constant 0 : index
    %104 = vector.load %arg14[%c0_60, %c0_61, %c0_62, %c0_63] : memref<1x4x16x64xbf16, #tpu.memory_space<vmem>>, vector<1x1x16x64xbf16>
    %105 = vector.shape_cast %104 : vector<1x1x16x64xbf16> to vector<16x64xbf16>
    %106 = arith.truncf %103 : vector<24x16xf32> to vector<24x16xbf16>
    %cst_64 = arith.constant dense<0.000000e+00> : vector<24x64xf32>
    %107 = tpu.matmul %106, %105, %cst_64 {dimension_numbers = #tpu.dot_dimension_numbers<[1], [0], [0], [1], [0, 0, 1, 1], [], []>} : vector<24x16xbf16>, vector<16x64xbf16>, vector<24x64xf32> -> vector<24x64xf32>
    %c0_65 = arith.constant 0 : index
    %c1 = arith.constant 1 : index
    %c0_66 = arith.constant 0 : index
    %c0_67 = arith.constant 0 : index
    %108 = vector.load %arg8[%c0_65, %c1, %c0_66, %c0_67] : memref<1x4x64x16xbf16, #tpu.memory_space<vmem>>, vector<1x1x64x16xbf16>
    %109 = vector.shape_cast %108 : vector<1x1x64x16xbf16> to vector<64x16xbf16>
    %110 = arith.truncf %60 : vector<24x64xf32> to vector<24x64xbf16>
    %cst_68 = arith.constant dense<0.000000e+00> : vector<24x16xf32>
    %111 = tpu.matmul %110, %109, %cst_68 {dimension_numbers = #tpu.dot_dimension_numbers<[1], [0], [0], [1], [0, 0, 1, 1], [], []>} : vector<24x64xbf16>, vector<64x16xbf16>, vector<24x16xf32> -> vector<24x16xf32>
    %c0_69 = arith.constant 0 : index
    %c1_70 = arith.constant 1 : index
    %c0_71 = arith.constant 0 : index
    %c0_72 = arith.constant 0 : index
    %112 = vector.load %arg9[%c0_69, %c1_70, %c0_71, %c0_72] : memref<1x4x1x16xf32, #tpu.memory_space<vmem>>, vector<1x1x1x16xf32>
    %113 = vector.shape_cast %112 : vector<1x1x1x16xf32> to vector<1x16xf32>
    %114 = vector.broadcast %113 : vector<1x16xf32> to vector<24x16xf32>
    %115 = arith.addf %111, %114 : vector<24x16xf32>
    %c0_73 = arith.constant 0 : index
    %c1_74 = arith.constant 1 : index
    %c0_75 = arith.constant 0 : index
    %c0_76 = arith.constant 0 : index
    %116 = vector.load %arg10[%c0_73, %c1_74, %c0_75, %c0_76] : memref<1x4x64x16xbf16, #tpu.memory_space<vmem>>, vector<1x1x64x16xbf16>
    %117 = vector.shape_cast %116 : vector<1x1x64x16xbf16> to vector<64x16xbf16>
    %118 = arith.truncf %60 : vector<24x64xf32> to vector<24x64xbf16>
    %cst_77 = arith.constant dense<0.000000e+00> : vector<24x16xf32>
    %119 = tpu.matmul %118, %117, %cst_77 {dimension_numbers = #tpu.dot_dimension_numbers<[1], [0], [0], [1], [0, 0, 1, 1], [], []>} : vector<24x64xbf16>, vector<64x16xbf16>, vector<24x16xf32> -> vector<24x16xf32>
    %c0_78 = arith.constant 0 : index
    %c1_79 = arith.constant 1 : index
    %c0_80 = arith.constant 0 : index
    %c0_81 = arith.constant 0 : index
    %120 = vector.load %arg11[%c0_78, %c1_79, %c0_80, %c0_81] : memref<1x4x1x16xf32, #tpu.memory_space<vmem>>, vector<1x1x1x16xf32>
    %121 = vector.shape_cast %120 : vector<1x1x1x16xf32> to vector<1x16xf32>
    %122 = vector.broadcast %121 : vector<1x16xf32> to vector<24x16xf32>
    %123 = arith.addf %119, %122 : vector<24x16xf32>
    %c0_82 = arith.constant 0 : index
    %c1_83 = arith.constant 1 : index
    %c0_84 = arith.constant 0 : index
    %c0_85 = arith.constant 0 : index
    %124 = vector.load %arg12[%c0_82, %c1_83, %c0_84, %c0_85] : memref<1x4x64x16xbf16, #tpu.memory_space<vmem>>, vector<1x1x64x16xbf16>
    %125 = vector.shape_cast %124 : vector<1x1x64x16xbf16> to vector<64x16xbf16>
    %126 = arith.truncf %60 : vector<24x64xf32> to vector<24x64xbf16>
    %cst_86 = arith.constant dense<0.000000e+00> : vector<24x16xf32>
    %127 = tpu.matmul %126, %125, %cst_86 {dimension_numbers = #tpu.dot_dimension_numbers<[1], [0], [0], [1], [0, 0, 1, 1], [], []>} : vector<24x64xbf16>, vector<64x16xbf16>, vector<24x16xf32> -> vector<24x16xf32>
    %c0_87 = arith.constant 0 : index
    %c1_88 = arith.constant 1 : index
    %c0_89 = arith.constant 0 : index
    %c0_90 = arith.constant 0 : index
    %128 = vector.load %arg13[%c0_87, %c1_88, %c0_89, %c0_90] : memref<1x4x1x16xf32, #tpu.memory_space<vmem>>, vector<1x1x1x16xf32>
    %129 = vector.shape_cast %128 : vector<1x1x1x16xf32> to vector<1x16xf32>
    %130 = vector.broadcast %129 : vector<1x16xf32> to vector<24x16xf32>
    %131 = arith.addf %127, %130 : vector<24x16xf32>
    %132 = arith.truncf %115 : vector<24x16xf32> to vector<24x16xbf16>
    %133 = arith.truncf %123 : vector<24x16xf32> to vector<24x16xbf16>
    %cst_91 = arith.constant dense<0.000000e+00> : vector<24x24xf32>
    %134 = tpu.matmul %132, %133, %cst_91 {dimension_numbers = #tpu.dot_dimension_numbers<[1], [1], [0], [0], [0, 0, 1, 0], [], []>} : vector<24x16xbf16>, vector<24x16xbf16>, vector<24x24xf32> -> vector<24x24xf32>
    %cst_92 = arith.constant 1.250000e-01 : f32
    %135 = vector.broadcast %cst_92 : f32 to vector<24x24xf32>
    %136 = arith.mulf %134, %135 : vector<24x24xf32>
    %cst_93 = arith.constant -1.000000e+30 : f32
    %137 = vector.broadcast %cst_93 : f32 to vector<24x24xf32>
    %138 = arith.select %36, %137, %136 : vector<24x24xi1>, vector<24x24xf32>
    %cst_94 = arith.constant dense<0xFF800000> : vector<24xf32>
    %139 = vector.multi_reduction <maximumf>, %138, %cst_94 [1] : vector<24x24xf32> to vector<24xf32>
    %140 = vector.shape_cast %139 : vector<24xf32> to vector<24x1xf32>
    %141 = vector.broadcast %140 : vector<24x1xf32> to vector<24x24xf32>
    %142 = arith.subf %138, %141 : vector<24x24xf32>
    %143 = math.exp %142 : vector<24x24xf32>
    %cst_95 = arith.constant dense<0.000000e+00> : vector<24xf32>
    %144 = vector.multi_reduction <add>, %143, %cst_95 [1] : vector<24x24xf32> to vector<24xf32>
    %145 = vector.shape_cast %144 : vector<24xf32> to vector<24x1xf32>
    %146 = arith.truncf %143 : vector<24x24xf32> to vector<24x24xbf16>
    %147 = arith.truncf %131 : vector<24x16xf32> to vector<24x16xbf16>
    %cst_96 = arith.constant dense<0.000000e+00> : vector<24x16xf32>
    %148 = tpu.matmul %146, %147, %cst_96 {dimension_numbers = #tpu.dot_dimension_numbers<[1], [0], [0], [1], [0, 0, 1, 1], [], []>} : vector<24x24xbf16>, vector<24x16xbf16>, vector<24x16xf32> -> vector<24x16xf32>
    %149 = vector.broadcast %145 : vector<24x1xf32> to vector<24x16xf32>
    %150 = arith.divf %148, %149 : vector<24x16xf32>
    %c0_97 = arith.constant 0 : index
    %c1_98 = arith.constant 1 : index
    %c0_99 = arith.constant 0 : index
    %c0_100 = arith.constant 0 : index
    %151 = vector.load %arg14[%c0_97, %c1_98, %c0_99, %c0_100] : memref<1x4x16x64xbf16, #tpu.memory_space<vmem>>, vector<1x1x16x64xbf16>
    %152 = vector.shape_cast %151 : vector<1x1x16x64xbf16> to vector<16x64xbf16>
    %153 = arith.truncf %150 : vector<24x16xf32> to vector<24x16xbf16>
    %cst_101 = arith.constant dense<0.000000e+00> : vector<24x64xf32>
    %154 = tpu.matmul %153, %152, %cst_101 {dimension_numbers = #tpu.dot_dimension_numbers<[1], [0], [0], [1], [0, 0, 1, 1], [], []>} : vector<24x16xbf16>, vector<16x64xbf16>, vector<24x64xf32> -> vector<24x64xf32>
    %155 = arith.addf %107, %154 : vector<24x64xf32>
    %c0_102 = arith.constant 0 : index
    %c2 = arith.constant 2 : index
    %c0_103 = arith.constant 0 : index
    %c0_104 = arith.constant 0 : index
    %156 = vector.load %arg8[%c0_102, %c2, %c0_103, %c0_104] : memref<1x4x64x16xbf16, #tpu.memory_space<vmem>>, vector<1x1x64x16xbf16>
    %157 = vector.shape_cast %156 : vector<1x1x64x16xbf16> to vector<64x16xbf16>
    %158 = arith.truncf %60 : vector<24x64xf32> to vector<24x64xbf16>
    %cst_105 = arith.constant dense<0.000000e+00> : vector<24x16xf32>
    %159 = tpu.matmul %158, %157, %cst_105 {dimension_numbers = #tpu.dot_dimension_numbers<[1], [0], [0], [1], [0, 0, 1, 1], [], []>} : vector<24x64xbf16>, vector<64x16xbf16>, vector<24x16xf32> -> vector<24x16xf32>
    %c0_106 = arith.constant 0 : index
    %c2_107 = arith.constant 2 : index
    %c0_108 = arith.constant 0 : index
    %c0_109 = arith.constant 0 : index
    %160 = vector.load %arg9[%c0_106, %c2_107, %c0_108, %c0_109] : memref<1x4x1x16xf32, #tpu.memory_space<vmem>>, vector<1x1x1x16xf32>
    %161 = vector.shape_cast %160 : vector<1x1x1x16xf32> to vector<1x16xf32>
    %162 = vector.broadcast %161 : vector<1x16xf32> to vector<24x16xf32>
    %163 = arith.addf %159, %162 : vector<24x16xf32>
    %c0_110 = arith.constant 0 : index
    %c2_111 = arith.constant 2 : index
    %c0_112 = arith.constant 0 : index
    %c0_113 = arith.constant 0 : index
    %164 = vector.load %arg10[%c0_110, %c2_111, %c0_112, %c0_113] : memref<1x4x64x16xbf16, #tpu.memory_space<vmem>>, vector<1x1x64x16xbf16>
    %165 = vector.shape_cast %164 : vector<1x1x64x16xbf16> to vector<64x16xbf16>
    %166 = arith.truncf %60 : vector<24x64xf32> to vector<24x64xbf16>
    %cst_114 = arith.constant dense<0.000000e+00> : vector<24x16xf32>
    %167 = tpu.matmul %166, %165, %cst_114 {dimension_numbers = #tpu.dot_dimension_numbers<[1], [0], [0], [1], [0, 0, 1, 1], [], []>} : vector<24x64xbf16>, vector<64x16xbf16>, vector<24x16xf32> -> vector<24x16xf32>
    %c0_115 = arith.constant 0 : index
    %c2_116 = arith.constant 2 : index
    %c0_117 = arith.constant 0 : index
    %c0_118 = arith.constant 0 : index
    %168 = vector.load %arg11[%c0_115, %c2_116, %c0_117, %c0_118] : memref<1x4x1x16xf32, #tpu.memory_space<vmem>>, vector<1x1x1x16xf32>
    %169 = vector.shape_cast %168 : vector<1x1x1x16xf32> to vector<1x16xf32>
    %170 = vector.broadcast %169 : vector<1x16xf32> to vector<24x16xf32>
    %171 = arith.addf %167, %170 : vector<24x16xf32>
    %c0_119 = arith.constant 0 : index
    %c2_120 = arith.constant 2 : index
    %c0_121 = arith.constant 0 : index
    %c0_122 = arith.constant 0 : index
    %172 = vector.load %arg12[%c0_119, %c2_120, %c0_121, %c0_122] : memref<1x4x64x16xbf16, #tpu.memory_space<vmem>>, vector<1x1x64x16xbf16>
    %173 = vector.shape_cast %172 : vector<1x1x64x16xbf16> to vector<64x16xbf16>
    %174 = arith.truncf %60 : vector<24x64xf32> to vector<24x64xbf16>
    %cst_123 = arith.constant dense<0.000000e+00> : vector<24x16xf32>
    %175 = tpu.matmul %174, %173, %cst_123 {dimension_numbers = #tpu.dot_dimension_numbers<[1], [0], [0], [1], [0, 0, 1, 1], [], []>} : vector<24x64xbf16>, vector<64x16xbf16>, vector<24x16xf32> -> vector<24x16xf32>
    %c0_124 = arith.constant 0 : index
    %c2_125 = arith.constant 2 : index
    %c0_126 = arith.constant 0 : index
    %c0_127 = arith.constant 0 : index
    %176 = vector.load %arg13[%c0_124, %c2_125, %c0_126, %c0_127] : memref<1x4x1x16xf32, #tpu.memory_space<vmem>>, vector<1x1x1x16xf32>
    %177 = vector.shape_cast %176 : vector<1x1x1x16xf32> to vector<1x16xf32>
    %178 = vector.broadcast %177 : vector<1x16xf32> to vector<24x16xf32>
    %179 = arith.addf %175, %178 : vector<24x16xf32>
    %180 = arith.truncf %163 : vector<24x16xf32> to vector<24x16xbf16>
    %181 = arith.truncf %171 : vector<24x16xf32> to vector<24x16xbf16>
    %cst_128 = arith.constant dense<0.000000e+00> : vector<24x24xf32>
    %182 = tpu.matmul %180, %181, %cst_128 {dimension_numbers = #tpu.dot_dimension_numbers<[1], [1], [0], [0], [0, 0, 1, 0], [], []>} : vector<24x16xbf16>, vector<24x16xbf16>, vector<24x24xf32> -> vector<24x24xf32>
    %cst_129 = arith.constant 1.250000e-01 : f32
    %183 = vector.broadcast %cst_129 : f32 to vector<24x24xf32>
    %184 = arith.mulf %182, %183 : vector<24x24xf32>
    %cst_130 = arith.constant -1.000000e+30 : f32
    %185 = vector.broadcast %cst_130 : f32 to vector<24x24xf32>
    %186 = arith.select %36, %185, %184 : vector<24x24xi1>, vector<24x24xf32>
    %cst_131 = arith.constant dense<0xFF800000> : vector<24xf32>
    %187 = vector.multi_reduction <maximumf>, %186, %cst_131 [1] : vector<24x24xf32> to vector<24xf32>
    %188 = vector.shape_cast %187 : vector<24xf32> to vector<24x1xf32>
    %189 = vector.broadcast %188 : vector<24x1xf32> to vector<24x24xf32>
    %190 = arith.subf %186, %189 : vector<24x24xf32>
    %191 = math.exp %190 : vector<24x24xf32>
    %cst_132 = arith.constant dense<0.000000e+00> : vector<24xf32>
    %192 = vector.multi_reduction <add>, %191, %cst_132 [1] : vector<24x24xf32> to vector<24xf32>
    %193 = vector.shape_cast %192 : vector<24xf32> to vector<24x1xf32>
    %194 = arith.truncf %191 : vector<24x24xf32> to vector<24x24xbf16>
    %195 = arith.truncf %179 : vector<24x16xf32> to vector<24x16xbf16>
    %cst_133 = arith.constant dense<0.000000e+00> : vector<24x16xf32>
    %196 = tpu.matmul %194, %195, %cst_133 {dimension_numbers = #tpu.dot_dimension_numbers<[1], [0], [0], [1], [0, 0, 1, 1], [], []>} : vector<24x24xbf16>, vector<24x16xbf16>, vector<24x16xf32> -> vector<24x16xf32>
    %197 = vector.broadcast %193 : vector<24x1xf32> to vector<24x16xf32>
    %198 = arith.divf %196, %197 : vector<24x16xf32>
    %c0_134 = arith.constant 0 : index
    %c2_135 = arith.constant 2 : index
    %c0_136 = arith.constant 0 : index
    %c0_137 = arith.constant 0 : index
    %199 = vector.load %arg14[%c0_134, %c2_135, %c0_136, %c0_137] : memref<1x4x16x64xbf16, #tpu.memory_space<vmem>>, vector<1x1x16x64xbf16>
    %200 = vector.shape_cast %199 : vector<1x1x16x64xbf16> to vector<16x64xbf16>
    %201 = arith.truncf %198 : vector<24x16xf32> to vector<24x16xbf16>
    %cst_138 = arith.constant dense<0.000000e+00> : vector<24x64xf32>
    %202 = tpu.matmul %201, %200, %cst_138 {dimension_numbers = #tpu.dot_dimension_numbers<[1], [0], [0], [1], [0, 0, 1, 1], [], []>} : vector<24x16xbf16>, vector<16x64xbf16>, vector<24x64xf32> -> vector<24x64xf32>
    %203 = arith.addf %155, %202 : vector<24x64xf32>
    %c0_139 = arith.constant 0 : index
    %c3 = arith.constant 3 : index
    %c0_140 = arith.constant 0 : index
    %c0_141 = arith.constant 0 : index
    %204 = vector.load %arg8[%c0_139, %c3, %c0_140, %c0_141] : memref<1x4x64x16xbf16, #tpu.memory_space<vmem>>, vector<1x1x64x16xbf16>
    %205 = vector.shape_cast %204 : vector<1x1x64x16xbf16> to vector<64x16xbf16>
    %206 = arith.truncf %60 : vector<24x64xf32> to vector<24x64xbf16>
    %cst_142 = arith.constant dense<0.000000e+00> : vector<24x16xf32>
    %207 = tpu.matmul %206, %205, %cst_142 {dimension_numbers = #tpu.dot_dimension_numbers<[1], [0], [0], [1], [0, 0, 1, 1], [], []>} : vector<24x64xbf16>, vector<64x16xbf16>, vector<24x16xf32> -> vector<24x16xf32>
    %c0_143 = arith.constant 0 : index
    %c3_144 = arith.constant 3 : index
    %c0_145 = arith.constant 0 : index
    %c0_146 = arith.constant 0 : index
    %208 = vector.load %arg9[%c0_143, %c3_144, %c0_145, %c0_146] : memref<1x4x1x16xf32, #tpu.memory_space<vmem>>, vector<1x1x1x16xf32>
    %209 = vector.shape_cast %208 : vector<1x1x1x16xf32> to vector<1x16xf32>
    %210 = vector.broadcast %209 : vector<1x16xf32> to vector<24x16xf32>
    %211 = arith.addf %207, %210 : vector<24x16xf32>
    %c0_147 = arith.constant 0 : index
    %c3_148 = arith.constant 3 : index
    %c0_149 = arith.constant 0 : index
    %c0_150 = arith.constant 0 : index
    %212 = vector.load %arg10[%c0_147, %c3_148, %c0_149, %c0_150] : memref<1x4x64x16xbf16, #tpu.memory_space<vmem>>, vector<1x1x64x16xbf16>
    %213 = vector.shape_cast %212 : vector<1x1x64x16xbf16> to vector<64x16xbf16>
    %214 = arith.truncf %60 : vector<24x64xf32> to vector<24x64xbf16>
    %cst_151 = arith.constant dense<0.000000e+00> : vector<24x16xf32>
    %215 = tpu.matmul %214, %213, %cst_151 {dimension_numbers = #tpu.dot_dimension_numbers<[1], [0], [0], [1], [0, 0, 1, 1], [], []>} : vector<24x64xbf16>, vector<64x16xbf16>, vector<24x16xf32> -> vector<24x16xf32>
    %c0_152 = arith.constant 0 : index
    %c3_153 = arith.constant 3 : index
    %c0_154 = arith.constant 0 : index
    %c0_155 = arith.constant 0 : index
    %216 = vector.load %arg11[%c0_152, %c3_153, %c0_154, %c0_155] : memref<1x4x1x16xf32, #tpu.memory_space<vmem>>, vector<1x1x1x16xf32>
    %217 = vector.shape_cast %216 : vector<1x1x1x16xf32> to vector<1x16xf32>
    %218 = vector.broadcast %217 : vector<1x16xf32> to vector<24x16xf32>
    %219 = arith.addf %215, %218 : vector<24x16xf32>
    %c0_156 = arith.constant 0 : index
    %c3_157 = arith.constant 3 : index
    %c0_158 = arith.constant 0 : index
    %c0_159 = arith.constant 0 : index
    %220 = vector.load %arg12[%c0_156, %c3_157, %c0_158, %c0_159] : memref<1x4x64x16xbf16, #tpu.memory_space<vmem>>, vector<1x1x64x16xbf16>
    %221 = vector.shape_cast %220 : vector<1x1x64x16xbf16> to vector<64x16xbf16>
    %222 = arith.truncf %60 : vector<24x64xf32> to vector<24x64xbf16>
    %cst_160 = arith.constant dense<0.000000e+00> : vector<24x16xf32>
    %223 = tpu.matmul %222, %221, %cst_160 {dimension_numbers = #tpu.dot_dimension_numbers<[1], [0], [0], [1], [0, 0, 1, 1], [], []>} : vector<24x64xbf16>, vector<64x16xbf16>, vector<24x16xf32> -> vector<24x16xf32>
    %c0_161 = arith.constant 0 : index
    %c3_162 = arith.constant 3 : index
    %c0_163 = arith.constant 0 : index
    %c0_164 = arith.constant 0 : index
    %224 = vector.load %arg13[%c0_161, %c3_162, %c0_163, %c0_164] : memref<1x4x1x16xf32, #tpu.memory_space<vmem>>, vector<1x1x1x16xf32>
    %225 = vector.shape_cast %224 : vector<1x1x1x16xf32> to vector<1x16xf32>
    %226 = vector.broadcast %225 : vector<1x16xf32> to vector<24x16xf32>
    %227 = arith.addf %223, %226 : vector<24x16xf32>
    %228 = arith.truncf %211 : vector<24x16xf32> to vector<24x16xbf16>
    %229 = arith.truncf %219 : vector<24x16xf32> to vector<24x16xbf16>
    %cst_165 = arith.constant dense<0.000000e+00> : vector<24x24xf32>
    %230 = tpu.matmul %228, %229, %cst_165 {dimension_numbers = #tpu.dot_dimension_numbers<[1], [1], [0], [0], [0, 0, 1, 0], [], []>} : vector<24x16xbf16>, vector<24x16xbf16>, vector<24x24xf32> -> vector<24x24xf32>
    %cst_166 = arith.constant 1.250000e-01 : f32
    %231 = vector.broadcast %cst_166 : f32 to vector<24x24xf32>
    %232 = arith.mulf %230, %231 : vector<24x24xf32>
    %cst_167 = arith.constant -1.000000e+30 : f32
    %233 = vector.broadcast %cst_167 : f32 to vector<24x24xf32>
    %234 = arith.select %36, %233, %232 : vector<24x24xi1>, vector<24x24xf32>
    %cst_168 = arith.constant dense<0xFF800000> : vector<24xf32>
    %235 = vector.multi_reduction <maximumf>, %234, %cst_168 [1] : vector<24x24xf32> to vector<24xf32>
    %236 = vector.shape_cast %235 : vector<24xf32> to vector<24x1xf32>
    %237 = vector.broadcast %236 : vector<24x1xf32> to vector<24x24xf32>
    %238 = arith.subf %234, %237 : vector<24x24xf32>
    %239 = math.exp %238 : vector<24x24xf32>
    %cst_169 = arith.constant dense<0.000000e+00> : vector<24xf32>
    %240 = vector.multi_reduction <add>, %239, %cst_169 [1] : vector<24x24xf32> to vector<24xf32>
    %241 = vector.shape_cast %240 : vector<24xf32> to vector<24x1xf32>
    %242 = arith.truncf %239 : vector<24x24xf32> to vector<24x24xbf16>
    %243 = arith.truncf %227 : vector<24x16xf32> to vector<24x16xbf16>
    %cst_170 = arith.constant dense<0.000000e+00> : vector<24x16xf32>
    %244 = tpu.matmul %242, %243, %cst_170 {dimension_numbers = #tpu.dot_dimension_numbers<[1], [0], [0], [1], [0, 0, 1, 1], [], []>} : vector<24x24xbf16>, vector<24x16xbf16>, vector<24x16xf32> -> vector<24x16xf32>
    %245 = vector.broadcast %241 : vector<24x1xf32> to vector<24x16xf32>
    %246 = arith.divf %244, %245 : vector<24x16xf32>
    %c0_171 = arith.constant 0 : index
    %c3_172 = arith.constant 3 : index
    %c0_173 = arith.constant 0 : index
    %c0_174 = arith.constant 0 : index
    %247 = vector.load %arg14[%c0_171, %c3_172, %c0_173, %c0_174] : memref<1x4x16x64xbf16, #tpu.memory_space<vmem>>, vector<1x1x16x64xbf16>
    %248 = vector.shape_cast %247 : vector<1x1x16x64xbf16> to vector<16x64xbf16>
    %249 = arith.truncf %246 : vector<24x16xf32> to vector<24x16xbf16>
    %cst_175 = arith.constant dense<0.000000e+00> : vector<24x64xf32>
    %250 = tpu.matmul %249, %248, %cst_175 {dimension_numbers = #tpu.dot_dimension_numbers<[1], [0], [0], [1], [0, 0, 1, 1], [], []>} : vector<24x16xbf16>, vector<16x64xbf16>, vector<24x64xf32> -> vector<24x64xf32>
    %251 = arith.addf %203, %250 : vector<24x64xf32>
    %252 = arith.addf %29, %251 : vector<24x64xf32>
    %c0_176 = arith.constant 0 : index
    %c0_177 = arith.constant 0 : index
    %c0_178 = arith.constant 0 : index
    %253 = vector.load %arg15[%c0_176, %c0_177, %c0_178] : memref<1x1x64xf32, #tpu.memory_space<vmem>>, vector<1x1x64xf32>
    %254 = vector.shape_cast %253 : vector<1x1x64xf32> to vector<1x64xf32>
    %255 = vector.broadcast %254 : vector<1x64xf32> to vector<24x64xf32>
    %256 = arith.addf %252, %255 : vector<24x64xf32>
    %c0_179 = arith.constant 0 : index
    %c0_180 = arith.constant 0 : index
    %c0_181 = arith.constant 0 : index
    %257 = vector.load %arg16[%c0_179, %c0_180, %c0_181] : memref<1x1x64xf32, #tpu.memory_space<vmem>>, vector<1x1x64xf32>
    %258 = vector.shape_cast %257 : vector<1x1x64xf32> to vector<1x64xf32>
    %c0_182 = arith.constant 0 : index
    %c0_183 = arith.constant 0 : index
    %c0_184 = arith.constant 0 : index
    %259 = vector.load %arg17[%c0_182, %c0_183, %c0_184] : memref<1x1x64xf32, #tpu.memory_space<vmem>>, vector<1x1x64xf32>
    %260 = vector.shape_cast %259 : vector<1x1x64xf32> to vector<1x64xf32>
    %cst_185 = arith.constant dense<0.000000e+00> : vector<24xf32>
    %261 = vector.multi_reduction <add>, %256, %cst_185 [1] : vector<24x64xf32> to vector<24xf32>
    %262 = vector.shape_cast %261 : vector<24xf32> to vector<24x1xf32>
    %cst_186 = arith.constant 6.400000e+01 : f32
    %263 = vector.broadcast %cst_186 : f32 to vector<24x1xf32>
    %264 = arith.divf %262, %263 : vector<24x1xf32>
    %265 = vector.broadcast %264 : vector<24x1xf32> to vector<24x64xf32>
    %266 = arith.subf %256, %265 : vector<24x64xf32>
    %267 = arith.mulf %266, %266 : vector<24x64xf32>
    %cst_187 = arith.constant dense<0.000000e+00> : vector<24xf32>
    %268 = vector.multi_reduction <add>, %267, %cst_187 [1] : vector<24x64xf32> to vector<24xf32>
    %269 = vector.shape_cast %268 : vector<24xf32> to vector<24x1xf32>
    %cst_188 = arith.constant 6.400000e+01 : f32
    %270 = vector.broadcast %cst_188 : f32 to vector<24x1xf32>
    %271 = arith.divf %269, %270 : vector<24x1xf32>
    %cst_189 = arith.constant 9.99999974E-6 : f32
    %272 = vector.broadcast %cst_189 : f32 to vector<24x1xf32>
    %273 = arith.addf %271, %272 : vector<24x1xf32>
    %274 = math.rsqrt %273 : vector<24x1xf32>
    %275 = vector.broadcast %274 : vector<24x1xf32> to vector<24x64xf32>
    %276 = arith.mulf %266, %275 : vector<24x64xf32>
    %277 = vector.broadcast %258 : vector<1x64xf32> to vector<24x64xf32>
    %278 = arith.mulf %276, %277 : vector<24x64xf32>
    %279 = vector.broadcast %260 : vector<1x64xf32> to vector<24x64xf32>
    %280 = arith.addf %278, %279 : vector<24x64xf32>
    %c0_190 = arith.constant 0 : index
    %c0_191 = arith.constant 0 : index
    %c0_192 = arith.constant 0 : index
    %281 = vector.load %arg18[%c0_190, %c0_191, %c0_192] : memref<1x64x128xbf16, #tpu.memory_space<vmem>>, vector<1x64x128xbf16>
    %282 = vector.shape_cast %281 : vector<1x64x128xbf16> to vector<64x128xbf16>
    %283 = arith.truncf %280 : vector<24x64xf32> to vector<24x64xbf16>
    %cst_193 = arith.constant dense<0.000000e+00> : vector<24x128xf32>
    %284 = tpu.matmul %283, %282, %cst_193 {dimension_numbers = #tpu.dot_dimension_numbers<[1], [0], [0], [1], [0, 0, 1, 1], [], []>} : vector<24x64xbf16>, vector<64x128xbf16>, vector<24x128xf32> -> vector<24x128xf32>
    %c0_194 = arith.constant 0 : index
    %c0_195 = arith.constant 0 : index
    %c0_196 = arith.constant 0 : index
    %285 = vector.load %arg19[%c0_194, %c0_195, %c0_196] : memref<1x1x128xf32, #tpu.memory_space<vmem>>, vector<1x1x128xf32>
    %286 = vector.shape_cast %285 : vector<1x1x128xf32> to vector<1x128xf32>
    %287 = vector.broadcast %286 : vector<1x128xf32> to vector<24x128xf32>
    %288 = arith.addf %284, %287 : vector<24x128xf32>
    %289 = arith.mulf %288, %288 : vector<24x128xf32>
    %290 = arith.mulf %288, %289 : vector<24x128xf32>
    %cst_197 = arith.constant 4.471500e-02 : f32
    %291 = vector.broadcast %cst_197 : f32 to vector<24x128xf32>
    %292 = arith.mulf %291, %290 : vector<24x128xf32>
    %293 = arith.addf %288, %292 : vector<24x128xf32>
    %cst_198 = arith.constant 0.797884583 : f32
    %294 = vector.broadcast %cst_198 : f32 to vector<24x128xf32>
    %295 = arith.mulf %294, %293 : vector<24x128xf32>
    %296 = math.tanh %295 : vector<24x128xf32>
    %cst_199 = arith.constant 1.000000e+00 : f32
    %297 = vector.broadcast %cst_199 : f32 to vector<24x128xf32>
    %298 = arith.addf %297, %296 : vector<24x128xf32>
    %cst_200 = arith.constant 5.000000e-01 : f32
    %299 = vector.broadcast %cst_200 : f32 to vector<24x128xf32>
    %300 = arith.mulf %299, %298 : vector<24x128xf32>
    %301 = arith.mulf %288, %300 : vector<24x128xf32>
    %c0_201 = arith.constant 0 : index
    %c0_202 = arith.constant 0 : index
    %c0_203 = arith.constant 0 : index
    %302 = vector.load %arg20[%c0_201, %c0_202, %c0_203] : memref<1x128x64xbf16, #tpu.memory_space<vmem>>, vector<1x128x64xbf16>
    %303 = vector.shape_cast %302 : vector<1x128x64xbf16> to vector<128x64xbf16>
    %304 = arith.truncf %301 : vector<24x128xf32> to vector<24x128xbf16>
    %cst_204 = arith.constant dense<0.000000e+00> : vector<24x64xf32>
    %305 = tpu.matmul %304, %303, %cst_204 {dimension_numbers = #tpu.dot_dimension_numbers<[1], [0], [0], [1], [0, 0, 1, 1], [], []>} : vector<24x128xbf16>, vector<128x64xbf16>, vector<24x64xf32> -> vector<24x64xf32>
    %c0_205 = arith.constant 0 : index
    %c0_206 = arith.constant 0 : index
    %c0_207 = arith.constant 0 : index
    %306 = vector.load %arg21[%c0_205, %c0_206, %c0_207] : memref<1x1x64xf32, #tpu.memory_space<vmem>>, vector<1x1x64xf32>
    %307 = vector.shape_cast %306 : vector<1x1x64xf32> to vector<1x64xf32>
    %308 = vector.broadcast %307 : vector<1x64xf32> to vector<24x64xf32>
    %309 = arith.addf %305, %308 : vector<24x64xf32>
    %310 = arith.addf %256, %309 : vector<24x64xf32>
    %c0_208 = arith.constant 0 : index
    %c0_209 = arith.constant 0 : index
    %c0_210 = arith.constant 0 : index
    %311 = vector.load %arg22[%c0_208, %c0_209, %c0_210] : memref<1x24x64xf32, #tpu.memory_space<vmem>>, vector<1x24x64xf32>
    %312 = vector.shape_cast %311 : vector<1x24x64xf32> to vector<24x64xf32>
    %313 = vector.shape_cast %310 : vector<24x64xf32> to vector<1x24x64xf32>
    tpu.vector_store %arg22[%c0_208, %c0_209, %c0_210], %313 {strides = array<i32>} : memref<1x24x64xf32, #tpu.memory_space<vmem>>, vector<1x24x64xf32>,
    return
  }
  func.func @transform_0(%arg0: i32) -> (i32, i32, i32) {
    %c0_i32 = arith.constant 0 : i32
    %c0_i32_0 = arith.constant 0 : i32
    %c0_i32_1 = arith.constant 0 : i32
    return %arg0, %c0_i32, %c0_i32_0 : i32, i32, i32
  }
  func.func @transform_1(%arg0: i32) -> (i32, i32) {
    %c0_i32 = arith.constant 0 : i32
    %c0_i32_0 = arith.constant 0 : i32
    %c0_i32_1 = arith.constant 0 : i32
    return %c0_i32, %c0_i32_0 : i32, i32
  }
  func.func @transform_2(%arg0: i32) -> (i32, i32) {
    %c0_i32 = arith.constant 0 : i32
    %c0_i32_0 = arith.constant 0 : i32
    %c0_i32_1 = arith.constant 0 : i32
    return %c0_i32, %c0_i32_0 : i32, i32
  }
  func.func @transform_3(%arg0: i32) -> (i32, i32) {
    %c0_i32 = arith.constant 0 : i32
    %c0_i32_0 = arith.constant 0 : i32
    %c0_i32_1 = arith.constant 0 : i32
    return %c0_i32, %c0_i32_0 : i32, i32
  }
  func.func @transform_4(%arg0: i32) -> (i32, i32) {
    %c0_i32 = arith.constant 0 : i32
    %c0_i32_0 = arith.constant 0 : i32
    %c0_i32_1 = arith.constant 0 : i32
    return %c0_i32, %c0_i32_0 : i32, i32
  }
  func.func @transform_5(%arg0: i32) -> (i32, i32, i32) {
    %c0_i32 = arith.constant 0 : i32
    %c0_i32_0 = arith.constant 0 : i32
    %c0_i32_1 = arith.constant 0 : i32
    %c0_i32_2 = arith.constant 0 : i32
    return %c0_i32, %c0_i32_0, %c0_i32_1 : i32, i32, i32
  }
  func.func @transform_6(%arg0: i32) -> (i32, i32, i32) {
    %c0_i32 = arith.constant 0 : i32
    %c0_i32_0 = arith.constant 0 : i32
    %c0_i32_1 = arith.constant 0 : i32
    %c0_i32_2 = arith.constant 0 : i32
    return %c0_i32, %c0_i32_0, %c0_i32_1 : i32, i32, i32
  }
  func.func @transform_7(%arg0: i32) -> (i32, i32, i32, i32) {
    %c0_i32 = arith.constant 0 : i32
    %c0_i32_0 = arith.constant 0 : i32
    %c0_i32_1 = arith.constant 0 : i32
    %c0_i32_2 = arith.constant 0 : i32
    %c0_i32_3 = arith.constant 0 : i32
    return %c0_i32, %c0_i32_0, %c0_i32_1, %c0_i32_2 : i32, i32, i32, i32
  }
  func.func @transform_8(%arg0: i32) -> (i32, i32, i32, i32) {
    %c0_i32 = arith.constant 0 : i32
    %c0_i32_0 = arith.constant 0 : i32
    %c0_i32_1 = arith.constant 0 : i32
    %c0_i32_2 = arith.constant 0 : i32
    %c0_i32_3 = arith.constant 0 : i32
    return %c0_i32, %c0_i32_0, %c0_i32_1, %c0_i32_2 : i32, i32, i32, i32
  }
  func.func @transform_9(%arg0: i32) -> (i32, i32, i32, i32) {
    %c0_i32 = arith.constant 0 : i32
    %c0_i32_0 = arith.constant 0 : i32
    %c0_i32_1 = arith.constant 0 : i32
    %c0_i32_2 = arith.constant 0 : i32
    %c0_i32_3 = arith.constant 0 : i32
    return %c0_i32, %c0_i32_0, %c0_i32_1, %c0_i32_2 : i32, i32, i32, i32
  }
  func.func @transform_10(%arg0: i32) -> (i32, i32, i32, i32) {
    %c0_i32 = arith.constant 0 : i32
    %c0_i32_0 = arith.constant 0 : i32
    %c0_i32_1 = arith.constant 0 : i32
    %c0_i32_2 = arith.constant 0 : i32
    %c0_i32_3 = arith.constant 0 : i32
    return %c0_i32, %c0_i32_0, %c0_i32_1, %c0_i32_2 : i32, i32, i32, i32
  }
  func.func @transform_11(%arg0: i32) -> (i32, i32, i32, i32) {
    %c0_i32 = arith.constant 0 : i32
    %c0_i32_0 = arith.constant 0 : i32
    %c0_i32_1 = arith.constant 0 : i32
    %c0_i32_2 = arith.constant 0 : i32
    %c0_i32_3 = arith.constant 0 : i32
    return %c0_i32, %c0_i32_0, %c0_i32_1, %c0_i32_2 : i32, i32, i32, i32
  }
  func.func @transform_12(%arg0: i32) -> (i32, i32, i32, i32) {
    %c0_i32 = arith.constant 0 : i32
    %c0_i32_0 = arith.constant 0 : i32
    %c0_i32_1 = arith.constant 0 : i32
    %c0_i32_2 = arith.constant 0 : i32
    %c0_i32_3 = arith.constant 0 : i32
    return %c0_i32, %c0_i32_0, %c0_i32_1, %c0_i32_2 : i32, i32, i32, i32
  }
  func.func @transform_13(%arg0: i32) -> (i32, i32, i32, i32) {
    %c0_i32 = arith.constant 0 : i32
    %c0_i32_0 = arith.constant 0 : i32
    %c0_i32_1 = arith.constant 0 : i32
    %c0_i32_2 = arith.constant 0 : i32
    %c0_i32_3 = arith.constant 0 : i32
    return %c0_i32, %c0_i32_0, %c0_i32_1, %c0_i32_2 : i32, i32, i32, i32
  }
  func.func @transform_14(%arg0: i32) -> (i32, i32, i32) {
    %c0_i32 = arith.constant 0 : i32
    %c0_i32_0 = arith.constant 0 : i32
    %c0_i32_1 = arith.constant 0 : i32
    %c0_i32_2 = arith.constant 0 : i32
    return %c0_i32, %c0_i32_0, %c0_i32_1 : i32, i32, i32
  }
  func.func @transform_15(%arg0: i32) -> (i32, i32, i32) {
    %c0_i32 = arith.constant 0 : i32
    %c0_i32_0 = arith.constant 0 : i32
    %c0_i32_1 = arith.constant 0 : i32
    %c0_i32_2 = arith.constant 0 : i32
    return %c0_i32, %c0_i32_0, %c0_i32_1 : i32, i32, i32
  }
  func.func @transform_16(%arg0: i32) -> (i32, i32, i32) {
    %c0_i32 = arith.constant 0 : i32
    %c0_i32_0 = arith.constant 0 : i32
    %c0_i32_1 = arith.constant 0 : i32
    %c0_i32_2 = arith.constant 0 : i32
    return %c0_i32, %c0_i32_0, %c0_i32_1 : i32, i32, i32
  }
  func.func @transform_17(%arg0: i32) -> (i32, i32, i32) {
    %c0_i32 = arith.constant 0 : i32
    %c0_i32_0 = arith.constant 0 : i32
    %c0_i32_1 = arith.constant 0 : i32
    %c0_i32_2 = arith.constant 0 : i32
    return %c0_i32, %c0_i32_0, %c0_i32_1 : i32, i32, i32
  }
  func.func @transform_18(%arg0: i32) -> (i32, i32, i32) {
    %c0_i32 = arith.constant 0 : i32
    %c0_i32_0 = arith.constant 0 : i32
    %c0_i32_1 = arith.constant 0 : i32
    %c0_i32_2 = arith.constant 0 : i32
    return %c0_i32, %c0_i32_0, %c0_i32_1 : i32, i32, i32
  }
  func.func @transform_19(%arg0: i32) -> (i32, i32, i32) {
    %c0_i32 = arith.constant 0 : i32
    %c0_i32_0 = arith.constant 0 : i32
    %c0_i32_1 = arith.constant 0 : i32
    %c0_i32_2 = arith.constant 0 : i32
    return %c0_i32, %c0_i32_0, %c0_i32_1 : i32, i32, i32
  }
  func.func @transform_20(%arg0: i32) -> (i32, i32, i32) {
    %c0_i32 = arith.constant 0 : i32
    %c0_i32_0 = arith.constant 0 : i32
    %c0_i32_1 = arith.constant 0 : i32
    %c0_i32_2 = arith.constant 0 : i32
    return %c0_i32, %c0_i32_0, %c0_i32_1 : i32, i32, i32
  }
  func.func @transform_21(%arg0: i32) -> (i32, i32, i32) {
    %c0_i32 = arith.constant 0 : i32
    %c0_i32_0 = arith.constant 0 : i32
    %c0_i32_1 = arith.constant 0 : i32
    return %arg0, %c0_i32, %c0_i32_0 : i32, i32, i32
  }
}

</mosaic_0001>

<llo_original>
// kernel: cvt_forward.3
$region0: #{cvt_forward.3}
  #allocation0 [shape = 'u32[]', space=smem, size = 0x4, offset = 0x4, fixed_abs, tag = 'smem constant byte address 0x4 - core index']
  #allocation1 [shape = 'u32[144,128]{1,0:T(1,128)}', space=vmem, size = 0x12000, scoped, tag = 'internal scratch']
  %s0 = inlined_call_operand.vmem [shape: f32[2,24,128], index: 0, kind: input, shape index: {}]
  %s1 = inlined_call_operand.vmem [shape: bf16[128,64], index: 1, kind: input, shape index: {}]
  %s2 = inlined_call_operand.vmem [shape: f32[1,64], index: 2, kind: input, shape index: {}, may-alias: {2,4}]
  %s3 = inlined_call_operand.vmem [shape: f32[1,64], index: 3, kind: input, shape index: {}]
  %s4 = inlined_call_operand.vmem [shape: f32[1,64], index: 4, kind: input, shape index: {}, may-alias: {2,4}]
  %s5 = inlined_call_operand.vmem [shape: f32[1,1,64], index: 5, kind: input, shape index: {}, may-alias: {5,15}]
  %s6 = inlined_call_operand.vmem [shape: f32[1,1,64], index: 6, kind: input, shape index: {}, may-alias: {6,14,16,20}]
  %s7 = inlined_call_operand.vmem [shape: bf16[1,4,64,16], index: 7, kind: input, shape index: {}]
  %s8 = inlined_call_operand.vmem [shape: f32[1,4,1,16], index: 8, kind: input, shape index: {}, may-alias: {8,10,12}]
  %s9 = inlined_call_operand.vmem [shape: bf16[1,4,64,16], index: 9, kind: input, shape index: {}]
  %s10 = inlined_call_operand.vmem [shape: f32[1,4,1,16], index: 10, kind: input, shape index: {}, may-alias: {8,10,12}]
  %s11 = inlined_call_operand.vmem [shape: bf16[1,4,64,16], index: 11, kind: input, shape index: {}]
  %s12 = inlined_call_operand.vmem [shape: f32[1,4,1,16], index: 12, kind: input, shape index: {}, may-alias: {8,10,12}]
  %s13 = inlined_call_operand.vmem [shape: bf16[1,4,16,64], index: 13, kind: input, shape index: {}]
  %s14 = inlined_call_operand.vmem [shape: f32[1,1,64], index: 14, kind: input, shape index: {}, may-alias: {6,14,16,20}]
  %s15 = inlined_call_operand.vmem [shape: f32[1,1,64], index: 15, kind: input, shape index: {}, may-alias: {5,15}]
  %s16 = inlined_call_operand.vmem [shape: f32[1,1,64], index: 16, kind: input, shape index: {}, may-alias: {6,14,16,20}]
  %s17 = inlined_call_operand.vmem [shape: bf16[1,64,128], index: 17, kind: input, shape index: {}]
  %s18 = inlined_call_operand.vmem [shape: f32[1,1,128], index: 18, kind: input, shape index: {}]
  %s19 = inlined_call_operand.vmem [shape: bf16[1,128,64], index: 19, kind: input, shape index: {}]
  %s20 = inlined_call_operand.vmem [shape: f32[1,1,64], index: 20, kind: input, shape index: {}, may-alias: {6,14,16,20}]
  %s21 = inlined_call_operand.vmem [shape: f32[2,24,64], index: 21, kind: output, shape index: {}]
  %s22 = sld [smem:[#allocation0]]
  $region117: #{cvt_forward.3} parent=0
    _
  %s24 = ssub.s32 1, %s22
  %s25 = scalar_select 0, %s24, %s22
  loop: start=0, step=1, limit=4
  $region2: #{cvt_forward.3} parent=0 // loop_pre_header
    _
  $region3: #{cvt_forward.3} parent=0 // loop_header
    %s27 = sphi 0, %s31
    %p28 = scmp.ge.s32.totalorder %s27, 4
    %s37 = sphi 0, %s39
    %s40 = sphi 0, %s37
    %s41 = sphi 0, %s40
    %s57 = sphi 0, %s41
    %s61 = sphi 0, %s61
    %s63 = sphi 0, %s61
    %s64 = sphi 0, %s63
    %s78 = sphi 0, %s64
    %s82 = sphi 0, %s82
    %s84 = sphi 0, %s82
    %s85 = sphi 0, %s84
    %s99 = sphi 0, %s85
    %s103 = sphi 0, %s103
    %s105 = sphi 0, %s103
    %s106 = sphi 0, %s105
    %s120 = sphi 0, %s106
    %s124 = sphi 0, %s124
    %s126 = sphi 0, %s124
    %s127 = sphi 0, %s126
    %s141 = sphi 0, %s127
    %s145 = sphi 0, %s145
    %s147 = sphi 0, %s145
    %s148 = sphi 0, %s147
    %s162 = sphi 0, %s148
    %s166 = sphi 0, %s166
    %s168 = sphi 0, %s166
    %s169 = sphi 0, %s168
    %s183 = sphi 0, %s169
    %s187 = sphi 0, %s187
    %s189 = sphi 0, %s187
    %s190 = sphi 0, %s189
    %s204 = sphi 0, %s190
    %s208 = sphi 0, %s208
    %s210 = sphi 0, %s208
    %s211 = sphi 0, %s210
    %s225 = sphi 0, %s211
    %s229 = sphi 0, %s229
    %s231 = sphi 0, %s229
    %s232 = sphi 0, %s231
    %s246 = sphi 0, %s232
    %s250 = sphi 0, %s250
    %s252 = sphi 0, %s250
    %s253 = sphi 0, %s252
    %s267 = sphi 0, %s253
    %s271 = sphi 0, %s271
    %s273 = sphi 0, %s271
    %s274 = sphi 0, %s273
    %s288 = sphi 0, %s274
    %s292 = sphi 0, %s292
    %s294 = sphi 0, %s292
    %s295 = sphi 0, %s294
    %s309 = sphi 0, %s295
    %s313 = sphi 0, %s313
    %s315 = sphi 0, %s313
    %s316 = sphi 0, %s315
    %s330 = sphi 0, %s316
    %s334 = sphi 0, %s334
    %s336 = sphi 0, %s334
    %s337 = sphi 0, %s336
    %s351 = sphi 0, %s337
    %s355 = sphi 0, %s355
    %s357 = sphi 0, %s355
    %s358 = sphi 0, %s357
    %s372 = sphi 0, %s358
    %s376 = sphi 0, %s376
    %s378 = sphi 0, %s376
    %s379 = sphi 0, %s378
    %s393 = sphi 0, %s379
    %s397 = sphi 0, %s397
    %s399 = sphi 0, %s397
    %s400 = sphi 0, %s399
    %s414 = sphi 0, %s400
    %s418 = sphi 0, %s418
    %s420 = sphi 0, %s418
    %s421 = sphi 0, %s420
    %s435 = sphi 0, %s421
    %s439 = sphi 0, %s439
    %s441 = sphi 0, %s439
    %s442 = sphi 0, %s441
    %s456 = sphi 0, %s442
    %s460 = sphi 0, %s460
    %s462 = sphi 0, %s460
    %s463 = sphi 0, %s462
    %s477 = sphi 0, %s463
    %s483 = sphi 0, %s485
    %s486 = sphi 0, %s483
    %s487 = sphi 0, %s486
    %s503 = sphi 0, %s487
  $region4: #{cvt_forward.3} parent=0 // loop_header_branch
    %30 = sbr.rel (%p28) target = $region8
  $region5: #{cvt_forward.3} parent=0 // loop_body
    %s32 = ssub.s32 %s27, 1
    %s33 = ssub.s32 %s27, 2
    %s34 = sadd.s32 %s27, 1
    %s35 = ssub.s32 %s27, %s34
    %p36 = scmp.eq.s32.totalorder %s35, 0
    %s38 = sadd.s32 %s37, 1
    %s39 = scalar_select %p36, %s37, %s38
    %p42 = pneg %p36
    %p43 = scmp.eq.s32.totalorder %s27, 1
    %p44 = por %p42, %p43
    %p45 = scmp.ne.s32.totalorder %s37, %s40
    %p46 = scmp.eq.s32.totalorder %s27, 0
    %p47 = por %p45, %p46
    %p48 = scmp.ne.s32.totalorder %s37, %s40
    %p49 = scmp.eq.s32.totalorder %s32, 1
    %p50 = por %p48, %p49
    %p51 = scmp.ne.s32.totalorder %s40, %s41
    %p52 = scmp.eq.s32.totalorder %s32, 0
    %p53 = por %p51, %p52
    %p54 = scmp.ne.s32.totalorder %s40, %s41
    %p55 = scmp.eq.s32.totalorder %s33, 1
    %p56 = por %p54, %p55
    %p58 = scmp.ne.s32.totalorder %s41, %s57
    %p59 = scmp.eq.s32.totalorder %s33, 0
    %p60 = por %p58, %p59
    %s62 = sadd.s32 %s61, 1
    %p65 = scmp.eq.s32.totalorder %s27, 1
    %p66 = scmp.ne.s32.totalorder %s61, %s63
    %p67 = scmp.eq.s32.totalorder %s27, 0
    %p68 = por %p66, %p67
    %p69 = scmp.ne.s32.totalorder %s61, %s63
    %p70 = scmp.eq.s32.totalorder %s32, 1
    %p71 = por %p69, %p70
    %p72 = scmp.ne.s32.totalorder %s63, %s64
    %p73 = scmp.eq.s32.totalorder %s32, 0
    %p74 = por %p72, %p73
    %p75 = scmp.ne.s32.totalorder %s63, %s64
    %p76 = scmp.eq.s32.totalorder %s33, 1
    %p77 = por %p75, %p76
    %p79 = scmp.ne.s32.totalorder %s64, %s78
    %p80 = scmp.eq.s32.totalorder %s33, 0
    %p81 = por %p79, %p80
    %s83 = sadd.s32 %s82, 1
    %p86 = scmp.eq.s32.totalorder %s27, 1
    %p87 = scmp.ne.s32.totalorder %s82, %s84
    %p88 = scmp.eq.s32.totalorder %s27, 0
    %p89 = por %p87, %p88
    %p90 = scmp.ne.s32.totalorder %s82, %s84
    %p91 = scmp.eq.s32.totalorder %s32, 1
    %p92 = por %p90, %p91
    %p93 = scmp.ne.s32.totalorder %s84, %s85
    %p94 = scmp.eq.s32.totalorder %s32, 0
    %p95 = por %p93, %p94
    %p96 = scmp.ne.s32.totalorder %s84, %s85
    %p97 = scmp.eq.s32.totalorder %s33, 1
    %p98 = por %p96, %p97
    %p100 = scmp.ne.s32.totalorder %s85, %s99
    %p101 = scmp.eq.s32.totalorder %s33, 0
    %p102 = por %p100, %p101
    %s104 = sadd.s32 %s103, 1
    %p107 = scmp.eq.s32.totalorder %s27, 1
    %p108 = scmp.ne.s32.totalorder %s103, %s105
    %p109 = scmp.eq.s32.totalorder %s27, 0
    %p110 = por %p108, %p109
    %p111 = scmp.ne.s32.totalorder %s103, %s105
    %p112 = scmp.eq.s32.totalorder %s32, 1
    %p113 = por %p111, %p112
    %p114 = scmp.ne.s32.totalorder %s105, %s106
    %p115 = scmp.eq.s32.totalorder %s32, 0
    %p116 = por %p114, %p115
    %p117 = scmp.ne.s32.totalorder %s105, %s106
    %p118 = scmp.eq.s32.totalorder %s33, 1
    %p119 = por %p117, %p118
    %p121 = scmp.ne.s32.totalorder %s106, %s120
    %p122 = scmp.eq.s32.totalorder %s33, 0
    %p123 = por %p121, %p122
    %s125 = sadd.s32 %s124, 1
    %p128 = scmp.eq.s32.totalorder %s27, 1
    %p129 = scmp.ne.s32.totalorder %s124, %s126
    %p130 = scmp.eq.s32.totalorder %s27, 0
    %p131 = por %p129, %p130
    %p132 = scmp.ne.s32.totalorder %s124, %s126
    %p133 = scmp.eq.s32.totalorder %s32, 1
    %p134 = por %p132, %p133
    %p135 = scmp.ne.s32.totalorder %s126, %s127
    %p136 = scmp.eq.s32.totalorder %s32, 0
    %p137 = por %p135, %p136
    %p138 = scmp.ne.s32.totalorder %s126, %s127
    %p139 = scmp.eq.s32.totalorder %s33, 1
    %p140 = por %p138, %p139
    %p142 = scmp.ne.s32.totalorder %s127, %s141
    %p143 = scmp.eq.s32.totalorder %s33, 0
    %p144 = por %p142, %p143
    %s146 = sadd.s32 %s145, 1
    %p149 = scmp.eq.s32.totalorder %s27, 1
    %p150 = scmp.ne.s32.totalorder %s145, %s147
    %p151 = scmp.eq.s32.totalorder %s27, 0
    %p152 = por %p150, %p151
    %p153 = scmp.ne.s32.totalorder %s145, %s147
    %p154 = scmp.eq.s32.totalorder %s32, 1
    %p155 = por %p153, %p154
    %p156 = scmp.ne.s32.totalorder %s147, %s148
    %p157 = scmp.eq.s32.totalorder %s32, 0
    %p158 = por %p156, %p157
    %p159 = scmp.ne.s32.totalorder %s147, %s148
    %p160 = scmp.eq.s32.totalorder %s33, 1
    %p161 = por %p159, %p160
    %p163 = scmp.ne.s32.totalorder %s148, %s162
    %p164 = scmp.eq.s32.totalorder %s33, 0
    %p165 = por %p163, %p164
    %s167 = sadd.s32 %s166, 1
    %p170 = scmp.eq.s32.totalorder %s27, 1
    %p171 = scmp.ne.s32.totalorder %s166, %s168
    %p172 = scmp.eq.s32.totalorder %s27, 0
    %p173 = por %p171, %p172
    %p174 = scmp.ne.s32.totalorder %s166, %s168
    %p175 = scmp.eq.s32.totalorder %s32, 1
    %p176 = por %p174, %p175
    %p177 = scmp.ne.s32.totalorder %s168, %s169
    %p178 = scmp.eq.s32.totalorder %s32, 0
    %p179 = por %p177, %p178
    %p180 = scmp.ne.s32.totalorder %s168, %s169
    %p181 = scmp.eq.s32.totalorder %s33, 1
    %p182 = por %p180, %p181
    %p184 = scmp.ne.s32.totalorder %s169, %s183
    %p185 = scmp.eq.s32.totalorder %s33, 0
    %p186 = por %p184, %p185
    %s188 = sadd.s32 %s187, 1
    %p191 = scmp.eq.s32.totalorder %s27, 1
    %p192 = scmp.ne.s32.totalorder %s187, %s189
    %p193 = scmp.eq.s32.totalorder %s27, 0
    %p194 = por %p192, %p193
    %p195 = scmp.ne.s32.totalorder %s187, %s189
    %p196 = scmp.eq.s32.totalorder %s32, 1
    %p197 = por %p195, %p196
    %p198 = scmp.ne.s32.totalorder %s189, %s190
    %p199 = scmp.eq.s32.totalorder %s32, 0
    %p200 = por %p198, %p199
    %p201 = scmp.ne.s32.totalorder %s189, %s190
    %p202 = scmp.eq.s32.totalorder %s33, 1
    %p203 = por %p201, %p202
    %p205 = scmp.ne.s32.totalorder %s190, %s204
    %p206 = scmp.eq.s32.totalorder %s33, 0
    %p207 = por %p205, %p206
    %s209 = sadd.s32 %s208, 1
    %p212 = scmp.eq.s32.totalorder %s27, 1
    %p213 = scmp.ne.s32.totalorder %s208, %s210
    %p214 = scmp.eq.s32.totalorder %s27, 0
    %p215 = por %p213, %p214
    %p216 = scmp.ne.s32.totalorder %s208, %s210
    %p217 = scmp.eq.s32.totalorder %s32, 1
    %p218 = por %p216, %p217
    %p219 = scmp.ne.s32.totalorder %s210, %s211
    %p220 = scmp.eq.s32.totalorder %s32, 0
    %p221 = por %p219, %p220
    %p222 = scmp.ne.s32.totalorder %s210, %s211
    %p223 = scmp.eq.s32.totalorder %s33, 1
    %p224 = por %p222, %p223
    %p226 = scmp.ne.s32.totalorder %s211, %s225
    %p227 = scmp.eq.s32.totalorder %s33, 0
    %p228 = por %p226, %p227
    %s230 = sadd.s32 %s229, 1
    %p233 = scmp.eq.s32.totalorder %s27, 1
    %p234 = scmp.ne.s32.totalorder %s229, %s231
    %p235 = scmp.eq.s32.totalorder %s27, 0
    %p236 = por %p234, %p235
    %p237 = scmp.ne.s32.totalorder %s229, %s231
    %p238 = scmp.eq.s32.totalorder %s32, 1
    %p239 = por %p237, %p238
    %p240 = scmp.ne.s32.totalorder %s231, %s232
    %p241 = scmp.eq.s32.totalorder %s32, 0
    %p242 = por %p240, %p241
    %p243 = scmp.ne.s32.totalorder %s231, %s232
    %p244 = scmp.eq.s32.totalorder %s33, 1
    %p245 = por %p243, %p244
    %p247 = scmp.ne.s32.totalorder %s232, %s246
    %p248 = scmp.eq.s32.totalorder %s33, 0
    %p249 = por %p247, %p248
    %s251 = sadd.s32 %s250, 1
    %p254 = scmp.eq.s32.totalorder %s27, 1
    %p255 = scmp.ne.s32.totalorder %s250, %s252
    %p256 = scmp.eq.s32.totalorder %s27, 0
    %p257 = por %p255, %p256
    %p258 = scmp.ne.s32.totalorder %s250, %s252
    %p259 = scmp.eq.s32.totalorder %s32, 1
    %p260 = por %p258, %p259
    %p261 = scmp.ne.s32.totalorder %s252, %s253
    %p262 = scmp.eq.s32.totalorder %s32, 0
    %p263 = por %p261, %p262
    %p264 = scmp.ne.s32.totalorder %s252, %s253
    %p265 = scmp.eq.s32.totalorder %s33, 1
    %p266 = por %p264, %p265
    %p268 = scmp.ne.s32.totalorder %s253, %s267
    %p269 = scmp.eq.s32.totalorder %s33, 0
    %p270 = por %p268, %p269
    %s272 = sadd.s32 %s271, 1
    %p275 = scmp.eq.s32.totalorder %s27, 1
    %p276 = scmp.ne.s32.totalorder %s271, %s273
    %p277 = scmp.eq.s32.totalorder %s27, 0
    %p278 = por %p276, %p277
    %p279 = scmp.ne.s32.totalorder %s271, %s273
    %p280 = scmp.eq.s32.totalorder %s32, 1
    %p281 = por %p279, %p280
    %p282 = scmp.ne.s32.totalorder %s273, %s274
    %p283 = scmp.eq.s32.totalorder %s32, 0
    %p284 = por %p282, %p283
    %p285 = scmp.ne.s32.totalorder %s273, %s274
    %p286 = scmp.eq.s32.totalorder %s33, 1
    %p287 = por %p285, %p286
    %p289 = scmp.ne.s32.totalorder %s274, %s288
    %p290 = scmp.eq.s32.totalorder %s33, 0
    %p291 = por %p289, %p290
    %s293 = sadd.s32 %s292, 1
    %p296 = scmp.eq.s32.totalorder %s27, 1
    %p297 = scmp.ne.s32.totalorder %s292, %s294
    %p298 = scmp.eq.s32.totalorder %s27, 0
    %p299 = por %p297, %p298
    %p300 = scmp.ne.s32.totalorder %s292, %s294
    %p301 = scmp.eq.s32.totalorder %s32, 1
    %p302 = por %p300, %p301
    %p303 = scmp.ne.s32.totalorder %s294, %s295
    %p304 = scmp.eq.s32.totalorder %s32, 0
    %p305 = por %p303, %p304
    %p306 = scmp.ne.s32.totalorder %s294, %s295
    %p307 = scmp.eq.s32.totalorder %s33, 1
    %p308 = por %p306, %p307
    %p310 = scmp.ne.s32.totalorder %s295, %s309
    %p311 = scmp.eq.s32.totalorder %s33, 0
    %p312 = por %p310, %p311
    %s314 = sadd.s32 %s313, 1
    %p317 = scmp.eq.s32.totalorder %s27, 1
    %p318 = scmp.ne.s32.totalorder %s313, %s315
    %p319 = scmp.eq.s32.totalorder %s27, 0
    %p320 = por %p318, %p319
    %p321 = scmp.ne.s32.totalorder %s313, %s315
    %p322 = scmp.eq.s32.totalorder %s32, 1
    %p323 = por %p321, %p322
    %p324 = scmp.ne.s32.totalorder %s315, %s316
    %p325 = scmp.eq.s32.totalorder %s32, 0
    %p326 = por %p324, %p325
    %p327 = scmp.ne.s32.totalorder %s315, %s316
    %p328 = scmp.eq.s32.totalorder %s33, 1
    %p329 = por %p327, %p328
    %p331 = scmp.ne.s32.totalorder %s316, %s330
    %p332 = scmp.eq.s32.totalorder %s33, 0
    %p333 = por %p331, %p332
    %s335 = sadd.s32 %s334, 1
    %p338 = scmp.eq.s32.totalorder %s27, 1
    %p339 = scmp.ne.s32.totalorder %s334, %s336
    %p340 = scmp.eq.s32.totalorder %s27, 0
    %p341 = por %p339, %p340
    %p342 = scmp.ne.s32.totalorder %s334, %s336
    %p343 = scmp.eq.s32.totalorder %s32, 1
    %p344 = por %p342, %p343
    %p345 = scmp.ne.s32.totalorder %s336, %s337
    %p346 = scmp.eq.s32.totalorder %s32, 0
    %p347 = por %p345, %p346
    %p348 = scmp.ne.s32.totalorder %s336, %s337
    %p349 = scmp.eq.s32.totalorder %s33, 1
    %p350 = por %p348, %p349
    %p352 = scmp.ne.s32.totalorder %s337, %s351
    %p353 = scmp.eq.s32.totalorder %s33, 0
    %p354 = por %p352, %p353
    %s356 = sadd.s32 %s355, 1
    %p359 = scmp.eq.s32.totalorder %s27, 1
    %p360 = scmp.ne.s32.totalorder %s355, %s357
    %p361 = scmp.eq.s32.totalorder %s27, 0
    %p362 = por %p360, %p361
    %p363 = scmp.ne.s32.totalorder %s355, %s357
    %p364 = scmp.eq.s32.totalorder %s32, 1
    %p365 = por %p363, %p364
    %p366 = scmp.ne.s32.totalorder %s357, %s358
    %p367 = scmp.eq.s32.totalorder %s32, 0
    %p368 = por %p366, %p367
    %p369 = scmp.ne.s32.totalorder %s357, %s358
    %p370 = scmp.eq.s32.totalorder %s33, 1
    %p371 = por %p369, %p370
    %p373 = scmp.ne.s32.totalorder %s358, %s372
    %p374 = scmp.eq.s32.totalorder %s33, 0
    %p375 = por %p373, %p374
    %s377 = sadd.s32 %s376, 1
    %p380 = scmp.eq.s32.totalorder %s27, 1
    %p381 = scmp.ne.s32.totalorder %s376, %s378
    %p382 = scmp.eq.s32.totalorder %s27, 0
    %p383 = por %p381, %p382
    %p384 = scmp.ne.s32.totalorder %s376, %s378
    %p385 = scmp.eq.s32.totalorder %s32, 1
    %p386 = por %p384, %p385
    %p387 = scmp.ne.s32.totalorder %s378, %s379
    %p388 = scmp.eq.s32.totalorder %s32, 0
    %p389 = por %p387, %p388
    %p390 = scmp.ne.s32.totalorder %s378, %s379
    %p391 = scmp.eq.s32.totalorder %s33, 1
    %p392 = por %p390, %p391
    %p394 = scmp.ne.s32.totalorder %s379, %s393
    %p395 = scmp.eq.s32.totalorder %s33, 0
    %p396 = por %p394, %p395
    %s398 = sadd.s32 %s397, 1
    %p401 = scmp.eq.s32.totalorder %s27, 1
    %p402 = scmp.ne.s32.totalorder %s397, %s399
    %p403 = scmp.eq.s32.totalorder %s27, 0
    %p404 = por %p402, %p403
    %p405 = scmp.ne.s32.totalorder %s397, %s399
    %p406 = scmp.eq.s32.totalorder %s32, 1
    %p407 = por %p405, %p406
    %p408 = scmp.ne.s32.totalorder %s399, %s400
    %p409 = scmp.eq.s32.totalorder %s32, 0
    %p410 = por %p408, %p409
    %p411 = scmp.ne.s32.totalorder %s399, %s400
    %p412 = scmp.eq.s32.totalorder %s33, 1
    %p413 = por %p411, %p412
    %p415 = scmp.ne.s32.totalorder %s400, %s414
    %p416 = scmp.eq.s32.totalorder %s33, 0
    %p417 = por %p415, %p416
    %s419 = sadd.s32 %s418, 1
    %p422 = scmp.eq.s32.totalorder %s27, 1
    %p423 = scmp.ne.s32.totalorder %s418, %s420
    %p424 = scmp.eq.s32.totalorder %s27, 0
    %p425 = por %p423, %p424
    %p426 = scmp.ne.s32.totalorder %s418, %s420
    %p427 = scmp.eq.s32.totalorder %s32, 1
    %p428 = por %p426, %p427
    %p429 = scmp.ne.s32.totalorder %s420, %s421
    %p430 = scmp.eq.s32.totalorder %s32, 0
    %p431 = por %p429, %p430
    %p432 = scmp.ne.s32.totalorder %s420, %s421
    %p433 = scmp.eq.s32.totalorder %s33, 1
    %p434 = por %p432, %p433
    %p436 = scmp.ne.s32.totalorder %s421, %s435
    %p437 = scmp.eq.s32.totalorder %s33, 0
    %p438 = por %p436, %p437
    %s440 = sadd.s32 %s439, 1
    %p443 = scmp.eq.s32.totalorder %s27, 1
    %p444 = scmp.ne.s32.totalorder %s439, %s441
    %p445 = scmp.eq.s32.totalorder %s27, 0
    %p446 = por %p444, %p445
    %p447 = scmp.ne.s32.totalorder %s439, %s441
    %p448 = scmp.eq.s32.totalorder %s32, 1
    %p449 = por %p447, %p448
    %p450 = scmp.ne.s32.totalorder %s441, %s442
    %p451 = scmp.eq.s32.totalorder %s32, 0
    %p452 = por %p450, %p451
    %p453 = scmp.ne.s32.totalorder %s441, %s442
    %p454 = scmp.eq.s32.totalorder %s33, 1
    %p455 = por %p453, %p454
    %p457 = scmp.ne.s32.totalorder %s442, %s456
    %p458 = scmp.eq.s32.totalorder %s33, 0
    %p459 = por %p457, %p458
    %s461 = sadd.s32 %s460, 1
    %p464 = scmp.eq.s32.totalorder %s27, 1
    %p465 = scmp.ne.s32.totalorder %s460, %s462
    %p466 = scmp.eq.s32.totalorder %s27, 0
    %p467 = por %p465, %p466
    %p468 = scmp.ne.s32.totalorder %s460, %s462
    %p469 = scmp.eq.s32.totalorder %s32, 1
    %p470 = por %p468, %p469
    %p471 = scmp.ne.s32.totalorder %s462, %s463
    %p472 = scmp.eq.s32.totalorder %s32, 0
    %p473 = por %p471, %p472
    %p474 = scmp.ne.s32.totalorder %s462, %s463
    %p475 = scmp.eq.s32.totalorder %s33, 1
    %p476 = por %p474, %p475
    %p478 = scmp.ne.s32.totalorder %s463, %s477
    %p479 = scmp.eq.s32.totalorder %s33, 0
    %p480 = por %p478, %p479
    %s481 = ssub.s32 %s27, %s34
    %p482 = scmp.eq.s32.totalorder %s481, 0
    %s484 = sadd.s32 %s483, 1
    %s485 = scalar_select %p482, %s483, %s484
    %p488 = pneg %p482
    %p489 = scmp.eq.s32.totalorder %s27, 1
    %p490 = por %p488, %p489
    %p491 = scmp.ne.s32.totalorder %s483, %s486
    %p492 = scmp.eq.s32.totalorder %s27, 0
    %p493 = por %p491, %p492
    %p494 = scmp.ne.s32.totalorder %s483, %s486
    %p495 = scmp.eq.s32.totalorder %s32, 1
    %p496 = por %p494, %p495
    %p497 = scmp.ne.s32.totalorder %s486, %s487
    %p498 = scmp.eq.s32.totalorder %s32, 0
    %p499 = por %p497, %p498
    %p500 = scmp.ne.s32.totalorder %s486, %s487
    %p501 = scmp.eq.s32.totalorder %s33, 1
    %p502 = por %p500, %p501
    %p504 = scmp.ne.s32.totalorder %s487, %s503
    %p505 = scmp.eq.s32.totalorder %s33, 0
    %p506 = por %p504, %p505
    %p507 = scmp.le.s32.totalorder 1, %s27
    %p508 = scmp.lt.s32.totalorder %s27, 3
    %p509 = pnand %p507, %p508
    %p510 = pneg %p509
    // Predicated region
    $region9: #{cvt_forward.3} parent=5 // pred_check
      _
    $region10: #{cvt_forward.3} parent=5 // pred_check_branch
      %512 = sbr.rel (%p509) target = $region12
    $region11: #{cvt_forward.3} parent=5 // pred_region
      %s513 = ssub.s32 %s27, 1
      // Predicated region
      $region13: #{cvt_forward.3} parent=11 // pred_check
        %p514 = pneg %p74
      $region14: #{cvt_forward.3} parent=11 // pred_check_branch
        %516 = sbr.rel (%p514) target = $region16
      $region15: #{cvt_forward.3} parent=11 // pred_region
        _
      $region16: #{cvt_forward.3} parent=11 // pred_fallthru
        _
      // Predicated region
      $region17: #{cvt_forward.3} parent=11 // pred_check
        %p517 = pneg %p95
      $region18: #{cvt_forward.3} parent=11 // pred_check_branch
        %519 = sbr.rel (%p517) target = $region20
      $region19: #{cvt_forward.3} parent=11 // pred_region
        _
      $region20: #{cvt_forward.3} parent=11 // pred_fallthru
        _
      // Predicated region
      $region21: #{cvt_forward.3} parent=11 // pred_check
        %p520 = pneg %p116
      $region22: #{cvt_forward.3} parent=11 // pred_check_branch
        %522 = sbr.rel (%p520) target = $region24
      $region23: #{cvt_forward.3} parent=11 // pred_region
        _
      $region24: #{cvt_forward.3} parent=11 // pred_fallthru
        _
      // Predicated region
      $region25: #{cvt_forward.3} parent=11 // pred_check
        %p523 = pneg %p137
      $region26: #{cvt_forward.3} parent=11 // pred_check_branch
        %525 = sbr.rel (%p523) target = $region28
      $region27: #{cvt_forward.3} parent=11 // pred_region
        _
      $region28: #{cvt_forward.3} parent=11 // pred_fallthru
        _
      // Predicated region
      $region29: #{cvt_forward.3} parent=11 // pred_check
        %p526 = pneg %p158
      $region30: #{cvt_forward.3} parent=11 // pred_check_branch
        %528 = sbr.rel (%p526) target = $region32
      $region31: #{cvt_forward.3} parent=11 // pred_region
        _
      $region32: #{cvt_forward.3} parent=11 // pred_fallthru
        _
      // Predicated region
      $region33: #{cvt_forward.3} parent=11 // pred_check
        %p529 = pneg %p179
      $region34: #{cvt_forward.3} parent=11 // pred_check_branch
        %531 = sbr.rel (%p529) target = $region36
      $region35: #{cvt_forward.3} parent=11 // pred_region
        _
      $region36: #{cvt_forward.3} parent=11 // pred_fallthru
        _
      // Predicated region
      $region37: #{cvt_forward.3} parent=11 // pred_check
        %p532 = pneg %p200
      $region38: #{cvt_forward.3} parent=11 // pred_check_branch
        %534 = sbr.rel (%p532) target = $region40
      $region39: #{cvt_forward.3} parent=11 // pred_region
        _
      $region40: #{cvt_forward.3} parent=11 // pred_fallthru
        _
      // Predicated region
      $region41: #{cvt_forward.3} parent=11 // pred_check
        %p535 = pneg %p221
      $region42: #{cvt_forward.3} parent=11 // pred_check_branch
        %537 = sbr.rel (%p535) target = $region44
      $region43: #{cvt_forward.3} parent=11 // pred_region
        _
      $region44: #{cvt_forward.3} parent=11 // pred_fallthru
        _
      // Predicated region
      $region45: #{cvt_forward.3} parent=11 // pred_check
        %p538 = pneg %p242
      $region46: #{cvt_forward.3} parent=11 // pred_check_branch
        %540 = sbr.rel (%p538) target = $region48
      $region47: #{cvt_forward.3} parent=11 // pred_region
        _
      $region48: #{cvt_forward.3} parent=11 // pred_fallthru
        _
      // Predicated region
      $region49: #{cvt_forward.3} parent=11 // pred_check
        %p541 = pneg %p263
      $region50: #{cvt_forward.3} parent=11 // pred_check_branch
        %543 = sbr.rel (%p541) target = $region52
      $region51: #{cvt_forward.3} parent=11 // pred_region
        _
      $region52: #{cvt_forward.3} parent=11 // pred_fallthru
        _
      // Predicated region
      $region53: #{cvt_forward.3} parent=11 // pred_check
        %p544 = pneg %p284
      $region54: #{cvt_forward.3} parent=11 // pred_check_branch
        %546 = sbr.rel (%p544) target = $region56
      $region55: #{cvt_forward.3} parent=11 // pred_region
        _
      $region56: #{cvt_forward.3} parent=11 // pred_fallthru
        _
      // Predicated region
      $region57: #{cvt_forward.3} parent=11 // pred_check
        %p547 = pneg %p305
      $region58: #{cvt_forward.3} parent=11 // pred_check_branch
        %549 = sbr.rel (%p547) target = $region60
      $region59: #{cvt_forward.3} parent=11 // pred_region
        _
      $region60: #{cvt_forward.3} parent=11 // pred_fallthru
        _
      // Predicated region
      $region61: #{cvt_forward.3} parent=11 // pred_check
        %p550 = pneg %p326
      $region62: #{cvt_forward.3} parent=11 // pred_check_branch
        %552 = sbr.rel (%p550) target = $region64
      $region63: #{cvt_forward.3} parent=11 // pred_region
        _
      $region64: #{cvt_forward.3} parent=11 // pred_fallthru
        _
      // Predicated region
      $region65: #{cvt_forward.3} parent=11 // pred_check
        %p553 = pneg %p347
      $region66: #{cvt_forward.3} parent=11 // pred_check_branch
        %555 = sbr.rel (%p553) target = $region68
      $region67: #{cvt_forward.3} parent=11 // pred_region
        _
      $region68: #{cvt_forward.3} parent=11 // pred_fallthru
        _
      // Predicated region
      $region69: #{cvt_forward.3} parent=11 // pred_check
        %p556 = pneg %p368
      $region70: #{cvt_forward.3} parent=11 // pred_check_branch
        %558 = sbr.rel (%p556) target = $region72
      $region71: #{cvt_forward.3} parent=11 // pred_region
        _
      $region72: #{cvt_forward.3} parent=11 // pred_fallthru
        _
      // Predicated region
      $region73: #{cvt_forward.3} parent=11 // pred_check
        %p559 = pneg %p389
      $region74: #{cvt_forward.3} parent=11 // pred_check_branch
        %561 = sbr.rel (%p559) target = $region76
      $region75: #{cvt_forward.3} parent=11 // pred_region
        _
      $region76: #{cvt_forward.3} parent=11 // pred_fallthru
        _
      // Predicated region
      $region77: #{cvt_forward.3} parent=11 // pred_check
        %p562 = pneg %p410
      $region78: #{cvt_forward.3} parent=11 // pred_check_branch
        %564 = sbr.rel (%p562) target = $region80
      $region79: #{cvt_forward.3} parent=11 // pred_region
        _
      $region80: #{cvt_forward.3} parent=11 // pred_fallthru
        _
      // Predicated region
      $region81: #{cvt_forward.3} parent=11 // pred_check
        %p565 = pneg %p431
      $region82: #{cvt_forward.3} parent=11 // pred_check_branch
        %567 = sbr.rel (%p565) target = $region84
      $region83: #{cvt_forward.3} parent=11 // pred_region
        _
      $region84: #{cvt_forward.3} parent=11 // pred_fallthru
        _
      // Predicated region
      $region85: #{cvt_forward.3} parent=11 // pred_check
        %p568 = pneg %p452
      $region86: #{cvt_forward.3} parent=11 // pred_check_branch
        %570 = sbr.rel (%p568) target = $region88
      $region87: #{cvt_forward.3} parent=11 // pred_region
        _
      $region88: #{cvt_forward.3} parent=11 // pred_fallthru
        _
      // Predicated region
      $region89: #{cvt_forward.3} parent=11 // pred_check
        %p571 = pneg %p473
      $region90: #{cvt_forward.3} parent=11 // pred_check_branch
        %573 = sbr.rel (%p571) target = $region92
      $region91: #{cvt_forward.3} parent=11 // pred_region
        _
      $region92: #{cvt_forward.3} parent=11 // pred_fallthru
        _
    $region12: #{cvt_forward.3} parent=5 // pred_fallthru
      _
    %p574 = scmp.lt.s32.totalorder %s27, 2
    // Predicated region
    $region93: #{cvt_forward.3} parent=5 // pred_check
      %p575 = pneg %p574
    $region94: #{cvt_forward.3} parent=5 // pred_check_branch
      %577 = sbr.rel (%p575) target = $region96
    $region95: #{cvt_forward.3} parent=5 // pred_region
      // Predicated region
      $region97: #{cvt_forward.3} parent=95 // pred_check
        %p578 = pneg %p47
      $region98: #{cvt_forward.3} parent=95 // pred_check_branch
        %580 = sbr.rel (%p578) target = $region100
      $region99: #{cvt_forward.3} parent=95 // pred_region
        %p581 = scmp.lt.s32.totalorder %s27, 1
        %s582 = scalar_select %p581, %s27, 1
        %s583 = smul.addr %s582, 3
        %s584 = smul.addr %s583, 8
        %s585 = scalar_lea.vmem %s0, %s584
      $region100: #{cvt_forward.3} parent=95 // pred_fallthru
        _
    $region96: #{cvt_forward.3} parent=5 // pred_fallthru
      _
    %p586 = scmp.le.s32.totalorder 1, %s27
    %p587 = scmp.lt.s32.totalorder %s27, 3
    %p588 = pnand %p586, %p587
    %p589 = pneg %p588
    // Predicated region
    $region101: #{cvt_forward.3} parent=5 // pred_check
      _
    $region102: #{cvt_forward.3} parent=5 // pred_check_branch
      %591 = sbr.rel (%p588) target = $region104
    $region103: #{cvt_forward.3} parent=5 // pred_region
      %s592 = ssub.s32 %s27, 1
      %p593 = scmp.lt.s32.totalorder %s32, 1
      %s594 = scalar_select %p593, %s32, 1
      %s595 = smul.addr %s594, 3
      %s596 = smul.addr %s595, 8
      %s597 = scalar_lea.vmem %s0, %s596
      %p598 = pneg %p53
      %p599 = pneg %p50
      %p600 = pneg %p74
      %p601 = pneg %p71
      %p602 = pneg %p95
      %p603 = pneg %p92
      %p604 = pneg %p116
      %p605 = pneg %p113
      %p606 = pneg %p137
      %p607 = pneg %p134
      %p608 = pneg %p158
      %p609 = pneg %p155
      %p610 = pneg %p179
      %p611 = pneg %p176
      %p612 = pneg %p200
      %p613 = pneg %p197
      %p614 = pneg %p221
      %p615 = pneg %p218
      %p616 = pneg %p242
      %p617 = pneg %p239
      %p618 = pneg %p263
      %p619 = pneg %p260
      %p620 = pneg %p284
      %p621 = pneg %p281
      %p622 = pneg %p305
      %p623 = pneg %p302
      %p624 = pneg %p326
      %p625 = pneg %p323
      %p626 = pneg %p347
      %p627 = pneg %p344
      %p628 = pneg %p368
      %p629 = pneg %p365
      %p630 = pneg %p389
      %p631 = pneg %p386
      %p632 = pneg %p410
      %p633 = pneg %p407
      %p634 = pneg %p431
      %p635 = pneg %p428
      %p636 = pneg %p452
      %p637 = pneg %p449
      %p638 = pneg %p473
      %p639 = pneg %p470
      %p640 = pneg %p499
      %p641 = pneg %p496
      %p642 = scmp.lt.s32.totalorder %s32, 1
      %s643 = scalar_select %p642, %s32, 1
      %s644 = smul.addr %s643, 3
      %s645 = smul.addr %s644, 8
      %s646 = scalar_lea.vmem %s21, %s645
      %p647 = scmp.lt.s32.totalorder %s32, 1
      %s648 = scalar_select %p647, %s32, 1
      %s649 = smul.addr %s648, 3
      %s650 = smul.addr %s649, 8
      %s651 = scalar_lea.vmem %s0, %s650
      %p652 = scmp.lt.s32.totalorder %s32, 1
      %s653 = scalar_select %p652, %s32, 1
      %s654 = smul.addr %s653, 3
      %s655 = smul.addr %s654, 8
      %s656 = scalar_lea.vmem %s21, %s655
      %v658 = vld [vmem:[%s651] sm:$0xff]
      %v659 = vld [vmem:[%s651 + $0x8] sm:$0xff]
      %v660 = vld [vmem:[%s651 + $0x10] sm:$0xff]
      %v661 = vld [vmem:[%s1] sm:$0xf]
      %v662 = vld [vmem:[%s1 + $0x4] sm:$0xf]
      %v663 = vld [vmem:[%s1 + $0x8] sm:$0xf]
      %v664 = vld [vmem:[%s1 + $0xc] sm:$0xf]
      %v665 = vld [vmem:[%s1 + $0x10] sm:$0xf]
      %v666 = vld [vmem:[%s1 + $0x14] sm:$0xf]
      %v667 = vld [vmem:[%s1 + $0x18] sm:$0xf]
      %v668 = vld [vmem:[%s1 + $0x1c] sm:$0xf]
      %v669 = vld [vmem:[%s1 + $0x20] sm:$0xf]
      %v670 = vld [vmem:[%s1 + $0x24] sm:$0xf]
      %v671 = vld [vmem:[%s1 + $0x28] sm:$0xf]
      %v672 = vld [vmem:[%s1 + $0x2c] sm:$0xf]
      %v673 = vld [vmem:[%s1 + $0x30] sm:$0xf]
      %v674 = vld [vmem:[%s1 + $0x34] sm:$0xf]
      %v675 = vld [vmem:[%s1 + $0x38] sm:$0xf]
      %v676 = vld [vmem:[%s1 + $0x3c] sm:$0xf]
      %v677 = vpack.c.bf16 %v659, %v658
      %v678 = vpack.c.bf16 %v660, %v660
      %v679 = vld [vmem:[%s2] sm:$0x1]
      %v681 = vlaneseq
      %v682 = vshrl.u32 %v681, 7
      %v683 = vsub.s32 0, %v682
      %v684 = vrot.slane %v679, %v683
      %v702 = vunpack.c.l.b16 %v661
      %v703 = vunpack.c.l.b16 %v662
      %v704 = vunpack.c.l.b16 %v663
      %v705 = vunpack.c.l.b16 %v664
      %v706 = vunpack.c.l.b16 %v665
      %v707 = vunpack.c.l.b16 %v666
      %v708 = vunpack.c.l.b16 %v667
      %v709 = vunpack.c.l.b16 %v668
      %v710 = vunpack.c.l.b16 %v669
      %v711 = vunpack.c.l.b16 %v670
      %v712 = vunpack.c.l.b16 %v671
      %v713 = vunpack.c.l.b16 %v672
      %v714 = vunpack.c.l.b16 %v673
      %v715 = vunpack.c.l.b16 %v674
      %v716 = vunpack.c.l.b16 %v675
      %v717 = vunpack.c.l.b16 %v676
      %v718 = vpack.c.b16 %v703, %v702
      %v719 = vpack.c.b16 %v705, %v704
      %v720 = vpack.c.b16 %v707, %v706
      %v721 = vpack.c.b16 %v709, %v708
      %v722 = vpack.c.b16 %v711, %v710
      %v723 = vpack.c.b16 %v713, %v712
      %v724 = vpack.c.b16 %v715, %v714
      %v725 = vpack.c.b16 %v717, %v716
      %734 = vmatprep.subr.bf16.mxu0 0
      %735 = vmatpush1.bf16.msra.mxu0 %v718
      %736 = vmatprep.subr.bf16.mxu0 0
      %737 = vmatpush1.bf16.msra.mxu0 %v719
      %738 = vmatprep.subr.bf16.mxu0 0
      %739 = vmatpush1.bf16.msra.mxu0 %v720
      %740 = vmatprep.subr.bf16.mxu0 0
      %741 = vmatpush1.bf16.msra.mxu0 %v721
      %742 = vmatprep.subr.bf16.mxu0 0
      %743 = vmatpush1.bf16.msra.mxu0 %v722
      %744 = vmatprep.subr.bf16.mxu0 0
      %745 = vmatpush1.bf16.msra.mxu0 %v723
      %746 = vmatprep.subr.bf16.mxu0 0
      %747 = vmatpush1.bf16.msra.mxu0 %v724
      %748 = vmatprep.subr.bf16.mxu0 0
      %749 = vmatpush1.bf16.msra.mxu0 %v725
      %750 = vmatprep.subr.bf16.mxu0 0
      %751 = vmatpush1.bf16.msra.mxu0 0
      %752 = vmatprep.subr.bf16.mxu0 0
      %753 = vmatpush1.bf16.msra.mxu0 0
      %754 = vmatprep.subr.bf16.mxu0 0
      %755 = vmatpush1.bf16.msra.mxu0 0
      %756 = vmatprep.subr.bf16.mxu0 0
      %757 = vmatpush1.bf16.msra.mxu0 0
      %758 = vmatprep.subr.bf16.mxu0 0
      %759 = vmatpush1.bf16.msra.mxu0 0
      %760 = vmatprep.subr.bf16.mxu0 0
      %761 = vmatpush1.bf16.msra.mxu0 0
      %762 = vmatprep.subr.bf16.mxu0 0
      %763 = vmatpush1.bf16.msra.mxu0 0
      %764 = vmatprep.subr.bf16.mxu0 0
      %765 = vmatpush1.bf16.msra.mxu0 0
      %766 = vmatprep.mubr.bf16.mxu0 0
      %767 = vmatmul.mubr.bf16.gmra.mrb[0].mxu0 %v677
      %v768 = vpop.f32.mrb[0].mxu0
      %v769 = vadd.f32 %v684, %v768
      %v770 = vpop.f32.mrb[0].mxu0
      %v771 = vpop.f32.mrb[0].mxu0
      %v772 = vadd.f32 %v684, %v771
      %v773 = vpop.f32.mrb[0].mxu0
      %774 = vmatprep.mubr.bf16.mxu0 0
      %775 = vmatmul.mubr.bf16.gmra.mrb[0].mxu0 %v678
      %v776 = vpop.f32.mrb[0].mxu0
      %v777 = vadd.f32 %v684, %v776
      %v778 = vpop.f32.mrb[0].mxu0
      %v779 = vpop.f32.mrb[0].mxu0
      %v780 = vpop.f32.mrb[0].mxu0
      %781 = vdwg.mxu0
      %v782 = vld [vmem:[%s3] sm:$0x1]
      %v783 = vld [vmem:[%s4] sm:$0x1]
      %vm784 = vcmask 523264
      %v785 = vsel %vm784, %v769, 0.0
      %786 = vadd.xlane.f32.xlu0 %v785
      %v787 = vpop.xlane.xlu0 %786
      %v788 = vsel %vm784, %v772, 0.0
      %789 = vadd.xlane.f32.xlu0 %v788
      %v790 = vpop.xlane.xlu0 %789
      %v791 = vsel %vm784, %v777, 0.0
      %792 = vadd.xlane.f32.xlu0 %v791
      %v793 = vpop.xlane.xlu0 %792
      %v794 = vrcp.pop 64.0
      %v795 = vmul.f32 %v787, %v794
      %v796 = vmul.f32 %v790, %v794
      %v797 = vmul.f32 %v793, %v794
      %v798 = vsub.f32 %v769, %v795
      %v799 = vsub.f32 %v772, %v796
      %v800 = vsub.f32 %v777, %v797
      %v801 = vmul.f32 %v798, %v798
      %v802 = vmul.f32 %v799, %v799
      %v803 = vmul.f32 %v800, %v800
      %v804 = vsel %vm784, %v801, 0.0
      %805 = vadd.xlane.f32.xlu0 %v804
      %v806 = vpop.xlane.xlu0 %805
      %v807 = vsel %vm784, %v802, 0.0
      %808 = vadd.xlane.f32.xlu0 %v807
      %v809 = vpop.xlane.xlu0 %808
      %v810 = vsel %vm784, %v803, 0.0
      %811 = vadd.xlane.f32.xlu0 %v810
      %v812 = vpop.xlane.xlu0 %811
      %v813 = vmul.f32 %v806, %v794
      %v814 = vmul.f32 %v809, %v794
      %v815 = vmul.f32 %v812, %v794
      %v816 = vadd.f32 %v813, 1e-05
      %v817 = vadd.f32 %v814, 1e-05
      %v818 = vadd.f32 %v815, 1e-05
      %v819 = vrsqrt.pop %v816
      %v820 = vrsqrt.pop %v817
      %v821 = vrsqrt.pop %v818
      %v822 = vmul.f32 %v798, %v819
      %v823 = vmul.f32 %v799, %v820
      %v824 = vmul.f32 %v800, %v821
      %v826 = vlaneseq
      %v827 = vshrl.u32 %v826, 7
      %v828 = vsub.s32 0, %v827
      %v829 = vrot.slane %v782, %v828
      %v831 = vmul.f32 %v822, %v829
      %v832 = vmul.f32 %v823, %v829
      %v833 = vmul.f32 %v824, %v829
      %v835 = vlaneseq
      %v836 = vshrl.u32 %v835, 7
      %v837 = vsub.s32 0, %v836
      %v838 = vrot.slane %v783, %v837
      %v840 = vadd.f32 %v831, %v838
      %v841 = vadd.f32 %v832, %v838
      %v842 = vadd.f32 %v833, %v838
      %v843 = vlaneseq
      %v844 = vshrl.u32 %v843, 7
      %v845 = vadd.s32 %v844, 8
      %v846 = vadd.s32 %v844, 16
      %v847 = vlaneseq
      %v848 = vand.u32 %v847, 127
      %vm849 = vcmp.lt.s32.totalorder %v844, 8
      %vm850 = vcmp.lt.s32.totalorder %v845, 8
      %vm851 = vcmp.lt.s32.totalorder %v846, 8
      %vm852 = vcmp.ge.s32.totalorder %v848, 8
      %vm853 = vmand %vm849, %vm852
      %vm854 = vmand %vm850, %vm852
      %vm855 = vmand %vm851, %vm852
      %v856 = vld [vmem:[%s5] sm:$0x1]
      %v857 = vld [vmem:[%s6] sm:$0x1]
      %v858 = vsel %vm784, %v840, 0.0
      %859 = vadd.xlane.f32.xlu0 %v858
      %v860 = vpop.xlane.xlu0 %859
      %v861 = vsel %vm784, %v841, 0.0
      %862 = vadd.xlane.f32.xlu0 %v861
      %v863 = vpop.xlane.xlu0 %862
      %v864 = vsel %vm784, %v842, 0.0
      %865 = vadd.xlane.f32.xlu0 %v864
      %v866 = vpop.xlane.xlu0 %865
      %v867 = vmul.f32 %v860, %v794
      %v868 = vmul.f32 %v863, %v794
      %v869 = vmul.f32 %v866, %v794
      %v870 = vsub.f32 %v840, %v867
      %v871 = vsub.f32 %v841, %v868
      %v872 = vsub.f32 %v842, %v869
      %v873 = vmul.f32 %v870, %v870
      %v874 = vmul.f32 %v871, %v871
      %v875 = vmul.f32 %v872, %v872
      %v876 = vsel %vm784, %v873, 0.0
      %877 = vadd.xlane.f32.xlu0 %v876
      %v878 = vpop.xlane.xlu0 %877
      %v879 = vsel %vm784, %v874, 0.0
      %880 = vadd.xlane.f32.xlu0 %v879
      %v881 = vpop.xlane.xlu0 %880
      %v882 = vsel %vm784, %v875, 0.0
      %883 = vadd.xlane.f32.xlu0 %v882
      %v884 = vpop.xlane.xlu0 %883
      %v885 = vmul.f32 %v878, %v794
      %v886 = vmul.f32 %v881, %v794
      %v887 = vmul.f32 %v884, %v794
      %v888 = vadd.f32 %v885, 1e-05
      %v889 = vadd.f32 %v886, 1e-05
      %v890 = vadd.f32 %v887, 1e-05
      %v891 = vrsqrt.pop %v888
      %v892 = vrsqrt.pop %v889
      %v893 = vrsqrt.pop %v890
      %v894 = vmul.f32 %v870, %v891
      %v895 = vmul.f32 %v871, %v892
      %v896 = vmul.f32 %v872, %v893
      %v898 = vlaneseq
      %v899 = vshrl.u32 %v898, 7
      %v900 = vsub.s32 0, %v899
      %v901 = vrot.slane %v856, %v900
      %v903 = vmul.f32 %v894, %v901
      %v904 = vmul.f32 %v895, %v901
      %v905 = vmul.f32 %v896, %v901
      %v907 = vlaneseq
      %v908 = vshrl.u32 %v907, 7
      %v909 = vsub.s32 0, %v908
      %v910 = vrot.slane %v857, %v909
      %v912 = vadd.f32 %v903, %v910
      %v913 = vadd.f32 %v904, %v910
      %v914 = vadd.f32 %v905, %v910
      %v915 = vld [vmem:[%s7] sm:$0xf]
      %v916 = vld [vmem:[%s7 + $0x4] sm:$0xf]
      %v917 = vld [vmem:[%s7 + $0x8] sm:$0xf]
      %v918 = vld [vmem:[%s7 + $0xc] sm:$0xf]
      %v919 = vld [vmem:[%s7 + $0x10] sm:$0xf]
      %v920 = vld [vmem:[%s7 + $0x14] sm:$0xf]
      %v921 = vld [vmem:[%s7 + $0x18] sm:$0xf]
      %v922 = vld [vmem:[%s7 + $0x1c] sm:$0xf]
      %v923 = vpack.c.bf16 %v913, %v912
      %v924 = vpack.c.bf16 %v914, %v914
      %v925 = vld [vmem:[%s8] sm:$0x1]
      %v927 = vlaneseq
      %v928 = vshrl.u32 %v927, 7
      %v929 = vsub.s32 0, %v928
      %v930 = vrot.slane %v925, %v929
      %v940 = vunpack.c.l.b16 %v915
      %v941 = vunpack.c.l.b16 %v916
      %v942 = vunpack.c.l.b16 %v917
      %v943 = vunpack.c.l.b16 %v918
      %v944 = vunpack.c.l.b16 %v919
      %v945 = vunpack.c.l.b16 %v920
      %v946 = vunpack.c.l.b16 %v921
      %v947 = vunpack.c.l.b16 %v922
      %v948 = vpack.c.b16 %v941, %v940
      %v949 = vpack.c.b16 %v943, %v942
      %v950 = vpack.c.b16 %v945, %v944
      %v951 = vpack.c.b16 %v947, %v946
      %v957 = vsel %vm784, %v923, 0
      %v960 = vsel %vm784, %v924, 0
      %962 = vmatprep.subr.bf16.mxu0 0
      %963 = vmatpush1.bf16.msra.mxu0 %v948
      %964 = vmatprep.subr.bf16.mxu0 0
      %965 = vmatpush1.bf16.msra.mxu0 %v949
      %966 = vmatprep.subr.bf16.mxu0 0
      %967 = vmatpush1.bf16.msra.mxu0 %v950
      %968 = vmatprep.subr.bf16.mxu0 0
      %969 = vmatpush1.bf16.msra.mxu0 %v951
      %970 = vmatprep.subr.bf16.mxu0 0
      %971 = vmatpush1.bf16.msra.mxu0 0
      %972 = vmatprep.subr.bf16.mxu0 0
      %973 = vmatpush1.bf16.msra.mxu0 0
      %974 = vmatprep.subr.bf16.mxu0 0
      %975 = vmatpush1.bf16.msra.mxu0 0
      %976 = vmatprep.subr.bf16.mxu0 0
      %977 = vmatpush1.bf16.msra.mxu0 0
      %978 = vmatprep.subr.bf16.mxu0 0
      %979 = vmatpush1.bf16.msra.mxu0 0
      %980 = vmatprep.subr.bf16.mxu0 0
      %981 = vmatpush1.bf16.msra.mxu0 0
      %982 = vmatprep.subr.bf16.mxu0 0
      %983 = vmatpush1.bf16.msra.mxu0 0
      %984 = vmatprep.subr.bf16.mxu0 0
      %985 = vmatpush1.bf16.msra.mxu0 0
      %986 = vmatprep.subr.bf16.mxu0 0
      %987 = vmatpush1.bf16.msra.mxu0 0
      %988 = vmatprep.subr.bf16.mxu0 0
      %989 = vmatpush1.bf16.msra.mxu0 0
      %990 = vmatprep.subr.bf16.mxu0 0
      %991 = vmatpush1.bf16.msra.mxu0 0
      %992 = vmatprep.subr.bf16.mxu0 0
      %993 = vmatpush1.bf16.msra.mxu0 0
      %994 = vmatprep.mubr.bf16.mxu0 0
      %995 = vmatmul.mubr.bf16.gmra.mrb[0].mxu0 %v957
      %v996 = vpop.f32.mrb[0].mxu0
      %v997 = vadd.f32 %v930, %v996
      %v998 = vpop.f32.mrb[0].mxu0
      %v999 = vpop.f32.mrb[0].mxu0
      %v1000 = vadd.f32 %v930, %v999
      %v1001 = vpop.f32.mrb[0].mxu0
      %1002 = vmatprep.mubr.bf16.mxu0 0
      %1003 = vmatmul.mubr.bf16.gmra.mrb[0].mxu0 %v960
      %v1004 = vpop.f32.mrb[0].mxu0
      %v1005 = vadd.f32 %v930, %v1004
      %v1006 = vpop.f32.mrb[0].mxu0
      %v1007 = vpop.f32.mrb[0].mxu0
      %v1008 = vpop.f32.mrb[0].mxu0
      %1009 = vdwg.mxu0
      %v1010 = vld [vmem:[%s9] sm:$0xf]
      %v1011 = vld [vmem:[%s9 + $0x4] sm:$0xf]
      %v1012 = vld [vmem:[%s9 + $0x8] sm:$0xf]
      %v1013 = vld [vmem:[%s9 + $0xc] sm:$0xf]
      %v1014 = vld [vmem:[%s9 + $0x10] sm:$0xf]
      %v1015 = vld [vmem:[%s9 + $0x14] sm:$0xf]
      %v1016 = vld [vmem:[%s9 + $0x18] sm:$0xf]
      %v1017 = vld [vmem:[%s9 + $0x1c] sm:$0xf]
      %v1018 = vld [vmem:[%s10] sm:$0x1]
      %v1020 = vlaneseq
      %v1021 = vshrl.u32 %v1020, 7
      %v1022 = vsub.s32 0, %v1021
      %v1023 = vrot.slane %v1018, %v1022
      %v1033 = vunpack.c.l.b16 %v1010
      %v1034 = vunpack.c.l.b16 %v1011
      %v1035 = vunpack.c.l.b16 %v1012
      %v1036 = vunpack.c.l.b16 %v1013
      %v1037 = vunpack.c.l.b16 %v1014
      %v1038 = vunpack.c.l.b16 %v1015
      %v1039 = vunpack.c.l.b16 %v1016
      %v1040 = vunpack.c.l.b16 %v1017
      %v1041 = vpack.c.b16 %v1034, %v1033
      %v1042 = vpack.c.b16 %v1036, %v1035
      %v1043 = vpack.c.b16 %v1038, %v1037
      %v1044 = vpack.c.b16 %v1040, %v1039
      %1049 = vmatprep.subr.bf16.mxu0 0
      %1050 = vmatpush1.bf16.msra.mxu0 %v1041
      %1051 = vmatprep.subr.bf16.mxu0 0
      %1052 = vmatpush1.bf16.msra.mxu0 %v1042
      %1053 = vmatprep.subr.bf16.mxu0 0
      %1054 = vmatpush1.bf16.msra.mxu0 %v1043
      %1055 = vmatprep.subr.bf16.mxu0 0
      %1056 = vmatpush1.bf16.msra.mxu0 %v1044
      %1057 = vmatprep.subr.bf16.mxu0 0
      %1058 = vmatpush1.bf16.msra.mxu0 0
      %1059 = vmatprep.subr.bf16.mxu0 0
      %1060 = vmatpush1.bf16.msra.mxu0 0
      %1061 = vmatprep.subr.bf16.mxu0 0
      %1062 = vmatpush1.bf16.msra.mxu0 0
      %1063 = vmatprep.subr.bf16.mxu0 0
      %1064 = vmatpush1.bf16.msra.mxu0 0
      %1065 = vmatprep.subr.bf16.mxu0 0
      %1066 = vmatpush1.bf16.msra.mxu0 0
      %1067 = vmatprep.subr.bf16.mxu0 0
      %1068 = vmatpush1.bf16.msra.mxu0 0
      %1069 = vmatprep.subr.bf16.mxu0 0
      %1070 = vmatpush1.bf16.msra.mxu0 0
      %1071 = vmatprep.subr.bf16.mxu0 0
      %1072 = vmatpush1.bf16.msra.mxu0 0
      %1073 = vmatprep.subr.bf16.mxu0 0
      %1074 = vmatpush1.bf16.msra.mxu0 0
      %1075 = vmatprep.subr.bf16.mxu0 0
      %1076 = vmatpush1.bf16.msra.mxu0 0
      %1077 = vmatprep.subr.bf16.mxu0 0
      %1078 = vmatpush1.bf16.msra.mxu0 0
      %1079 = vmatprep.subr.bf16.mxu0 0
      %1080 = vmatpush1.bf16.msra.mxu0 0
      %1081 = vmatprep.mubr.bf16.mxu0 0
      %1082 = vmatmul.mubr.bf16.gmra.mrb[0].mxu0 %v957
      %v1083 = vpop.f32.mrb[0].mxu0
      %v1084 = vadd.f32 %v1023, %v1083
      %v1085 = vpop.f32.mrb[0].mxu0
      %v1086 = vpop.f32.mrb[0].mxu0
      %v1087 = vadd.f32 %v1023, %v1086
      %v1088 = vpop.f32.mrb[0].mxu0
      %1089 = vmatprep.mubr.bf16.mxu0 0
      %1090 = vmatmul.mubr.bf16.gmra.mrb[0].mxu0 %v960
      %v1091 = vpop.f32.mrb[0].mxu0
      %v1092 = vadd.f32 %v1023, %v1091
      %v1093 = vpop.f32.mrb[0].mxu0
      %v1094 = vpop.f32.mrb[0].mxu0
      %v1095 = vpop.f32.mrb[0].mxu0
      %1096 = vdwg.mxu0
      %v1097 = vld [vmem:[%s11] sm:$0xf]
      %v1098 = vld [vmem:[%s11 + $0x4] sm:$0xf]
      %v1099 = vld [vmem:[%s11 + $0x8] sm:$0xf]
      %v1100 = vld [vmem:[%s11 + $0xc] sm:$0xf]
      %v1101 = vld [vmem:[%s11 + $0x10] sm:$0xf]
      %v1102 = vld [vmem:[%s11 + $0x14] sm:$0xf]
      %v1103 = vld [vmem:[%s11 + $0x18] sm:$0xf]
      %v1104 = vld [vmem:[%s11 + $0x1c] sm:$0xf]
      %v1105 = vld [vmem:[%s12] sm:$0x1]
      %v1107 = vlaneseq
      %v1108 = vshrl.u32 %v1107, 7
      %v1109 = vsub.s32 0, %v1108
      %v1110 = vrot.slane %v1105, %v1109
      %v1120 = vunpack.c.l.b16 %v1097
      %v1121 = vunpack.c.l.b16 %v1098
      %v1122 = vunpack.c.l.b16 %v1099
      %v1123 = vunpack.c.l.b16 %v1100
      %v1124 = vunpack.c.l.b16 %v1101
      %v1125 = vunpack.c.l.b16 %v1102
      %v1126 = vunpack.c.l.b16 %v1103
      %v1127 = vunpack.c.l.b16 %v1104
      %v1128 = vpack.c.b16 %v1121, %v1120
      %v1129 = vpack.c.b16 %v1123, %v1122
      %v1130 = vpack.c.b16 %v1125, %v1124
      %v1131 = vpack.c.b16 %v1127, %v1126
      %1136 = vmatprep.subr.bf16.mxu0 0
      %1137 = vmatpush1.bf16.msra.mxu0 %v1128
      %1138 = vmatprep.subr.bf16.mxu0 0
      %1139 = vmatpush1.bf16.msra.mxu0 %v1129
      %1140 = vmatprep.subr.bf16.mxu0 0
      %1141 = vmatpush1.bf16.msra.mxu0 %v1130
      %1142 = vmatprep.subr.bf16.mxu0 0
      %1143 = vmatpush1.bf16.msra.mxu0 %v1131
      %1144 = vmatprep.subr.bf16.mxu0 0
      %1145 = vmatpush1.bf16.msra.mxu0 0
      %1146 = vmatprep.subr.bf16.mxu0 0
      %1147 = vmatpush1.bf16.msra.mxu0 0
      %1148 = vmatprep.subr.bf16.mxu0 0
      %1149 = vmatpush1.bf16.msra.mxu0 0
      %1150 = vmatprep.subr.bf16.mxu0 0
      %1151 = vmatpush1.bf16.msra.mxu0 0
      %1152 = vmatprep.subr.bf16.mxu0 0
      %1153 = vmatpush1.bf16.msra.mxu0 0
      %1154 = vmatprep.subr.bf16.mxu0 0
      %1155 = vmatpush1.bf16.msra.mxu0 0
      %1156 = vmatprep.subr.bf16.mxu0 0
      %1157 = vmatpush1.bf16.msra.mxu0 0
      %1158 = vmatprep.subr.bf16.mxu0 0
      %1159 = vmatpush1.bf16.msra.mxu0 0
      %1160 = vmatprep.subr.bf16.mxu0 0
      %1161 = vmatpush1.bf16.msra.mxu0 0
      %1162 = vmatprep.subr.bf16.mxu0 0
      %1163 = vmatpush1.bf16.msra.mxu0 0
      %1164 = vmatprep.subr.bf16.mxu0 0
      %1165 = vmatpush1.bf16.msra.mxu0 0
      %1166 = vmatprep.subr.bf16.mxu0 0
      %1167 = vmatpush1.bf16.msra.mxu0 0
      %1168 = vmatprep.mubr.bf16.mxu0 0
      %1169 = vmatmul.mubr.bf16.gmra.mrb[0].mxu0 %v957
      %v1170 = vpop.f32.mrb[0].mxu0
      %v1171 = vadd.f32 %v1110, %v1170
      %v1172 = vpop.f32.mrb[0].mxu0
      %v1173 = vpop.f32.mrb[0].mxu0
      %v1174 = vadd.f32 %v1110, %v1173
      %v1175 = vpop.f32.mrb[0].mxu0
      %1176 = vmatprep.mubr.bf16.mxu0 0
      %1177 = vmatmul.mubr.bf16.gmra.mrb[0].mxu0 %v960
      %v1178 = vpop.f32.mrb[0].mxu0
      %v1179 = vadd.f32 %v1110, %v1178
      %v1180 = vpop.f32.mrb[0].mxu0
      %v1181 = vpop.f32.mrb[0].mxu0
      %v1182 = vpop.f32.mrb[0].mxu0
      %1183 = vdwg.mxu0
      %v1184 = vpack.c.bf16 %v1000, %v997
      %v1185 = vpack.c.bf16 %v1005, %v1005
      %v1186 = vpack.c.bf16 %v1087, %v1084
      %v1187 = vpack.c.bf16 %v1092, %v1092
      %vm1188 = vcmask 130048
      %v1190 = vsel %vm1188, %v1184, 0
      %v1193 = vsel %vm1188, %v1185, 0
      %v1196 = vsel %vm1188, %v1186, 0
      %v1199 = vsel %vm1188, %v1187, 0
      %1201 = vmatprep.subr.bf16.mxu0 0
      %1202 = vmatpush1.bf16.xpose.msra.mxu0 %v1196
      %1203 = vmatprep.subr.bf16.mxu0 0
      %1204 = vmatpush1.bf16.xpose.msra.mxu0 %v1199
      %1205 = vmatprep.subr.bf16.mxu0 0
      %1206 = vmatpush1.bf16.xpose.msra.mxu0 0
      %1207 = vmatprep.subr.bf16.mxu0 0
      %1208 = vmatpush1.bf16.xpose.msra.mxu0 0
      %1209 = vmatprep.subr.bf16.mxu0 0
      %1210 = vmatpush1.bf16.xpose.msra.mxu0 0
      %1211 = vmatprep.subr.bf16.mxu0 0
      %1212 = vmatpush1.bf16.xpose.msra.mxu0 0
      %1213 = vmatprep.subr.bf16.mxu0 0
      %1214 = vmatpush1.bf16.xpose.msra.mxu0 0
      %1215 = vmatprep.subr.bf16.mxu0 0
      %1216 = vmatpush1.bf16.xpose.msra.mxu0 0
      %1217 = vmatprep.subr.bf16.mxu0 0
      %1218 = vmatpush1.bf16.xpose.msra.mxu0 0
      %1219 = vmatprep.subr.bf16.mxu0 0
      %1220 = vmatpush1.bf16.xpose.msra.mxu0 0
      %1221 = vmatprep.subr.bf16.mxu0 0
      %1222 = vmatpush1.bf16.xpose.msra.mxu0 0
      %1223 = vmatprep.subr.bf16.mxu0 0
      %1224 = vmatpush1.bf16.xpose.msra.mxu0 0
      %1225 = vmatprep.subr.bf16.mxu0 0
      %1226 = vmatpush1.bf16.xpose.msra.mxu0 0
      %1227 = vmatprep.subr.bf16.mxu0 0
      %1228 = vmatpush1.bf16.xpose.msra.mxu0 0
      %1229 = vmatprep.subr.bf16.mxu0 0
      %1230 = vmatpush1.bf16.xpose.msra.mxu0 0
      %1231 = vmatprep.subr.bf16.mxu0 0
      %1232 = vmatpush1.bf16.xpose.msra.mxu0 0
      %1233 = vmatprep.mubr.bf16.mxu0 0
      %1234 = vmatmul.mubr.bf16.gmra.mrb[0].mxu0 %v1190
      %v1235 = vpop.f32.mrb[0].mxu0
      %v1236 = vadd.f32 0.0, %v1235
      %v1237 = vpop.f32.mrb[0].mxu0
      %v1238 = vpop.f32.mrb[0].mxu0
      %v1239 = vadd.f32 0.0, %v1238
      %v1240 = vpop.f32.mrb[0].mxu0
      %1241 = vmatprep.mubr.bf16.mxu0 0
      %1242 = vmatmul.mubr.bf16.gmra.mrb[0].mxu0 %v1193
      %v1243 = vpop.f32.mrb[0].mxu0
      %v1244 = vadd.f32 0.0, %v1243
      %v1245 = vpop.f32.mrb[0].mxu0
      %v1246 = vpop.f32.mrb[0].mxu0
      %v1247 = vpop.f32.mrb[0].mxu0
      %1248 = vdwg.mxu0
      %v1249 = vmul.f32 %v1236, 0.125
      %v1250 = vmul.f32 %v1239, 0.125
      %v1251 = vmul.f32 %v1244, 0.125
      %v1252 = vsel %vm853, -1e+30, %v1249
      %v1253 = vsel %vm854, -1e+30, %v1250
      %v1254 = vsel %vm855, -1e+30, %v1251
      %vm1255 = vcmask 195584
      %v1256 = vsel %vm1255, %v1252, -inf
      %1257 = vmax.xlane.f32.xlu0 %v1256
      %v1258 = vpop.xlane.xlu0 %1257
      %v1259 = vsel %vm1255, %v1253, -inf
      %1260 = vmax.xlane.f32.xlu0 %v1259
      %v1261 = vpop.xlane.xlu0 %1260
      %v1262 = vsel %vm1255, %v1254, -inf
      %1263 = vmax.xlane.f32.xlu0 %v1262
      %v1264 = vpop.xlane.xlu0 %1263
      %v1265 = vsub.f32 %v1252, %v1258
      %v1266 = vsub.f32 %v1253, %v1261
      %v1267 = vsub.f32 %v1254, %v1264
      %v1268 = vmul.f32 %v1265, 1.442695
      %v1269 = vpow.pop %v1268
      %v1270 = vmul.f32 %v1266, 1.442695
      %v1271 = vpow.pop %v1270
      %v1272 = vmul.f32 %v1267, 1.442695
      %v1273 = vpow.pop %v1272
      %v1274 = vsel %vm1255, %v1269, 0.0
      %1275 = vadd.xlane.f32.xlu0 %v1274
      %v1276 = vpop.xlane.xlu0 %1275
      %v1277 = vsel %vm1255, %v1271, 0.0
      %1278 = vadd.xlane.f32.xlu0 %v1277
      %v1279 = vpop.xlane.xlu0 %1278
      %v1280 = vsel %vm1255, %v1273, 0.0
      %1281 = vadd.xlane.f32.xlu0 %v1280
      %v1282 = vpop.xlane.xlu0 %1281
      %v1283 = vpack.c.bf16 %v1271, %v1269
      %v1284 = vpack.c.bf16 %v1273, %v1273
      %v1285 = vpack.c.bf16 %v1174, %v1171
      %v1286 = vpack.c.bf16 %v1179, %v1179
      %v1288 = vsel %vm1255, %v1283, 0
      %v1291 = vsel %vm1255, %v1284, 0
      %vm1293 = vcmask 1043456
      %v1295 = vsel %vm1293, %v1286, 0
      %1297 = vmatprep.subr.bf16.mxu0 0
      %1298 = vmatpush1.bf16.msra.mxu0 %v1285
      %1299 = vmatprep.subr.bf16.mxu0 0
      %1300 = vmatpush1.bf16.msra.mxu0 %v1295
      %1301 = vmatprep.subr.bf16.mxu0 0
      %1302 = vmatpush1.bf16.msra.mxu0 0
      %1303 = vmatprep.subr.bf16.mxu0 0
      %1304 = vmatpush1.bf16.msra.mxu0 0
      %1305 = vmatprep.subr.bf16.mxu0 0
      %1306 = vmatpush1.bf16.msra.mxu0 0
      %1307 = vmatprep.subr.bf16.mxu0 0
      %1308 = vmatpush1.bf16.msra.mxu0 0
      %1309 = vmatprep.subr.bf16.mxu0 0
      %1310 = vmatpush1.bf16.msra.mxu0 0
      %1311 = vmatprep.subr.bf16.mxu0 0
      %1312 = vmatpush1.bf16.msra.mxu0 0
      %1313 = vmatprep.subr.bf16.mxu0 0
      %1314 = vmatpush1.bf16.msra.mxu0 0
      %1315 = vmatprep.subr.bf16.mxu0 0
      %1316 = vmatpush1.bf16.msra.mxu0 0
      %1317 = vmatprep.subr.bf16.mxu0 0
      %1318 = vmatpush1.bf16.msra.mxu0 0
      %1319 = vmatprep.subr.bf16.mxu0 0
      %1320 = vmatpush1.bf16.msra.mxu0 0
      %1321 = vmatprep.subr.bf16.mxu0 0
      %1322 = vmatpush1.bf16.msra.mxu0 0
      %1323 = vmatprep.subr.bf16.mxu0 0
      %1324 = vmatpush1.bf16.msra.mxu0 0
      %1325 = vmatprep.subr.bf16.mxu0 0
      %1326 = vmatpush1.bf16.msra.mxu0 0
      %1327 = vmatprep.subr.bf16.mxu0 0
      %1328 = vmatpush1.bf16.msra.mxu0 0
      %1329 = vmatprep.mubr.bf16.mxu0 0
      %1330 = vmatmul.mubr.bf16.gmra.mrb[0].mxu0 %v1288
      %v1331 = vpop.f32.mrb[0].mxu0
      %v1332 = vadd.f32 0.0, %v1331
      %v1333 = vpop.f32.mrb[0].mxu0
      %v1334 = vpop.f32.mrb[0].mxu0
      %v1335 = vadd.f32 0.0, %v1334
      %v1336 = vpop.f32.mrb[0].mxu0
      %1337 = vmatprep.mubr.bf16.mxu0 0
      %1338 = vmatmul.mubr.bf16.gmra.mrb[0].mxu0 %v1291
      %v1339 = vpop.f32.mrb[0].mxu0
      %v1340 = vadd.f32 0.0, %v1339
      %v1341 = vpop.f32.mrb[0].mxu0
      %v1342 = vpop.f32.mrb[0].mxu0
      %v1343 = vpop.f32.mrb[0].mxu0
      %1344 = vdwg.mxu0
      %v1345 = vrcp.pop %v1276
      %v1346 = vmul.f32 %v1332, %v1345
      %v1347 = vrcp.pop %v1279
      %v1348 = vmul.f32 %v1335, %v1347
      %v1349 = vrcp.pop %v1282
      %v1350 = vmul.f32 %v1340, %v1349
      %v1351 = vld [vmem:[%s13] sm:$0xf]
      %v1352 = vld [vmem:[%s13 + $0x4] sm:$0xf]
      %v1353 = vpack.c.bf16 %v1348, %v1346
      %v1354 = vpack.c.bf16 %v1350, %v1350
      %s1355 = scalar_lea.vmem %s7, 32
      %v1356 = vld [vmem:[%s1355] sm:$0xf]
      %v1357 = vld [vmem:[%s1355 + $0x4] sm:$0xf]
      %v1358 = vld [vmem:[%s1355 + $0x8] sm:$0xf]
      %v1359 = vld [vmem:[%s1355 + $0xc] sm:$0xf]
      %v1360 = vld [vmem:[%s1355 + $0x10] sm:$0xf]
      %v1361 = vld [vmem:[%s1355 + $0x14] sm:$0xf]
      %v1362 = vld [vmem:[%s1355 + $0x18] sm:$0xf]
      %v1363 = vld [vmem:[%s1355 + $0x1c] sm:$0xf]
      %s1364 = scalar_lea.vmem %s8, 1
      %v1365 = vld [vmem:[%s1364] sm:$0x1]
      %v1367 = vlaneseq
      %v1368 = vshrl.u32 %v1367, 7
      %v1369 = vsub.s32 0, %v1368
      %v1370 = vrot.slane %v1365, %v1369
      %v1380 = vunpack.c.l.b16 %v1356
      %v1381 = vunpack.c.l.b16 %v1357
      %v1382 = vunpack.c.l.b16 %v1358
      %v1383 = vunpack.c.l.b16 %v1359
      %v1384 = vunpack.c.l.b16 %v1360
      %v1385 = vunpack.c.l.b16 %v1361
      %v1386 = vunpack.c.l.b16 %v1362
      %v1387 = vunpack.c.l.b16 %v1363
      %v1388 = vpack.c.b16 %v1381, %v1380
      %v1389 = vpack.c.b16 %v1383, %v1382
      %v1390 = vpack.c.b16 %v1385, %v1384
      %v1391 = vpack.c.b16 %v1387, %v1386
      %1396 = vmatprep.subr.bf16.mxu0 0
      %1397 = vmatpush1.bf16.msra.mxu0 %v1388
      %1398 = vmatprep.subr.bf16.mxu0 0
      %1399 = vmatpush1.bf16.msra.mxu0 %v1389
      %1400 = vmatprep.subr.bf16.mxu0 0
      %1401 = vmatpush1.bf16.msra.mxu0 %v1390
      %1402 = vmatprep.subr.bf16.mxu0 0
      %1403 = vmatpush1.bf16.msra.mxu0 %v1391
      %1404 = vmatprep.subr.bf16.mxu0 0
      %1405 = vmatpush1.bf16.msra.mxu0 0
      %1406 = vmatprep.subr.bf16.mxu0 0
      %1407 = vmatpush1.bf16.msra.mxu0 0
      %1408 = vmatprep.subr.bf16.mxu0 0
      %1409 = vmatpush1.bf16.msra.mxu0 0
      %1410 = vmatprep.subr.bf16.mxu0 0
      %1411 = vmatpush1.bf16.msra.mxu0 0
      %1412 = vmatprep.subr.bf16.mxu0 0
      %1413 = vmatpush1.bf16.msra.mxu0 0
      %1414 = vmatprep.subr.bf16.mxu0 0
      %1415 = vmatpush1.bf16.msra.mxu0 0
      %1416 = vmatprep.subr.bf16.mxu0 0
      %1417 = vmatpush1.bf16.msra.mxu0 0
      %1418 = vmatprep.subr.bf16.mxu0 0
      %1419 = vmatpush1.bf16.msra.mxu0 0
      %1420 = vmatprep.subr.bf16.mxu0 0
      %1421 = vmatpush1.bf16.msra.mxu0 0
      %1422 = vmatprep.subr.bf16.mxu0 0
      %1423 = vmatpush1.bf16.msra.mxu0 0
      %1424 = vmatprep.subr.bf16.mxu0 0
      %1425 = vmatpush1.bf16.msra.mxu0 0
      %1426 = vmatprep.subr.bf16.mxu0 0
      %1427 = vmatpush1.bf16.msra.mxu0 0
      %1428 = vmatprep.mubr.bf16.mxu0 0
      %1429 = vmatmul.mubr.bf16.gmra.mrb[0].mxu0 %v957
      %v1430 = vpop.f32.mrb[0].mxu0
      %v1431 = vadd.f32 %v1370, %v1430
      %v1432 = vpop.f32.mrb[0].mxu0
      %v1433 = vpop.f32.mrb[0].mxu0
      %v1434 = vadd.f32 %v1370, %v1433
      %v1435 = vpop.f32.mrb[0].mxu0
      %1436 = vmatprep.mubr.bf16.mxu0 0
      %1437 = vmatmul.mubr.bf16.gmra.mrb[0].mxu0 %v960
      %v1438 = vpop.f32.mrb[0].mxu0
      %v1439 = vadd.f32 %v1370, %v1438
      %v1440 = vpop.f32.mrb[0].mxu0
      %v1441 = vpop.f32.mrb[0].mxu0
      %v1442 = vpop.f32.mrb[0].mxu0
      %1443 = vdwg.mxu0
      %s1444 = scalar_lea.vmem %s9, 32
      %v1445 = vld [vmem:[%s1444] sm:$0xf]
      %v1446 = vld [vmem:[%s1444 + $0x4] sm:$0xf]
      %v1447 = vld [vmem:[%s1444 + $0x8] sm:$0xf]
      %v1448 = vld [vmem:[%s1444 + $0xc] sm:$0xf]
      %v1449 = vld [vmem:[%s1444 + $0x10] sm:$0xf]
      %v1450 = vld [vmem:[%s1444 + $0x14] sm:$0xf]
      %v1451 = vld [vmem:[%s1444 + $0x18] sm:$0xf]
      %v1452 = vld [vmem:[%s1444 + $0x1c] sm:$0xf]
      %s1453 = scalar_lea.vmem %s10, 1
      %v1454 = vld [vmem:[%s1453] sm:$0x1]
      %v1456 = vlaneseq
      %v1457 = vshrl.u32 %v1456, 7
      %v1458 = vsub.s32 0, %v1457
      %v1459 = vrot.slane %v1454, %v1458
      %v1469 = vunpack.c.l.b16 %v1445
      %v1470 = vunpack.c.l.b16 %v1446
      %v1471 = vunpack.c.l.b16 %v1447
      %v1472 = vunpack.c.l.b16 %v1448
      %v1473 = vunpack.c.l.b16 %v1449
      %v1474 = vunpack.c.l.b16 %v1450
      %v1475 = vunpack.c.l.b16 %v1451
      %v1476 = vunpack.c.l.b16 %v1452
      %v1477 = vpack.c.b16 %v1470, %v1469
      %v1478 = vpack.c.b16 %v1472, %v1471
      %v1479 = vpack.c.b16 %v1474, %v1473
      %v1480 = vpack.c.b16 %v1476, %v1475
      %1485 = vmatprep.subr.bf16.mxu0 0
      %1486 = vmatpush1.bf16.msra.mxu0 %v1477
      %1487 = vmatprep.subr.bf16.mxu0 0
      %1488 = vmatpush1.bf16.msra.mxu0 %v1478
      %1489 = vmatprep.subr.bf16.mxu0 0
      %1490 = vmatpush1.bf16.msra.mxu0 %v1479
      %1491 = vmatprep.subr.bf16.mxu0 0
      %1492 = vmatpush1.bf16.msra.mxu0 %v1480
      %1493 = vmatprep.subr.bf16.mxu0 0
      %1494 = vmatpush1.bf16.msra.mxu0 0
      %1495 = vmatprep.subr.bf16.mxu0 0
      %1496 = vmatpush1.bf16.msra.mxu0 0
      %1497 = vmatprep.subr.bf16.mxu0 0
      %1498 = vmatpush1.bf16.msra.mxu0 0
      %1499 = vmatprep.subr.bf16.mxu0 0
      %1500 = vmatpush1.bf16.msra.mxu0 0
      %1501 = vmatprep.subr.bf16.mxu0 0
      %1502 = vmatpush1.bf16.msra.mxu0 0
      %1503 = vmatprep.subr.bf16.mxu0 0
      %1504 = vmatpush1.bf16.msra.mxu0 0
      %1505 = vmatprep.subr.bf16.mxu0 0
      %1506 = vmatpush1.bf16.msra.mxu0 0
      %1507 = vmatprep.subr.bf16.mxu0 0
      %1508 = vmatpush1.bf16.msra.mxu0 0
      %1509 = vmatprep.subr.bf16.mxu0 0
      %1510 = vmatpush1.bf16.msra.mxu0 0
      %1511 = vmatprep.subr.bf16.mxu0 0
      %1512 = vmatpush1.bf16.msra.mxu0 0
      %1513 = vmatprep.subr.bf16.mxu0 0
      %1514 = vmatpush1.bf16.msra.mxu0 0
      %1515 = vmatprep.subr.bf16.mxu0 0
      %1516 = vmatpush1.bf16.msra.mxu0 0
      %1517 = vmatprep.mubr.bf16.mxu0 0
      %1518 = vmatmul.mubr.bf16.gmra.mrb[0].mxu0 %v957
      %v1519 = vpop.f32.mrb[0].mxu0
      %v1520 = vadd.f32 %v1459, %v1519
      %v1521 = vpop.f32.mrb[0].mxu0
      %v1522 = vpop.f32.mrb[0].mxu0
      %v1523 = vadd.f32 %v1459, %v1522
      %v1524 = vpop.f32.mrb[0].mxu0
      %1525 = vmatprep.mubr.bf16.mxu0 0
      %1526 = vmatmul.mubr.bf16.gmra.mrb[0].mxu0 %v960
      %v1527 = vpop.f32.mrb[0].mxu0
      %v1528 = vadd.f32 %v1459, %v1527
      %v1529 = vpop.f32.mrb[0].mxu0
      %v1530 = vpop.f32.mrb[0].mxu0
      %v1531 = vpop.f32.mrb[0].mxu0
      %1532 = vdwg.mxu0
      %s1533 = scalar_lea.vmem %s11, 32
      %v1534 = vld [vmem:[%s1533] sm:$0xf]
      %v1535 = vld [vmem:[%s1533 + $0x4] sm:$0xf]
      %v1536 = vld [vmem:[%s1533 + $0x8] sm:$0xf]
      %v1537 = vld [vmem:[%s1533 + $0xc] sm:$0xf]
      %v1538 = vld [vmem:[%s1533 + $0x10] sm:$0xf]
      %v1539 = vld [vmem:[%s1533 + $0x14] sm:$0xf]
      %v1540 = vld [vmem:[%s1533 + $0x18] sm:$0xf]
      %v1541 = vld [vmem:[%s1533 + $0x1c] sm:$0xf]
      %s1542 = scalar_lea.vmem %s12, 1
      %v1543 = vld [vmem:[%s1542] sm:$0x1]
      %v1545 = vlaneseq
      %v1546 = vshrl.u32 %v1545, 7
      %v1547 = vsub.s32 0, %v1546
      %v1548 = vrot.slane %v1543, %v1547
      %v1558 = vunpack.c.l.b16 %v1534
      %v1559 = vunpack.c.l.b16 %v1535
      %v1560 = vunpack.c.l.b16 %v1536
      %v1561 = vunpack.c.l.b16 %v1537
      %v1562 = vunpack.c.l.b16 %v1538
      %v1563 = vunpack.c.l.b16 %v1539
      %v1564 = vunpack.c.l.b16 %v1540
      %v1565 = vunpack.c.l.b16 %v1541
      %v1566 = vpack.c.b16 %v1559, %v1558
      %v1567 = vpack.c.b16 %v1561, %v1560
      %v1568 = vpack.c.b16 %v1563, %v1562
      %v1569 = vpack.c.b16 %v1565, %v1564
      %1574 = vmatprep.subr.bf16.mxu0 0
      %1575 = vmatpush1.bf16.msra.mxu0 %v1566
      %1576 = vmatprep.subr.bf16.mxu0 0
      %1577 = vmatpush1.bf16.msra.mxu0 %v1567
      %1578 = vmatprep.subr.bf16.mxu0 0
      %1579 = vmatpush1.bf16.msra.mxu0 %v1568
      %1580 = vmatprep.subr.bf16.mxu0 0
      %1581 = vmatpush1.bf16.msra.mxu0 %v1569
      %1582 = vmatprep.subr.bf16.mxu0 0
      %1583 = vmatpush1.bf16.msra.mxu0 0
      %1584 = vmatprep.subr.bf16.mxu0 0
      %1585 = vmatpush1.bf16.msra.mxu0 0
      %1586 = vmatprep.subr.bf16.mxu0 0
      %1587 = vmatpush1.bf16.msra.mxu0 0
      %1588 = vmatprep.subr.bf16.mxu0 0
      %1589 = vmatpush1.bf16.msra.mxu0 0
      %1590 = vmatprep.subr.bf16.mxu0 0
      %1591 = vmatpush1.bf16.msra.mxu0 0
      %1592 = vmatprep.subr.bf16.mxu0 0
      %1593 = vmatpush1.bf16.msra.mxu0 0
      %1594 = vmatprep.subr.bf16.mxu0 0
      %1595 = vmatpush1.bf16.msra.mxu0 0
      %1596 = vmatprep.subr.bf16.mxu0 0
      %1597 = vmatpush1.bf16.msra.mxu0 0
      %1598 = vmatprep.subr.bf16.mxu0 0
      %1599 = vmatpush1.bf16.msra.mxu0 0
      %1600 = vmatprep.subr.bf16.mxu0 0
      %1601 = vmatpush1.bf16.msra.mxu0 0
      %1602 = vmatprep.subr.bf16.mxu0 0
      %1603 = vmatpush1.bf16.msra.mxu0 0
      %1604 = vmatprep.subr.bf16.mxu0 0
      %1605 = vmatpush1.bf16.msra.mxu0 0
      %1606 = vmatprep.mubr.bf16.mxu0 0
      %1607 = vmatmul.mubr.bf16.gmra.mrb[0].mxu0 %v957
      %v1608 = vpop.f32.mrb[0].mxu0
      %v1609 = vadd.f32 %v1548, %v1608
      %v1610 = vpop.f32.mrb[0].mxu0
      %v1611 = vpop.f32.mrb[0].mxu0
      %v1612 = vadd.f32 %v1548, %v1611
      %v1613 = vpop.f32.mrb[0].mxu0
      %1614 = vmatprep.mubr.bf16.mxu0 0
      %1615 = vmatmul.mubr.bf16.gmra.mrb[0].mxu0 %v960
      %v1616 = vpop.f32.mrb[0].mxu0
      %v1617 = vadd.f32 %v1548, %v1616
      %v1618 = vpop.f32.mrb[0].mxu0
      %v1619 = vpop.f32.mrb[0].mxu0
      %v1620 = vpop.f32.mrb[0].mxu0
      %1621 = vdwg.mxu0
      %v1622 = vpack.c.bf16 %v1434, %v1431
      %v1623 = vpack.c.bf16 %v1439, %v1439
      %v1624 = vpack.c.bf16 %v1523, %v1520
      %v1625 = vpack.c.bf16 %v1528, %v1528
      %v1627 = vsel %vm1188, %v1622, 0
      %v1630 = vsel %vm1188, %v1623, 0
      %v1633 = vsel %vm1188, %v1624, 0
      %v1636 = vsel %vm1188, %v1625, 0
      %1638 = vmatprep.subr.bf16.mxu0 0
      %1639 = vmatpush1.bf16.xpose.msra.mxu0 %v1633
      %1640 = vmatprep.subr.bf16.mxu0 0
      %1641 = vmatpush1.bf16.xpose.msra.mxu0 %v1636
      %1642 = vmatprep.subr.bf16.mxu0 0
      %1643 = vmatpush1.bf16.xpose.msra.mxu0 0
      %1644 = vmatprep.subr.bf16.mxu0 0
      %1645 = vmatpush1.bf16.xpose.msra.mxu0 0
      %1646 = vmatprep.subr.bf16.mxu0 0
      %1647 = vmatpush1.bf16.xpose.msra.mxu0 0
      %1648 = vmatprep.subr.bf16.mxu0 0
      %1649 = vmatpush1.bf16.xpose.msra.mxu0 0
      %1650 = vmatprep.subr.bf16.mxu0 0
      %1651 = vmatpush1.bf16.xpose.msra.mxu0 0
      %1652 = vmatprep.subr.bf16.mxu0 0
      %1653 = vmatpush1.bf16.xpose.msra.mxu0 0
      %1654 = vmatprep.subr.bf16.mxu0 0
      %1655 = vmatpush1.bf16.xpose.msra.mxu0 0
      %1656 = vmatprep.subr.bf16.mxu0 0
      %1657 = vmatpush1.bf16.xpose.msra.mxu0 0
      %1658 = vmatprep.subr.bf16.mxu0 0
      %1659 = vmatpush1.bf16.xpose.msra.mxu0 0
      %1660 = vmatprep.subr.bf16.mxu0 0
      %1661 = vmatpush1.bf16.xpose.msra.mxu0 0
      %1662 = vmatprep.subr.bf16.mxu0 0
      %1663 = vmatpush1.bf16.xpose.msra.mxu0 0
      %1664 = vmatprep.subr.bf16.mxu0 0
      %1665 = vmatpush1.bf16.xpose.msra.mxu0 0
      %1666 = vmatprep.subr.bf16.mxu0 0
      %1667 = vmatpush1.bf16.xpose.msra.mxu0 0
      %1668 = vmatprep.subr.bf16.mxu0 0
      %1669 = vmatpush1.bf16.xpose.msra.mxu0 0
      %1670 = vmatprep.mubr.bf16.mxu0 0
      %1671 = vmatmul.mubr.bf16.gmra.mrb[0].mxu0 %v1627
      %v1672 = vpop.f32.mrb[0].mxu0
      %v1673 = vadd.f32 0.0, %v1672
      %v1674 = vpop.f32.mrb[0].mxu0
      %v1675 = vpop.f32.mrb[0].mxu0
      %v1676 = vadd.f32 0.0, %v1675
      %v1677 = vpop.f32.mrb[0].mxu0
      %1678 = vmatprep.mubr.bf16.mxu0 0
      %1679 = vmatmul.mubr.bf16.gmra.mrb[0].mxu0 %v1630
      %v1680 = vpop.f32.mrb[0].mxu0
      %v1681 = vadd.f32 0.0, %v1680
      %v1682 = vpop.f32.mrb[0].mxu0
      %v1683 = vpop.f32.mrb[0].mxu0
      %v1684 = vpop.f32.mrb[0].mxu0
      %1685 = vdwg.mxu0
      %v1686 = vmul.f32 %v1673, 0.125
      %v1687 = vmul.f32 %v1676, 0.125
      %v1688 = vmul.f32 %v1681, 0.125
      %v1689 = vsel %vm853, -1e+30, %v1686
      %v1690 = vsel %vm854, -1e+30, %v1687
      %v1691 = vsel %vm855, -1e+30, %v1688
      %v1692 = vsel %vm1255, %v1689, -inf
      %1693 = vmax.xlane.f32.xlu0 %v1692
      %v1694 = vpop.xlane.xlu0 %1693
      %v1695 = vsel %vm1255, %v1690, -inf
      %1696 = vmax.xlane.f32.xlu0 %v1695
      %v1697 = vpop.xlane.xlu0 %1696
      %v1698 = vsel %vm1255, %v1691, -inf
      %1699 = vmax.xlane.f32.xlu0 %v1698
      %v1700 = vpop.xlane.xlu0 %1699
      %v1701 = vsub.f32 %v1689, %v1694
      %v1702 = vsub.f32 %v1690, %v1697
      %v1703 = vsub.f32 %v1691, %v1700
      %v1704 = vmul.f32 %v1701, 1.442695
      %v1705 = vpow.pop %v1704
      %v1706 = vmul.f32 %v1702, 1.442695
      %v1707 = vpow.pop %v1706
      %v1708 = vmul.f32 %v1703, 1.442695
      %v1709 = vpow.pop %v1708
      %v1710 = vsel %vm1255, %v1705, 0.0
      %1711 = vadd.xlane.f32.xlu0 %v1710
      %v1712 = vpop.xlane.xlu0 %1711
      %v1713 = vsel %vm1255, %v1707, 0.0
      %1714 = vadd.xlane.f32.xlu0 %v1713
      %v1715 = vpop.xlane.xlu0 %1714
      %v1716 = vsel %vm1255, %v1709, 0.0
      %1717 = vadd.xlane.f32.xlu0 %v1716
      %v1718 = vpop.xlane.xlu0 %1717
      %v1719 = vpack.c.bf16 %v1707, %v1705
      %v1720 = vpack.c.bf16 %v1709, %v1709
      %v1721 = vpack.c.bf16 %v1612, %v1609
      %v1722 = vpack.c.bf16 %v1617, %v1617
      %v1724 = vsel %vm1255, %v1719, 0
      %v1727 = vsel %vm1255, %v1720, 0
      %v1730 = vsel %vm1293, %v1722, 0
      %1732 = vmatprep.subr.bf16.mxu0 0
      %1733 = vmatpush1.bf16.msra.mxu0 %v1721
      %1734 = vmatprep.subr.bf16.mxu0 0
      %1735 = vmatpush1.bf16.msra.mxu0 %v1730
      %1736 = vmatprep.subr.bf16.mxu0 0
      %1737 = vmatpush1.bf16.msra.mxu0 0
      %1738 = vmatprep.subr.bf16.mxu0 0
      %1739 = vmatpush1.bf16.msra.mxu0 0
      %1740 = vmatprep.subr.bf16.mxu0 0
      %1741 = vmatpush1.bf16.msra.mxu0 0
      %1742 = vmatprep.subr.bf16.mxu0 0
      %1743 = vmatpush1.bf16.msra.mxu0 0
      %1744 = vmatprep.subr.bf16.mxu0 0
      %1745 = vmatpush1.bf16.msra.mxu0 0
      %1746 = vmatprep.subr.bf16.mxu0 0
      %1747 = vmatpush1.bf16.msra.mxu0 0
      %1748 = vmatprep.subr.bf16.mxu0 0
      %1749 = vmatpush1.bf16.msra.mxu0 0
      %1750 = vmatprep.subr.bf16.mxu0 0
      %1751 = vmatpush1.bf16.msra.mxu0 0
      %1752 = vmatprep.subr.bf16.mxu0 0
      %1753 = vmatpush1.bf16.msra.mxu0 0
      %1754 = vmatprep.subr.bf16.mxu0 0
      %1755 = vmatpush1.bf16.msra.mxu0 0
      %1756 = vmatprep.subr.bf16.mxu0 0
      %1757 = vmatpush1.bf16.msra.mxu0 0
      %1758 = vmatprep.subr.bf16.mxu0 0
      %1759 = vmatpush1.bf16.msra.mxu0 0
      %1760 = vmatprep.subr.bf16.mxu0 0
      %1761 = vmatpush1.bf16.msra.mxu0 0
      %1762 = vmatprep.subr.bf16.mxu0 0
      %1763 = vmatpush1.bf16.msra.mxu0 0
      %1764 = vmatprep.mubr.bf16.mxu0 0
      %1765 = vmatmul.mubr.bf16.gmra.mrb[0].mxu0 %v1724
      %v1766 = vpop.f32.mrb[0].mxu0
      %v1767 = vadd.f32 0.0, %v1766
      %v1768 = vpop.f32.mrb[0].mxu0
      %v1769 = vpop.f32.mrb[0].mxu0
      %v1770 = vadd.f32 0.0, %v1769
      %v1771 = vpop.f32.mrb[0].mxu0
      %1772 = vmatprep.mubr.bf16.mxu0 0
      %1773 = vmatmul.mubr.bf16.gmra.mrb[0].mxu0 %v1727
      %v1774 = vpop.f32.mrb[0].mxu0
      %v1775 = vadd.f32 0.0, %v1774
      %v1776 = vpop.f32.mrb[0].mxu0
      %v1777 = vpop.f32.mrb[0].mxu0
      %v1778 = vpop.f32.mrb[0].mxu0
      %1779 = vdwg.mxu0
      %v1780 = vrcp.pop %v1712
      %v1781 = vmul.f32 %v1767, %v1780
      %v1782 = vrcp.pop %v1715
      %v1783 = vmul.f32 %v1770, %v1782
      %v1784 = vrcp.pop %v1718
      %v1785 = vmul.f32 %v1775, %v1784
      %s1786 = scalar_lea.vmem %s13, 8
      %v1787 = vld [vmem:[%s1786] sm:$0xf]
      %v1788 = vld [vmem:[%s1786 + $0x4] sm:$0xf]
      %v1789 = vpack.c.bf16 %v1783, %v1781
      %v1790 = vpack.c.bf16 %v1785, %v1785
      %v1793 = vunpack.c.l.b16 %v1787
      %v1794 = vunpack.c.l.b16 %v1788
      %v1795 = vpack.c.b16 %v1794, %v1793
      %v1798 = vsel %vm1188, %v1789, 0
      %v1801 = vsel %vm1188, %v1790, 0
      %1803 = vmatprep.subr.bf16.mxu0 0
      %1804 = vmatpush1.bf16.msra.mxu0 %v1795
      %1805 = vmatprep.subr.bf16.mxu0 0
      %1806 = vmatpush1.bf16.msra.mxu0 0
      %1807 = vmatprep.subr.bf16.mxu0 0
      %1808 = vmatpush1.bf16.msra.mxu0 0
      %1809 = vmatprep.subr.bf16.mxu0 0
      %1810 = vmatpush1.bf16.msra.mxu0 0
      %1811 = vmatprep.subr.bf16.mxu0 0
      %1812 = vmatpush1.bf16.msra.mxu0 0
      %1813 = vmatprep.subr.bf16.mxu0 0
      %1814 = vmatpush1.bf16.msra.mxu0 0
      %1815 = vmatprep.subr.bf16.mxu0 0
      %1816 = vmatpush1.bf16.msra.mxu0 0
      %1817 = vmatprep.subr.bf16.mxu0 0
      %1818 = vmatpush1.bf16.msra.mxu0 0
      %1819 = vmatprep.subr.bf16.mxu0 0
      %1820 = vmatpush1.bf16.msra.mxu0 0
      %1821 = vmatprep.subr.bf16.mxu0 0
      %1822 = vmatpush1.bf16.msra.mxu0 0
      %1823 = vmatprep.subr.bf16.mxu0 0
      %1824 = vmatpush1.bf16.msra.mxu0 0
      %1825 = vmatprep.subr.bf16.mxu0 0
      %1826 = vmatpush1.bf16.msra.mxu0 0
      %1827 = vmatprep.subr.bf16.mxu0 0
      %1828 = vmatpush1.bf16.msra.mxu0 0
      %1829 = vmatprep.subr.bf16.mxu0 0
      %1830 = vmatpush1.bf16.msra.mxu0 0
      %1831 = vmatprep.subr.bf16.mxu0 0
      %1832 = vmatpush1.bf16.msra.mxu0 0
      %1833 = vmatprep.subr.bf16.mxu0 0
      %1834 = vmatpush1.bf16.msra.mxu0 0
      %1835 = vmatprep.mubr.bf16.mxu0 0
      %1836 = vmatmul.mubr.bf16.gmra.mrb[0].mxu0 %v1798
      %v1837 = vpop.f32.mrb[0].mxu0
      %v1838 = vadd.f32 0.0, %v1837
      %v1839 = vpop.f32.mrb[0].mxu0
      %v1840 = vpop.f32.mrb[0].mxu0
      %v1841 = vadd.f32 0.0, %v1840
      %v1842 = vpop.f32.mrb[0].mxu0
      %1843 = vmatprep.mubr.bf16.mxu0 0
      %1844 = vmatmul.mubr.bf16.gmra.mrb[0].mxu0 %v1801
      %v1845 = vpop.f32.mrb[0].mxu0
      %v1846 = vadd.f32 0.0, %v1845
      %v1847 = vpop.f32.mrb[0].mxu0
      %v1848 = vpop.f32.mrb[0].mxu0
      %v1849 = vpop.f32.mrb[0].mxu0
      %1850 = vdwg.mxu0
      %v1853 = vunpack.c.l.b16 %v1351
      %v1854 = vunpack.c.l.b16 %v1352
      %v1855 = vpack.c.b16 %v1854, %v1853
      %v1858 = vsel %vm1188, %v1353, 0
      %v1861 = vsel %vm1188, %v1354, 0
      %1863 = vmatprep.subr.bf16.mxu0 0
      %1864 = vmatpush1.bf16.msra.mxu0 %v1855
      %1865 = vmatprep.subr.bf16.mxu0 0
      %1866 = vmatpush1.bf16.msra.mxu0 0
      %1867 = vmatprep.subr.bf16.mxu0 0
      %1868 = vmatpush1.bf16.msra.mxu0 0
      %1869 = vmatprep.subr.bf16.mxu0 0
      %1870 = vmatpush1.bf16.msra.mxu0 0
      %1871 = vmatprep.subr.bf16.mxu0 0
      %1872 = vmatpush1.bf16.msra.mxu0 0
      %1873 = vmatprep.subr.bf16.mxu0 0
      %1874 = vmatpush1.bf16.msra.mxu0 0
      %1875 = vmatprep.subr.bf16.mxu0 0
      %1876 = vmatpush1.bf16.msra.mxu0 0
      %1877 = vmatprep.subr.bf16.mxu0 0
      %1878 = vmatpush1.bf16.msra.mxu0 0
      %1879 = vmatprep.subr.bf16.mxu0 0
      %1880 = vmatpush1.bf16.msra.mxu0 0
      %1881 = vmatprep.subr.bf16.mxu0 0
      %1882 = vmatpush1.bf16.msra.mxu0 0
      %1883 = vmatprep.subr.bf16.mxu0 0
      %1884 = vmatpush1.bf16.msra.mxu0 0
      %1885 = vmatprep.subr.bf16.mxu0 0
      %1886 = vmatpush1.bf16.msra.mxu0 0
      %1887 = vmatprep.subr.bf16.mxu0 0
      %1888 = vmatpush1.bf16.msra.mxu0 0
      %1889 = vmatprep.subr.bf16.mxu0 0
      %1890 = vmatpush1.bf16.msra.mxu0 0
      %1891 = vmatprep.subr.bf16.mxu0 0
      %1892 = vmatpush1.bf16.msra.mxu0 0
      %1893 = vmatprep.subr.bf16.mxu0 0
      %1894 = vmatpush1.bf16.msra.mxu0 0
      %1895 = vmatprep.mubr.bf16.mxu0 0
      %1896 = vmatmul.mubr.bf16.gmra.mrb[0].mxu0 %v1858
      %v1897 = vpop.f32.mrb[0].mxu0
      %v1898 = vadd.f32 %v1838, %v1897
      %v1899 = vpop.f32.mrb[0].mxu0
      %v1900 = vpop.f32.mrb[0].mxu0
      %v1901 = vadd.f32 %v1841, %v1900
      %v1902 = vpop.f32.mrb[0].mxu0
      %1903 = vmatprep.mubr.bf16.mxu0 0
      %1904 = vmatmul.mubr.bf16.gmra.mrb[0].mxu0 %v1861
      %v1905 = vpop.f32.mrb[0].mxu0
      %v1906 = vadd.f32 %v1846, %v1905
      %v1907 = vpop.f32.mrb[0].mxu0
      %v1908 = vpop.f32.mrb[0].mxu0
      %v1909 = vpop.f32.mrb[0].mxu0
      %1910 = vdwg.mxu0
      %s1911 = scalar_lea.vmem %s7, 64
      %v1912 = vld [vmem:[%s1911] sm:$0xf]
      %v1913 = vld [vmem:[%s1911 + $0x4] sm:$0xf]
      %v1914 = vld [vmem:[%s1911 + $0x8] sm:$0xf]
      %v1915 = vld [vmem:[%s1911 + $0xc] sm:$0xf]
      %v1916 = vld [vmem:[%s1911 + $0x10] sm:$0xf]
      %v1917 = vld [vmem:[%s1911 + $0x14] sm:$0xf]
      %v1918 = vld [vmem:[%s1911 + $0x18] sm:$0xf]
      %v1919 = vld [vmem:[%s1911 + $0x1c] sm:$0xf]
      %s1920 = scalar_lea.vmem %s8, 2
      %v1921 = vld [vmem:[%s1920] sm:$0x1]
      %v1923 = vlaneseq
      %v1924 = vshrl.u32 %v1923, 7
      %v1925 = vsub.s32 0, %v1924
      %v1926 = vrot.slane %v1921, %v1925
      %v1936 = vunpack.c.l.b16 %v1912
      %v1937 = vunpack.c.l.b16 %v1913
      %v1938 = vunpack.c.l.b16 %v1914
      %v1939 = vunpack.c.l.b16 %v1915
      %v1940 = vunpack.c.l.b16 %v1916
      %v1941 = vunpack.c.l.b16 %v1917
      %v1942 = vunpack.c.l.b16 %v1918
      %v1943 = vunpack.c.l.b16 %v1919
      %v1944 = vpack.c.b16 %v1937, %v1936
      %v1945 = vpack.c.b16 %v1939, %v1938
      %v1946 = vpack.c.b16 %v1941, %v1940
      %v1947 = vpack.c.b16 %v1943, %v1942
      %1952 = vmatprep.subr.bf16.mxu0 0
      %1953 = vmatpush1.bf16.msra.mxu0 %v1944
      %1954 = vmatprep.subr.bf16.mxu0 0
      %1955 = vmatpush1.bf16.msra.mxu0 %v1945
      %1956 = vmatprep.subr.bf16.mxu0 0
      %1957 = vmatpush1.bf16.msra.mxu0 %v1946
      %1958 = vmatprep.subr.bf16.mxu0 0
      %1959 = vmatpush1.bf16.msra.mxu0 %v1947
      %1960 = vmatprep.subr.bf16.mxu0 0
      %1961 = vmatpush1.bf16.msra.mxu0 0
      %1962 = vmatprep.subr.bf16.mxu0 0
      %1963 = vmatpush1.bf16.msra.mxu0 0
      %1964 = vmatprep.subr.bf16.mxu0 0
      %1965 = vmatpush1.bf16.msra.mxu0 0
      %1966 = vmatprep.subr.bf16.mxu0 0
      %1967 = vmatpush1.bf16.msra.mxu0 0
      %1968 = vmatprep.subr.bf16.mxu0 0
      %1969 = vmatpush1.bf16.msra.mxu0 0
      %1970 = vmatprep.subr.bf16.mxu0 0
      %1971 = vmatpush1.bf16.msra.mxu0 0
      %1972 = vmatprep.subr.bf16.mxu0 0
      %1973 = vmatpush1.bf16.msra.mxu0 0
      %1974 = vmatprep.subr.bf16.mxu0 0
      %1975 = vmatpush1.bf16.msra.mxu0 0
      %1976 = vmatprep.subr.bf16.mxu0 0
      %1977 = vmatpush1.bf16.msra.mxu0 0
      %1978 = vmatprep.subr.bf16.mxu0 0
      %1979 = vmatpush1.bf16.msra.mxu0 0
      %1980 = vmatprep.subr.bf16.mxu0 0
      %1981 = vmatpush1.bf16.msra.mxu0 0
      %1982 = vmatprep.subr.bf16.mxu0 0
      %1983 = vmatpush1.bf16.msra.mxu0 0
      %1984 = vmatprep.mubr.bf16.mxu0 0
      %1985 = vmatmul.mubr.bf16.gmra.mrb[0].mxu0 %v957
      %v1986 = vpop.f32.mrb[0].mxu0
      %v1987 = vadd.f32 %v1926, %v1986
      %v1988 = vpop.f32.mrb[0].mxu0
      %v1989 = vpop.f32.mrb[0].mxu0
      %v1990 = vadd.f32 %v1926, %v1989
      %v1991 = vpop.f32.mrb[0].mxu0
      %1992 = vmatprep.mubr.bf16.mxu0 0
      %1993 = vmatmul.mubr.bf16.gmra.mrb[0].mxu0 %v960
      %v1994 = vpop.f32.mrb[0].mxu0
      %v1995 = vadd.f32 %v1926, %v1994
      %v1996 = vpop.f32.mrb[0].mxu0
      %v1997 = vpop.f32.mrb[0].mxu0
      %v1998 = vpop.f32.mrb[0].mxu0
      %1999 = vdwg.mxu0
      %s2000 = scalar_lea.vmem %s9, 64
      %v2001 = vld [vmem:[%s2000] sm:$0xf]
      %v2002 = vld [vmem:[%s2000 + $0x4] sm:$0xf]
      %v2003 = vld [vmem:[%s2000 + $0x8] sm:$0xf]
      %v2004 = vld [vmem:[%s2000 + $0xc] sm:$0xf]
      %v2005 = vld [vmem:[%s2000 + $0x10] sm:$0xf]
      %v2006 = vld [vmem:[%s2000 + $0x14] sm:$0xf]
      %v2007 = vld [vmem:[%s2000 + $0x18] sm:$0xf]
      %v2008 = vld [vmem:[%s2000 + $0x1c] sm:$0xf]
      %s2009 = scalar_lea.vmem %s10, 2
      %v2010 = vld [vmem:[%s2009] sm:$0x1]
      %v2012 = vlaneseq
      %v2013 = vshrl.u32 %v2012, 7
      %v2014 = vsub.s32 0, %v2013
      %v2015 = vrot.slane %v2010, %v2014
      %v2025 = vunpack.c.l.b16 %v2001
      %v2026 = vunpack.c.l.b16 %v2002
      %v2027 = vunpack.c.l.b16 %v2003
      %v2028 = vunpack.c.l.b16 %v2004
      %v2029 = vunpack.c.l.b16 %v2005
      %v2030 = vunpack.c.l.b16 %v2006
      %v2031 = vunpack.c.l.b16 %v2007
      %v2032 = vunpack.c.l.b16 %v2008
      %v2033 = vpack.c.b16 %v2026, %v2025
      %v2034 = vpack.c.b16 %v2028, %v2027
      %v2035 = vpack.c.b16 %v2030, %v2029
      %v2036 = vpack.c.b16 %v2032, %v2031
      %2041 = vmatprep.subr.bf16.mxu0 0
      %2042 = vmatpush1.bf16.msra.mxu0 %v2033
      %2043 = vmatprep.subr.bf16.mxu0 0
      %2044 = vmatpush1.bf16.msra.mxu0 %v2034
      %2045 = vmatprep.subr.bf16.mxu0 0
      %2046 = vmatpush1.bf16.msra.mxu0 %v2035
      %2047 = vmatprep.subr.bf16.mxu0 0
      %2048 = vmatpush1.bf16.msra.mxu0 %v2036
      %2049 = vmatprep.subr.bf16.mxu0 0
      %2050 = vmatpush1.bf16.msra.mxu0 0
      %2051 = vmatprep.subr.bf16.mxu0 0
      %2052 = vmatpush1.bf16.msra.mxu0 0
      %2053 = vmatprep.subr.bf16.mxu0 0
      %2054 = vmatpush1.bf16.msra.mxu0 0
      %2055 = vmatprep.subr.bf16.mxu0 0
      %2056 = vmatpush1.bf16.msra.mxu0 0
      %2057 = vmatprep.subr.bf16.mxu0 0
      %2058 = vmatpush1.bf16.msra.mxu0 0
      %2059 = vmatprep.subr.bf16.mxu0 0
      %2060 = vmatpush1.bf16.msra.mxu0 0
      %2061 = vmatprep.subr.bf16.mxu0 0
      %2062 = vmatpush1.bf16.msra.mxu0 0
      %2063 = vmatprep.subr.bf16.mxu0 0
      %2064 = vmatpush1.bf16.msra.mxu0 0
      %2065 = vmatprep.subr.bf16.mxu0 0
      %2066 = vmatpush1.bf16.msra.mxu0 0
      %2067 = vmatprep.subr.bf16.mxu0 0
      %2068 = vmatpush1.bf16.msra.mxu0 0
      %2069 = vmatprep.subr.bf16.mxu0 0
      %2070 = vmatpush1.bf16.msra.mxu0 0
      %2071 = vmatprep.subr.bf16.mxu0 0
      %2072 = vmatpush1.bf16.msra.mxu0 0
      %2073 = vmatprep.mubr.bf16.mxu0 0
      %2074 = vmatmul.mubr.bf16.gmra.mrb[0].mxu0 %v957
      %v2075 = vpop.f32.mrb[0].mxu0
      %v2076 = vadd.f32 %v2015, %v2075
      %v2077 = vpop.f32.mrb[0].mxu0
      %v2078 = vpop.f32.mrb[0].mxu0
      %v2079 = vadd.f32 %v2015, %v2078
      %v2080 = vpop.f32.mrb[0].mxu0
      %2081 = vmatprep.mubr.bf16.mxu0 0
      %2082 = vmatmul.mubr.bf16.gmra.mrb[0].mxu0 %v960
      %v2083 = vpop.f32.mrb[0].mxu0
      %v2084 = vadd.f32 %v2015, %v2083
      %v2085 = vpop.f32.mrb[0].mxu0
      %v2086 = vpop.f32.mrb[0].mxu0
      %v2087 = vpop.f32.mrb[0].mxu0
      %2088 = vdwg.mxu0
      %s2089 = scalar_lea.vmem %s11, 64
      %v2090 = vld [vmem:[%s2089] sm:$0xf]
      %v2091 = vld [vmem:[%s2089 + $0x4] sm:$0xf]
      %v2092 = vld [vmem:[%s2089 + $0x8] sm:$0xf]
      %v2093 = vld [vmem:[%s2089 + $0xc] sm:$0xf]
      %v2094 = vld [vmem:[%s2089 + $0x10] sm:$0xf]
      %v2095 = vld [vmem:[%s2089 + $0x14] sm:$0xf]
      %v2096 = vld [vmem:[%s2089 + $0x18] sm:$0xf]
      %v2097 = vld [vmem:[%s2089 + $0x1c] sm:$0xf]
      %s2098 = scalar_lea.vmem %s12, 2
      %v2099 = vld [vmem:[%s2098] sm:$0x1]
      %v2101 = vlaneseq
      %v2102 = vshrl.u32 %v2101, 7
      %v2103 = vsub.s32 0, %v2102
      %v2104 = vrot.slane %v2099, %v2103
      %v2114 = vunpack.c.l.b16 %v2090
      %v2115 = vunpack.c.l.b16 %v2091
      %v2116 = vunpack.c.l.b16 %v2092
      %v2117 = vunpack.c.l.b16 %v2093
      %v2118 = vunpack.c.l.b16 %v2094
      %v2119 = vunpack.c.l.b16 %v2095
      %v2120 = vunpack.c.l.b16 %v2096
      %v2121 = vunpack.c.l.b16 %v2097
      %v2122 = vpack.c.b16 %v2115, %v2114
      %v2123 = vpack.c.b16 %v2117, %v2116
      %v2124 = vpack.c.b16 %v2119, %v2118
      %v2125 = vpack.c.b16 %v2121, %v2120
      %2130 = vmatprep.subr.bf16.mxu0 0
      %2131 = vmatpush1.bf16.msra.mxu0 %v2122
      %2132 = vmatprep.subr.bf16.mxu0 0
      %2133 = vmatpush1.bf16.msra.mxu0 %v2123
      %2134 = vmatprep.subr.bf16.mxu0 0
      %2135 = vmatpush1.bf16.msra.mxu0 %v2124
      %2136 = vmatprep.subr.bf16.mxu0 0
      %2137 = vmatpush1.bf16.msra.mxu0 %v2125
      %2138 = vmatprep.subr.bf16.mxu0 0
      %2139 = vmatpush1.bf16.msra.mxu0 0
      %2140 = vmatprep.subr.bf16.mxu0 0
      %2141 = vmatpush1.bf16.msra.mxu0 0
      %2142 = vmatprep.subr.bf16.mxu0 0
      %2143 = vmatpush1.bf16.msra.mxu0 0
      %2144 = vmatprep.subr.bf16.mxu0 0
      %2145 = vmatpush1.bf16.msra.mxu0 0
      %2146 = vmatprep.subr.bf16.mxu0 0
      %2147 = vmatpush1.bf16.msra.mxu0 0
      %2148 = vmatprep.subr.bf16.mxu0 0
      %2149 = vmatpush1.bf16.msra.mxu0 0
      %2150 = vmatprep.subr.bf16.mxu0 0
      %2151 = vmatpush1.bf16.msra.mxu0 0
      %2152 = vmatprep.subr.bf16.mxu0 0
      %2153 = vmatpush1.bf16.msra.mxu0 0
      %2154 = vmatprep.subr.bf16.mxu0 0
      %2155 = vmatpush1.bf16.msra.mxu0 0
      %2156 = vmatprep.subr.bf16.mxu0 0
      %2157 = vmatpush1.bf16.msra.mxu0 0
      %2158 = vmatprep.subr.bf16.mxu0 0
      %2159 = vmatpush1.bf16.msra.mxu0 0
      %2160 = vmatprep.subr.bf16.mxu0 0
      %2161 = vmatpush1.bf16.msra.mxu0 0
      %2162 = vmatprep.mubr.bf16.mxu0 0
      %2163 = vmatmul.mubr.bf16.gmra.mrb[0].mxu0 %v957
      %v2164 = vpop.f32.mrb[0].mxu0
      %v2165 = vadd.f32 %v2104, %v2164
      %v2166 = vpop.f32.mrb[0].mxu0
      %v2167 = vpop.f32.mrb[0].mxu0
      %v2168 = vadd.f32 %v2104, %v2167
      %v2169 = vpop.f32.mrb[0].mxu0
      %2170 = vmatprep.mubr.bf16.mxu0 0
      %2171 = vmatmul.mubr.bf16.gmra.mrb[0].mxu0 %v960
      %v2172 = vpop.f32.mrb[0].mxu0
      %v2173 = vadd.f32 %v2104, %v2172
      %v2174 = vpop.f32.mrb[0].mxu0
      %v2175 = vpop.f32.mrb[0].mxu0
      %v2176 = vpop.f32.mrb[0].mxu0
      %2177 = vdwg.mxu0
      %v2178 = vpack.c.bf16 %v1990, %v1987
      %v2179 = vpack.c.bf16 %v1995, %v1995
      %v2180 = vpack.c.bf16 %v2079, %v2076
      %v2181 = vpack.c.bf16 %v2084, %v2084
      %v2183 = vsel %vm1188, %v2178, 0
      %v2186 = vsel %vm1188, %v2179, 0
      %v2189 = vsel %vm1188, %v2180, 0
      %v2192 = vsel %vm1188, %v2181, 0
      %2194 = vmatprep.subr.bf16.mxu0 0
      %2195 = vmatpush1.bf16.xpose.msra.mxu0 %v2189
      %2196 = vmatprep.subr.bf16.mxu0 0
      %2197 = vmatpush1.bf16.xpose.msra.mxu0 %v2192
      %2198 = vmatprep.subr.bf16.mxu0 0
      %2199 = vmatpush1.bf16.xpose.msra.mxu0 0
      %2200 = vmatprep.subr.bf16.mxu0 0
      %2201 = vmatpush1.bf16.xpose.msra.mxu0 0
      %2202 = vmatprep.subr.bf16.mxu0 0
      %2203 = vmatpush1.bf16.xpose.msra.mxu0 0
      %2204 = vmatprep.subr.bf16.mxu0 0
      %2205 = vmatpush1.bf16.xpose.msra.mxu0 0
      %2206 = vmatprep.subr.bf16.mxu0 0
      %2207 = vmatpush1.bf16.xpose.msra.mxu0 0
      %2208 = vmatprep.subr.bf16.mxu0 0
      %2209 = vmatpush1.bf16.xpose.msra.mxu0 0
      %2210 = vmatprep.subr.bf16.mxu0 0
      %2211 = vmatpush1.bf16.xpose.msra.mxu0 0
      %2212 = vmatprep.subr.bf16.mxu0 0
      %2213 = vmatpush1.bf16.xpose.msra.mxu0 0
      %2214 = vmatprep.subr.bf16.mxu0 0
      %2215 = vmatpush1.bf16.xpose.msra.mxu0 0
      %2216 = vmatprep.subr.bf16.mxu0 0
      %2217 = vmatpush1.bf16.xpose.msra.mxu0 0
      %2218 = vmatprep.subr.bf16.mxu0 0
      %2219 = vmatpush1.bf16.xpose.msra.mxu0 0
      %2220 = vmatprep.subr.bf16.mxu0 0
      %2221 = vmatpush1.bf16.xpose.msra.mxu0 0
      %2222 = vmatprep.subr.bf16.mxu0 0
      %2223 = vmatpush1.bf16.xpose.msra.mxu0 0
      %2224 = vmatprep.subr.bf16.mxu0 0
      %2225 = vmatpush1.bf16.xpose.msra.mxu0 0
      %2226 = vmatprep.mubr.bf16.mxu0 0
      %2227 = vmatmul.mubr.bf16.gmra.mrb[0].mxu0 %v2183
      %v2228 = vpop.f32.mrb[0].mxu0
      %v2229 = vadd.f32 0.0, %v2228
      %v2230 = vpop.f32.mrb[0].mxu0
      %v2231 = vpop.f32.mrb[0].mxu0
      %v2232 = vadd.f32 0.0, %v2231
      %v2233 = vpop.f32.mrb[0].mxu0
      %2234 = vmatprep.mubr.bf16.mxu0 0
      %2235 = vmatmul.mubr.bf16.gmra.mrb[0].mxu0 %v2186
      %v2236 = vpop.f32.mrb[0].mxu0
      %v2237 = vadd.f32 0.0, %v2236
      %v2238 = vpop.f32.mrb[0].mxu0
      %v2239 = vpop.f32.mrb[0].mxu0
      %v2240 = vpop.f32.mrb[0].mxu0
      %2241 = vdwg.mxu0
      %v2242 = vmul.f32 %v2229, 0.125
      %v2243 = vmul.f32 %v2232, 0.125
      %v2244 = vmul.f32 %v2237, 0.125
      %v2245 = vsel %vm853, -1e+30, %v2242
      %v2246 = vsel %vm854, -1e+30, %v2243
      %v2247 = vsel %vm855, -1e+30, %v2244
      %v2248 = vsel %vm1255, %v2245, -inf
      %2249 = vmax.xlane.f32.xlu0 %v2248
      %v2250 = vpop.xlane.xlu0 %2249
      %v2251 = vsel %vm1255, %v2246, -inf
      %2252 = vmax.xlane.f32.xlu0 %v2251
      %v2253 = vpop.xlane.xlu0 %2252
      %v2254 = vsel %vm1255, %v2247, -inf
      %2255 = vmax.xlane.f32.xlu0 %v2254
      %v2256 = vpop.xlane.xlu0 %2255
      %v2257 = vsub.f32 %v2245, %v2250
      %v2258 = vsub.f32 %v2246, %v2253
      %v2259 = vsub.f32 %v2247, %v2256
      %v2260 = vmul.f32 %v2257, 1.442695
      %v2261 = vpow.pop %v2260
      %v2262 = vmul.f32 %v2258, 1.442695
      %v2263 = vpow.pop %v2262
      %v2264 = vmul.f32 %v2259, 1.442695
      %v2265 = vpow.pop %v2264
      %v2266 = vsel %vm1255, %v2261, 0.0
      %2267 = vadd.xlane.f32.xlu0 %v2266
      %v2268 = vpop.xlane.xlu0 %2267
      %v2269 = vsel %vm1255, %v2263, 0.0
      %2270 = vadd.xlane.f32.xlu0 %v2269
      %v2271 = vpop.xlane.xlu0 %2270
      %v2272 = vsel %vm1255, %v2265, 0.0
      %2273 = vadd.xlane.f32.xlu0 %v2272
      %v2274 = vpop.xlane.xlu0 %2273
      %v2275 = vpack.c.bf16 %v2263, %v2261
      %v2276 = vpack.c.bf16 %v2265, %v2265
      %v2277 = vpack.c.bf16 %v2168, %v2165
      %v2278 = vpack.c.bf16 %v2173, %v2173
      %v2280 = vsel %vm1255, %v2275, 0
      %v2283 = vsel %vm1255, %v2276, 0
      %v2286 = vsel %vm1293, %v2278, 0
      %2288 = vmatprep.subr.bf16.mxu0 0
      %2289 = vmatpush1.bf16.msra.mxu0 %v2277
      %2290 = vmatprep.subr.bf16.mxu0 0
      %2291 = vmatpush1.bf16.msra.mxu0 %v2286
      %2292 = vmatprep.subr.bf16.mxu0 0
      %2293 = vmatpush1.bf16.msra.mxu0 0
      %2294 = vmatprep.subr.bf16.mxu0 0
      %2295 = vmatpush1.bf16.msra.mxu0 0
      %2296 = vmatprep.subr.bf16.mxu0 0
      %2297 = vmatpush1.bf16.msra.mxu0 0
      %2298 = vmatprep.subr.bf16.mxu0 0
      %2299 = vmatpush1.bf16.msra.mxu0 0
      %2300 = vmatprep.subr.bf16.mxu0 0
      %2301 = vmatpush1.bf16.msra.mxu0 0
      %2302 = vmatprep.subr.bf16.mxu0 0
      %2303 = vmatpush1.bf16.msra.mxu0 0
      %2304 = vmatprep.subr.bf16.mxu0 0
      %2305 = vmatpush1.bf16.msra.mxu0 0
      %2306 = vmatprep.subr.bf16.mxu0 0
      %2307 = vmatpush1.bf16.msra.mxu0 0
      %2308 = vmatprep.subr.bf16.mxu0 0
      %2309 = vmatpush1.bf16.msra.mxu0 0
      %2310 = vmatprep.subr.bf16.mxu0 0
      %2311 = vmatpush1.bf16.msra.mxu0 0
      %2312 = vmatprep.subr.bf16.mxu0 0
      %2313 = vmatpush1.bf16.msra.mxu0 0
      %2314 = vmatprep.subr.bf16.mxu0 0
      %2315 = vmatpush1.bf16.msra.mxu0 0
      %2316 = vmatprep.subr.bf16.mxu0 0
      %2317 = vmatpush1.bf16.msra.mxu0 0
      %2318 = vmatprep.subr.bf16.mxu0 0
      %2319 = vmatpush1.bf16.msra.mxu0 0
      %2320 = vmatprep.mubr.bf16.mxu0 0
      %2321 = vmatmul.mubr.bf16.gmra.mrb[0].mxu0 %v2280
      %v2322 = vpop.f32.mrb[0].mxu0
      %v2323 = vadd.f32 0.0, %v2322
      %v2324 = vpop.f32.mrb[0].mxu0
      %v2325 = vpop.f32.mrb[0].mxu0
      %v2326 = vadd.f32 0.0, %v2325
      %v2327 = vpop.f32.mrb[0].mxu0
      %2328 = vmatprep.mubr.bf16.mxu0 0
      %2329 = vmatmul.mubr.bf16.gmra.mrb[0].mxu0 %v2283
      %v2330 = vpop.f32.mrb[0].mxu0
      %v2331 = vadd.f32 0.0, %v2330
      %v2332 = vpop.f32.mrb[0].mxu0
      %v2333 = vpop.f32.mrb[0].mxu0
      %v2334 = vpop.f32.mrb[0].mxu0
      %2335 = vdwg.mxu0
      %v2336 = vrcp.pop %v2268
      %v2337 = vmul.f32 %v2323, %v2336
      %v2338 = vrcp.pop %v2271
      %v2339 = vmul.f32 %v2326, %v2338
      %v2340 = vrcp.pop %v2274
      %v2341 = vmul.f32 %v2331, %v2340
      %s2342 = scalar_lea.vmem %s13, 16
      %v2343 = vld [vmem:[%s2342] sm:$0xf]
      %v2344 = vld [vmem:[%s2342 + $0x4] sm:$0xf]
      %v2345 = vpack.c.bf16 %v2339, %v2337
      %v2346 = vpack.c.bf16 %v2341, %v2341
      %v2349 = vunpack.c.l.b16 %v2343
      %v2350 = vunpack.c.l.b16 %v2344
      %v2351 = vpack.c.b16 %v2350, %v2349
      %v2354 = vsel %vm1188, %v2345, 0
      %v2357 = vsel %vm1188, %v2346, 0
      %2359 = vmatprep.subr.bf16.mxu0 0
      %2360 = vmatpush1.bf16.msra.mxu0 %v2351
      %2361 = vmatprep.subr.bf16.mxu0 0
      %2362 = vmatpush1.bf16.msra.mxu0 0
      %2363 = vmatprep.subr.bf16.mxu0 0
      %2364 = vmatpush1.bf16.msra.mxu0 0
      %2365 = vmatprep.subr.bf16.mxu0 0
      %2366 = vmatpush1.bf16.msra.mxu0 0
      %2367 = vmatprep.subr.bf16.mxu0 0
      %2368 = vmatpush1.bf16.msra.mxu0 0
      %2369 = vmatprep.subr.bf16.mxu0 0
      %2370 = vmatpush1.bf16.msra.mxu0 0
      %2371 = vmatprep.subr.bf16.mxu0 0
      %2372 = vmatpush1.bf16.msra.mxu0 0
      %2373 = vmatprep.subr.bf16.mxu0 0
      %2374 = vmatpush1.bf16.msra.mxu0 0
      %2375 = vmatprep.subr.bf16.mxu0 0
      %2376 = vmatpush1.bf16.msra.mxu0 0
      %2377 = vmatprep.subr.bf16.mxu0 0
      %2378 = vmatpush1.bf16.msra.mxu0 0
      %2379 = vmatprep.subr.bf16.mxu0 0
      %2380 = vmatpush1.bf16.msra.mxu0 0
      %2381 = vmatprep.subr.bf16.mxu0 0
      %2382 = vmatpush1.bf16.msra.mxu0 0
      %2383 = vmatprep.subr.bf16.mxu0 0
      %2384 = vmatpush1.bf16.msra.mxu0 0
      %2385 = vmatprep.subr.bf16.mxu0 0
      %2386 = vmatpush1.bf16.msra.mxu0 0
      %2387 = vmatprep.subr.bf16.mxu0 0
      %2388 = vmatpush1.bf16.msra.mxu0 0
      %2389 = vmatprep.subr.bf16.mxu0 0
      %2390 = vmatpush1.bf16.msra.mxu0 0
      %2391 = vmatprep.mubr.bf16.mxu0 0
      %2392 = vmatmul.mubr.bf16.gmra.mrb[0].mxu0 %v2354
      %v2393 = vpop.f32.mrb[0].mxu0
      %v2394 = vadd.f32 0.0, %v2393
      %v2395 = vpop.f32.mrb[0].mxu0
      %v2396 = vpop.f32.mrb[0].mxu0
      %v2397 = vadd.f32 0.0, %v2396
      %v2398 = vpop.f32.mrb[0].mxu0
      %2399 = vmatprep.mubr.bf16.mxu0 0
      %2400 = vmatmul.mubr.bf16.gmra.mrb[0].mxu0 %v2357
      %v2401 = vpop.f32.mrb[0].mxu0
      %v2402 = vadd.f32 0.0, %v2401
      %v2403 = vpop.f32.mrb[0].mxu0
      %v2404 = vpop.f32.mrb[0].mxu0
      %v2405 = vpop.f32.mrb[0].mxu0
      %2406 = vdwg.mxu0
      %v2407 = vadd.f32 %v1898, %v2394
      %v2408 = vadd.f32 %v1901, %v2397
      %v2409 = vadd.f32 %v1906, %v2402
      %s2410 = scalar_lea.vmem %s7, 96
      %v2411 = vld [vmem:[%s2410] sm:$0xf]
      %v2412 = vld [vmem:[%s2410 + $0x4] sm:$0xf]
      %v2413 = vld [vmem:[%s2410 + $0x8] sm:$0xf]
      %v2414 = vld [vmem:[%s2410 + $0xc] sm:$0xf]
      %v2415 = vld [vmem:[%s2410 + $0x10] sm:$0xf]
      %v2416 = vld [vmem:[%s2410 + $0x14] sm:$0xf]
      %v2417 = vld [vmem:[%s2410 + $0x18] sm:$0xf]
      %v2418 = vld [vmem:[%s2410 + $0x1c] sm:$0xf]
      %s2419 = scalar_lea.vmem %s8, 3
      %v2420 = vld [vmem:[%s2419] sm:$0x1]
      %v2422 = vlaneseq
      %v2423 = vshrl.u32 %v2422, 7
      %v2424 = vsub.s32 0, %v2423
      %v2425 = vrot.slane %v2420, %v2424
      %v2435 = vunpack.c.l.b16 %v2411
      %v2436 = vunpack.c.l.b16 %v2412
      %v2437 = vunpack.c.l.b16 %v2413
      %v2438 = vunpack.c.l.b16 %v2414
      %v2439 = vunpack.c.l.b16 %v2415
      %v2440 = vunpack.c.l.b16 %v2416
      %v2441 = vunpack.c.l.b16 %v2417
      %v2442 = vunpack.c.l.b16 %v2418
      %v2443 = vpack.c.b16 %v2436, %v2435
      %v2444 = vpack.c.b16 %v2438, %v2437
      %v2445 = vpack.c.b16 %v2440, %v2439
      %v2446 = vpack.c.b16 %v2442, %v2441
      %2451 = vmatprep.subr.bf16.mxu0 0
      %2452 = vmatpush1.bf16.msra.mxu0 %v2443
      %2453 = vmatprep.subr.bf16.mxu0 0
      %2454 = vmatpush1.bf16.msra.mxu0 %v2444
      %2455 = vmatprep.subr.bf16.mxu0 0
      %2456 = vmatpush1.bf16.msra.mxu0 %v2445
      %2457 = vmatprep.subr.bf16.mxu0 0
      %2458 = vmatpush1.bf16.msra.mxu0 %v2446
      %2459 = vmatprep.subr.bf16.mxu0 0
      %2460 = vmatpush1.bf16.msra.mxu0 0
      %2461 = vmatprep.subr.bf16.mxu0 0
      %2462 = vmatpush1.bf16.msra.mxu0 0
      %2463 = vmatprep.subr.bf16.mxu0 0
      %2464 = vmatpush1.bf16.msra.mxu0 0
      %2465 = vmatprep.subr.bf16.mxu0 0
      %2466 = vmatpush1.bf16.msra.mxu0 0
      %2467 = vmatprep.subr.bf16.mxu0 0
      %2468 = vmatpush1.bf16.msra.mxu0 0
      %2469 = vmatprep.subr.bf16.mxu0 0
      %2470 = vmatpush1.bf16.msra.mxu0 0
      %2471 = vmatprep.subr.bf16.mxu0 0
      %2472 = vmatpush1.bf16.msra.mxu0 0
      %2473 = vmatprep.subr.bf16.mxu0 0
      %2474 = vmatpush1.bf16.msra.mxu0 0
      %2475 = vmatprep.subr.bf16.mxu0 0
      %2476 = vmatpush1.bf16.msra.mxu0 0
      %2477 = vmatprep.subr.bf16.mxu0 0
      %2478 = vmatpush1.bf16.msra.mxu0 0
      %2479 = vmatprep.subr.bf16.mxu0 0
      %2480 = vmatpush1.bf16.msra.mxu0 0
      %2481 = vmatprep.subr.bf16.mxu0 0
      %2482 = vmatpush1.bf16.msra.mxu0 0
      %2483 = vmatprep.mubr.bf16.mxu0 0
      %2484 = vmatmul.mubr.bf16.gmra.mrb[0].mxu0 %v957
      %v2485 = vpop.f32.mrb[0].mxu0
      %v2486 = vadd.f32 %v2425, %v2485
      %v2487 = vpop.f32.mrb[0].mxu0
      %v2488 = vpop.f32.mrb[0].mxu0
      %v2489 = vadd.f32 %v2425, %v2488
      %v2490 = vpop.f32.mrb[0].mxu0
      %2491 = vmatprep.mubr.bf16.mxu0 0
      %2492 = vmatmul.mubr.bf16.gmra.mrb[0].mxu0 %v960
      %v2493 = vpop.f32.mrb[0].mxu0
      %v2494 = vadd.f32 %v2425, %v2493
      %v2495 = vpop.f32.mrb[0].mxu0
      %v2496 = vpop.f32.mrb[0].mxu0
      %v2497 = vpop.f32.mrb[0].mxu0
      %2498 = vdwg.mxu0
      %s2499 = scalar_lea.vmem %s9, 96
      %v2500 = vld [vmem:[%s2499] sm:$0xf]
      %v2501 = vld [vmem:[%s2499 + $0x4] sm:$0xf]
      %v2502 = vld [vmem:[%s2499 + $0x8] sm:$0xf]
      %v2503 = vld [vmem:[%s2499 + $0xc] sm:$0xf]
      %v2504 = vld [vmem:[%s2499 + $0x10] sm:$0xf]
      %v2505 = vld [vmem:[%s2499 + $0x14] sm:$0xf]
      %v2506 = vld [vmem:[%s2499 + $0x18] sm:$0xf]
      %v2507 = vld [vmem:[%s2499 + $0x1c] sm:$0xf]
      %s2508 = scalar_lea.vmem %s10, 3
      %v2509 = vld [vmem:[%s2508] sm:$0x1]
      %v2511 = vlaneseq
      %v2512 = vshrl.u32 %v2511, 7
      %v2513 = vsub.s32 0, %v2512
      %v2514 = vrot.slane %v2509, %v2513
      %v2524 = vunpack.c.l.b16 %v2500
      %v2525 = vunpack.c.l.b16 %v2501
      %v2526 = vunpack.c.l.b16 %v2502
      %v2527 = vunpack.c.l.b16 %v2503
      %v2528 = vunpack.c.l.b16 %v2504
      %v2529 = vunpack.c.l.b16 %v2505
      %v2530 = vunpack.c.l.b16 %v2506
      %v2531 = vunpack.c.l.b16 %v2507
      %v2532 = vpack.c.b16 %v2525, %v2524
      %v2533 = vpack.c.b16 %v2527, %v2526
      %v2534 = vpack.c.b16 %v2529, %v2528
      %v2535 = vpack.c.b16 %v2531, %v2530
      %2540 = vmatprep.subr.bf16.mxu0 0
      %2541 = vmatpush1.bf16.msra.mxu0 %v2532
      %2542 = vmatprep.subr.bf16.mxu0 0
      %2543 = vmatpush1.bf16.msra.mxu0 %v2533
      %2544 = vmatprep.subr.bf16.mxu0 0
      %2545 = vmatpush1.bf16.msra.mxu0 %v2534
      %2546 = vmatprep.subr.bf16.mxu0 0
      %2547 = vmatpush1.bf16.msra.mxu0 %v2535
      %2548 = vmatprep.subr.bf16.mxu0 0
      %2549 = vmatpush1.bf16.msra.mxu0 0
      %2550 = vmatprep.subr.bf16.mxu0 0
      %2551 = vmatpush1.bf16.msra.mxu0 0
      %2552 = vmatprep.subr.bf16.mxu0 0
      %2553 = vmatpush1.bf16.msra.mxu0 0
      %2554 = vmatprep.subr.bf16.mxu0 0
      %2555 = vmatpush1.bf16.msra.mxu0 0
      %2556 = vmatprep.subr.bf16.mxu0 0
      %2557 = vmatpush1.bf16.msra.mxu0 0
      %2558 = vmatprep.subr.bf16.mxu0 0
      %2559 = vmatpush1.bf16.msra.mxu0 0
      %2560 = vmatprep.subr.bf16.mxu0 0
      %2561 = vmatpush1.bf16.msra.mxu0 0
      %2562 = vmatprep.subr.bf16.mxu0 0
      %2563 = vmatpush1.bf16.msra.mxu0 0
      %2564 = vmatprep.subr.bf16.mxu0 0
      %2565 = vmatpush1.bf16.msra.mxu0 0
      %2566 = vmatprep.subr.bf16.mxu0 0
      %2567 = vmatpush1.bf16.msra.mxu0 0
      %2568 = vmatprep.subr.bf16.mxu0 0
      %2569 = vmatpush1.bf16.msra.mxu0 0
      %2570 = vmatprep.subr.bf16.mxu0 0
      %2571 = vmatpush1.bf16.msra.mxu0 0
      %2572 = vmatprep.mubr.bf16.mxu0 0
      %2573 = vmatmul.mubr.bf16.gmra.mrb[0].mxu0 %v957
      %v2574 = vpop.f32.mrb[0].mxu0
      %v2575 = vadd.f32 %v2514, %v2574
      %v2576 = vpop.f32.mrb[0].mxu0
      %v2577 = vpop.f32.mrb[0].mxu0
      %v2578 = vadd.f32 %v2514, %v2577
      %v2579 = vpop.f32.mrb[0].mxu0
      %2580 = vmatprep.mubr.bf16.mxu0 0
      %2581 = vmatmul.mubr.bf16.gmra.mrb[0].mxu0 %v960
      %v2582 = vpop.f32.mrb[0].mxu0
      %v2583 = vadd.f32 %v2514, %v2582
      %v2584 = vpop.f32.mrb[0].mxu0
      %v2585 = vpop.f32.mrb[0].mxu0
      %v2586 = vpop.f32.mrb[0].mxu0
      %2587 = vdwg.mxu0
      %s2588 = scalar_lea.vmem %s11, 96
      %v2589 = vld [vmem:[%s2588] sm:$0xf]
      %v2590 = vld [vmem:[%s2588 + $0x4] sm:$0xf]
      %v2591 = vld [vmem:[%s2588 + $0x8] sm:$0xf]
      %v2592 = vld [vmem:[%s2588 + $0xc] sm:$0xf]
      %v2593 = vld [vmem:[%s2588 + $0x10] sm:$0xf]
      %v2594 = vld [vmem:[%s2588 + $0x14] sm:$0xf]
      %v2595 = vld [vmem:[%s2588 + $0x18] sm:$0xf]
      %v2596 = vld [vmem:[%s2588 + $0x1c] sm:$0xf]
      %s2597 = scalar_lea.vmem %s12, 3
      %v2598 = vld [vmem:[%s2597] sm:$0x1]
      %v2600 = vlaneseq
      %v2601 = vshrl.u32 %v2600, 7
      %v2602 = vsub.s32 0, %v2601
      %v2603 = vrot.slane %v2598, %v2602
      %v2613 = vunpack.c.l.b16 %v2589
      %v2614 = vunpack.c.l.b16 %v2590
      %v2615 = vunpack.c.l.b16 %v2591
      %v2616 = vunpack.c.l.b16 %v2592
      %v2617 = vunpack.c.l.b16 %v2593
      %v2618 = vunpack.c.l.b16 %v2594
      %v2619 = vunpack.c.l.b16 %v2595
      %v2620 = vunpack.c.l.b16 %v2596
      %v2621 = vpack.c.b16 %v2614, %v2613
      %v2622 = vpack.c.b16 %v2616, %v2615
      %v2623 = vpack.c.b16 %v2618, %v2617
      %v2624 = vpack.c.b16 %v2620, %v2619
      %2629 = vmatprep.subr.bf16.mxu0 0
      %2630 = vmatpush1.bf16.msra.mxu0 %v2621
      %2631 = vmatprep.subr.bf16.mxu0 0
      %2632 = vmatpush1.bf16.msra.mxu0 %v2622
      %2633 = vmatprep.subr.bf16.mxu0 0
      %2634 = vmatpush1.bf16.msra.mxu0 %v2623
      %2635 = vmatprep.subr.bf16.mxu0 0
      %2636 = vmatpush1.bf16.msra.mxu0 %v2624
      %2637 = vmatprep.subr.bf16.mxu0 0
      %2638 = vmatpush1.bf16.msra.mxu0 0
      %2639 = vmatprep.subr.bf16.mxu0 0
      %2640 = vmatpush1.bf16.msra.mxu0 0
      %2641 = vmatprep.subr.bf16.mxu0 0
      %2642 = vmatpush1.bf16.msra.mxu0 0
      %2643 = vmatprep.subr.bf16.mxu0 0
      %2644 = vmatpush1.bf16.msra.mxu0 0
      %2645 = vmatprep.subr.bf16.mxu0 0
      %2646 = vmatpush1.bf16.msra.mxu0 0
      %2647 = vmatprep.subr.bf16.mxu0 0
      %2648 = vmatpush1.bf16.msra.mxu0 0
      %2649 = vmatprep.subr.bf16.mxu0 0
      %2650 = vmatpush1.bf16.msra.mxu0 0
      %2651 = vmatprep.subr.bf16.mxu0 0
      %2652 = vmatpush1.bf16.msra.mxu0 0
      %2653 = vmatprep.subr.bf16.mxu0 0
      %2654 = vmatpush1.bf16.msra.mxu0 0
      %2655 = vmatprep.subr.bf16.mxu0 0
      %2656 = vmatpush1.bf16.msra.mxu0 0
      %2657 = vmatprep.subr.bf16.mxu0 0
      %2658 = vmatpush1.bf16.msra.mxu0 0
      %2659 = vmatprep.subr.bf16.mxu0 0
      %2660 = vmatpush1.bf16.msra.mxu0 0
      %2661 = vmatprep.mubr.bf16.mxu0 0
      %2662 = vmatmul.mubr.bf16.gmra.mrb[0].mxu0 %v957
      %v2663 = vpop.f32.mrb[0].mxu0
      %v2664 = vadd.f32 %v2603, %v2663
      %v2665 = vpop.f32.mrb[0].mxu0
      %v2666 = vpop.f32.mrb[0].mxu0
      %v2667 = vadd.f32 %v2603, %v2666
      %v2668 = vpop.f32.mrb[0].mxu0
      %2669 = vmatprep.mubr.bf16.mxu0 0
      %2670 = vmatmul.mubr.bf16.gmra.mrb[0].mxu0 %v960
      %v2671 = vpop.f32.mrb[0].mxu0
      %v2672 = vadd.f32 %v2603, %v2671
      %v2673 = vpop.f32.mrb[0].mxu0
      %v2674 = vpop.f32.mrb[0].mxu0
      %v2675 = vpop.f32.mrb[0].mxu0
      %2676 = vdwg.mxu0
      %v2677 = vpack.c.bf16 %v2489, %v2486
      %v2678 = vpack.c.bf16 %v2494, %v2494
      %v2679 = vpack.c.bf16 %v2578, %v2575
      %v2680 = vpack.c.bf16 %v2583, %v2583
      %v2682 = vsel %vm1188, %v2677, 0
      %v2685 = vsel %vm1188, %v2678, 0
      %v2688 = vsel %vm1188, %v2679, 0
      %v2691 = vsel %vm1188, %v2680, 0
      %2693 = vmatprep.subr.bf16.mxu0 0
      %2694 = vmatpush1.bf16.xpose.msra.mxu0 %v2688
      %2695 = vmatprep.subr.bf16.mxu0 0
      %2696 = vmatpush1.bf16.xpose.msra.mxu0 %v2691
      %2697 = vmatprep.subr.bf16.mxu0 0
      %2698 = vmatpush1.bf16.xpose.msra.mxu0 0
      %2699 = vmatprep.subr.bf16.mxu0 0
      %2700 = vmatpush1.bf16.xpose.msra.mxu0 0
      %2701 = vmatprep.subr.bf16.mxu0 0
      %2702 = vmatpush1.bf16.xpose.msra.mxu0 0
      %2703 = vmatprep.subr.bf16.mxu0 0
      %2704 = vmatpush1.bf16.xpose.msra.mxu0 0
      %2705 = vmatprep.subr.bf16.mxu0 0
      %2706 = vmatpush1.bf16.xpose.msra.mxu0 0
      %2707 = vmatprep.subr.bf16.mxu0 0
      %2708 = vmatpush1.bf16.xpose.msra.mxu0 0
      %2709 = vmatprep.subr.bf16.mxu0 0
      %2710 = vmatpush1.bf16.xpose.msra.mxu0 0
      %2711 = vmatprep.subr.bf16.mxu0 0
      %2712 = vmatpush1.bf16.xpose.msra.mxu0 0
      %2713 = vmatprep.subr.bf16.mxu0 0
      %2714 = vmatpush1.bf16.xpose.msra.mxu0 0
      %2715 = vmatprep.subr.bf16.mxu0 0
      %2716 = vmatpush1.bf16.xpose.msra.mxu0 0
      %2717 = vmatprep.subr.bf16.mxu0 0
      %2718 = vmatpush1.bf16.xpose.msra.mxu0 0
      %2719 = vmatprep.subr.bf16.mxu0 0
      %2720 = vmatpush1.bf16.xpose.msra.mxu0 0
      %2721 = vmatprep.subr.bf16.mxu0 0
      %2722 = vmatpush1.bf16.xpose.msra.mxu0 0
      %2723 = vmatprep.subr.bf16.mxu0 0
      %2724 = vmatpush1.bf16.xpose.msra.mxu0 0
      %2725 = vmatprep.mubr.bf16.mxu0 0
      %2726 = vmatmul.mubr.bf16.gmra.mrb[0].mxu0 %v2682
      %v2727 = vpop.f32.mrb[0].mxu0
      %v2728 = vadd.f32 0.0, %v2727
      %v2729 = vpop.f32.mrb[0].mxu0
      %v2730 = vpop.f32.mrb[0].mxu0
      %v2731 = vadd.f32 0.0, %v2730
      %v2732 = vpop.f32.mrb[0].mxu0
      %2733 = vmatprep.mubr.bf16.mxu0 0
      %2734 = vmatmul.mubr.bf16.gmra.mrb[0].mxu0 %v2685
      %v2735 = vpop.f32.mrb[0].mxu0
      %v2736 = vadd.f32 0.0, %v2735
      %v2737 = vpop.f32.mrb[0].mxu0
      %v2738 = vpop.f32.mrb[0].mxu0
      %v2739 = vpop.f32.mrb[0].mxu0
      %2740 = vdwg.mxu0
      %v2741 = vmul.f32 %v2728, 0.125
      %v2742 = vmul.f32 %v2731, 0.125
      %v2743 = vmul.f32 %v2736, 0.125
      %v2744 = vsel %vm853, -1e+30, %v2741
      %v2745 = vsel %vm854, -1e+30, %v2742
      %v2746 = vsel %vm855, -1e+30, %v2743
      %v2747 = vsel %vm1255, %v2744, -inf
      %2748 = vmax.xlane.f32.xlu0 %v2747
      %v2749 = vpop.xlane.xlu0 %2748
      %v2750 = vsel %vm1255, %v2745, -inf
      %2751 = vmax.xlane.f32.xlu0 %v2750
      %v2752 = vpop.xlane.xlu0 %2751
      %v2753 = vsel %vm1255, %v2746, -inf
      %2754 = vmax.xlane.f32.xlu0 %v2753
      %v2755 = vpop.xlane.xlu0 %2754
      %v2756 = vsub.f32 %v2744, %v2749
      %v2757 = vsub.f32 %v2745, %v2752
      %v2758 = vsub.f32 %v2746, %v2755
      %v2759 = vmul.f32 %v2756, 1.442695
      %v2760 = vpow.pop %v2759
      %v2761 = vmul.f32 %v2757, 1.442695
      %v2762 = vpow.pop %v2761
      %v2763 = vmul.f32 %v2758, 1.442695
      %v2764 = vpow.pop %v2763
      %v2765 = vsel %vm1255, %v2760, 0.0
      %2766 = vadd.xlane.f32.xlu0 %v2765
      %v2767 = vpop.xlane.xlu0 %2766
      %v2768 = vsel %vm1255, %v2762, 0.0
      %2769 = vadd.xlane.f32.xlu0 %v2768
      %v2770 = vpop.xlane.xlu0 %2769
      %v2771 = vsel %vm1255, %v2764, 0.0
      %2772 = vadd.xlane.f32.xlu0 %v2771
      %v2773 = vpop.xlane.xlu0 %2772
      %v2774 = vpack.c.bf16 %v2762, %v2760
      %v2775 = vpack.c.bf16 %v2764, %v2764
      %v2776 = vpack.c.bf16 %v2667, %v2664
      %v2777 = vpack.c.bf16 %v2672, %v2672
      %v2779 = vsel %vm1255, %v2774, 0
      %v2782 = vsel %vm1255, %v2775, 0
      %v2785 = vsel %vm1293, %v2777, 0
      %2787 = vmatprep.subr.bf16.mxu0 0
      %2788 = vmatpush1.bf16.msra.mxu0 %v2776
      %2789 = vmatprep.subr.bf16.mxu0 0
      %2790 = vmatpush1.bf16.msra.mxu0 %v2785
      %2791 = vmatprep.subr.bf16.mxu0 0
      %2792 = vmatpush1.bf16.msra.mxu0 0
      %2793 = vmatprep.subr.bf16.mxu0 0
      %2794 = vmatpush1.bf16.msra.mxu0 0
      %2795 = vmatprep.subr.bf16.mxu0 0
      %2796 = vmatpush1.bf16.msra.mxu0 0
      %2797 = vmatprep.subr.bf16.mxu0 0
      %2798 = vmatpush1.bf16.msra.mxu0 0
      %2799 = vmatprep.subr.bf16.mxu0 0
      %2800 = vmatpush1.bf16.msra.mxu0 0
      %2801 = vmatprep.subr.bf16.mxu0 0
      %2802 = vmatpush1.bf16.msra.mxu0 0
      %2803 = vmatprep.subr.bf16.mxu0 0
      %2804 = vmatpush1.bf16.msra.mxu0 0
      %2805 = vmatprep.subr.bf16.mxu0 0
      %2806 = vmatpush1.bf16.msra.mxu0 0
      %2807 = vmatprep.subr.bf16.mxu0 0
      %2808 = vmatpush1.bf16.msra.mxu0 0
      %2809 = vmatprep.subr.bf16.mxu0 0
      %2810 = vmatpush1.bf16.msra.mxu0 0
      %2811 = vmatprep.subr.bf16.mxu0 0
      %2812 = vmatpush1.bf16.msra.mxu0 0
      %2813 = vmatprep.subr.bf16.mxu0 0
      %2814 = vmatpush1.bf16.msra.mxu0 0
      %2815 = vmatprep.subr.bf16.mxu0 0
      %2816 = vmatpush1.bf16.msra.mxu0 0
      %2817 = vmatprep.subr.bf16.mxu0 0
      %2818 = vmatpush1.bf16.msra.mxu0 0
      %2819 = vmatprep.mubr.bf16.mxu0 0
      %2820 = vmatmul.mubr.bf16.gmra.mrb[0].mxu0 %v2779
      %v2821 = vpop.f32.mrb[0].mxu0
      %v2822 = vadd.f32 0.0, %v2821
      %v2823 = vpop.f32.mrb[0].mxu0
      %v2824 = vpop.f32.mrb[0].mxu0
      %v2825 = vadd.f32 0.0, %v2824
      %v2826 = vpop.f32.mrb[0].mxu0
      %2827 = vmatprep.mubr.bf16.mxu0 0
      %2828 = vmatmul.mubr.bf16.gmra.mrb[0].mxu0 %v2782
      %v2829 = vpop.f32.mrb[0].mxu0
      %v2830 = vadd.f32 0.0, %v2829
      %v2831 = vpop.f32.mrb[0].mxu0
      %v2832 = vpop.f32.mrb[0].mxu0
      %v2833 = vpop.f32.mrb[0].mxu0
      %2834 = vdwg.mxu0
      %v2835 = vrcp.pop %v2767
      %v2836 = vmul.f32 %v2822, %v2835
      %v2837 = vrcp.pop %v2770
      %v2838 = vmul.f32 %v2825, %v2837
      %v2839 = vrcp.pop %v2773
      %v2840 = vmul.f32 %v2830, %v2839
      %s2841 = scalar_lea.vmem %s13, 24
      %v2842 = vld [vmem:[%s2841] sm:$0xf]
      %v2843 = vld [vmem:[%s2841 + $0x4] sm:$0xf]
      %v2844 = vpack.c.bf16 %v2838, %v2836
      %v2845 = vpack.c.bf16 %v2840, %v2840
      %v2848 = vunpack.c.l.b16 %v2842
      %v2849 = vunpack.c.l.b16 %v2843
      %v2850 = vpack.c.b16 %v2849, %v2848
      %v2853 = vsel %vm1188, %v2844, 0
      %v2856 = vsel %vm1188, %v2845, 0
      %2858 = vmatprep.subr.bf16.mxu0 0
      %2859 = vmatpush1.bf16.msra.mxu0 %v2850
      %2860 = vmatprep.subr.bf16.mxu0 0
      %2861 = vmatpush1.bf16.msra.mxu0 0
      %2862 = vmatprep.subr.bf16.mxu0 0
      %2863 = vmatpush1.bf16.msra.mxu0 0
      %2864 = vmatprep.subr.bf16.mxu0 0
      %2865 = vmatpush1.bf16.msra.mxu0 0
      %2866 = vmatprep.subr.bf16.mxu0 0
      %2867 = vmatpush1.bf16.msra.mxu0 0
      %2868 = vmatprep.subr.bf16.mxu0 0
      %2869 = vmatpush1.bf16.msra.mxu0 0
      %2870 = vmatprep.subr.bf16.mxu0 0
      %2871 = vmatpush1.bf16.msra.mxu0 0
      %2872 = vmatprep.subr.bf16.mxu0 0
      %2873 = vmatpush1.bf16.msra.mxu0 0
      %2874 = vmatprep.subr.bf16.mxu0 0
      %2875 = vmatpush1.bf16.msra.mxu0 0
      %2876 = vmatprep.subr.bf16.mxu0 0
      %2877 = vmatpush1.bf16.msra.mxu0 0
      %2878 = vmatprep.subr.bf16.mxu0 0
      %2879 = vmatpush1.bf16.msra.mxu0 0
      %2880 = vmatprep.subr.bf16.mxu0 0
      %2881 = vmatpush1.bf16.msra.mxu0 0
      %2882 = vmatprep.subr.bf16.mxu0 0
      %2883 = vmatpush1.bf16.msra.mxu0 0
      %2884 = vmatprep.subr.bf16.mxu0 0
      %2885 = vmatpush1.bf16.msra.mxu0 0
      %2886 = vmatprep.subr.bf16.mxu0 0
      %2887 = vmatpush1.bf16.msra.mxu0 0
      %2888 = vmatprep.subr.bf16.mxu0 0
      %2889 = vmatpush1.bf16.msra.mxu0 0
      %2890 = vmatprep.mubr.bf16.mxu0 0
      %2891 = vmatmul.mubr.bf16.gmra.mrb[0].mxu0 %v2853
      %v2892 = vpop.f32.mrb[0].mxu0
      %v2893 = vadd.f32 0.0, %v2892
      %v2894 = vpop.f32.mrb[0].mxu0
      %v2895 = vpop.f32.mrb[0].mxu0
      %v2896 = vadd.f32 0.0, %v2895
      %v2897 = vpop.f32.mrb[0].mxu0
      %2898 = vmatprep.mubr.bf16.mxu0 0
      %2899 = vmatmul.mubr.bf16.gmra.mrb[0].mxu0 %v2856
      %v2900 = vpop.f32.mrb[0].mxu0
      %v2901 = vadd.f32 0.0, %v2900
      %v2902 = vpop.f32.mrb[0].mxu0
      %v2903 = vpop.f32.mrb[0].mxu0
      %v2904 = vpop.f32.mrb[0].mxu0
      %2905 = vdwg.mxu0
      %v2906 = vadd.f32 %v2407, %v2893
      %v2907 = vadd.f32 %v2408, %v2896
      %v2908 = vadd.f32 %v2409, %v2901
      %v2909 = vadd.f32 %v840, %v2906
      %v2910 = vadd.f32 %v841, %v2907
      %v2911 = vadd.f32 %v842, %v2908
      %v2912 = vld [vmem:[%s14] sm:$0x1]
      %v2914 = vlaneseq
      %v2915 = vshrl.u32 %v2914, 7
      %v2916 = vsub.s32 0, %v2915
      %v2917 = vrot.slane %v2912, %v2916
      %v2919 = vadd.f32 %v2909, %v2917
      %v2920 = vadd.f32 %v2910, %v2917
      %v2921 = vadd.f32 %v2911, %v2917
      %v2922 = vld [vmem:[%s15] sm:$0x1]
      %v2923 = vld [vmem:[%s16] sm:$0x1]
      %v2924 = vsel %vm784, %v2919, 0.0
      %2925 = vadd.xlane.f32.xlu0 %v2924
      %v2926 = vpop.xlane.xlu0 %2925
      %v2927 = vsel %vm784, %v2920, 0.0
      %2928 = vadd.xlane.f32.xlu0 %v2927
      %v2929 = vpop.xlane.xlu0 %2928
      %v2930 = vsel %vm784, %v2921, 0.0
      %2931 = vadd.xlane.f32.xlu0 %v2930
      %v2932 = vpop.xlane.xlu0 %2931
      %v2933 = vmul.f32 %v2926, %v794
      %v2934 = vmul.f32 %v2929, %v794
      %v2935 = vmul.f32 %v2932, %v794
      %v2936 = vsub.f32 %v2919, %v2933
      %v2937 = vsub.f32 %v2920, %v2934
      %v2938 = vsub.f32 %v2921, %v2935
      %v2939 = vmul.f32 %v2936, %v2936
      %v2940 = vmul.f32 %v2937, %v2937
      %v2941 = vmul.f32 %v2938, %v2938
      %v2942 = vsel %vm784, %v2939, 0.0
      %2943 = vadd.xlane.f32.xlu0 %v2942
      %v2944 = vpop.xlane.xlu0 %2943
      %v2945 = vsel %vm784, %v2940, 0.0
      %2946 = vadd.xlane.f32.xlu0 %v2945
      %v2947 = vpop.xlane.xlu0 %2946
      %v2948 = vsel %vm784, %v2941, 0.0
      %2949 = vadd.xlane.f32.xlu0 %v2948
      %v2950 = vpop.xlane.xlu0 %2949
      %v2951 = vmul.f32 %v2944, %v794
      %v2952 = vmul.f32 %v2947, %v794
      %v2953 = vmul.f32 %v2950, %v794
      %v2954 = vadd.f32 %v2951, 1e-05
      %v2955 = vadd.f32 %v2952, 1e-05
      %v2956 = vadd.f32 %v2953, 1e-05
      %v2957 = vrsqrt.pop %v2954
      %v2958 = vrsqrt.pop %v2955
      %v2959 = vrsqrt.pop %v2956
      %v2960 = vmul.f32 %v2936, %v2957
      %v2961 = vmul.f32 %v2937, %v2958
      %v2962 = vmul.f32 %v2938, %v2959
      %v2964 = vlaneseq
      %v2965 = vshrl.u32 %v2964, 7
      %v2966 = vsub.s32 0, %v2965
      %v2967 = vrot.slane %v2922, %v2966
      %v2969 = vmul.f32 %v2960, %v2967
      %v2970 = vmul.f32 %v2961, %v2967
      %v2971 = vmul.f32 %v2962, %v2967
      %v2973 = vlaneseq
      %v2974 = vshrl.u32 %v2973, 7
      %v2975 = vsub.s32 0, %v2974
      %v2976 = vrot.slane %v2923, %v2975
      %v2978 = vadd.f32 %v2969, %v2976
      %v2979 = vadd.f32 %v2970, %v2976
      %v2980 = vadd.f32 %v2971, %v2976
      %v2981 = vld [vmem:[%s17] sm:$0xf]
      %v2982 = vld [vmem:[%s17 + $0x4] sm:$0xf]
      %v2983 = vld [vmem:[%s17 + $0x8] sm:$0xf]
      %v2984 = vld [vmem:[%s17 + $0xc] sm:$0xf]
      %v2985 = vld [vmem:[%s17 + $0x10] sm:$0xf]
      %v2986 = vld [vmem:[%s17 + $0x14] sm:$0xf]
      %v2987 = vld [vmem:[%s17 + $0x18] sm:$0xf]
      %v2988 = vld [vmem:[%s17 + $0x1c] sm:$0xf]
      %v2989 = vpack.c.bf16 %v2979, %v2978
      %v2990 = vpack.c.bf16 %v2980, %v2980
      %v2991 = vld [vmem:[%s18] sm:$0x1]
      %v2993 = vlaneseq
      %v2994 = vshrl.u32 %v2993, 7
      %v2995 = vsub.s32 0, %v2994
      %v2996 = vrot.slane %v2991, %v2995
      %v3006 = vunpack.c.l.b16 %v2981
      %v3007 = vunpack.c.l.b16 %v2982
      %v3008 = vunpack.c.l.b16 %v2983
      %v3009 = vunpack.c.l.b16 %v2984
      %v3010 = vunpack.c.l.b16 %v2985
      %v3011 = vunpack.c.l.b16 %v2986
      %v3012 = vunpack.c.l.b16 %v2987
      %v3013 = vunpack.c.l.b16 %v2988
      %v3014 = vpack.c.b16 %v3007, %v3006
      %v3015 = vpack.c.b16 %v3009, %v3008
      %v3016 = vpack.c.b16 %v3011, %v3010
      %v3017 = vpack.c.b16 %v3013, %v3012
      %v3023 = vsel %vm784, %v2989, 0
      %v3026 = vsel %vm784, %v2990, 0
      %3028 = vmatprep.subr.bf16.mxu0 0
      %3029 = vmatpush1.bf16.msra.mxu0 %v3014
      %3030 = vmatprep.subr.bf16.mxu0 0
      %3031 = vmatpush1.bf16.msra.mxu0 %v3015
      %3032 = vmatprep.subr.bf16.mxu0 0
      %3033 = vmatpush1.bf16.msra.mxu0 %v3016
      %3034 = vmatprep.subr.bf16.mxu0 0
      %3035 = vmatpush1.bf16.msra.mxu0 %v3017
      %3036 = vmatprep.subr.bf16.mxu0 0
      %3037 = vmatpush1.bf16.msra.mxu0 0
      %3038 = vmatprep.subr.bf16.mxu0 0
      %3039 = vmatpush1.bf16.msra.mxu0 0
      %3040 = vmatprep.subr.bf16.mxu0 0
      %3041 = vmatpush1.bf16.msra.mxu0 0
      %3042 = vmatprep.subr.bf16.mxu0 0
      %3043 = vmatpush1.bf16.msra.mxu0 0
      %3044 = vmatprep.subr.bf16.mxu0 0
      %3045 = vmatpush1.bf16.msra.mxu0 0
      %3046 = vmatprep.subr.bf16.mxu0 0
      %3047 = vmatpush1.bf16.msra.mxu0 0
      %3048 = vmatprep.subr.bf16.mxu0 0
      %3049 = vmatpush1.bf16.msra.mxu0 0
      %3050 = vmatprep.subr.bf16.mxu0 0
      %3051 = vmatpush1.bf16.msra.mxu0 0
      %3052 = vmatprep.subr.bf16.mxu0 0
      %3053 = vmatpush1.bf16.msra.mxu0 0
      %3054 = vmatprep.subr.bf16.mxu0 0
      %3055 = vmatpush1.bf16.msra.mxu0 0
      %3056 = vmatprep.subr.bf16.mxu0 0
      %3057 = vmatpush1.bf16.msra.mxu0 0
      %3058 = vmatprep.subr.bf16.mxu0 0
      %3059 = vmatpush1.bf16.msra.mxu0 0
      %3060 = vmatprep.mubr.bf16.mxu0 0
      %3061 = vmatmul.mubr.bf16.gmra.mrb[0].mxu0 %v3023
      %v3062 = vpop.f32.mrb[0].mxu0
      %v3063 = vadd.f32 %v2996, %v3062
      %v3064 = vpop.f32.mrb[0].mxu0
      %v3065 = vpop.f32.mrb[0].mxu0
      %v3066 = vadd.f32 %v2996, %v3065
      %v3067 = vpop.f32.mrb[0].mxu0
      %3068 = vmatprep.mubr.bf16.mxu0 0
      %3069 = vmatmul.mubr.bf16.gmra.mrb[0].mxu0 %v3026
      %v3070 = vpop.f32.mrb[0].mxu0
      %v3071 = vadd.f32 %v2996, %v3070
      %v3072 = vpop.f32.mrb[0].mxu0
      %v3073 = vpop.f32.mrb[0].mxu0
      %v3074 = vpop.f32.mrb[0].mxu0
      %3075 = vdwg.mxu0
      %v3076 = vmul.f32 %v3063, %v3063
      %v3077 = vmul.f32 %v3066, %v3066
      %v3078 = vmul.f32 %v3071, %v3071
      %v3079 = vmul.f32 %v3063, %v3076
      %v3080 = vmul.f32 %v3066, %v3077
      %v3081 = vmul.f32 %v3071, %v3078
      %v3082 = vmul.f32 %v3079, 0.044715
      %v3083 = vmul.f32 %v3080, 0.044715
      %v3084 = vmul.f32 %v3081, 0.044715
      %v3085 = vadd.f32 %v3063, %v3082
      %v3086 = vadd.f32 %v3066, %v3083
      %v3087 = vadd.f32 %v3071, %v3084
      %v3088 = vmul.f32 %v3085, 0.7978846
      %v3089 = vmul.f32 %v3086, 0.7978846
      %v3090 = vmul.f32 %v3087, 0.7978846
      %v3091 = vtanh.pop %v3088
      %v3092 = vtanh.pop %v3089
      %v3093 = vtanh.pop %v3090
      %v3094 = vadd.f32 %v3091, 1.0
      %v3095 = vadd.f32 %v3092, 1.0
      %v3096 = vadd.f32 %v3093, 1.0
      %v3097 = vmul.f32 %v3094, 0.5
      %v3098 = vmul.f32 %v3095, 0.5
      %v3099 = vmul.f32 %v3096, 0.5
      %v3100 = vmul.f32 %v3063, %v3097
      %v3101 = vmul.f32 %v3066, %v3098
      %v3102 = vmul.f32 %v3071, %v3099
      %v3103 = vld [vmem:[%s19] sm:$0xf]
      %v3104 = vld [vmem:[%s19 + $0x4] sm:$0xf]
      %v3105 = vld [vmem:[%s19 + $0x8] sm:$0xf]
      %v3106 = vld [vmem:[%s19 + $0xc] sm:$0xf]
      %v3107 = vld [vmem:[%s19 + $0x10] sm:$0xf]
      %v3108 = vld [vmem:[%s19 + $0x14] sm:$0xf]
      %v3109 = vld [vmem:[%s19 + $0x18] sm:$0xf]
      %v3110 = vld [vmem:[%s19 + $0x1c] sm:$0xf]
      %v3111 = vld [vmem:[%s19 + $0x20] sm:$0xf]
      %v3112 = vld [vmem:[%s19 + $0x24] sm:$0xf]
      %v3113 = vld [vmem:[%s19 + $0x28] sm:$0xf]
      %v3114 = vld [vmem:[%s19 + $0x2c] sm:$0xf]
      %v3115 = vld [vmem:[%s19 + $0x30] sm:$0xf]
      %v3116 = vld [vmem:[%s19 + $0x34] sm:$0xf]
      %v3117 = vld [vmem:[%s19 + $0x38] sm:$0xf]
      %v3118 = vld [vmem:[%s19 + $0x3c] sm:$0xf]
      %v3119 = vpack.c.bf16 %v3101, %v3100
      %v3120 = vpack.c.bf16 %v3102, %v3102
      %v3121 = vld [vmem:[%s20] sm:$0x1]
      %v3123 = vlaneseq
      %v3124 = vshrl.u32 %v3123, 7
      %v3125 = vsub.s32 0, %v3124
      %v3126 = vrot.slane %v3121, %v3125
      %v3144 = vunpack.c.l.b16 %v3103
      %v3145 = vunpack.c.l.b16 %v3104
      %v3146 = vunpack.c.l.b16 %v3105
      %v3147 = vunpack.c.l.b16 %v3106
      %v3148 = vunpack.c.l.b16 %v3107
      %v3149 = vunpack.c.l.b16 %v3108
      %v3150 = vunpack.c.l.b16 %v3109
      %v3151 = vunpack.c.l.b16 %v3110
      %v3152 = vunpack.c.l.b16 %v3111
      %v3153 = vunpack.c.l.b16 %v3112
      %v3154 = vunpack.c.l.b16 %v3113
      %v3155 = vunpack.c.l.b16 %v3114
      %v3156 = vunpack.c.l.b16 %v3115
      %v3157 = vunpack.c.l.b16 %v3116
      %v3158 = vunpack.c.l.b16 %v3117
      %v3159 = vunpack.c.l.b16 %v3118
      %v3160 = vpack.c.b16 %v3145, %v3144
      %v3161 = vpack.c.b16 %v3147, %v3146
      %v3162 = vpack.c.b16 %v3149, %v3148
      %v3163 = vpack.c.b16 %v3151, %v3150
      %v3164 = vpack.c.b16 %v3153, %v3152
      %v3165 = vpack.c.b16 %v3155, %v3154
      %v3166 = vpack.c.b16 %v3157, %v3156
      %v3167 = vpack.c.b16 %v3159, %v3158
      %3176 = vmatprep.subr.bf16.mxu0 0
      %3177 = vmatpush1.bf16.msra.mxu0 %v3160
      %3178 = vmatprep.subr.bf16.mxu0 0
      %3179 = vmatpush1.bf16.msra.mxu0 %v3161
      %3180 = vmatprep.subr.bf16.mxu0 0
      %3181 = vmatpush1.bf16.msra.mxu0 %v3162
      %3182 = vmatprep.subr.bf16.mxu0 0
      %3183 = vmatpush1.bf16.msra.mxu0 %v3163
      %3184 = vmatprep.subr.bf16.mxu0 0
      %3185 = vmatpush1.bf16.msra.mxu0 %v3164
      %3186 = vmatprep.subr.bf16.mxu0 0
      %3187 = vmatpush1.bf16.msra.mxu0 %v3165
      %3188 = vmatprep.subr.bf16.mxu0 0
      %3189 = vmatpush1.bf16.msra.mxu0 %v3166
      %3190 = vmatprep.subr.bf16.mxu0 0
      %3191 = vmatpush1.bf16.msra.mxu0 %v3167
      %3192 = vmatprep.subr.bf16.mxu0 0
      %3193 = vmatpush1.bf16.msra.mxu0 0
      %3194 = vmatprep.subr.bf16.mxu0 0
      %3195 = vmatpush1.bf16.msra.mxu0 0
      %3196 = vmatprep.subr.bf16.mxu0 0
      %3197 = vmatpush1.bf16.msra.mxu0 0
      %3198 = vmatprep.subr.bf16.mxu0 0
      %3199 = vmatpush1.bf16.msra.mxu0 0
      %3200 = vmatprep.subr.bf16.mxu0 0
      %3201 = vmatpush1.bf16.msra.mxu0 0
      %3202 = vmatprep.subr.bf16.mxu0 0
      %3203 = vmatpush1.bf16.msra.mxu0 0
      %3204 = vmatprep.subr.bf16.mxu0 0
      %3205 = vmatpush1.bf16.msra.mxu0 0
      %3206 = vmatprep.subr.bf16.mxu0 0
      %3207 = vmatpush1.bf16.msra.mxu0 0
      %3208 = vmatprep.mubr.bf16.mxu0 0
      %3209 = vmatmul.mubr.bf16.gmra.mrb[0].mxu0 %v3119
      %v3210 = vpop.f32.mrb[0].mxu0
      %v3211 = vadd.f32 %v3126, %v3210
      %v3212 = vpop.f32.mrb[0].mxu0
      %v3213 = vpop.f32.mrb[0].mxu0
      %v3214 = vadd.f32 %v3126, %v3213
      %v3215 = vpop.f32.mrb[0].mxu0
      %3216 = vmatprep.mubr.bf16.mxu0 0
      %3217 = vmatmul.mubr.bf16.gmra.mrb[0].mxu0 %v3120
      %v3218 = vpop.f32.mrb[0].mxu0
      %v3219 = vadd.f32 %v3126, %v3218
      %v3220 = vpop.f32.mrb[0].mxu0
      %v3221 = vpop.f32.mrb[0].mxu0
      %v3222 = vpop.f32.mrb[0].mxu0
      %3223 = vdwg.mxu0
      %v3224 = vadd.f32 %v2919, %v3211
      %v3225 = vadd.f32 %v2920, %v3214
      %v3226 = vadd.f32 %v2921, %v3219
      %3227 = vst.msk [vmem:[%s656] sm:$0xff] %vm784, %v3224
      %3228 = vst.msk [vmem:[%s656 + $0x8] sm:$0xff] %vm784, %v3225
      %3229 = vst.msk [vmem:[%s656 + $0x10] sm:$0xff] %vm784, %v3226
      %p3230 = scmp.lt.s32.totalorder %s32, 1
      %s3231 = scalar_select %p3230, %s32, 1
      %s3232 = smul.addr %s3231, 3
      %s3233 = smul.addr %s3232, 8
      %s3234 = scalar_lea.vmem %s21, %s3233
      // Predicated region
      $region105: #{cvt_forward.3} parent=103 // pred_check
        %p3235 = pneg %p496
      $region106: #{cvt_forward.3} parent=103 // pred_check_branch
        %3237 = sbr.rel (%p3235) target = $region108
      $region107: #{cvt_forward.3} parent=103 // pred_region
        _
      $region108: #{cvt_forward.3} parent=103 // pred_fallthru
        _
    $region104: #{cvt_forward.3} parent=5 // pred_fallthru
      _
    %p3238 = scmp.le.s32.totalorder 2, %s27
    // Predicated region
    $region109: #{cvt_forward.3} parent=5 // pred_check
      %p3239 = pneg %p3238
    $region110: #{cvt_forward.3} parent=5 // pred_check_branch
      %3241 = sbr.rel (%p3239) target = $region112
    $region111: #{cvt_forward.3} parent=5 // pred_region
      %s3242 = ssub.s32 %s27, 2
      // Predicated region
      $region113: #{cvt_forward.3} parent=111 // pred_check
        %p3243 = pneg %p502
      $region114: #{cvt_forward.3} parent=111 // pred_check_branch
        %3245 = sbr.rel (%p3243) target = $region116
      $region115: #{cvt_forward.3} parent=111 // pred_region
        %p3246 = scmp.lt.s32.totalorder %s33, 1
        %s3247 = scalar_select %p3246, %s33, 1
        %s3248 = smul.addr %s3247, 3
        %s3249 = smul.addr %s3248, 8
        %s3250 = scalar_lea.vmem %s21, %s3249
      $region116: #{cvt_forward.3} parent=111 // pred_fallthru
        _
    $region112: #{cvt_forward.3} parent=5 // pred_fallthru
      _
  $region6: #{cvt_forward.3} parent=0 // loop_footer
    %s31 = sadd.s32 1, %s27
  $region7: #{cvt_forward.3} parent=0 // loop_footer_branch
    %26 = sbr.rel target = $region3
  $region8: #{cvt_forward.3} parent=0 // loop_exit
    _

// kernel: cvt_forward.2
$region0: #{cvt_forward.2}
  #allocation0 [shape = 'u32[]', space=smem, size = 0x4, offset = 0x4, fixed_abs, tag = 'smem constant byte address 0x4 - core index']
  #allocation1 [shape = 'u32[144,128]{1,0:T(1,128)}', space=vmem, size = 0x12000, scoped, tag = 'internal scratch']
  %s0 = inlined_call_operand.vmem [shape: f32[2,96,48], index: 0, kind: input, shape index: {}]
  %s1 = inlined_call_operand.vmem [shape: bf16[48,32], index: 1, kind: input, shape index: {}]
  %s2 = inlined_call_operand.vmem [shape: f32[1,32], index: 2, kind: input, shape index: {}, may-alias: {2,4}]
  %s3 = inlined_call_operand.vmem [shape: f32[1,32], index: 3, kind: input, shape index: {}]
  %s4 = inlined_call_operand.vmem [shape: f32[1,32], index: 4, kind: input, shape index: {}, may-alias: {2,4}]
  %s5 = inlined_call_operand.vmem [shape: f32[2,1,32], index: 5, kind: input, shape index: {}, may-alias: {5,15}]
  %s6 = inlined_call_operand.vmem [shape: f32[2,1,32], index: 6, kind: input, shape index: {}, may-alias: {6,14,16,20}]
  %s7 = inlined_call_operand.vmem [shape: bf16[2,2,32,16], index: 7, kind: input, shape index: {}]
  %s8 = inlined_call_operand.vmem [shape: f32[2,2,1,16], index: 8, kind: input, shape index: {}, may-alias: {8,10,12}]
  %s9 = inlined_call_operand.vmem [shape: bf16[2,2,32,16], index: 9, kind: input, shape index: {}]
  %s10 = inlined_call_operand.vmem [shape: f32[2,2,1,16], index: 10, kind: input, shape index: {}, may-alias: {8,10,12}]
  %s11 = inlined_call_operand.vmem [shape: bf16[2,2,32,16], index: 11, kind: input, shape index: {}]
  %s12 = inlined_call_operand.vmem [shape: f32[2,2,1,16], index: 12, kind: input, shape index: {}, may-alias: {8,10,12}]
  %s13 = inlined_call_operand.vmem [shape: bf16[2,2,16,32], index: 13, kind: input, shape index: {}]
  %s14 = inlined_call_operand.vmem [shape: f32[2,1,32], index: 14, kind: input, shape index: {}, may-alias: {6,14,16,20}]
  %s15 = inlined_call_operand.vmem [shape: f32[2,1,32], index: 15, kind: input, shape index: {}, may-alias: {5,15}]
  %s16 = inlined_call_operand.vmem [shape: f32[2,1,32], index: 16, kind: input, shape index: {}, may-alias: {6,14,16,20}]
  %s17 = inlined_call_operand.vmem [shape: bf16[2,32,64], index: 17, kind: input, shape index: {}]
  %s18 = inlined_call_operand.vmem [shape: f32[2,1,64], index: 18, kind: input, shape index: {}]
  %s19 = inlined_call_operand.vmem [shape: bf16[2,64,32], index: 19, kind: input, shape index: {}]
  %s20 = inlined_call_operand.vmem [shape: f32[2,1,32], index: 20, kind: input, shape index: {}, may-alias: {6,14,16,20}]
  %s21 = inlined_call_operand.vmem [shape: f32[2,96,32], index: 21, kind: output, shape index: {}]
  %s22 = sld [smem:[#allocation0]]
  $region117: #{cvt_forward.2} parent=0
    _
  %s24 = ssub.s32 1, %s22
  %s25 = scalar_select 0, %s24, %s22
  loop: start=0, step=1, limit=4
  $region2: #{cvt_forward.2} parent=0 // loop_pre_header
    _
  $region3: #{cvt_forward.2} parent=0 // loop_header
    %s27 = sphi 0, %s31
    %p28 = scmp.ge.s32.totalorder %s27, 4
    %s37 = sphi 0, %s39
    %s40 = sphi 0, %s37
    %s41 = sphi 0, %s40
    %s57 = sphi 0, %s41
    %s61 = sphi 0, %s61
    %s63 = sphi 0, %s61
    %s64 = sphi 0, %s63
    %s78 = sphi 0, %s64
    %s82 = sphi 0, %s82
    %s84 = sphi 0, %s82
    %s85 = sphi 0, %s84
    %s99 = sphi 0, %s85
    %s103 = sphi 0, %s103
    %s105 = sphi 0, %s103
    %s106 = sphi 0, %s105
    %s120 = sphi 0, %s106
    %s124 = sphi 0, %s124
    %s126 = sphi 0, %s124
    %s127 = sphi 0, %s126
    %s141 = sphi 0, %s127
    %s145 = sphi 0, %s145
    %s147 = sphi 0, %s145
    %s148 = sphi 0, %s147
    %s162 = sphi 0, %s148
    %s166 = sphi 0, %s166
    %s168 = sphi 0, %s166
    %s169 = sphi 0, %s168
    %s183 = sphi 0, %s169
    %s187 = sphi 0, %s187
    %s189 = sphi 0, %s187
    %s190 = sphi 0, %s189
    %s204 = sphi 0, %s190
    %s208 = sphi 0, %s208
    %s210 = sphi 0, %s208
    %s211 = sphi 0, %s210
    %s225 = sphi 0, %s211
    %s229 = sphi 0, %s229
    %s231 = sphi 0, %s229
    %s232 = sphi 0, %s231
    %s246 = sphi 0, %s232
    %s250 = sphi 0, %s250
    %s252 = sphi 0, %s250
    %s253 = sphi 0, %s252
    %s267 = sphi 0, %s253
    %s271 = sphi 0, %s271
    %s273 = sphi 0, %s271
    %s274 = sphi 0, %s273
    %s288 = sphi 0, %s274
    %s292 = sphi 0, %s292
    %s294 = sphi 0, %s292
    %s295 = sphi 0, %s294
    %s309 = sphi 0, %s295
    %s313 = sphi 0, %s313
    %s315 = sphi 0, %s313
    %s316 = sphi 0, %s315
    %s330 = sphi 0, %s316
    %s334 = sphi 0, %s334
    %s336 = sphi 0, %s334
    %s337 = sphi 0, %s336
    %s351 = sphi 0, %s337
    %s355 = sphi 0, %s355
    %s357 = sphi 0, %s355
    %s358 = sphi 0, %s357
    %s372 = sphi 0, %s358
    %s376 = sphi 0, %s376
    %s378 = sphi 0, %s376
    %s379 = sphi 0, %s378
    %s393 = sphi 0, %s379
    %s397 = sphi 0, %s397
    %s399 = sphi 0, %s397
    %s400 = sphi 0, %s399
    %s414 = sphi 0, %s400
    %s418 = sphi 0, %s418
    %s420 = sphi 0, %s418
    %s421 = sphi 0, %s420
    %s435 = sphi 0, %s421
    %s439 = sphi 0, %s439
    %s441 = sphi 0, %s439
    %s442 = sphi 0, %s441
    %s456 = sphi 0, %s442
    %s460 = sphi 0, %s460
    %s462 = sphi 0, %s460
    %s463 = sphi 0, %s462
    %s477 = sphi 0, %s463
    %s483 = sphi 0, %s485
    %s486 = sphi 0, %s483
    %s487 = sphi 0, %s486
    %s503 = sphi 0, %s487
  $region4: #{cvt_forward.2} parent=0 // loop_header_branch
    %30 = sbr.rel (%p28) target = $region8
  $region5: #{cvt_forward.2} parent=0 // loop_body
    %s32 = ssub.s32 %s27, 1
    %s33 = ssub.s32 %s27, 2
    %s34 = sadd.s32 %s27, 1
    %s35 = ssub.s32 %s27, %s34
    %p36 = scmp.eq.s32.totalorder %s35, 0
    %s38 = sadd.s32 %s37, 1
    %s39 = scalar_select %p36, %s37, %s38
    %p42 = pneg %p36
    %p43 = scmp.eq.s32.totalorder %s27, 1
    %p44 = por %p42, %p43
    %p45 = scmp.ne.s32.totalorder %s37, %s40
    %p46 = scmp.eq.s32.totalorder %s27, 0
    %p47 = por %p45, %p46
    %p48 = scmp.ne.s32.totalorder %s37, %s40
    %p49 = scmp.eq.s32.totalorder %s32, 1
    %p50 = por %p48, %p49
    %p51 = scmp.ne.s32.totalorder %s40, %s41
    %p52 = scmp.eq.s32.totalorder %s32, 0
    %p53 = por %p51, %p52
    %p54 = scmp.ne.s32.totalorder %s40, %s41
    %p55 = scmp.eq.s32.totalorder %s33, 1
    %p56 = por %p54, %p55
    %p58 = scmp.ne.s32.totalorder %s41, %s57
    %p59 = scmp.eq.s32.totalorder %s33, 0
    %p60 = por %p58, %p59
    %s62 = sadd.s32 %s61, 1
    %p65 = scmp.eq.s32.totalorder %s27, 1
    %p66 = scmp.ne.s32.totalorder %s61, %s63
    %p67 = scmp.eq.s32.totalorder %s27, 0
    %p68 = por %p66, %p67
    %p69 = scmp.ne.s32.totalorder %s61, %s63
    %p70 = scmp.eq.s32.totalorder %s32, 1
    %p71 = por %p69, %p70
    %p72 = scmp.ne.s32.totalorder %s63, %s64
    %p73 = scmp.eq.s32.totalorder %s32, 0
    %p74 = por %p72, %p73
    %p75 = scmp.ne.s32.totalorder %s63, %s64
    %p76 = scmp.eq.s32.totalorder %s33, 1
    %p77 = por %p75, %p76
    %p79 = scmp.ne.s32.totalorder %s64, %s78
    %p80 = scmp.eq.s32.totalorder %s33, 0
    %p81 = por %p79, %p80
    %s83 = sadd.s32 %s82, 1
    %p86 = scmp.eq.s32.totalorder %s27, 1
    %p87 = scmp.ne.s32.totalorder %s82, %s84
    %p88 = scmp.eq.s32.totalorder %s27, 0
    %p89 = por %p87, %p88
    %p90 = scmp.ne.s32.totalorder %s82, %s84
    %p91 = scmp.eq.s32.totalorder %s32, 1
    %p92 = por %p90, %p91
    %p93 = scmp.ne.s32.totalorder %s84, %s85
    %p94 = scmp.eq.s32.totalorder %s32, 0
    %p95 = por %p93, %p94
    %p96 = scmp.ne.s32.totalorder %s84, %s85
    %p97 = scmp.eq.s32.totalorder %s33, 1
    %p98 = por %p96, %p97
    %p100 = scmp.ne.s32.totalorder %s85, %s99
    %p101 = scmp.eq.s32.totalorder %s33, 0
    %p102 = por %p100, %p101
    %s104 = sadd.s32 %s103, 1
    %p107 = scmp.eq.s32.totalorder %s27, 1
    %p108 = scmp.ne.s32.totalorder %s103, %s105
    %p109 = scmp.eq.s32.totalorder %s27, 0
    %p110 = por %p108, %p109
    %p111 = scmp.ne.s32.totalorder %s103, %s105
    %p112 = scmp.eq.s32.totalorder %s32, 1
    %p113 = por %p111, %p112
    %p114 = scmp.ne.s32.totalorder %s105, %s106
    %p115 = scmp.eq.s32.totalorder %s32, 0
    %p116 = por %p114, %p115
    %p117 = scmp.ne.s32.totalorder %s105, %s106
    %p118 = scmp.eq.s32.totalorder %s33, 1
    %p119 = por %p117, %p118
    %p121 = scmp.ne.s32.totalorder %s106, %s120
    %p122 = scmp.eq.s32.totalorder %s33, 0
    %p123 = por %p121, %p122
    %s125 = sadd.s32 %s124, 1
    %p128 = scmp.eq.s32.totalorder %s27, 1
    %p129 = scmp.ne.s32.totalorder %s124, %s126
    %p130 = scmp.eq.s32.totalorder %s27, 0
    %p131 = por %p129, %p130
    %p132 = scmp.ne.s32.totalorder %s124, %s126
    %p133 = scmp.eq.s32.totalorder %s32, 1
    %p134 = por %p132, %p133
    %p135 = scmp.ne.s32.totalorder %s126, %s127
    %p136 = scmp.eq.s32.totalorder %s32, 0
    %p137 = por %p135, %p136
    %p138 = scmp.ne.s32.totalorder %s126, %s127
    %p139 = scmp.eq.s32.totalorder %s33, 1
    %p140 = por %p138, %p139
    %p142 = scmp.ne.s32.totalorder %s127, %s141
    %p143 = scmp.eq.s32.totalorder %s33, 0
    %p144 = por %p142, %p143
    %s146 = sadd.s32 %s145, 1
    %p149 = scmp.eq.s32.totalorder %s27, 1
    %p150 = scmp.ne.s32.totalorder %s145, %s147
    %p151 = scmp.eq.s32.totalorder %s27, 0
    %p152 = por %p150, %p151
    %p153 = scmp.ne.s32.totalorder %s145, %s147
    %p154 = scmp.eq.s32.totalorder %s32, 1
    %p155 = por %p153, %p154
    %p156 = scmp.ne.s32.totalorder %s147, %s148
    %p157 = scmp.eq.s32.totalorder %s32, 0
    %p158 = por %p156, %p157
    %p159 = scmp.ne.s32.totalorder %s147, %s148
    %p160 = scmp.eq.s32.totalorder %s33, 1
    %p161 = por %p159, %p160
    %p163 = scmp.ne.s32.totalorder %s148, %s162
    %p164 = scmp.eq.s32.totalorder %s33, 0
    %p165 = por %p163, %p164
    %s167 = sadd.s32 %s166, 1
    %p170 = scmp.eq.s32.totalorder %s27, 1
    %p171 = scmp.ne.s32.totalorder %s166, %s168
    %p172 = scmp.eq.s32.totalorder %s27, 0
    %p173 = por %p171, %p172
    %p174 = scmp.ne.s32.totalorder %s166, %s168
    %p175 = scmp.eq.s32.totalorder %s32, 1
    %p176 = por %p174, %p175
    %p177 = scmp.ne.s32.totalorder %s168, %s169
    %p178 = scmp.eq.s32.totalorder %s32, 0
    %p179 = por %p177, %p178
    %p180 = scmp.ne.s32.totalorder %s168, %s169
    %p181 = scmp.eq.s32.totalorder %s33, 1
    %p182 = por %p180, %p181
    %p184 = scmp.ne.s32.totalorder %s169, %s183
    %p185 = scmp.eq.s32.totalorder %s33, 0
    %p186 = por %p184, %p185
    %s188 = sadd.s32 %s187, 1
    %p191 = scmp.eq.s32.totalorder %s27, 1
    %p192 = scmp.ne.s32.totalorder %s187, %s189
    %p193 = scmp.eq.s32.totalorder %s27, 0
    %p194 = por %p192, %p193
    %p195 = scmp.ne.s32.totalorder %s187, %s189
    %p196 = scmp.eq.s32.totalorder %s32, 1
    %p197 = por %p195, %p196
    %p198 = scmp.ne.s32.totalorder %s189, %s190
    %p199 = scmp.eq.s32.totalorder %s32, 0
    %p200 = por %p198, %p199
    %p201 = scmp.ne.s32.totalorder %s189, %s190
    %p202 = scmp.eq.s32.totalorder %s33, 1
    %p203 = por %p201, %p202
    %p205 = scmp.ne.s32.totalorder %s190, %s204
    %p206 = scmp.eq.s32.totalorder %s33, 0
    %p207 = por %p205, %p206
    %s209 = sadd.s32 %s208, 1
    %p212 = scmp.eq.s32.totalorder %s27, 1
    %p213 = scmp.ne.s32.totalorder %s208, %s210
    %p214 = scmp.eq.s32.totalorder %s27, 0
    %p215 = por %p213, %p214
    %p216 = scmp.ne.s32.totalorder %s208, %s210
    %p217 = scmp.eq.s32.totalorder %s32, 1
    %p218 = por %p216, %p217
    %p219 = scmp.ne.s32.totalorder %s210, %s211
    %p220 = scmp.eq.s32.totalorder %s32, 0
    %p221 = por %p219, %p220
    %p222 = scmp.ne.s32.totalorder %s210, %s211
    %p223 = scmp.eq.s32.totalorder %s33, 1
    %p224 = por %p222, %p223
    %p226 = scmp.ne.s32.totalorder %s211, %s225
    %p227 = scmp.eq.s32.totalorder %s33, 0
    %p228 = por %p226, %p227
    %s230 = sadd.s32 %s229, 1
    %p233 = scmp.eq.s32.totalorder %s27, 1
    %p234 = scmp.ne.s32.totalorder %s229, %s231
    %p235 = scmp.eq.s32.totalorder %s27, 0
    %p236 = por %p234, %p235
    %p237 = scmp.ne.s32.totalorder %s229, %s231
    %p238 = scmp.eq.s32.totalorder %s32, 1
    %p239 = por %p237, %p238
    %p240 = scmp.ne.s32.totalorder %s231, %s232
    %p241 = scmp.eq.s32.totalorder %s32, 0
    %p242 = por %p240, %p241
    %p243 = scmp.ne.s32.totalorder %s231, %s232
    %p244 = scmp.eq.s32.totalorder %s33, 1
    %p245 = por %p243, %p244
    %p247 = scmp.ne.s32.totalorder %s232, %s246
    %p248 = scmp.eq.s32.totalorder %s33, 0
    %p249 = por %p247, %p248
    %s251 = sadd.s32 %s250, 1
    %p254 = scmp.eq.s32.totalorder %s27, 1
    %p255 = scmp.ne.s32.totalorder %s250, %s252
    %p256 = scmp.eq.s32.totalorder %s27, 0
    %p257 = por %p255, %p256
    %p258 = scmp.ne.s32.totalorder %s250, %s252
    %p259 = scmp.eq.s32.totalorder %s32, 1
    %p260 = por %p258, %p259
    %p261 = scmp.ne.s32.totalorder %s252, %s253
    %p262 = scmp.eq.s32.totalorder %s32, 0
    %p263 = por %p261, %p262
    %p264 = scmp.ne.s32.totalorder %s252, %s253
    %p265 = scmp.eq.s32.totalorder %s33, 1
    %p266 = por %p264, %p265
    %p268 = scmp.ne.s32.totalorder %s253, %s267
    %p269 = scmp.eq.s32.totalorder %s33, 0
    %p270 = por %p268, %p269
    %s272 = sadd.s32 %s271, 1
    %p275 = scmp.eq.s32.totalorder %s27, 1
    %p276 = scmp.ne.s32.totalorder %s271, %s273
    %p277 = scmp.eq.s32.totalorder %s27, 0
    %p278 = por %p276, %p277
    %p279 = scmp.ne.s32.totalorder %s271, %s273
    %p280 = scmp.eq.s32.totalorder %s32, 1
    %p281 = por %p279, %p280
    %p282 = scmp.ne.s32.totalorder %s273, %s274
    %p283 = scmp.eq.s32.totalorder %s32, 0
    %p284 = por %p282, %p283
    %p285 = scmp.ne.s32.totalorder %s273, %s274
    %p286 = scmp.eq.s32.totalorder %s33, 1
    %p287 = por %p285, %p286
    %p289 = scmp.ne.s32.totalorder %s274, %s288
    %p290 = scmp.eq.s32.totalorder %s33, 0
    %p291 = por %p289, %p290
    %s293 = sadd.s32 %s292, 1
    %p296 = scmp.eq.s32.totalorder %s27, 1
    %p297 = scmp.ne.s32.totalorder %s292, %s294
    %p298 = scmp.eq.s32.totalorder %s27, 0
    %p299 = por %p297, %p298
    %p300 = scmp.ne.s32.totalorder %s292, %s294
    %p301 = scmp.eq.s32.totalorder %s32, 1
    %p302 = por %p300, %p301
    %p303 = scmp.ne.s32.totalorder %s294, %s295
    %p304 = scmp.eq.s32.totalorder %s32, 0
    %p305 = por %p303, %p304
    %p306 = scmp.ne.s32.totalorder %s294, %s295
    %p307 = scmp.eq.s32.totalorder %s33, 1
    %p308 = por %p306, %p307
    %p310 = scmp.ne.s32.totalorder %s295, %s309
    %p311 = scmp.eq.s32.totalorder %s33, 0
    %p312 = por %p310, %p311
    %s314 = sadd.s32 %s313, 1
    %p317 = scmp.eq.s32.totalorder %s27, 1
    %p318 = scmp.ne.s32.totalorder %s313, %s315
    %p319 = scmp.eq.s32.totalorder %s27, 0
    %p320 = por %p318, %p319
    %p321 = scmp.ne.s32.totalorder %s313, %s315
    %p322 = scmp.eq.s32.totalorder %s32, 1
    %p323 = por %p321, %p322
    %p324 = scmp.ne.s32.totalorder %s315, %s316
    %p325 = scmp.eq.s32.totalorder %s32, 0
    %p326 = por %p324, %p325
    %p327 = scmp.ne.s32.totalorder %s315, %s316
    %p328 = scmp.eq.s32.totalorder %s33, 1
    %p329 = por %p327, %p328
    %p331 = scmp.ne.s32.totalorder %s316, %s330
    %p332 = scmp.eq.s32.totalorder %s33, 0
    %p333 = por %p331, %p332
    %s335 = sadd.s32 %s334, 1
    %p338 = scmp.eq.s32.totalorder %s27, 1
    %p339 = scmp.ne.s32.totalorder %s334, %s336
    %p340 = scmp.eq.s32.totalorder %s27, 0
    %p341 = por %p339, %p340
    %p342 = scmp.ne.s32.totalorder %s334, %s336
    %p343 = scmp.eq.s32.totalorder %s32, 1
    %p344 = por %p342, %p343
    %p345 = scmp.ne.s32.totalorder %s336, %s337
    %p346 = scmp.eq.s32.totalorder %s32, 0
    %p347 = por %p345, %p346
    %p348 = scmp.ne.s32.totalorder %s336, %s337
    %p349 = scmp.eq.s32.totalorder %s33, 1
    %p350 = por %p348, %p349
    %p352 = scmp.ne.s32.totalorder %s337, %s351
    %p353 = scmp.eq.s32.totalorder %s33, 0
    %p354 = por %p352, %p353
    %s356 = sadd.s32 %s355, 1
    %p359 = scmp.eq.s32.totalorder %s27, 1
    %p360 = scmp.ne.s32.totalorder %s355, %s357
    %p361 = scmp.eq.s32.totalorder %s27, 0
    %p362 = por %p360, %p361
    %p363 = scmp.ne.s32.totalorder %s355, %s357
    %p364 = scmp.eq.s32.totalorder %s32, 1
    %p365 = por %p363, %p364
    %p366 = scmp.ne.s32.totalorder %s357, %s358
    %p367 = scmp.eq.s32.totalorder %s32, 0
    %p368 = por %p366, %p367
    %p369 = scmp.ne.s32.totalorder %s357, %s358
    %p370 = scmp.eq.s32.totalorder %s33, 1
    %p371 = por %p369, %p370
    %p373 = scmp.ne.s32.totalorder %s358, %s372
    %p374 = scmp.eq.s32.totalorder %s33, 0
    %p375 = por %p373, %p374
    %s377 = sadd.s32 %s376, 1
    %p380 = scmp.eq.s32.totalorder %s27, 1
    %p381 = scmp.ne.s32.totalorder %s376, %s378
    %p382 = scmp.eq.s32.totalorder %s27, 0
    %p383 = por %p381, %p382
    %p384 = scmp.ne.s32.totalorder %s376, %s378
    %p385 = scmp.eq.s32.totalorder %s32, 1
    %p386 = por %p384, %p385
    %p387 = scmp.ne.s32.totalorder %s378, %s379
    %p388 = scmp.eq.s32.totalorder %s32, 0
    %p389 = por %p387, %p388
    %p390 = scmp.ne.s32.totalorder %s378, %s379
    %p391 = scmp.eq.s32.totalorder %s33, 1
    %p392 = por %p390, %p391
    %p394 = scmp.ne.s32.totalorder %s379, %s393
    %p395 = scmp.eq.s32.totalorder %s33, 0
    %p396 = por %p394, %p395
    %s398 = sadd.s32 %s397, 1
    %p401 = scmp.eq.s32.totalorder %s27, 1
    %p402 = scmp.ne.s32.totalorder %s397, %s399
    %p403 = scmp.eq.s32.totalorder %s27, 0
    %p404 = por %p402, %p403
    %p405 = scmp.ne.s32.totalorder %s397, %s399
    %p406 = scmp.eq.s32.totalorder %s32, 1
    %p407 = por %p405, %p406
    %p408 = scmp.ne.s32.totalorder %s399, %s400
    %p409 = scmp.eq.s32.totalorder %s32, 0
    %p410 = por %p408, %p409
    %p411 = scmp.ne.s32.totalorder %s399, %s400
    %p412 = scmp.eq.s32.totalorder %s33, 1
    %p413 = por %p411, %p412
    %p415 = scmp.ne.s32.totalorder %s400, %s414
    %p416 = scmp.eq.s32.totalorder %s33, 0
    %p417 = por %p415, %p416
    %s419 = sadd.s32 %s418, 1
    %p422 = scmp.eq.s32.totalorder %s27, 1
    %p423 = scmp.ne.s32.totalorder %s418, %s420
    %p424 = scmp.eq.s32.totalorder %s27, 0
    %p425 = por %p423, %p424
    %p426 = scmp.ne.s32.totalorder %s418, %s420
    %p427 = scmp.eq.s32.totalorder %s32, 1
    %p428 = por %p426, %p427
    %p429 = scmp.ne.s32.totalorder %s420, %s421
    %p430 = scmp.eq.s32.totalorder %s32, 0
    %p431 = por %p429, %p430
    %p432 = scmp.ne.s32.totalorder %s420, %s421
    %p433 = scmp.eq.s32.totalorder %s33, 1
    %p434 = por %p432, %p433
    %p436 = scmp.ne.s32.totalorder %s421, %s435
    %p437 = scmp.eq.s32.totalorder %s33, 0
    %p438 = por %p436, %p437
    %s440 = sadd.s32 %s439, 1
    %p443 = scmp.eq.s32.totalorder %s27, 1
    %p444 = scmp.ne.s32.totalorder %s439, %s441
    %p445 = scmp.eq.s32.totalorder %s27, 0
    %p446 = por %p444, %p445
    %p447 = scmp.ne.s32.totalorder %s439, %s441
    %p448 = scmp.eq.s32.totalorder %s32, 1
    %p449 = por %p447, %p448
    %p450 = scmp.ne.s32.totalorder %s441, %s442
    %p451 = scmp.eq.s32.totalorder %s32, 0
    %p452 = por %p450, %p451
    %p453 = scmp.ne.s32.totalorder %s441, %s442
    %p454 = scmp.eq.s32.totalorder %s33, 1
    %p455 = por %p453, %p454
    %p457 = scmp.ne.s32.totalorder %s442, %s456
    %p458 = scmp.eq.s32.totalorder %s33, 0
    %p459 = por %p457, %p458
    %s461 = sadd.s32 %s460, 1
    %p464 = scmp.eq.s32.totalorder %s27, 1
    %p465 = scmp.ne.s32.totalorder %s460, %s462
    %p466 = scmp.eq.s32.totalorder %s27, 0
    %p467 = por %p465, %p466
    %p468 = scmp.ne.s32.totalorder %s460, %s462
    %p469 = scmp.eq.s32.totalorder %s32, 1
    %p470 = por %p468, %p469
    %p471 = scmp.ne.s32.totalorder %s462, %s463
    %p472 = scmp.eq.s32.totalorder %s32, 0
    %p473 = por %p471, %p472
    %p474 = scmp.ne.s32.totalorder %s462, %s463
    %p475 = scmp.eq.s32.totalorder %s33, 1
    %p476 = por %p474, %p475
    %p478 = scmp.ne.s32.totalorder %s463, %s477
    %p479 = scmp.eq.s32.totalorder %s33, 0
    %p480 = por %p478, %p479
    %s481 = ssub.s32 %s27, %s34
    %p482 = scmp.eq.s32.totalorder %s481, 0
    %s484 = sadd.s32 %s483, 1
    %s485 = scalar_select %p482, %s483, %s484
    %p488 = pneg %p482
    %p489 = scmp.eq.s32.totalorder %s27, 1
    %p490 = por %p488, %p489
    %p491 = scmp.ne.s32.totalorder %s483, %s486
    %p492 = scmp.eq.s32.totalorder %s27, 0
    %p493 = por %p491, %p492
    %p494 = scmp.ne.s32.totalorder %s483, %s486
    %p495 = scmp.eq.s32.totalorder %s32, 1
    %p496 = por %p494, %p495
    %p497 = scmp.ne.s32.totalorder %s486, %s487
    %p498 = scmp.eq.s32.totalorder %s32, 0
    %p499 = por %p497, %p498
    %p500 = scmp.ne.s32.totalorder %s486, %s487
    %p501 = scmp.eq.s32.totalorder %s33, 1
    %p502 = por %p500, %p501
    %p504 = scmp.ne.s32.totalorder %s487, %s503
    %p505 = scmp.eq.s32.totalorder %s33, 0
    %p506 = por %p504, %p505
    %p507 = scmp.le.s32.totalorder 1, %s27
    %p508 = scmp.lt.s32.totalorder %s27, 3
    %p509 = pnand %p507, %p508
    %p510 = pneg %p509
    // Predicated region
    $region9: #{cvt_forward.2} parent=5 // pred_check
      _
    $region10: #{cvt_forward.2} parent=5 // pred_check_branch
      %512 = sbr.rel (%p509) target = $region12
    $region11: #{cvt_forward.2} parent=5 // pred_region
      %s513 = ssub.s32 %s27, 1
      // Predicated region
      $region13: #{cvt_forward.2} parent=11 // pred_check
        %p514 = pneg %p74
      $region14: #{cvt_forward.2} parent=11 // pred_check_branch
        %516 = sbr.rel (%p514) target = $region16
      $region15: #{cvt_forward.2} parent=11 // pred_region
        _
      $region16: #{cvt_forward.2} parent=11 // pred_fallthru
        _
      // Predicated region
      $region17: #{cvt_forward.2} parent=11 // pred_check
        %p517 = pneg %p95
      $region18: #{cvt_forward.2} parent=11 // pred_check_branch
        %519 = sbr.rel (%p517) target = $region20
      $region19: #{cvt_forward.2} parent=11 // pred_region
        _
      $region20: #{cvt_forward.2} parent=11 // pred_fallthru
        _
      // Predicated region
      $region21: #{cvt_forward.2} parent=11 // pred_check
        %p520 = pneg %p116
      $region22: #{cvt_forward.2} parent=11 // pred_check_branch
        %522 = sbr.rel (%p520) target = $region24
      $region23: #{cvt_forward.2} parent=11 // pred_region
        _
      $region24: #{cvt_forward.2} parent=11 // pred_fallthru
        _
      // Predicated region
      $region25: #{cvt_forward.2} parent=11 // pred_check
        %p523 = pneg %p137
      $region26: #{cvt_forward.2} parent=11 // pred_check_branch
        %525 = sbr.rel (%p523) target = $region28
      $region27: #{cvt_forward.2} parent=11 // pred_region
        _
      $region28: #{cvt_forward.2} parent=11 // pred_fallthru
        _
      // Predicated region
      $region29: #{cvt_forward.2} parent=11 // pred_check
        %p526 = pneg %p158
      $region30: #{cvt_forward.2} parent=11 // pred_check_branch
        %528 = sbr.rel (%p526) target = $region32
      $region31: #{cvt_forward.2} parent=11 // pred_region
        _
      $region32: #{cvt_forward.2} parent=11 // pred_fallthru
        _
      // Predicated region
      $region33: #{cvt_forward.2} parent=11 // pred_check
        %p529 = pneg %p179
      $region34: #{cvt_forward.2} parent=11 // pred_check_branch
        %531 = sbr.rel (%p529) target = $region36
      $region35: #{cvt_forward.2} parent=11 // pred_region
        _
      $region36: #{cvt_forward.2} parent=11 // pred_fallthru
        _
      // Predicated region
      $region37: #{cvt_forward.2} parent=11 // pred_check
        %p532 = pneg %p200
      $region38: #{cvt_forward.2} parent=11 // pred_check_branch
        %534 = sbr.rel (%p532) target = $region40
      $region39: #{cvt_forward.2} parent=11 // pred_region
        _
      $region40: #{cvt_forward.2} parent=11 // pred_fallthru
        _
      // Predicated region
      $region41: #{cvt_forward.2} parent=11 // pred_check
        %p535 = pneg %p221
      $region42: #{cvt_forward.2} parent=11 // pred_check_branch
        %537 = sbr.rel (%p535) target = $region44
      $region43: #{cvt_forward.2} parent=11 // pred_region
        _
      $region44: #{cvt_forward.2} parent=11 // pred_fallthru
        _
      // Predicated region
      $region45: #{cvt_forward.2} parent=11 // pred_check
        %p538 = pneg %p242
      $region46: #{cvt_forward.2} parent=11 // pred_check_branch
        %540 = sbr.rel (%p538) target = $region48
      $region47: #{cvt_forward.2} parent=11 // pred_region
        _
      $region48: #{cvt_forward.2} parent=11 // pred_fallthru
        _
      // Predicated region
      $region49: #{cvt_forward.2} parent=11 // pred_check
        %p541 = pneg %p263
      $region50: #{cvt_forward.2} parent=11 // pred_check_branch
        %543 = sbr.rel (%p541) target = $region52
      $region51: #{cvt_forward.2} parent=11 // pred_region
        _
      $region52: #{cvt_forward.2} parent=11 // pred_fallthru
        _
      // Predicated region
      $region53: #{cvt_forward.2} parent=11 // pred_check
        %p544 = pneg %p284
      $region54: #{cvt_forward.2} parent=11 // pred_check_branch
        %546 = sbr.rel (%p544) target = $region56
      $region55: #{cvt_forward.2} parent=11 // pred_region
        _
      $region56: #{cvt_forward.2} parent=11 // pred_fallthru
        _
      // Predicated region
      $region57: #{cvt_forward.2} parent=11 // pred_check
        %p547 = pneg %p305
      $region58: #{cvt_forward.2} parent=11 // pred_check_branch
        %549 = sbr.rel (%p547) target = $region60
      $region59: #{cvt_forward.2} parent=11 // pred_region
        _
      $region60: #{cvt_forward.2} parent=11 // pred_fallthru
        _
      // Predicated region
      $region61: #{cvt_forward.2} parent=11 // pred_check
        %p550 = pneg %p326
      $region62: #{cvt_forward.2} parent=11 // pred_check_branch
        %552 = sbr.rel (%p550) target = $region64
      $region63: #{cvt_forward.2} parent=11 // pred_region
        _
      $region64: #{cvt_forward.2} parent=11 // pred_fallthru
        _
      // Predicated region
      $region65: #{cvt_forward.2} parent=11 // pred_check
        %p553 = pneg %p347
      $region66: #{cvt_forward.2} parent=11 // pred_check_branch
        %555 = sbr.rel (%p553) target = $region68
      $region67: #{cvt_forward.2} parent=11 // pred_region
        _
      $region68: #{cvt_forward.2} parent=11 // pred_fallthru
        _
      // Predicated region
      $region69: #{cvt_forward.2} parent=11 // pred_check
        %p556 = pneg %p368
      $region70: #{cvt_forward.2} parent=11 // pred_check_branch
        %558 = sbr.rel (%p556) target = $region72
      $region71: #{cvt_forward.2} parent=11 // pred_region
        _
      $region72: #{cvt_forward.2} parent=11 // pred_fallthru
        _
      // Predicated region
      $region73: #{cvt_forward.2} parent=11 // pred_check
        %p559 = pneg %p389
      $region74: #{cvt_forward.2} parent=11 // pred_check_branch
        %561 = sbr.rel (%p559) target = $region76
      $region75: #{cvt_forward.2} parent=11 // pred_region
        _
      $region76: #{cvt_forward.2} parent=11 // pred_fallthru
        _
      // Predicated region
      $region77: #{cvt_forward.2} parent=11 // pred_check
        %p562 = pneg %p410
      $region78: #{cvt_forward.2} parent=11 // pred_check_branch
        %564 = sbr.rel (%p562) target = $region80
      $region79: #{cvt_forward.2} parent=11 // pred_region
        _
      $region80: #{cvt_forward.2} parent=11 // pred_fallthru
        _
      // Predicated region
      $region81: #{cvt_forward.2} parent=11 // pred_check
        %p565 = pneg %p431
      $region82: #{cvt_forward.2} parent=11 // pred_check_branch
        %567 = sbr.rel (%p565) target = $region84
      $region83: #{cvt_forward.2} parent=11 // pred_region
        _
      $region84: #{cvt_forward.2} parent=11 // pred_fallthru
        _
      // Predicated region
      $region85: #{cvt_forward.2} parent=11 // pred_check
        %p568 = pneg %p452
      $region86: #{cvt_forward.2} parent=11 // pred_check_branch
        %570 = sbr.rel (%p568) target = $region88
      $region87: #{cvt_forward.2} parent=11 // pred_region
        _
      $region88: #{cvt_forward.2} parent=11 // pred_fallthru
        _
      // Predicated region
      $region89: #{cvt_forward.2} parent=11 // pred_check
        %p571 = pneg %p473
      $region90: #{cvt_forward.2} parent=11 // pred_check_branch
        %573 = sbr.rel (%p571) target = $region92
      $region91: #{cvt_forward.2} parent=11 // pred_region
        _
      $region92: #{cvt_forward.2} parent=11 // pred_fallthru
        _
    $region12: #{cvt_forward.2} parent=5 // pred_fallthru
      _
    %p574 = scmp.lt.s32.totalorder %s27, 2
    // Predicated region
    $region93: #{cvt_forward.2} parent=5 // pred_check
      %p575 = pneg %p574
    $region94: #{cvt_forward.2} parent=5 // pred_check_branch
      %577 = sbr.rel (%p575) target = $region96
    $region95: #{cvt_forward.2} parent=5 // pred_region
      // Predicated region
      $region97: #{cvt_forward.2} parent=95 // pred_check
        %p578 = pneg %p47
      $region98: #{cvt_forward.2} parent=95 // pred_check_branch
        %580 = sbr.rel (%p578) target = $region100
      $region99: #{cvt_forward.2} parent=95 // pred_region
        %p581 = scmp.lt.s32.totalorder %s27, 1
        %s582 = scalar_select %p581, %s27, 1
        %s583 = smul.addr %s582, 12
        %s584 = smul.addr %s583, 8
        %s585 = scalar_lea.vmem %s0, %s584
      $region100: #{cvt_forward.2} parent=95 // pred_fallthru
        _
    $region96: #{cvt_forward.2} parent=5 // pred_fallthru
      _
    %p586 = scmp.le.s32.totalorder 1, %s27
    %p587 = scmp.lt.s32.totalorder %s27, 3
    %p588 = pnand %p586, %p587
    %p589 = pneg %p588
    // Predicated region
    $region101: #{cvt_forward.2} parent=5 // pred_check
      _
    $region102: #{cvt_forward.2} parent=5 // pred_check_branch
      %591 = sbr.rel (%p588) target = $region104
    $region103: #{cvt_forward.2} parent=5 // pred_region
      %s592 = ssub.s32 %s27, 1
      %p593 = scmp.lt.s32.totalorder %s32, 1
      %s594 = scalar_select %p593, %s32, 1
      %s595 = smul.addr %s594, 12
      %s596 = smul.addr %s595, 8
      %s597 = scalar_lea.vmem %s0, %s596
      %p598 = pneg %p53
      %p599 = pneg %p50
      %p600 = pneg %p74
      %p601 = pneg %p71
      %p602 = pneg %p95
      %p603 = pneg %p92
      %p604 = pneg %p116
      %p605 = pneg %p113
      %p606 = pneg %p137
      %p607 = pneg %p134
      %p608 = pneg %p158
      %p609 = pneg %p155
      %p610 = pneg %p179
      %p611 = pneg %p176
      %p612 = pneg %p200
      %p613 = pneg %p197
      %p614 = pneg %p221
      %p615 = pneg %p218
      %p616 = pneg %p242
      %p617 = pneg %p239
      %p618 = pneg %p263
      %p619 = pneg %p260
      %p620 = pneg %p284
      %p621 = pneg %p281
      %p622 = pneg %p305
      %p623 = pneg %p302
      %p624 = pneg %p326
      %p625 = pneg %p323
      %p626 = pneg %p347
      %p627 = pneg %p344
      %p628 = pneg %p368
      %p629 = pneg %p365
      %p630 = pneg %p389
      %p631 = pneg %p386
      %p632 = pneg %p410
      %p633 = pneg %p407
      %p634 = pneg %p431
      %p635 = pneg %p428
      %p636 = pneg %p452
      %p637 = pneg %p449
      %p638 = pneg %p473
      %p639 = pneg %p470
      %p640 = pneg %p499
      %p641 = pneg %p496
      %p642 = scmp.lt.s32.totalorder %s32, 1
      %s643 = scalar_select %p642, %s32, 1
      %s644 = smul.addr %s643, 12
      %s645 = smul.addr %s644, 8
      %s646 = scalar_lea.vmem %s21, %s645
      %p647 = scmp.lt.s32.totalorder %s32, 1
      %s648 = scalar_select %p647, %s32, 1
      %s649 = smul.addr %s648, 12
      %s650 = smul.addr %s649, 8
      %s651 = scalar_lea.vmem %s0, %s650
      %p652 = scmp.lt.s32.totalorder %s32, 1
      %s653 = scalar_select %p652, %s32, 1
      %s654 = smul.addr %s653, 12
      %s655 = smul.addr %s654, 8
      %s656 = scalar_lea.vmem %s21, %s655
      %v658 = vld [vmem:[%s651] sm:$0xff]
      %v659 = vld [vmem:[%s651 + $0x8] sm:$0xff]
      %v660 = vld [vmem:[%s651 + $0x10] sm:$0xff]
      %v661 = vld [vmem:[%s651 + $0x18] sm:$0xff]
      %v662 = vld [vmem:[%s651 + $0x20] sm:$0xff]
      %v663 = vld [vmem:[%s651 + $0x28] sm:$0xff]
      %v664 = vld [vmem:[%s651 + $0x30] sm:$0xff]
      %v665 = vld [vmem:[%s651 + $0x38] sm:$0xff]
      %v666 = vld [vmem:[%s651 + $0x40] sm:$0xff]
      %v667 = vld [vmem:[%s651 + $0x48] sm:$0xff]
      %v668 = vld [vmem:[%s651 + $0x50] sm:$0xff]
      %v669 = vld [vmem:[%s651 + $0x58] sm:$0xff]
      %v670 = vld [vmem:[%s1] sm:$0xf]
      %v671 = vld [vmem:[%s1 + $0x4] sm:$0xf]
      %v672 = vld [vmem:[%s1 + $0x8] sm:$0xf]
      %v673 = vld [vmem:[%s1 + $0xc] sm:$0xf]
      %v674 = vld [vmem:[%s1 + $0x10] sm:$0xf]
      %v675 = vld [vmem:[%s1 + $0x14] sm:$0xf]
      %v676 = vpack.c.bf16 %v659, %v658
      %v677 = vpack.c.bf16 %v661, %v660
      %v678 = vpack.c.bf16 %v663, %v662
      %v679 = vpack.c.bf16 %v665, %v664
      %v680 = vpack.c.bf16 %v667, %v666
      %v681 = vpack.c.bf16 %v669, %v668
      %v682 = vld [vmem:[%s2] sm:$0x1]
      %v684 = vlaneseq
      %v685 = vshrl.u32 %v684, 7
      %v686 = vsub.s32 0, %v685
      %v687 = vrot.slane %v682, %v686
      %v695 = vunpack.c.l.b16 %v670
      %v696 = vunpack.c.l.b16 %v671
      %v697 = vunpack.c.l.b16 %v672
      %v698 = vunpack.c.l.b16 %v673
      %v699 = vunpack.c.l.b16 %v674
      %v700 = vunpack.c.l.b16 %v675
      %v701 = vpack.c.b16 %v696, %v695
      %v702 = vpack.c.b16 %v698, %v697
      %v703 = vpack.c.b16 %v700, %v699
      %vm707 = vcmask 392192
      %v709 = vsel %vm707, %v676, 0
      %v712 = vsel %vm707, %v677, 0
      %v715 = vsel %vm707, %v678, 0
      %v718 = vsel %vm707, %v679, 0
      %v721 = vsel %vm707, %v680, 0
      %v724 = vsel %vm707, %v681, 0
      %726 = vmatprep.subr.bf16.mxu0 0
      %727 = vmatpush1.bf16.msra.mxu0 %v701
      %728 = vmatprep.subr.bf16.mxu0 0
      %729 = vmatpush1.bf16.msra.mxu0 %v702
      %730 = vmatprep.subr.bf16.mxu0 0
      %731 = vmatpush1.bf16.msra.mxu0 %v703
      %732 = vmatprep.subr.bf16.mxu0 0
      %733 = vmatpush1.bf16.msra.mxu0 0
      %734 = vmatprep.subr.bf16.mxu0 0
      %735 = vmatpush1.bf16.msra.mxu0 0
      %736 = vmatprep.subr.bf16.mxu0 0
      %737 = vmatpush1.bf16.msra.mxu0 0
      %738 = vmatprep.subr.bf16.mxu0 0
      %739 = vmatpush1.bf16.msra.mxu0 0
      %740 = vmatprep.subr.bf16.mxu0 0
      %741 = vmatpush1.bf16.msra.mxu0 0
      %742 = vmatprep.subr.bf16.mxu0 0
      %743 = vmatpush1.bf16.msra.mxu0 0
      %744 = vmatprep.subr.bf16.mxu0 0
      %745 = vmatpush1.bf16.msra.mxu0 0
      %746 = vmatprep.subr.bf16.mxu0 0
      %747 = vmatpush1.bf16.msra.mxu0 0
      %748 = vmatprep.subr.bf16.mxu0 0
      %749 = vmatpush1.bf16.msra.mxu0 0
      %750 = vmatprep.subr.bf16.mxu0 0
      %751 = vmatpush1.bf16.msra.mxu0 0
      %752 = vmatprep.subr.bf16.mxu0 0
      %753 = vmatpush1.bf16.msra.mxu0 0
      %754 = vmatprep.subr.bf16.mxu0 0
      %755 = vmatpush1.bf16.msra.mxu0 0
      %756 = vmatprep.subr.bf16.mxu0 0
      %757 = vmatpush1.bf16.msra.mxu0 0
      %758 = vmatprep.mubr.bf16.mxu0 0
      %759 = vmatmul.mubr.bf16.gmra.mrb[0].mxu0 %v709
      %v760 = vpop.f32.mrb[0].mxu0
      %v761 = vadd.f32 %v687, %v760
      %v762 = vpop.f32.mrb[0].mxu0
      %v763 = vpop.f32.mrb[0].mxu0
      %v764 = vadd.f32 %v687, %v763
      %v765 = vpop.f32.mrb[0].mxu0
      %766 = vmatprep.mubr.bf16.mxu0 0
      %767 = vmatmul.mubr.bf16.gmra.mrb[0].mxu0 %v712
      %v768 = vpop.f32.mrb[0].mxu0
      %v769 = vadd.f32 %v687, %v768
      %v770 = vpop.f32.mrb[0].mxu0
      %v771 = vpop.f32.mrb[0].mxu0
      %v772 = vadd.f32 %v687, %v771
      %v773 = vpop.f32.mrb[0].mxu0
      %774 = vmatprep.mubr.bf16.mxu0 0
      %775 = vmatmul.mubr.bf16.gmra.mrb[0].mxu0 %v715
      %v776 = vpop.f32.mrb[0].mxu0
      %v777 = vadd.f32 %v687, %v776
      %v778 = vpop.f32.mrb[0].mxu0
      %v779 = vpop.f32.mrb[0].mxu0
      %v780 = vadd.f32 %v687, %v779
      %v781 = vpop.f32.mrb[0].mxu0
      %782 = vmatprep.mubr.bf16.mxu0 0
      %783 = vmatmul.mubr.bf16.gmra.mrb[0].mxu0 %v718
      %v784 = vpop.f32.mrb[0].mxu0
      %v785 = vadd.f32 %v687, %v784
      %v786 = vpop.f32.mrb[0].mxu0
      %v787 = vpop.f32.mrb[0].mxu0
      %v788 = vadd.f32 %v687, %v787
      %v789 = vpop.f32.mrb[0].mxu0
      %790 = vmatprep.mubr.bf16.mxu0 0
      %791 = vmatmul.mubr.bf16.gmra.mrb[0].mxu0 %v721
      %v792 = vpop.f32.mrb[0].mxu0
      %v793 = vadd.f32 %v687, %v792
      %v794 = vpop.f32.mrb[0].mxu0
      %v795 = vpop.f32.mrb[0].mxu0
      %v796 = vadd.f32 %v687, %v795
      %v797 = vpop.f32.mrb[0].mxu0
      %798 = vmatprep.mubr.bf16.mxu0 0
      %799 = vmatmul.mubr.bf16.gmra.mrb[0].mxu0 %v724
      %v800 = vpop.f32.mrb[0].mxu0
      %v801 = vadd.f32 %v687, %v800
      %v802 = vpop.f32.mrb[0].mxu0
      %v803 = vpop.f32.mrb[0].mxu0
      %v804 = vadd.f32 %v687, %v803
      %v805 = vpop.f32.mrb[0].mxu0
      %806 = vdwg.mxu0
      %v807 = vld [vmem:[%s3] sm:$0x1]
      %v808 = vld [vmem:[%s4] sm:$0x1]
      %vm809 = vcmask 261120
      %v810 = vsel %vm809, %v761, 0.0
      %811 = vadd.xlane.f32.xlu0 %v810
      %v812 = vpop.xlane.xlu0 %811
      %v813 = vsel %vm809, %v764, 0.0
      %814 = vadd.xlane.f32.xlu0 %v813
      %v815 = vpop.xlane.xlu0 %814
      %v816 = vsel %vm809, %v769, 0.0
      %817 = vadd.xlane.f32.xlu0 %v816
      %v818 = vpop.xlane.xlu0 %817
      %v819 = vsel %vm809, %v772, 0.0
      %820 = vadd.xlane.f32.xlu0 %v819
      %v821 = vpop.xlane.xlu0 %820
      %v822 = vsel %vm809, %v777, 0.0
      %823 = vadd.xlane.f32.xlu0 %v822
      %v824 = vpop.xlane.xlu0 %823
      %v825 = vsel %vm809, %v780, 0.0
      %826 = vadd.xlane.f32.xlu0 %v825
      %v827 = vpop.xlane.xlu0 %826
      %v828 = vsel %vm809, %v785, 0.0
      %829 = vadd.xlane.f32.xlu0 %v828
      %v830 = vpop.xlane.xlu0 %829
      %v831 = vsel %vm809, %v788, 0.0
      %832 = vadd.xlane.f32.xlu0 %v831
      %v833 = vpop.xlane.xlu0 %832
      %v834 = vsel %vm809, %v793, 0.0
      %835 = vadd.xlane.f32.xlu0 %v834
      %v836 = vpop.xlane.xlu0 %835
      %v837 = vsel %vm809, %v796, 0.0
      %838 = vadd.xlane.f32.xlu0 %v837
      %v839 = vpop.xlane.xlu0 %838
      %v840 = vsel %vm809, %v801, 0.0
      %841 = vadd.xlane.f32.xlu0 %v840
      %v842 = vpop.xlane.xlu0 %841
      %v843 = vsel %vm809, %v804, 0.0
      %844 = vadd.xlane.f32.xlu0 %v843
      %v845 = vpop.xlane.xlu0 %844
      %v846 = vrcp.pop 32.0
      %v847 = vmul.f32 %v812, %v846
      %v848 = vmul.f32 %v815, %v846
      %v849 = vmul.f32 %v818, %v846
      %v850 = vmul.f32 %v821, %v846
      %v851 = vmul.f32 %v824, %v846
      %v852 = vmul.f32 %v827, %v846
      %v853 = vmul.f32 %v830, %v846
      %v854 = vmul.f32 %v833, %v846
      %v855 = vmul.f32 %v836, %v846
      %v856 = vmul.f32 %v839, %v846
      %v857 = vmul.f32 %v842, %v846
      %v858 = vmul.f32 %v845, %v846
      %v859 = vsub.f32 %v761, %v847
      %v860 = vsub.f32 %v764, %v848
      %v861 = vsub.f32 %v769, %v849
      %v862 = vsub.f32 %v772, %v850
      %v863 = vsub.f32 %v777, %v851
      %v864 = vsub.f32 %v780, %v852
      %v865 = vsub.f32 %v785, %v853
      %v866 = vsub.f32 %v788, %v854
      %v867 = vsub.f32 %v793, %v855
      %v868 = vsub.f32 %v796, %v856
      %v869 = vsub.f32 %v801, %v857
      %v870 = vsub.f32 %v804, %v858
      %v871 = vmul.f32 %v859, %v859
      %v872 = vmul.f32 %v860, %v860
      %v873 = vmul.f32 %v861, %v861
      %v874 = vmul.f32 %v862, %v862
      %v875 = vmul.f32 %v863, %v863
      %v876 = vmul.f32 %v864, %v864
      %v877 = vmul.f32 %v865, %v865
      %v878 = vmul.f32 %v866, %v866
      %v879 = vmul.f32 %v867, %v867
      %v880 = vmul.f32 %v868, %v868
      %v881 = vmul.f32 %v869, %v869
      %v882 = vmul.f32 %v870, %v870
      %v883 = vsel %vm809, %v871, 0.0
      %884 = vadd.xlane.f32.xlu0 %v883
      %v885 = vpop.xlane.xlu0 %884
      %v886 = vsel %vm809, %v872, 0.0
      %887 = vadd.xlane.f32.xlu0 %v886
      %v888 = vpop.xlane.xlu0 %887
      %v889 = vsel %vm809, %v873, 0.0
      %890 = vadd.xlane.f32.xlu0 %v889
      %v891 = vpop.xlane.xlu0 %890
      %v892 = vsel %vm809, %v874, 0.0
      %893 = vadd.xlane.f32.xlu0 %v892
      %v894 = vpop.xlane.xlu0 %893
      %v895 = vsel %vm809, %v875, 0.0
      %896 = vadd.xlane.f32.xlu0 %v895
      %v897 = vpop.xlane.xlu0 %896
      %v898 = vsel %vm809, %v876, 0.0
      %899 = vadd.xlane.f32.xlu0 %v898
      %v900 = vpop.xlane.xlu0 %899
      %v901 = vsel %vm809, %v877, 0.0
      %902 = vadd.xlane.f32.xlu0 %v901
      %v903 = vpop.xlane.xlu0 %902
      %v904 = vsel %vm809, %v878, 0.0
      %905 = vadd.xlane.f32.xlu0 %v904
      %v906 = vpop.xlane.xlu0 %905
      %v907 = vsel %vm809, %v879, 0.0
      %908 = vadd.xlane.f32.xlu0 %v907
      %v909 = vpop.xlane.xlu0 %908
      %v910 = vsel %vm809, %v880, 0.0
      %911 = vadd.xlane.f32.xlu0 %v910
      %v912 = vpop.xlane.xlu0 %911
      %v913 = vsel %vm809, %v881, 0.0
      %914 = vadd.xlane.f32.xlu0 %v913
      %v915 = vpop.xlane.xlu0 %914
      %v916 = vsel %vm809, %v882, 0.0
      %917 = vadd.xlane.f32.xlu0 %v916
      %v918 = vpop.xlane.xlu0 %917
      %v919 = vmul.f32 %v885, %v846
      %v920 = vmul.f32 %v888, %v846
      %v921 = vmul.f32 %v891, %v846
      %v922 = vmul.f32 %v894, %v846
      %v923 = vmul.f32 %v897, %v846
      %v924 = vmul.f32 %v900, %v846
      %v925 = vmul.f32 %v903, %v846
      %v926 = vmul.f32 %v906, %v846
      %v927 = vmul.f32 %v909, %v846
      %v928 = vmul.f32 %v912, %v846
      %v929 = vmul.f32 %v915, %v846
      %v930 = vmul.f32 %v918, %v846
      %v931 = vadd.f32 %v919, 1e-05
      %v932 = vadd.f32 %v920, 1e-05
      %v933 = vadd.f32 %v921, 1e-05
      %v934 = vadd.f32 %v922, 1e-05
      %v935 = vadd.f32 %v923, 1e-05
      %v936 = vadd.f32 %v924, 1e-05
      %v937 = vadd.f32 %v925, 1e-05
      %v938 = vadd.f32 %v926, 1e-05
      %v939 = vadd.f32 %v927, 1e-05
      %v940 = vadd.f32 %v928, 1e-05
      %v941 = vadd.f32 %v929, 1e-05
      %v942 = vadd.f32 %v930, 1e-05
      %v943 = vrsqrt.pop %v931
      %v944 = vrsqrt.pop %v932
      %v945 = vrsqrt.pop %v933
      %v946 = vrsqrt.pop %v934
      %v947 = vrsqrt.pop %v935
      %v948 = vrsqrt.pop %v936
      %v949 = vrsqrt.pop %v937
      %v950 = vrsqrt.pop %v938
      %v951 = vrsqrt.pop %v939
      %v952 = vrsqrt.pop %v940
      %v953 = vrsqrt.pop %v941
      %v954 = vrsqrt.pop %v942
      %v955 = vmul.f32 %v859, %v943
      %v956 = vmul.f32 %v860, %v944
      %v957 = vmul.f32 %v861, %v945
      %v958 = vmul.f32 %v862, %v946
      %v959 = vmul.f32 %v863, %v947
      %v960 = vmul.f32 %v864, %v948
      %v961 = vmul.f32 %v865, %v949
      %v962 = vmul.f32 %v866, %v950
      %v963 = vmul.f32 %v867, %v951
      %v964 = vmul.f32 %v868, %v952
      %v965 = vmul.f32 %v869, %v953
      %v966 = vmul.f32 %v870, %v954
      %v968 = vlaneseq
      %v969 = vshrl.u32 %v968, 7
      %v970 = vsub.s32 0, %v969
      %v971 = vrot.slane %v807, %v970
      %v973 = vmul.f32 %v955, %v971
      %v974 = vmul.f32 %v956, %v971
      %v975 = vmul.f32 %v957, %v971
      %v976 = vmul.f32 %v958, %v971
      %v977 = vmul.f32 %v959, %v971
      %v978 = vmul.f32 %v960, %v971
      %v979 = vmul.f32 %v961, %v971
      %v980 = vmul.f32 %v962, %v971
      %v981 = vmul.f32 %v963, %v971
      %v982 = vmul.f32 %v964, %v971
      %v983 = vmul.f32 %v965, %v971
      %v984 = vmul.f32 %v966, %v971
      %v986 = vlaneseq
      %v987 = vshrl.u32 %v986, 7
      %v988 = vsub.s32 0, %v987
      %v989 = vrot.slane %v808, %v988
      %v991 = vadd.f32 %v973, %v989
      %v992 = vadd.f32 %v974, %v989
      %v993 = vadd.f32 %v975, %v989
      %v994 = vadd.f32 %v976, %v989
      %v995 = vadd.f32 %v977, %v989
      %v996 = vadd.f32 %v978, %v989
      %v997 = vadd.f32 %v979, %v989
      %v998 = vadd.f32 %v980, %v989
      %v999 = vadd.f32 %v981, %v989
      %v1000 = vadd.f32 %v982, %v989
      %v1001 = vadd.f32 %v983, %v989
      %v1002 = vadd.f32 %v984, %v989
      %v1003 = vlaneseq
      %v1004 = vshrl.u32 %v1003, 7
      %v1005 = vadd.s32 %v1004, 8
      %v1006 = vadd.s32 %v1004, 16
      %v1007 = vadd.s32 %v1004, 24
      %v1008 = vadd.s32 %v1004, 32
      %v1009 = vadd.s32 %v1004, 40
      %v1010 = vadd.s32 %v1004, 48
      %v1011 = vadd.s32 %v1004, 56
      %v1012 = vadd.s32 %v1004, 64
      %v1013 = vadd.s32 %v1004, 72
      %v1014 = vadd.s32 %v1004, 80
      %v1015 = vadd.s32 %v1004, 88
      %v1016 = vlaneseq
      %v1017 = vand.u32 %v1016, 127
      %vm1018 = vcmp.lt.s32.totalorder %v1004, 32
      %vm1019 = vcmp.lt.s32.totalorder %v1005, 32
      %vm1020 = vcmp.lt.s32.totalorder %v1006, 32
      %vm1021 = vcmp.lt.s32.totalorder %v1007, 32
      %vm1022 = vcmp.lt.s32.totalorder %v1008, 32
      %vm1023 = vcmp.lt.s32.totalorder %v1009, 32
      %vm1024 = vcmp.lt.s32.totalorder %v1010, 32
      %vm1025 = vcmp.lt.s32.totalorder %v1011, 32
      %vm1026 = vcmp.lt.s32.totalorder %v1012, 32
      %vm1027 = vcmp.lt.s32.totalorder %v1013, 32
      %vm1028 = vcmp.lt.s32.totalorder %v1014, 32
      %vm1029 = vcmp.lt.s32.totalorder %v1015, 32
      %vm1030 = vcmp.ge.s32.totalorder %v1017, 32
      %vm1031 = vmand %vm1018, %vm1030
      %vm1032 = vmand %vm1019, %vm1030
      %vm1033 = vmand %vm1020, %vm1030
      %vm1034 = vmand %vm1021, %vm1030
      %vm1035 = vmand %vm1022, %vm1030
      %vm1036 = vmand %vm1023, %vm1030
      %vm1037 = vmand %vm1024, %vm1030
      %vm1038 = vmand %vm1025, %vm1030
      %vm1039 = vmand %vm1026, %vm1030
      %vm1040 = vmand %vm1027, %vm1030
      %vm1041 = vmand %vm1028, %vm1030
      %vm1042 = vmand %vm1029, %vm1030
      %v1043 = vld [vmem:[%s5] sm:$0x1]
      %v1044 = vld [vmem:[%s6] sm:$0x1]
      %v1045 = vsel %vm809, %v991, 0.0
      %1046 = vadd.xlane.f32.xlu0 %v1045
      %v1047 = vpop.xlane.xlu0 %1046
      %v1048 = vsel %vm809, %v992, 0.0
      %1049 = vadd.xlane.f32.xlu0 %v1048
      %v1050 = vpop.xlane.xlu0 %1049
      %v1051 = vsel %vm809, %v993, 0.0
      %1052 = vadd.xlane.f32.xlu0 %v1051
      %v1053 = vpop.xlane.xlu0 %1052
      %v1054 = vsel %vm809, %v994, 0.0
      %1055 = vadd.xlane.f32.xlu0 %v1054
      %v1056 = vpop.xlane.xlu0 %1055
      %v1057 = vsel %vm809, %v995, 0.0
      %1058 = vadd.xlane.f32.xlu0 %v1057
      %v1059 = vpop.xlane.xlu0 %1058
      %v1060 = vsel %vm809, %v996, 0.0
      %1061 = vadd.xlane.f32.xlu0 %v1060
      %v1062 = vpop.xlane.xlu0 %1061
      %v1063 = vsel %vm809, %v997, 0.0
      %1064 = vadd.xlane.f32.xlu0 %v1063
      %v1065 = vpop.xlane.xlu0 %1064
      %v1066 = vsel %vm809, %v998, 0.0
      %1067 = vadd.xlane.f32.xlu0 %v1066
      %v1068 = vpop.xlane.xlu0 %1067
      %v1069 = vsel %vm809, %v999, 0.0
      %1070 = vadd.xlane.f32.xlu0 %v1069
      %v1071 = vpop.xlane.xlu0 %1070
      %v1072 = vsel %vm809, %v1000, 0.0
      %1073 = vadd.xlane.f32.xlu0 %v1072
      %v1074 = vpop.xlane.xlu0 %1073
      %v1075 = vsel %vm809, %v1001, 0.0
      %1076 = vadd.xlane.f32.xlu0 %v1075
      %v1077 = vpop.xlane.xlu0 %1076
      %v1078 = vsel %vm809, %v1002, 0.0
      %1079 = vadd.xlane.f32.xlu0 %v1078
      %v1080 = vpop.xlane.xlu0 %1079
      %v1081 = vmul.f32 %v1047, %v846
      %v1082 = vmul.f32 %v1050, %v846
      %v1083 = vmul.f32 %v1053, %v846
      %v1084 = vmul.f32 %v1056, %v846
      %v1085 = vmul.f32 %v1059, %v846
      %v1086 = vmul.f32 %v1062, %v846
      %v1087 = vmul.f32 %v1065, %v846
      %v1088 = vmul.f32 %v1068, %v846
      %v1089 = vmul.f32 %v1071, %v846
      %v1090 = vmul.f32 %v1074, %v846
      %v1091 = vmul.f32 %v1077, %v846
      %v1092 = vmul.f32 %v1080, %v846
      %v1093 = vsub.f32 %v991, %v1081
      %v1094 = vsub.f32 %v992, %v1082
      %v1095 = vsub.f32 %v993, %v1083
      %v1096 = vsub.f32 %v994, %v1084
      %v1097 = vsub.f32 %v995, %v1085
      %v1098 = vsub.f32 %v996, %v1086
      %v1099 = vsub.f32 %v997, %v1087
      %v1100 = vsub.f32 %v998, %v1088
      %v1101 = vsub.f32 %v999, %v1089
      %v1102 = vsub.f32 %v1000, %v1090
      %v1103 = vsub.f32 %v1001, %v1091
      %v1104 = vsub.f32 %v1002, %v1092
      %v1105 = vmul.f32 %v1093, %v1093
      %v1106 = vmul.f32 %v1094, %v1094
      %v1107 = vmul.f32 %v1095, %v1095
      %v1108 = vmul.f32 %v1096, %v1096
      %v1109 = vmul.f32 %v1097, %v1097
      %v1110 = vmul.f32 %v1098, %v1098
      %v1111 = vmul.f32 %v1099, %v1099
      %v1112 = vmul.f32 %v1100, %v1100
      %v1113 = vmul.f32 %v1101, %v1101
      %v1114 = vmul.f32 %v1102, %v1102
      %v1115 = vmul.f32 %v1103, %v1103
      %v1116 = vmul.f32 %v1104, %v1104
      %v1117 = vsel %vm809, %v1105, 0.0
      %1118 = vadd.xlane.f32.xlu0 %v1117
      %v1119 = vpop.xlane.xlu0 %1118
      %v1120 = vsel %vm809, %v1106, 0.0
      %1121 = vadd.xlane.f32.xlu0 %v1120
      %v1122 = vpop.xlane.xlu0 %1121
      %v1123 = vsel %vm809, %v1107, 0.0
      %1124 = vadd.xlane.f32.xlu0 %v1123
      %v1125 = vpop.xlane.xlu0 %1124
      %v1126 = vsel %vm809, %v1108, 0.0
      %1127 = vadd.xlane.f32.xlu0 %v1126
      %v1128 = vpop.xlane.xlu0 %1127
      %v1129 = vsel %vm809, %v1109, 0.0
      %1130 = vadd.xlane.f32.xlu0 %v1129
      %v1131 = vpop.xlane.xlu0 %1130
      %v1132 = vsel %vm809, %v1110, 0.0
      %1133 = vadd.xlane.f32.xlu0 %v1132
      %v1134 = vpop.xlane.xlu0 %1133
      %v1135 = vsel %vm809, %v1111, 0.0
      %1136 = vadd.xlane.f32.xlu0 %v1135
      %v1137 = vpop.xlane.xlu0 %1136
      %v1138 = vsel %vm809, %v1112, 0.0
      %1139 = vadd.xlane.f32.xlu0 %v1138
      %v1140 = vpop.xlane.xlu0 %1139
      %v1141 = vsel %vm809, %v1113, 0.0
      %1142 = vadd.xlane.f32.xlu0 %v1141
      %v1143 = vpop.xlane.xlu0 %1142
      %v1144 = vsel %vm809, %v1114, 0.0
      %1145 = vadd.xlane.f32.xlu0 %v1144
      %v1146 = vpop.xlane.xlu0 %1145
      %v1147 = vsel %vm809, %v1115, 0.0
      %1148 = vadd.xlane.f32.xlu0 %v1147
      %v1149 = vpop.xlane.xlu0 %1148
      %v1150 = vsel %vm809, %v1116, 0.0
      %1151 = vadd.xlane.f32.xlu0 %v1150
      %v1152 = vpop.xlane.xlu0 %1151
      %v1153 = vmul.f32 %v1119, %v846
      %v1154 = vmul.f32 %v1122, %v846
      %v1155 = vmul.f32 %v1125, %v846
      %v1156 = vmul.f32 %v1128, %v846
      %v1157 = vmul.f32 %v1131, %v846
      %v1158 = vmul.f32 %v1134, %v846
      %v1159 = vmul.f32 %v1137, %v846
      %v1160 = vmul.f32 %v1140, %v846
      %v1161 = vmul.f32 %v1143, %v846
      %v1162 = vmul.f32 %v1146, %v846
      %v1163 = vmul.f32 %v1149, %v846
      %v1164 = vmul.f32 %v1152, %v846
      %v1165 = vadd.f32 %v1153, 1e-05
      %v1166 = vadd.f32 %v1154, 1e-05
      %v1167 = vadd.f32 %v1155, 1e-05
      %v1168 = vadd.f32 %v1156, 1e-05
      %v1169 = vadd.f32 %v1157, 1e-05
      %v1170 = vadd.f32 %v1158, 1e-05
      %v1171 = vadd.f32 %v1159, 1e-05
      %v1172 = vadd.f32 %v1160, 1e-05
      %v1173 = vadd.f32 %v1161, 1e-05
      %v1174 = vadd.f32 %v1162, 1e-05
      %v1175 = vadd.f32 %v1163, 1e-05
      %v1176 = vadd.f32 %v1164, 1e-05
      %v1177 = vrsqrt.pop %v1165
      %v1178 = vrsqrt.pop %v1166
      %v1179 = vrsqrt.pop %v1167
      %v1180 = vrsqrt.pop %v1168
      %v1181 = vrsqrt.pop %v1169
      %v1182 = vrsqrt.pop %v1170
      %v1183 = vrsqrt.pop %v1171
      %v1184 = vrsqrt.pop %v1172
      %v1185 = vrsqrt.pop %v1173
      %v1186 = vrsqrt.pop %v1174
      %v1187 = vrsqrt.pop %v1175
      %v1188 = vrsqrt.pop %v1176
      %v1189 = vmul.f32 %v1093, %v1177
      %v1190 = vmul.f32 %v1094, %v1178
      %v1191 = vmul.f32 %v1095, %v1179
      %v1192 = vmul.f32 %v1096, %v1180
      %v1193 = vmul.f32 %v1097, %v1181
      %v1194 = vmul.f32 %v1098, %v1182
      %v1195 = vmul.f32 %v1099, %v1183
      %v1196 = vmul.f32 %v1100, %v1184
      %v1197 = vmul.f32 %v1101, %v1185
      %v1198 = vmul.f32 %v1102, %v1186
      %v1199 = vmul.f32 %v1103, %v1187
      %v1200 = vmul.f32 %v1104, %v1188
      %v1202 = vlaneseq
      %v1203 = vshrl.u32 %v1202, 7
      %v1204 = vsub.s32 0, %v1203
      %v1205 = vrot.slane %v1043, %v1204
      %v1207 = vmul.f32 %v1189, %v1205
      %v1208 = vmul.f32 %v1190, %v1205
      %v1209 = vmul.f32 %v1191, %v1205
      %v1210 = vmul.f32 %v1192, %v1205
      %v1211 = vmul.f32 %v1193, %v1205
      %v1212 = vmul.f32 %v1194, %v1205
      %v1213 = vmul.f32 %v1195, %v1205
      %v1214 = vmul.f32 %v1196, %v1205
      %v1215 = vmul.f32 %v1197, %v1205
      %v1216 = vmul.f32 %v1198, %v1205
      %v1217 = vmul.f32 %v1199, %v1205
      %v1218 = vmul.f32 %v1200, %v1205
      %v1220 = vlaneseq
      %v1221 = vshrl.u32 %v1220, 7
      %v1222 = vsub.s32 0, %v1221
      %v1223 = vrot.slane %v1044, %v1222
      %v1225 = vadd.f32 %v1207, %v1223
      %v1226 = vadd.f32 %v1208, %v1223
      %v1227 = vadd.f32 %v1209, %v1223
      %v1228 = vadd.f32 %v1210, %v1223
      %v1229 = vadd.f32 %v1211, %v1223
      %v1230 = vadd.f32 %v1212, %v1223
      %v1231 = vadd.f32 %v1213, %v1223
      %v1232 = vadd.f32 %v1214, %v1223
      %v1233 = vadd.f32 %v1215, %v1223
      %v1234 = vadd.f32 %v1216, %v1223
      %v1235 = vadd.f32 %v1217, %v1223
      %v1236 = vadd.f32 %v1218, %v1223
      %v1237 = vld [vmem:[%s7] sm:$0xf]
      %v1238 = vld [vmem:[%s7 + $0x4] sm:$0xf]
      %v1239 = vld [vmem:[%s7 + $0x8] sm:$0xf]
      %v1240 = vld [vmem:[%s7 + $0xc] sm:$0xf]
      %v1241 = vpack.c.bf16 %v1226, %v1225
      %v1242 = vpack.c.bf16 %v1228, %v1227
      %v1243 = vpack.c.bf16 %v1230, %v1229
      %v1244 = vpack.c.bf16 %v1232, %v1231
      %v1245 = vpack.c.bf16 %v1234, %v1233
      %v1246 = vpack.c.bf16 %v1236, %v1235
      %v1247 = vld [vmem:[%s8] sm:$0x1]
      %v1249 = vlaneseq
      %v1250 = vshrl.u32 %v1249, 7
      %v1251 = vsub.s32 0, %v1250
      %v1252 = vrot.slane %v1247, %v1251
      %v1258 = vunpack.c.l.b16 %v1237
      %v1259 = vunpack.c.l.b16 %v1238
      %v1260 = vunpack.c.l.b16 %v1239
      %v1261 = vunpack.c.l.b16 %v1240
      %v1262 = vpack.c.b16 %v1259, %v1258
      %v1263 = vpack.c.b16 %v1261, %v1260
      %v1267 = vsel %vm809, %v1241, 0
      %v1270 = vsel %vm809, %v1242, 0
      %v1273 = vsel %vm809, %v1243, 0
      %v1276 = vsel %vm809, %v1244, 0
      %v1279 = vsel %vm809, %v1245, 0
      %v1282 = vsel %vm809, %v1246, 0
      %1284 = vmatprep.subr.bf16.mxu0 0
      %1285 = vmatpush1.bf16.msra.mxu0 %v1262
      %1286 = vmatprep.subr.bf16.mxu0 0
      %1287 = vmatpush1.bf16.msra.mxu0 %v1263
      %1288 = vmatprep.subr.bf16.mxu0 0
      %1289 = vmatpush1.bf16.msra.mxu0 0
      %1290 = vmatprep.subr.bf16.mxu0 0
      %1291 = vmatpush1.bf16.msra.mxu0 0
      %1292 = vmatprep.subr.bf16.mxu0 0
      %1293 = vmatpush1.bf16.msra.mxu0 0
      %1294 = vmatprep.subr.bf16.mxu0 0
      %1295 = vmatpush1.bf16.msra.mxu0 0
      %1296 = vmatprep.subr.bf16.mxu0 0
      %1297 = vmatpush1.bf16.msra.mxu0 0
      %1298 = vmatprep.subr.bf16.mxu0 0
      %1299 = vmatpush1.bf16.msra.mxu0 0
      %1300 = vmatprep.subr.bf16.mxu0 0
      %1301 = vmatpush1.bf16.msra.mxu0 0
      %1302 = vmatprep.subr.bf16.mxu0 0
      %1303 = vmatpush1.bf16.msra.mxu0 0
      %1304 = vmatprep.subr.bf16.mxu0 0
      %1305 = vmatpush1.bf16.msra.mxu0 0
      %1306 = vmatprep.subr.bf16.mxu0 0
      %1307 = vmatpush1.bf16.msra.mxu0 0
      %1308 = vmatprep.subr.bf16.mxu0 0
      %1309 = vmatpush1.bf16.msra.mxu0 0
      %1310 = vmatprep.subr.bf16.mxu0 0
      %1311 = vmatpush1.bf16.msra.mxu0 0
      %1312 = vmatprep.subr.bf16.mxu0 0
      %1313 = vmatpush1.bf16.msra.mxu0 0
      %1314 = vmatprep.subr.bf16.mxu0 0
      %1315 = vmatpush1.bf16.msra.mxu0 0
      %1316 = vmatprep.mubr.bf16.mxu0 0
      %1317 = vmatmul.mubr.bf16.gmra.mrb[0].mxu0 %v1267
      %v1318 = vpop.f32.mrb[0].mxu0
      %v1319 = vadd.f32 %v1252, %v1318
      %v1320 = vpop.f32.mrb[0].mxu0
      %v1321 = vpop.f32.mrb[0].mxu0
      %v1322 = vadd.f32 %v1252, %v1321
      %v1323 = vpop.f32.mrb[0].mxu0
      %1324 = vmatprep.mubr.bf16.mxu0 0
      %1325 = vmatmul.mubr.bf16.gmra.mrb[0].mxu0 %v1270
      %v1326 = vpop.f32.mrb[0].mxu0
      %v1327 = vadd.f32 %v1252, %v1326
      %v1328 = vpop.f32.mrb[0].mxu0
      %v1329 = vpop.f32.mrb[0].mxu0
      %v1330 = vadd.f32 %v1252, %v1329
      %v1331 = vpop.f32.mrb[0].mxu0
      %1332 = vmatprep.mubr.bf16.mxu0 0
      %1333 = vmatmul.mubr.bf16.gmra.mrb[0].mxu0 %v1273
      %v1334 = vpop.f32.mrb[0].mxu0
      %v1335 = vadd.f32 %v1252, %v1334
      %v1336 = vpop.f32.mrb[0].mxu0
      %v1337 = vpop.f32.mrb[0].mxu0
      %v1338 = vadd.f32 %v1252, %v1337
      %v1339 = vpop.f32.mrb[0].mxu0
      %1340 = vmatprep.mubr.bf16.mxu0 0
      %1341 = vmatmul.mubr.bf16.gmra.mrb[0].mxu0 %v1276
      %v1342 = vpop.f32.mrb[0].mxu0
      %v1343 = vadd.f32 %v1252, %v1342
      %v1344 = vpop.f32.mrb[0].mxu0
      %v1345 = vpop.f32.mrb[0].mxu0
      %v1346 = vadd.f32 %v1252, %v1345
      %v1347 = vpop.f32.mrb[0].mxu0
      %1348 = vmatprep.mubr.bf16.mxu0 0
      %1349 = vmatmul.mubr.bf16.gmra.mrb[0].mxu0 %v1279
      %v1350 = vpop.f32.mrb[0].mxu0
      %v1351 = vadd.f32 %v1252, %v1350
      %v1352 = vpop.f32.mrb[0].mxu0
      %v1353 = vpop.f32.mrb[0].mxu0
      %v1354 = vadd.f32 %v1252, %v1353
      %v1355 = vpop.f32.mrb[0].mxu0
      %1356 = vmatprep.mubr.bf16.mxu0 0
      %1357 = vmatmul.mubr.bf16.gmra.mrb[0].mxu0 %v1282
      %v1358 = vpop.f32.mrb[0].mxu0
      %v1359 = vadd.f32 %v1252, %v1358
      %v1360 = vpop.f32.mrb[0].mxu0
      %v1361 = vpop.f32.mrb[0].mxu0
      %v1362 = vadd.f32 %v1252, %v1361
      %v1363 = vpop.f32.mrb[0].mxu0
      %1364 = vdwg.mxu0
      %v1365 = vld [vmem:[%s9] sm:$0xf]
      %v1366 = vld [vmem:[%s9 + $0x4] sm:$0xf]
      %v1367 = vld [vmem:[%s9 + $0x8] sm:$0xf]
      %v1368 = vld [vmem:[%s9 + $0xc] sm:$0xf]
      %v1369 = vld [vmem:[%s10] sm:$0x1]
      %v1371 = vlaneseq
      %v1372 = vshrl.u32 %v1371, 7
      %v1373 = vsub.s32 0, %v1372
      %v1374 = vrot.slane %v1369, %v1373
      %v1380 = vunpack.c.l.b16 %v1365
      %v1381 = vunpack.c.l.b16 %v1366
      %v1382 = vunpack.c.l.b16 %v1367
      %v1383 = vunpack.c.l.b16 %v1368
      %v1384 = vpack.c.b16 %v1381, %v1380
      %v1385 = vpack.c.b16 %v1383, %v1382
      %1388 = vmatprep.subr.bf16.mxu0 0
      %1389 = vmatpush1.bf16.msra.mxu0 %v1384
      %1390 = vmatprep.subr.bf16.mxu0 0
      %1391 = vmatpush1.bf16.msra.mxu0 %v1385
      %1392 = vmatprep.subr.bf16.mxu0 0
      %1393 = vmatpush1.bf16.msra.mxu0 0
      %1394 = vmatprep.subr.bf16.mxu0 0
      %1395 = vmatpush1.bf16.msra.mxu0 0
      %1396 = vmatprep.subr.bf16.mxu0 0
      %1397 = vmatpush1.bf16.msra.mxu0 0
      %1398 = vmatprep.subr.bf16.mxu0 0
      %1399 = vmatpush1.bf16.msra.mxu0 0
      %1400 = vmatprep.subr.bf16.mxu0 0
      %1401 = vmatpush1.bf16.msra.mxu0 0
      %1402 = vmatprep.subr.bf16.mxu0 0
      %1403 = vmatpush1.bf16.msra.mxu0 0
      %1404 = vmatprep.subr.bf16.mxu0 0
      %1405 = vmatpush1.bf16.msra.mxu0 0
      %1406 = vmatprep.subr.bf16.mxu0 0
      %1407 = vmatpush1.bf16.msra.mxu0 0
      %1408 = vmatprep.subr.bf16.mxu0 0
      %1409 = vmatpush1.bf16.msra.mxu0 0
      %1410 = vmatprep.subr.bf16.mxu0 0
      %1411 = vmatpush1.bf16.msra.mxu0 0
      %1412 = vmatprep.subr.bf16.mxu0 0
      %1413 = vmatpush1.bf16.msra.mxu0 0
      %1414 = vmatprep.subr.bf16.mxu0 0
      %1415 = vmatpush1.bf16.msra.mxu0 0
      %1416 = vmatprep.subr.bf16.mxu0 0
      %1417 = vmatpush1.bf16.msra.mxu0 0
      %1418 = vmatprep.subr.bf16.mxu0 0
      %1419 = vmatpush1.bf16.msra.mxu0 0
      %1420 = vmatprep.mubr.bf16.mxu0 0
      %1421 = vmatmul.mubr.bf16.gmra.mrb[0].mxu0 %v1267
      %v1422 = vpop.f32.mrb[0].mxu0
      %v1423 = vadd.f32 %v1374, %v1422
      %v1424 = vpop.f32.mrb[0].mxu0
      %v1425 = vpop.f32.mrb[0].mxu0
      %v1426 = vadd.f32 %v1374, %v1425
      %v1427 = vpop.f32.mrb[0].mxu0
      %1428 = vmatprep.mubr.bf16.mxu0 0
      %1429 = vmatmul.mubr.bf16.gmra.mrb[0].mxu0 %v1270
      %v1430 = vpop.f32.mrb[0].mxu0
      %v1431 = vadd.f32 %v1374, %v1430
      %v1432 = vpop.f32.mrb[0].mxu0
      %v1433 = vpop.f32.mrb[0].mxu0
      %v1434 = vadd.f32 %v1374, %v1433
      %v1435 = vpop.f32.mrb[0].mxu0
      %1436 = vmatprep.mubr.bf16.mxu0 0
      %1437 = vmatmul.mubr.bf16.gmra.mrb[0].mxu0 %v1273
      %v1438 = vpop.f32.mrb[0].mxu0
      %v1439 = vadd.f32 %v1374, %v1438
      %v1440 = vpop.f32.mrb[0].mxu0
      %v1441 = vpop.f32.mrb[0].mxu0
      %v1442 = vadd.f32 %v1374, %v1441
      %v1443 = vpop.f32.mrb[0].mxu0
      %1444 = vmatprep.mubr.bf16.mxu0 0
      %1445 = vmatmul.mubr.bf16.gmra.mrb[0].mxu0 %v1276
      %v1446 = vpop.f32.mrb[0].mxu0
      %v1447 = vadd.f32 %v1374, %v1446
      %v1448 = vpop.f32.mrb[0].mxu0
      %v1449 = vpop.f32.mrb[0].mxu0
      %v1450 = vadd.f32 %v1374, %v1449
      %v1451 = vpop.f32.mrb[0].mxu0
      %1452 = vmatprep.mubr.bf16.mxu0 0
      %1453 = vmatmul.mubr.bf16.gmra.mrb[0].mxu0 %v1279
      %v1454 = vpop.f32.mrb[0].mxu0
      %v1455 = vadd.f32 %v1374, %v1454
      %v1456 = vpop.f32.mrb[0].mxu0
      %v1457 = vpop.f32.mrb[0].mxu0
      %v1458 = vadd.f32 %v1374, %v1457
      %v1459 = vpop.f32.mrb[0].mxu0
      %1460 = vmatprep.mubr.bf16.mxu0 0
      %1461 = vmatmul.mubr.bf16.gmra.mrb[0].mxu0 %v1282
      %v1462 = vpop.f32.mrb[0].mxu0
      %v1463 = vadd.f32 %v1374, %v1462
      %v1464 = vpop.f32.mrb[0].mxu0
      %v1465 = vpop.f32.mrb[0].mxu0
      %v1466 = vadd.f32 %v1374, %v1465
      %v1467 = vpop.f32.mrb[0].mxu0
      %1468 = vdwg.mxu0
      %v1469 = vld [vmem:[%s11] sm:$0xf]
      %v1470 = vld [vmem:[%s11 + $0x4] sm:$0xf]
      %v1471 = vld [vmem:[%s11 + $0x8] sm:$0xf]
      %v1472 = vld [vmem:[%s11 + $0xc] sm:$0xf]
      %v1473 = vld [vmem:[%s12] sm:$0x1]
      %v1475 = vlaneseq
      %v1476 = vshrl.u32 %v1475, 7
      %v1477 = vsub.s32 0, %v1476
      %v1478 = vrot.slane %v1473, %v1477
      %v1484 = vunpack.c.l.b16 %v1469
      %v1485 = vunpack.c.l.b16 %v1470
      %v1486 = vunpack.c.l.b16 %v1471
      %v1487 = vunpack.c.l.b16 %v1472
      %v1488 = vpack.c.b16 %v1485, %v1484
      %v1489 = vpack.c.b16 %v1487, %v1486
      %1492 = vmatprep.subr.bf16.mxu0 0
      %1493 = vmatpush1.bf16.msra.mxu0 %v1488
      %1494 = vmatprep.subr.bf16.mxu0 0
      %1495 = vmatpush1.bf16.msra.mxu0 %v1489
      %1496 = vmatprep.subr.bf16.mxu0 0
      %1497 = vmatpush1.bf16.msra.mxu0 0
      %1498 = vmatprep.subr.bf16.mxu0 0
      %1499 = vmatpush1.bf16.msra.mxu0 0
      %1500 = vmatprep.subr.bf16.mxu0 0
      %1501 = vmatpush1.bf16.msra.mxu0 0
      %1502 = vmatprep.subr.bf16.mxu0 0
      %1503 = vmatpush1.bf16.msra.mxu0 0
      %1504 = vmatprep.subr.bf16.mxu0 0
      %1505 = vmatpush1.bf16.msra.mxu0 0
      %1506 = vmatprep.subr.bf16.mxu0 0
      %1507 = vmatpush1.bf16.msra.mxu0 0
      %1508 = vmatprep.subr.bf16.mxu0 0
      %1509 = vmatpush1.bf16.msra.mxu0 0
      %1510 = vmatprep.subr.bf16.mxu0 0
      %1511 = vmatpush1.bf16.msra.mxu0 0
      %1512 = vmatprep.subr.bf16.mxu0 0
      %1513 = vmatpush1.bf16.msra.mxu0 0
      %1514 = vmatprep.subr.bf16.mxu0 0
      %1515 = vmatpush1.bf16.msra.mxu0 0
      %1516 = vmatprep.subr.bf16.mxu0 0
      %1517 = vmatpush1.bf16.msra.mxu0 0
      %1518 = vmatprep.subr.bf16.mxu0 0
      %1519 = vmatpush1.bf16.msra.mxu0 0
      %1520 = vmatprep.subr.bf16.mxu0 0
      %1521 = vmatpush1.bf16.msra.mxu0 0
      %1522 = vmatprep.subr.bf16.mxu0 0
      %1523 = vmatpush1.bf16.msra.mxu0 0
      %1524 = vmatprep.mubr.bf16.mxu0 0
      %1525 = vmatmul.mubr.bf16.gmra.mrb[0].mxu0 %v1267
      %v1526 = vpop.f32.mrb[0].mxu0
      %v1527 = vadd.f32 %v1478, %v1526
      %v1528 = vpop.f32.mrb[0].mxu0
      %v1529 = vpop.f32.mrb[0].mxu0
      %v1530 = vadd.f32 %v1478, %v1529
      %v1531 = vpop.f32.mrb[0].mxu0
      %1532 = vmatprep.mubr.bf16.mxu0 0
      %1533 = vmatmul.mubr.bf16.gmra.mrb[0].mxu0 %v1270
      %v1534 = vpop.f32.mrb[0].mxu0
      %v1535 = vadd.f32 %v1478, %v1534
      %v1536 = vpop.f32.mrb[0].mxu0
      %v1537 = vpop.f32.mrb[0].mxu0
      %v1538 = vadd.f32 %v1478, %v1537
      %v1539 = vpop.f32.mrb[0].mxu0
      %1540 = vmatprep.mubr.bf16.mxu0 0
      %1541 = vmatmul.mubr.bf16.gmra.mrb[0].mxu0 %v1273
      %v1542 = vpop.f32.mrb[0].mxu0
      %v1543 = vadd.f32 %v1478, %v1542
      %v1544 = vpop.f32.mrb[0].mxu0
      %v1545 = vpop.f32.mrb[0].mxu0
      %v1546 = vadd.f32 %v1478, %v1545
      %v1547 = vpop.f32.mrb[0].mxu0
      %1548 = vmatprep.mubr.bf16.mxu0 0
      %1549 = vmatmul.mubr.bf16.gmra.mrb[0].mxu0 %v1276
      %v1550 = vpop.f32.mrb[0].mxu0
      %v1551 = vadd.f32 %v1478, %v1550
      %v1552 = vpop.f32.mrb[0].mxu0
      %v1553 = vpop.f32.mrb[0].mxu0
      %v1554 = vadd.f32 %v1478, %v1553
      %v1555 = vpop.f32.mrb[0].mxu0
      %1556 = vmatprep.mubr.bf16.mxu0 0
      %1557 = vmatmul.mubr.bf16.gmra.mrb[0].mxu0 %v1279
      %v1558 = vpop.f32.mrb[0].mxu0
      %v1559 = vadd.f32 %v1478, %v1558
      %v1560 = vpop.f32.mrb[0].mxu0
      %v1561 = vpop.f32.mrb[0].mxu0
      %v1562 = vadd.f32 %v1478, %v1561
      %v1563 = vpop.f32.mrb[0].mxu0
      %1564 = vmatprep.mubr.bf16.mxu0 0
      %1565 = vmatmul.mubr.bf16.gmra.mrb[0].mxu0 %v1282
      %v1566 = vpop.f32.mrb[0].mxu0
      %v1567 = vadd.f32 %v1478, %v1566
      %v1568 = vpop.f32.mrb[0].mxu0
      %v1569 = vpop.f32.mrb[0].mxu0
      %v1570 = vadd.f32 %v1478, %v1569
      %v1571 = vpop.f32.mrb[0].mxu0
      %1572 = vdwg.mxu0
      %v1573 = vpack.c.bf16 %v1322, %v1319
      %v1574 = vpack.c.bf16 %v1330, %v1327
      %v1575 = vpack.c.bf16 %v1338, %v1335
      %v1576 = vpack.c.bf16 %v1346, %v1343
      %v1577 = vpack.c.bf16 %v1354, %v1351
      %v1578 = vpack.c.bf16 %v1362, %v1359
      %v1579 = vpack.c.bf16 %v1426, %v1423
      %v1580 = vpack.c.bf16 %v1434, %v1431
      %v1581 = vpack.c.bf16 %v1442, %v1439
      %v1582 = vpack.c.bf16 %v1450, %v1447
      %v1583 = vpack.c.bf16 %v1458, %v1455
      %v1584 = vpack.c.bf16 %v1466, %v1463
      %vm1585 = vcmask 130048
      %v1587 = vsel %vm1585, %v1573, 0
      %v1590 = vsel %vm1585, %v1574, 0
      %v1593 = vsel %vm1585, %v1575, 0
      %v1596 = vsel %vm1585, %v1576, 0
      %v1599 = vsel %vm1585, %v1577, 0
      %v1602 = vsel %vm1585, %v1578, 0
      %v1605 = vsel %vm1585, %v1579, 0
      %v1608 = vsel %vm1585, %v1580, 0
      %v1611 = vsel %vm1585, %v1581, 0
      %v1614 = vsel %vm1585, %v1582, 0
      %v1617 = vsel %vm1585, %v1583, 0
      %v1620 = vsel %vm1585, %v1584, 0
      %1622 = vmatprep.subr.bf16.mxu0 0
      %1623 = vmatpush1.bf16.xpose.msra.mxu0 %v1605
      %1624 = vmatprep.subr.bf16.mxu0 0
      %1625 = vmatpush1.bf16.xpose.msra.mxu0 %v1608
      %1626 = vmatprep.subr.bf16.mxu0 0
      %1627 = vmatpush1.bf16.xpose.msra.mxu0 %v1611
      %1628 = vmatprep.subr.bf16.mxu0 0
      %1629 = vmatpush1.bf16.xpose.msra.mxu0 %v1614
      %1630 = vmatprep.subr.bf16.mxu0 0
      %1631 = vmatpush1.bf16.xpose.msra.mxu0 %v1617
      %1632 = vmatprep.subr.bf16.mxu0 0
      %1633 = vmatpush1.bf16.xpose.msra.mxu0 %v1620
      %1634 = vmatprep.subr.bf16.mxu0 0
      %1635 = vmatpush1.bf16.xpose.msra.mxu0 0
      %1636 = vmatprep.subr.bf16.mxu0 0
      %1637 = vmatpush1.bf16.xpose.msra.mxu0 0
      %1638 = vmatprep.subr.bf16.mxu0 0
      %1639 = vmatpush1.bf16.xpose.msra.mxu0 0
      %1640 = vmatprep.subr.bf16.mxu0 0
      %1641 = vmatpush1.bf16.xpose.msra.mxu0 0
      %1642 = vmatprep.subr.bf16.mxu0 0
      %1643 = vmatpush1.bf16.xpose.msra.mxu0 0
      %1644 = vmatprep.subr.bf16.mxu0 0
      %1645 = vmatpush1.bf16.xpose.msra.mxu0 0
      %1646 = vmatprep.subr.bf16.mxu0 0
      %1647 = vmatpush1.bf16.xpose.msra.mxu0 0
      %1648 = vmatprep.subr.bf16.mxu0 0
      %1649 = vmatpush1.bf16.xpose.msra.mxu0 0
      %1650 = vmatprep.subr.bf16.mxu0 0
      %1651 = vmatpush1.bf16.xpose.msra.mxu0 0
      %1652 = vmatprep.subr.bf16.mxu0 0
      %1653 = vmatpush1.bf16.xpose.msra.mxu0 0
      %1654 = vmatprep.mubr.bf16.mxu0 0
      %1655 = vmatmul.mubr.bf16.gmra.mrb[0].mxu0 %v1587
      %v1656 = vpop.f32.mrb[0].mxu0
      %v1657 = vadd.f32 0.0, %v1656
      %v1658 = vpop.f32.mrb[0].mxu0
      %v1659 = vpop.f32.mrb[0].mxu0
      %v1660 = vadd.f32 0.0, %v1659
      %v1661 = vpop.f32.mrb[0].mxu0
      %1662 = vmatprep.mubr.bf16.mxu0 0
      %1663 = vmatmul.mubr.bf16.gmra.mrb[0].mxu0 %v1590
      %v1664 = vpop.f32.mrb[0].mxu0
      %v1665 = vadd.f32 0.0, %v1664
      %v1666 = vpop.f32.mrb[0].mxu0
      %v1667 = vpop.f32.mrb[0].mxu0
      %v1668 = vadd.f32 0.0, %v1667
      %v1669 = vpop.f32.mrb[0].mxu0
      %1670 = vmatprep.mubr.bf16.mxu0 0
      %1671 = vmatmul.mubr.bf16.gmra.mrb[0].mxu0 %v1593
      %v1672 = vpop.f32.mrb[0].mxu0
      %v1673 = vadd.f32 0.0, %v1672
      %v1674 = vpop.f32.mrb[0].mxu0
      %v1675 = vpop.f32.mrb[0].mxu0
      %v1676 = vadd.f32 0.0, %v1675
      %v1677 = vpop.f32.mrb[0].mxu0
      %1678 = vmatprep.mubr.bf16.mxu0 0
      %1679 = vmatmul.mubr.bf16.gmra.mrb[0].mxu0 %v1596
      %v1680 = vpop.f32.mrb[0].mxu0
      %v1681 = vadd.f32 0.0, %v1680
      %v1682 = vpop.f32.mrb[0].mxu0
      %v1683 = vpop.f32.mrb[0].mxu0
      %v1684 = vadd.f32 0.0, %v1683
      %v1685 = vpop.f32.mrb[0].mxu0
      %1686 = vmatprep.mubr.bf16.mxu0 0
      %1687 = vmatmul.mubr.bf16.gmra.mrb[0].mxu0 %v1599
      %v1688 = vpop.f32.mrb[0].mxu0
      %v1689 = vadd.f32 0.0, %v1688
      %v1690 = vpop.f32.mrb[0].mxu0
      %v1691 = vpop.f32.mrb[0].mxu0
      %v1692 = vadd.f32 0.0, %v1691
      %v1693 = vpop.f32.mrb[0].mxu0
      %1694 = vmatprep.mubr.bf16.mxu0 0
      %1695 = vmatmul.mubr.bf16.gmra.mrb[0].mxu0 %v1602
      %v1696 = vpop.f32.mrb[0].mxu0
      %v1697 = vadd.f32 0.0, %v1696
      %v1698 = vpop.f32.mrb[0].mxu0
      %v1699 = vpop.f32.mrb[0].mxu0
      %v1700 = vadd.f32 0.0, %v1699
      %v1701 = vpop.f32.mrb[0].mxu0
      %1702 = vdwg.mxu0
      %v1703 = vmul.f32 %v1657, 0.17677669
      %v1704 = vmul.f32 %v1660, 0.17677669
      %v1705 = vmul.f32 %v1665, 0.17677669
      %v1706 = vmul.f32 %v1668, 0.17677669
      %v1707 = vmul.f32 %v1673, 0.17677669
      %v1708 = vmul.f32 %v1676, 0.17677669
      %v1709 = vmul.f32 %v1681, 0.17677669
      %v1710 = vmul.f32 %v1684, 0.17677669
      %v1711 = vmul.f32 %v1689, 0.17677669
      %v1712 = vmul.f32 %v1692, 0.17677669
      %v1713 = vmul.f32 %v1697, 0.17677669
      %v1714 = vmul.f32 %v1700, 0.17677669
      %v1715 = vsel %vm1031, -1e+30, %v1703
      %v1716 = vsel %vm1032, -1e+30, %v1704
      %v1717 = vsel %vm1033, -1e+30, %v1705
      %v1718 = vsel %vm1034, -1e+30, %v1706
      %v1719 = vsel %vm1035, -1e+30, %v1707
      %v1720 = vsel %vm1036, -1e+30, %v1708
      %v1721 = vsel %vm1037, -1e+30, %v1709
      %v1722 = vsel %vm1038, -1e+30, %v1710
      %v1723 = vsel %vm1039, -1e+30, %v1711
      %v1724 = vsel %vm1040, -1e+30, %v1712
      %v1725 = vsel %vm1041, -1e+30, %v1713
      %v1726 = vsel %vm1042, -1e+30, %v1714
      %vm1727 = vcmask 785408
      %v1728 = vsel %vm1727, %v1715, -inf
      %1729 = vmax.xlane.f32.xlu0 %v1728
      %v1730 = vpop.xlane.xlu0 %1729
      %v1731 = vsel %vm1727, %v1716, -inf
      %1732 = vmax.xlane.f32.xlu0 %v1731
      %v1733 = vpop.xlane.xlu0 %1732
      %v1734 = vsel %vm1727, %v1717, -inf
      %1735 = vmax.xlane.f32.xlu0 %v1734
      %v1736 = vpop.xlane.xlu0 %1735
      %v1737 = vsel %vm1727, %v1718, -inf
      %1738 = vmax.xlane.f32.xlu0 %v1737
      %v1739 = vpop.xlane.xlu0 %1738
      %v1740 = vsel %vm1727, %v1719, -inf
      %1741 = vmax.xlane.f32.xlu0 %v1740
      %v1742 = vpop.xlane.xlu0 %1741
      %v1743 = vsel %vm1727, %v1720, -inf
      %1744 = vmax.xlane.f32.xlu0 %v1743
      %v1745 = vpop.xlane.xlu0 %1744
      %v1746 = vsel %vm1727, %v1721, -inf
      %1747 = vmax.xlane.f32.xlu0 %v1746
      %v1748 = vpop.xlane.xlu0 %1747
      %v1749 = vsel %vm1727, %v1722, -inf
      %1750 = vmax.xlane.f32.xlu0 %v1749
      %v1751 = vpop.xlane.xlu0 %1750
      %v1752 = vsel %vm1727, %v1723, -inf
      %1753 = vmax.xlane.f32.xlu0 %v1752
      %v1754 = vpop.xlane.xlu0 %1753
      %v1755 = vsel %vm1727, %v1724, -inf
      %1756 = vmax.xlane.f32.xlu0 %v1755
      %v1757 = vpop.xlane.xlu0 %1756
      %v1758 = vsel %vm1727, %v1725, -inf
      %1759 = vmax.xlane.f32.xlu0 %v1758
      %v1760 = vpop.xlane.xlu0 %1759
      %v1761 = vsel %vm1727, %v1726, -inf
      %1762 = vmax.xlane.f32.xlu0 %v1761
      %v1763 = vpop.xlane.xlu0 %1762
      %v1764 = vsub.f32 %v1715, %v1730
      %v1765 = vsub.f32 %v1716, %v1733
      %v1766 = vsub.f32 %v1717, %v1736
      %v1767 = vsub.f32 %v1718, %v1739
      %v1768 = vsub.f32 %v1719, %v1742
      %v1769 = vsub.f32 %v1720, %v1745
      %v1770 = vsub.f32 %v1721, %v1748
      %v1771 = vsub.f32 %v1722, %v1751
      %v1772 = vsub.f32 %v1723, %v1754
      %v1773 = vsub.f32 %v1724, %v1757
      %v1774 = vsub.f32 %v1725, %v1760
      %v1775 = vsub.f32 %v1726, %v1763
      %v1776 = vmul.f32 %v1764, 1.442695
      %v1777 = vpow.pop %v1776
      %v1778 = vmul.f32 %v1765, 1.442695
      %v1779 = vpow.pop %v1778
      %v1780 = vmul.f32 %v1766, 1.442695
      %v1781 = vpow.pop %v1780
      %v1782 = vmul.f32 %v1767, 1.442695
      %v1783 = vpow.pop %v1782
      %v1784 = vmul.f32 %v1768, 1.442695
      %v1785 = vpow.pop %v1784
      %v1786 = vmul.f32 %v1769, 1.442695
      %v1787 = vpow.pop %v1786
      %v1788 = vmul.f32 %v1770, 1.442695
      %v1789 = vpow.pop %v1788
      %v1790 = vmul.f32 %v1771, 1.442695
      %v1791 = vpow.pop %v1790
      %v1792 = vmul.f32 %v1772, 1.442695
      %v1793 = vpow.pop %v1792
      %v1794 = vmul.f32 %v1773, 1.442695
      %v1795 = vpow.pop %v1794
      %v1796 = vmul.f32 %v1774, 1.442695
      %v1797 = vpow.pop %v1796
      %v1798 = vmul.f32 %v1775, 1.442695
      %v1799 = vpow.pop %v1798
      %v1800 = vsel %vm1727, %v1777, 0.0
      %1801 = vadd.xlane.f32.xlu0 %v1800
      %v1802 = vpop.xlane.xlu0 %1801
      %v1803 = vsel %vm1727, %v1779, 0.0
      %1804 = vadd.xlane.f32.xlu0 %v1803
      %v1805 = vpop.xlane.xlu0 %1804
      %v1806 = vsel %vm1727, %v1781, 0.0
      %1807 = vadd.xlane.f32.xlu0 %v1806
      %v1808 = vpop.xlane.xlu0 %1807
      %v1809 = vsel %vm1727, %v1783, 0.0
      %1810 = vadd.xlane.f32.xlu0 %v1809
      %v1811 = vpop.xlane.xlu0 %1810
      %v1812 = vsel %vm1727, %v1785, 0.0
      %1813 = vadd.xlane.f32.xlu0 %v1812
      %v1814 = vpop.xlane.xlu0 %1813
      %v1815 = vsel %vm1727, %v1787, 0.0
      %1816 = vadd.xlane.f32.xlu0 %v1815
      %v1817 = vpop.xlane.xlu0 %1816
      %v1818 = vsel %vm1727, %v1789, 0.0
      %1819 = vadd.xlane.f32.xlu0 %v1818
      %v1820 = vpop.xlane.xlu0 %1819
      %v1821 = vsel %vm1727, %v1791, 0.0
      %1822 = vadd.xlane.f32.xlu0 %v1821
      %v1823 = vpop.xlane.xlu0 %1822
      %v1824 = vsel %vm1727, %v1793, 0.0
      %1825 = vadd.xlane.f32.xlu0 %v1824
      %v1826 = vpop.xlane.xlu0 %1825
      %v1827 = vsel %vm1727, %v1795, 0.0
      %1828 = vadd.xlane.f32.xlu0 %v1827
      %v1829 = vpop.xlane.xlu0 %1828
      %v1830 = vsel %vm1727, %v1797, 0.0
      %1831 = vadd.xlane.f32.xlu0 %v1830
      %v1832 = vpop.xlane.xlu0 %1831
      %v1833 = vsel %vm1727, %v1799, 0.0
      %1834 = vadd.xlane.f32.xlu0 %v1833
      %v1835 = vpop.xlane.xlu0 %1834
      %v1836 = vpack.c.bf16 %v1779, %v1777
      %v1837 = vpack.c.bf16 %v1783, %v1781
      %v1838 = vpack.c.bf16 %v1787, %v1785
      %v1839 = vpack.c.bf16 %v1791, %v1789
      %v1840 = vpack.c.bf16 %v1795, %v1793
      %v1841 = vpack.c.bf16 %v1799, %v1797
      %v1842 = vpack.c.bf16 %v1530, %v1527
      %v1843 = vpack.c.bf16 %v1538, %v1535
      %v1844 = vpack.c.bf16 %v1546, %v1543
      %v1845 = vpack.c.bf16 %v1554, %v1551
      %v1846 = vpack.c.bf16 %v1562, %v1559
      %v1847 = vpack.c.bf16 %v1570, %v1567
      %v1849 = vsel %vm1727, %v1836, 0
      %v1852 = vsel %vm1727, %v1837, 0
      %v1855 = vsel %vm1727, %v1838, 0
      %v1858 = vsel %vm1727, %v1839, 0
      %v1861 = vsel %vm1727, %v1840, 0
      %v1864 = vsel %vm1727, %v1841, 0
      %1866 = vmatprep.subr.bf16.mxu0 0
      %1867 = vmatpush1.bf16.msra.mxu0 %v1842
      %1868 = vmatprep.subr.bf16.mxu0 0
      %1869 = vmatpush1.bf16.msra.mxu0 %v1843
      %1870 = vmatprep.subr.bf16.mxu0 0
      %1871 = vmatpush1.bf16.msra.mxu0 %v1844
      %1872 = vmatprep.subr.bf16.mxu0 0
      %1873 = vmatpush1.bf16.msra.mxu0 %v1845
      %1874 = vmatprep.subr.bf16.mxu0 0
      %1875 = vmatpush1.bf16.msra.mxu0 %v1846
      %1876 = vmatprep.subr.bf16.mxu0 0
      %1877 = vmatpush1.bf16.msra.mxu0 %v1847
      %1878 = vmatprep.subr.bf16.mxu0 0
      %1879 = vmatpush1.bf16.msra.mxu0 0
      %1880 = vmatprep.subr.bf16.mxu0 0
      %1881 = vmatpush1.bf16.msra.mxu0 0
      %1882 = vmatprep.subr.bf16.mxu0 0
      %1883 = vmatpush1.bf16.msra.mxu0 0
      %1884 = vmatprep.subr.bf16.mxu0 0
      %1885 = vmatpush1.bf16.msra.mxu0 0
      %1886 = vmatprep.subr.bf16.mxu0 0
      %1887 = vmatpush1.bf16.msra.mxu0 0
      %1888 = vmatprep.subr.bf16.mxu0 0
      %1889 = vmatpush1.bf16.msra.mxu0 0
      %1890 = vmatprep.subr.bf16.mxu0 0
      %1891 = vmatpush1.bf16.msra.mxu0 0
      %1892 = vmatprep.subr.bf16.mxu0 0
      %1893 = vmatpush1.bf16.msra.mxu0 0
      %1894 = vmatprep.subr.bf16.mxu0 0
      %1895 = vmatpush1.bf16.msra.mxu0 0
      %1896 = vmatprep.subr.bf16.mxu0 0
      %1897 = vmatpush1.bf16.msra.mxu0 0
      %1898 = vmatprep.mubr.bf16.mxu0 0
      %1899 = vmatmul.mubr.bf16.gmra.mrb[0].mxu0 %v1849
      %v1900 = vpop.f32.mrb[0].mxu0
      %v1901 = vadd.f32 0.0, %v1900
      %v1902 = vpop.f32.mrb[0].mxu0
      %v1903 = vpop.f32.mrb[0].mxu0
      %v1904 = vadd.f32 0.0, %v1903
      %v1905 = vpop.f32.mrb[0].mxu0
      %1906 = vmatprep.mubr.bf16.mxu0 0
      %1907 = vmatmul.mubr.bf16.gmra.mrb[0].mxu0 %v1852
      %v1908 = vpop.f32.mrb[0].mxu0
      %v1909 = vadd.f32 0.0, %v1908
      %v1910 = vpop.f32.mrb[0].mxu0
      %v1911 = vpop.f32.mrb[0].mxu0
      %v1912 = vadd.f32 0.0, %v1911
      %v1913 = vpop.f32.mrb[0].mxu0
      %1914 = vmatprep.mubr.bf16.mxu0 0
      %1915 = vmatmul.mubr.bf16.gmra.mrb[0].mxu0 %v1855
      %v1916 = vpop.f32.mrb[0].mxu0
      %v1917 = vadd.f32 0.0, %v1916
      %v1918 = vpop.f32.mrb[0].mxu0
      %v1919 = vpop.f32.mrb[0].mxu0
      %v1920 = vadd.f32 0.0, %v1919
      %v1921 = vpop.f32.mrb[0].mxu0
      %1922 = vmatprep.mubr.bf16.mxu0 0
      %1923 = vmatmul.mubr.bf16.gmra.mrb[0].mxu0 %v1858
      %v1924 = vpop.f32.mrb[0].mxu0
      %v1925 = vadd.f32 0.0, %v1924
      %v1926 = vpop.f32.mrb[0].mxu0
      %v1927 = vpop.f32.mrb[0].mxu0
      %v1928 = vadd.f32 0.0, %v1927
      %v1929 = vpop.f32.mrb[0].mxu0
      %1930 = vmatprep.mubr.bf16.mxu0 0
      %1931 = vmatmul.mubr.bf16.gmra.mrb[0].mxu0 %v1861
      %v1932 = vpop.f32.mrb[0].mxu0
      %v1933 = vadd.f32 0.0, %v1932
      %v1934 = vpop.f32.mrb[0].mxu0
      %v1935 = vpop.f32.mrb[0].mxu0
      %v1936 = vadd.f32 0.0, %v1935
      %v1937 = vpop.f32.mrb[0].mxu0
      %1938 = vmatprep.mubr.bf16.mxu0 0
      %1939 = vmatmul.mubr.bf16.gmra.mrb[0].mxu0 %v1864
      %v1940 = vpop.f32.mrb[0].mxu0
      %v1941 = vadd.f32 0.0, %v1940
      %v1942 = vpop.f32.mrb[0].mxu0
      %v1943 = vpop.f32.mrb[0].mxu0
      %v1944 = vadd.f32 0.0, %v1943
      %v1945 = vpop.f32.mrb[0].mxu0
      %1946 = vdwg.mxu0
      %v1947 = vrcp.pop %v1802
      %v1948 = vmul.f32 %v1901, %v1947
      %v1949 = vrcp.pop %v1805
      %v1950 = vmul.f32 %v1904, %v1949
      %v1951 = vrcp.pop %v1808
      %v1952 = vmul.f32 %v1909, %v1951
      %v1953 = vrcp.pop %v1811
      %v1954 = vmul.f32 %v1912, %v1953
      %v1955 = vrcp.pop %v1814
      %v1956 = vmul.f32 %v1917, %v1955
      %v1957 = vrcp.pop %v1817
      %v1958 = vmul.f32 %v1920, %v1957
      %v1959 = vrcp.pop %v1820
      %v1960 = vmul.f32 %v1925, %v1959
      %v1961 = vrcp.pop %v1823
      %v1962 = vmul.f32 %v1928, %v1961
      %v1963 = vrcp.pop %v1826
      %v1964 = vmul.f32 %v1933, %v1963
      %v1965 = vrcp.pop %v1829
      %v1966 = vmul.f32 %v1936, %v1965
      %v1967 = vrcp.pop %v1832
      %v1968 = vmul.f32 %v1941, %v1967
      %v1969 = vrcp.pop %v1835
      %v1970 = vmul.f32 %v1944, %v1969
      %v1971 = vld [vmem:[%s13] sm:$0xf]
      %v1972 = vld [vmem:[%s13 + $0x4] sm:$0xf]
      %v1973 = vpack.c.bf16 %v1950, %v1948
      %v1974 = vpack.c.bf16 %v1954, %v1952
      %v1975 = vpack.c.bf16 %v1958, %v1956
      %v1976 = vpack.c.bf16 %v1962, %v1960
      %v1977 = vpack.c.bf16 %v1966, %v1964
      %v1978 = vpack.c.bf16 %v1970, %v1968
      %s1979 = scalar_lea.vmem %s7, 16
      %v1980 = vld [vmem:[%s1979] sm:$0xf]
      %v1981 = vld [vmem:[%s1979 + $0x4] sm:$0xf]
      %v1982 = vld [vmem:[%s1979 + $0x8] sm:$0xf]
      %v1983 = vld [vmem:[%s1979 + $0xc] sm:$0xf]
      %s1984 = scalar_lea.vmem %s8, 1
      %v1985 = vld [vmem:[%s1984] sm:$0x1]
      %v1987 = vlaneseq
      %v1988 = vshrl.u32 %v1987, 7
      %v1989 = vsub.s32 0, %v1988
      %v1990 = vrot.slane %v1985, %v1989
      %v1996 = vunpack.c.l.b16 %v1980
      %v1997 = vunpack.c.l.b16 %v1981
      %v1998 = vunpack.c.l.b16 %v1982
      %v1999 = vunpack.c.l.b16 %v1983
      %v2000 = vpack.c.b16 %v1997, %v1996
      %v2001 = vpack.c.b16 %v1999, %v1998
      %2004 = vmatprep.subr.bf16.mxu0 0
      %2005 = vmatpush1.bf16.msra.mxu0 %v2000
      %2006 = vmatprep.subr.bf16.mxu0 0
      %2007 = vmatpush1.bf16.msra.mxu0 %v2001
      %2008 = vmatprep.subr.bf16.mxu0 0
      %2009 = vmatpush1.bf16.msra.mxu0 0
      %2010 = vmatprep.subr.bf16.mxu0 0
      %2011 = vmatpush1.bf16.msra.mxu0 0
      %2012 = vmatprep.subr.bf16.mxu0 0
      %2013 = vmatpush1.bf16.msra.mxu0 0
      %2014 = vmatprep.subr.bf16.mxu0 0
      %2015 = vmatpush1.bf16.msra.mxu0 0
      %2016 = vmatprep.subr.bf16.mxu0 0
      %2017 = vmatpush1.bf16.msra.mxu0 0
      %2018 = vmatprep.subr.bf16.mxu0 0
      %2019 = vmatpush1.bf16.msra.mxu0 0
      %2020 = vmatprep.subr.bf16.mxu0 0
      %2021 = vmatpush1.bf16.msra.mxu0 0
      %2022 = vmatprep.subr.bf16.mxu0 0
      %2023 = vmatpush1.bf16.msra.mxu0 0
      %2024 = vmatprep.subr.bf16.mxu0 0
      %2025 = vmatpush1.bf16.msra.mxu0 0
      %2026 = vmatprep.subr.bf16.mxu0 0
      %2027 = vmatpush1.bf16.msra.mxu0 0
      %2028 = vmatprep.subr.bf16.mxu0 0
      %2029 = vmatpush1.bf16.msra.mxu0 0
      %2030 = vmatprep.subr.bf16.mxu0 0
      %2031 = vmatpush1.bf16.msra.mxu0 0
      %2032 = vmatprep.subr.bf16.mxu0 0
      %2033 = vmatpush1.bf16.msra.mxu0 0
      %2034 = vmatprep.subr.bf16.mxu0 0
      %2035 = vmatpush1.bf16.msra.mxu0 0
      %2036 = vmatprep.mubr.bf16.mxu0 0
      %2037 = vmatmul.mubr.bf16.gmra.mrb[0].mxu0 %v1267
      %v2038 = vpop.f32.mrb[0].mxu0
      %v2039 = vadd.f32 %v1990, %v2038
      %v2040 = vpop.f32.mrb[0].mxu0
      %v2041 = vpop.f32.mrb[0].mxu0
      %v2042 = vadd.f32 %v1990, %v2041
      %v2043 = vpop.f32.mrb[0].mxu0
      %2044 = vmatprep.mubr.bf16.mxu0 0
      %2045 = vmatmul.mubr.bf16.gmra.mrb[0].mxu0 %v1270
      %v2046 = vpop.f32.mrb[0].mxu0
      %v2047 = vadd.f32 %v1990, %v2046
      %v2048 = vpop.f32.mrb[0].mxu0
      %v2049 = vpop.f32.mrb[0].mxu0
      %v2050 = vadd.f32 %v1990, %v2049
      %v2051 = vpop.f32.mrb[0].mxu0
      %2052 = vmatprep.mubr.bf16.mxu0 0
      %2053 = vmatmul.mubr.bf16.gmra.mrb[0].mxu0 %v1273
      %v2054 = vpop.f32.mrb[0].mxu0
      %v2055 = vadd.f32 %v1990, %v2054
      %v2056 = vpop.f32.mrb[0].mxu0
      %v2057 = vpop.f32.mrb[0].mxu0
      %v2058 = vadd.f32 %v1990, %v2057
      %v2059 = vpop.f32.mrb[0].mxu0
      %2060 = vmatprep.mubr.bf16.mxu0 0
      %2061 = vmatmul.mubr.bf16.gmra.mrb[0].mxu0 %v1276
      %v2062 = vpop.f32.mrb[0].mxu0
      %v2063 = vadd.f32 %v1990, %v2062
      %v2064 = vpop.f32.mrb[0].mxu0
      %v2065 = vpop.f32.mrb[0].mxu0
      %v2066 = vadd.f32 %v1990, %v2065
      %v2067 = vpop.f32.mrb[0].mxu0
      %2068 = vmatprep.mubr.bf16.mxu0 0
      %2069 = vmatmul.mubr.bf16.gmra.mrb[0].mxu0 %v1279
      %v2070 = vpop.f32.mrb[0].mxu0
      %v2071 = vadd.f32 %v1990, %v2070
      %v2072 = vpop.f32.mrb[0].mxu0
      %v2073 = vpop.f32.mrb[0].mxu0
      %v2074 = vadd.f32 %v1990, %v2073
      %v2075 = vpop.f32.mrb[0].mxu0
      %2076 = vmatprep.mubr.bf16.mxu0 0
      %2077 = vmatmul.mubr.bf16.gmra.mrb[0].mxu0 %v1282
      %v2078 = vpop.f32.mrb[0].mxu0
      %v2079 = vadd.f32 %v1990, %v2078
      %v2080 = vpop.f32.mrb[0].mxu0
      %v2081 = vpop.f32.mrb[0].mxu0
      %v2082 = vadd.f32 %v1990, %v2081
      %v2083 = vpop.f32.mrb[0].mxu0
      %2084 = vdwg.mxu0
      %s2085 = scalar_lea.vmem %s9, 16
      %v2086 = vld [vmem:[%s2085] sm:$0xf]
      %v2087 = vld [vmem:[%s2085 + $0x4] sm:$0xf]
      %v2088 = vld [vmem:[%s2085 + $0x8] sm:$0xf]
      %v2089 = vld [vmem:[%s2085 + $0xc] sm:$0xf]
      %s2090 = scalar_lea.vmem %s10, 1
      %v2091 = vld [vmem:[%s2090] sm:$0x1]
      %v2093 = vlaneseq
      %v2094 = vshrl.u32 %v2093, 7
      %v2095 = vsub.s32 0, %v2094
      %v2096 = vrot.slane %v2091, %v2095
      %v2102 = vunpack.c.l.b16 %v2086
      %v2103 = vunpack.c.l.b16 %v2087
      %v2104 = vunpack.c.l.b16 %v2088
      %v2105 = vunpack.c.l.b16 %v2089
      %v2106 = vpack.c.b16 %v2103, %v2102
      %v2107 = vpack.c.b16 %v2105, %v2104
      %2110 = vmatprep.subr.bf16.mxu0 0
      %2111 = vmatpush1.bf16.msra.mxu0 %v2106
      %2112 = vmatprep.subr.bf16.mxu0 0
      %2113 = vmatpush1.bf16.msra.mxu0 %v2107
      %2114 = vmatprep.subr.bf16.mxu0 0
      %2115 = vmatpush1.bf16.msra.mxu0 0
      %2116 = vmatprep.subr.bf16.mxu0 0
      %2117 = vmatpush1.bf16.msra.mxu0 0
      %2118 = vmatprep.subr.bf16.mxu0 0
      %2119 = vmatpush1.bf16.msra.mxu0 0
      %2120 = vmatprep.subr.bf16.mxu0 0
      %2121 = vmatpush1.bf16.msra.mxu0 0
      %2122 = vmatprep.subr.bf16.mxu0 0
      %2123 = vmatpush1.bf16.msra.mxu0 0
      %2124 = vmatprep.subr.bf16.mxu0 0
      %2125 = vmatpush1.bf16.msra.mxu0 0
      %2126 = vmatprep.subr.bf16.mxu0 0
      %2127 = vmatpush1.bf16.msra.mxu0 0
      %2128 = vmatprep.subr.bf16.mxu0 0
      %2129 = vmatpush1.bf16.msra.mxu0 0
      %2130 = vmatprep.subr.bf16.mxu0 0
      %2131 = vmatpush1.bf16.msra.mxu0 0
      %2132 = vmatprep.subr.bf16.mxu0 0
      %2133 = vmatpush1.bf16.msra.mxu0 0
      %2134 = vmatprep.subr.bf16.mxu0 0
      %2135 = vmatpush1.bf16.msra.mxu0 0
      %2136 = vmatprep.subr.bf16.mxu0 0
      %2137 = vmatpush1.bf16.msra.mxu0 0
      %2138 = vmatprep.subr.bf16.mxu0 0
      %2139 = vmatpush1.bf16.msra.mxu0 0
      %2140 = vmatprep.subr.bf16.mxu0 0
      %2141 = vmatpush1.bf16.msra.mxu0 0
      %2142 = vmatprep.mubr.bf16.mxu0 0
      %2143 = vmatmul.mubr.bf16.gmra.mrb[0].mxu0 %v1267
      %v2144 = vpop.f32.mrb[0].mxu0
      %v2145 = vadd.f32 %v2096, %v2144
      %v2146 = vpop.f32.mrb[0].mxu0
      %v2147 = vpop.f32.mrb[0].mxu0
      %v2148 = vadd.f32 %v2096, %v2147
      %v2149 = vpop.f32.mrb[0].mxu0
      %2150 = vmatprep.mubr.bf16.mxu0 0
      %2151 = vmatmul.mubr.bf16.gmra.mrb[0].mxu0 %v1270
      %v2152 = vpop.f32.mrb[0].mxu0
      %v2153 = vadd.f32 %v2096, %v2152
      %v2154 = vpop.f32.mrb[0].mxu0
      %v2155 = vpop.f32.mrb[0].mxu0
      %v2156 = vadd.f32 %v2096, %v2155
      %v2157 = vpop.f32.mrb[0].mxu0
      %2158 = vmatprep.mubr.bf16.mxu0 0
      %2159 = vmatmul.mubr.bf16.gmra.mrb[0].mxu0 %v1273
      %v2160 = vpop.f32.mrb[0].mxu0
      %v2161 = vadd.f32 %v2096, %v2160
      %v2162 = vpop.f32.mrb[0].mxu0
      %v2163 = vpop.f32.mrb[0].mxu0
      %v2164 = vadd.f32 %v2096, %v2163
      %v2165 = vpop.f32.mrb[0].mxu0
      %2166 = vmatprep.mubr.bf16.mxu0 0
      %2167 = vmatmul.mubr.bf16.gmra.mrb[0].mxu0 %v1276
      %v2168 = vpop.f32.mrb[0].mxu0
      %v2169 = vadd.f32 %v2096, %v2168
      %v2170 = vpop.f32.mrb[0].mxu0
      %v2171 = vpop.f32.mrb[0].mxu0
      %v2172 = vadd.f32 %v2096, %v2171
      %v2173 = vpop.f32.mrb[0].mxu0
      %2174 = vmatprep.mubr.bf16.mxu0 0
      %2175 = vmatmul.mubr.bf16.gmra.mrb[0].mxu0 %v1279
      %v2176 = vpop.f32.mrb[0].mxu0
      %v2177 = vadd.f32 %v2096, %v2176
      %v2178 = vpop.f32.mrb[0].mxu0
      %v2179 = vpop.f32.mrb[0].mxu0
      %v2180 = vadd.f32 %v2096, %v2179
      %v2181 = vpop.f32.mrb[0].mxu0
      %2182 = vmatprep.mubr.bf16.mxu0 0
      %2183 = vmatmul.mubr.bf16.gmra.mrb[0].mxu0 %v1282
      %v2184 = vpop.f32.mrb[0].mxu0
      %v2185 = vadd.f32 %v2096, %v2184
      %v2186 = vpop.f32.mrb[0].mxu0
      %v2187 = vpop.f32.mrb[0].mxu0
      %v2188 = vadd.f32 %v2096, %v2187
      %v2189 = vpop.f32.mrb[0].mxu0
      %2190 = vdwg.mxu0
      %s2191 = scalar_lea.vmem %s11, 16
      %v2192 = vld [vmem:[%s2191] sm:$0xf]
      %v2193 = vld [vmem:[%s2191 + $0x4] sm:$0xf]
      %v2194 = vld [vmem:[%s2191 + $0x8] sm:$0xf]
      %v2195 = vld [vmem:[%s2191 + $0xc] sm:$0xf]
      %s2196 = scalar_lea.vmem %s12, 1
      %v2197 = vld [vmem:[%s2196] sm:$0x1]
      %v2199 = vlaneseq
      %v2200 = vshrl.u32 %v2199, 7
      %v2201 = vsub.s32 0, %v2200
      %v2202 = vrot.slane %v2197, %v2201
      %v2208 = vunpack.c.l.b16 %v2192
      %v2209 = vunpack.c.l.b16 %v2193
      %v2210 = vunpack.c.l.b16 %v2194
      %v2211 = vunpack.c.l.b16 %v2195
      %v2212 = vpack.c.b16 %v2209, %v2208
      %v2213 = vpack.c.b16 %v2211, %v2210
      %2216 = vmatprep.subr.bf16.mxu0 0
      %2217 = vmatpush1.bf16.msra.mxu0 %v2212
      %2218 = vmatprep.subr.bf16.mxu0 0
      %2219 = vmatpush1.bf16.msra.mxu0 %v2213
      %2220 = vmatprep.subr.bf16.mxu0 0
      %2221 = vmatpush1.bf16.msra.mxu0 0
      %2222 = vmatprep.subr.bf16.mxu0 0
      %2223 = vmatpush1.bf16.msra.mxu0 0
      %2224 = vmatprep.subr.bf16.mxu0 0
      %2225 = vmatpush1.bf16.msra.mxu0 0
      %2226 = vmatprep.subr.bf16.mxu0 0
      %2227 = vmatpush1.bf16.msra.mxu0 0
      %2228 = vmatprep.subr.bf16.mxu0 0
      %2229 = vmatpush1.bf16.msra.mxu0 0
      %2230 = vmatprep.subr.bf16.mxu0 0
      %2231 = vmatpush1.bf16.msra.mxu0 0
      %2232 = vmatprep.subr.bf16.mxu0 0
      %2233 = vmatpush1.bf16.msra.mxu0 0
      %2234 = vmatprep.subr.bf16.mxu0 0
      %2235 = vmatpush1.bf16.msra.mxu0 0
      %2236 = vmatprep.subr.bf16.mxu0 0
      %2237 = vmatpush1.bf16.msra.mxu0 0
      %2238 = vmatprep.subr.bf16.mxu0 0
      %2239 = vmatpush1.bf16.msra.mxu0 0
      %2240 = vmatprep.subr.bf16.mxu0 0
      %2241 = vmatpush1.bf16.msra.mxu0 0
      %2242 = vmatprep.subr.bf16.mxu0 0
      %2243 = vmatpush1.bf16.msra.mxu0 0
      %2244 = vmatprep.subr.bf16.mxu0 0
      %2245 = vmatpush1.bf16.msra.mxu0 0
      %2246 = vmatprep.subr.bf16.mxu0 0
      %2247 = vmatpush1.bf16.msra.mxu0 0
      %2248 = vmatprep.mubr.bf16.mxu0 0
      %2249 = vmatmul.mubr.bf16.gmra.mrb[0].mxu0 %v1267
      %v2250 = vpop.f32.mrb[0].mxu0
      %v2251 = vadd.f32 %v2202, %v2250
      %v2252 = vpop.f32.mrb[0].mxu0
      %v2253 = vpop.f32.mrb[0].mxu0
      %v2254 = vadd.f32 %v2202, %v2253
      %v2255 = vpop.f32.mrb[0].mxu0
      %2256 = vmatprep.mubr.bf16.mxu0 0
      %2257 = vmatmul.mubr.bf16.gmra.mrb[0].mxu0 %v1270
      %v2258 = vpop.f32.mrb[0].mxu0
      %v2259 = vadd.f32 %v2202, %v2258
      %v2260 = vpop.f32.mrb[0].mxu0
      %v2261 = vpop.f32.mrb[0].mxu0
      %v2262 = vadd.f32 %v2202, %v2261
      %v2263 = vpop.f32.mrb[0].mxu0
      %2264 = vmatprep.mubr.bf16.mxu0 0
      %2265 = vmatmul.mubr.bf16.gmra.mrb[0].mxu0 %v1273
      %v2266 = vpop.f32.mrb[0].mxu0
      %v2267 = vadd.f32 %v2202, %v2266
      %v2268 = vpop.f32.mrb[0].mxu0
      %v2269 = vpop.f32.mrb[0].mxu0
      %v2270 = vadd.f32 %v2202, %v2269
      %v2271 = vpop.f32.mrb[0].mxu0
      %2272 = vmatprep.mubr.bf16.mxu0 0
      %2273 = vmatmul.mubr.bf16.gmra.mrb[0].mxu0 %v1276
      %v2274 = vpop.f32.mrb[0].mxu0
      %v2275 = vadd.f32 %v2202, %v2274
      %v2276 = vpop.f32.mrb[0].mxu0
      %v2277 = vpop.f32.mrb[0].mxu0
      %v2278 = vadd.f32 %v2202, %v2277
      %v2279 = vpop.f32.mrb[0].mxu0
      %2280 = vmatprep.mubr.bf16.mxu0 0
      %2281 = vmatmul.mubr.bf16.gmra.mrb[0].mxu0 %v1279
      %v2282 = vpop.f32.mrb[0].mxu0
      %v2283 = vadd.f32 %v2202, %v2282
      %v2284 = vpop.f32.mrb[0].mxu0
      %v2285 = vpop.f32.mrb[0].mxu0
      %v2286 = vadd.f32 %v2202, %v2285
      %v2287 = vpop.f32.mrb[0].mxu0
      %2288 = vmatprep.mubr.bf16.mxu0 0
      %2289 = vmatmul.mubr.bf16.gmra.mrb[0].mxu0 %v1282
      %v2290 = vpop.f32.mrb[0].mxu0
      %v2291 = vadd.f32 %v2202, %v2290
      %v2292 = vpop.f32.mrb[0].mxu0
      %v2293 = vpop.f32.mrb[0].mxu0
      %v2294 = vadd.f32 %v2202, %v2293
      %v2295 = vpop.f32.mrb[0].mxu0
      %2296 = vdwg.mxu0
      %v2297 = vpack.c.bf16 %v2042, %v2039
      %v2298 = vpack.c.bf16 %v2050, %v2047
      %v2299 = vpack.c.bf16 %v2058, %v2055
      %v2300 = vpack.c.bf16 %v2066, %v2063
      %v2301 = vpack.c.bf16 %v2074, %v2071
      %v2302 = vpack.c.bf16 %v2082, %v2079
      %v2303 = vpack.c.bf16 %v2148, %v2145
      %v2304 = vpack.c.bf16 %v2156, %v2153
      %v2305 = vpack.c.bf16 %v2164, %v2161
      %v2306 = vpack.c.bf16 %v2172, %v2169
      %v2307 = vpack.c.bf16 %v2180, %v2177
      %v2308 = vpack.c.bf16 %v2188, %v2185
      %v2310 = vsel %vm1585, %v2297, 0
      %v2313 = vsel %vm1585, %v2298, 0
      %v2316 = vsel %vm1585, %v2299, 0
      %v2319 = vsel %vm1585, %v2300, 0
      %v2322 = vsel %vm1585, %v2301, 0
      %v2325 = vsel %vm1585, %v2302, 0
      %v2328 = vsel %vm1585, %v2303, 0
      %v2331 = vsel %vm1585, %v2304, 0
      %v2334 = vsel %vm1585, %v2305, 0
      %v2337 = vsel %vm1585, %v2306, 0
      %v2340 = vsel %vm1585, %v2307, 0
      %v2343 = vsel %vm1585, %v2308, 0
      %2345 = vmatprep.subr.bf16.mxu0 0
      %2346 = vmatpush1.bf16.xpose.msra.mxu0 %v2328
      %2347 = vmatprep.subr.bf16.mxu0 0
      %2348 = vmatpush1.bf16.xpose.msra.mxu0 %v2331
      %2349 = vmatprep.subr.bf16.mxu0 0
      %2350 = vmatpush1.bf16.xpose.msra.mxu0 %v2334
      %2351 = vmatprep.subr.bf16.mxu0 0
      %2352 = vmatpush1.bf16.xpose.msra.mxu0 %v2337
      %2353 = vmatprep.subr.bf16.mxu0 0
      %2354 = vmatpush1.bf16.xpose.msra.mxu0 %v2340
      %2355 = vmatprep.subr.bf16.mxu0 0
      %2356 = vmatpush1.bf16.xpose.msra.mxu0 %v2343
      %2357 = vmatprep.subr.bf16.mxu0 0
      %2358 = vmatpush1.bf16.xpose.msra.mxu0 0
      %2359 = vmatprep.subr.bf16.mxu0 0
      %2360 = vmatpush1.bf16.xpose.msra.mxu0 0
      %2361 = vmatprep.subr.bf16.mxu0 0
      %2362 = vmatpush1.bf16.xpose.msra.mxu0 0
      %2363 = vmatprep.subr.bf16.mxu0 0
      %2364 = vmatpush1.bf16.xpose.msra.mxu0 0
      %2365 = vmatprep.subr.bf16.mxu0 0
      %2366 = vmatpush1.bf16.xpose.msra.mxu0 0
      %2367 = vmatprep.subr.bf16.mxu0 0
      %2368 = vmatpush1.bf16.xpose.msra.mxu0 0
      %2369 = vmatprep.subr.bf16.mxu0 0
      %2370 = vmatpush1.bf16.xpose.msra.mxu0 0
      %2371 = vmatprep.subr.bf16.mxu0 0
      %2372 = vmatpush1.bf16.xpose.msra.mxu0 0
      %2373 = vmatprep.subr.bf16.mxu0 0
      %2374 = vmatpush1.bf16.xpose.msra.mxu0 0
      %2375 = vmatprep.subr.bf16.mxu0 0
      %2376 = vmatpush1.bf16.xpose.msra.mxu0 0
      %2377 = vmatprep.mubr.bf16.mxu0 0
      %2378 = vmatmul.mubr.bf16.gmra.mrb[0].mxu0 %v2310
      %v2379 = vpop.f32.mrb[0].mxu0
      %v2380 = vadd.f32 0.0, %v2379
      %v2381 = vpop.f32.mrb[0].mxu0
      %v2382 = vpop.f32.mrb[0].mxu0
      %v2383 = vadd.f32 0.0, %v2382
      %v2384 = vpop.f32.mrb[0].mxu0
      %2385 = vmatprep.mubr.bf16.mxu0 0
      %2386 = vmatmul.mubr.bf16.gmra.mrb[0].mxu0 %v2313
      %v2387 = vpop.f32.mrb[0].mxu0
      %v2388 = vadd.f32 0.0, %v2387
      %v2389 = vpop.f32.mrb[0].mxu0
      %v2390 = vpop.f32.mrb[0].mxu0
      %v2391 = vadd.f32 0.0, %v2390
      %v2392 = vpop.f32.mrb[0].mxu0
      %2393 = vmatprep.mubr.bf16.mxu0 0
      %2394 = vmatmul.mubr.bf16.gmra.mrb[0].mxu0 %v2316
      %v2395 = vpop.f32.mrb[0].mxu0
      %v2396 = vadd.f32 0.0, %v2395
      %v2397 = vpop.f32.mrb[0].mxu0
      %v2398 = vpop.f32.mrb[0].mxu0
      %v2399 = vadd.f32 0.0, %v2398
      %v2400 = vpop.f32.mrb[0].mxu0
      %2401 = vmatprep.mubr.bf16.mxu0 0
      %2402 = vmatmul.mubr.bf16.gmra.mrb[0].mxu0 %v2319
      %v2403 = vpop.f32.mrb[0].mxu0
      %v2404 = vadd.f32 0.0, %v2403
      %v2405 = vpop.f32.mrb[0].mxu0
      %v2406 = vpop.f32.mrb[0].mxu0
      %v2407 = vadd.f32 0.0, %v2406
      %v2408 = vpop.f32.mrb[0].mxu0
      %2409 = vmatprep.mubr.bf16.mxu0 0
      %2410 = vmatmul.mubr.bf16.gmra.mrb[0].mxu0 %v2322
      %v2411 = vpop.f32.mrb[0].mxu0
      %v2412 = vadd.f32 0.0, %v2411
      %v2413 = vpop.f32.mrb[0].mxu0
      %v2414 = vpop.f32.mrb[0].mxu0
      %v2415 = vadd.f32 0.0, %v2414
      %v2416 = vpop.f32.mrb[0].mxu0
      %2417 = vmatprep.mubr.bf16.mxu0 0
      %2418 = vmatmul.mubr.bf16.gmra.mrb[0].mxu0 %v2325
      %v2419 = vpop.f32.mrb[0].mxu0
      %v2420 = vadd.f32 0.0, %v2419
      %v2421 = vpop.f32.mrb[0].mxu0
      %v2422 = vpop.f32.mrb[0].mxu0
      %v2423 = vadd.f32 0.0, %v2422
      %v2424 = vpop.f32.mrb[0].mxu0
      %2425 = vdwg.mxu0
      %v2426 = vmul.f32 %v2380, 0.17677669
      %v2427 = vmul.f32 %v2383, 0.17677669
      %v2428 = vmul.f32 %v2388, 0.17677669
      %v2429 = vmul.f32 %v2391, 0.17677669
      %v2430 = vmul.f32 %v2396, 0.17677669
      %v2431 = vmul.f32 %v2399, 0.17677669
      %v2432 = vmul.f32 %v2404, 0.17677669
      %v2433 = vmul.f32 %v2407, 0.17677669
      %v2434 = vmul.f32 %v2412, 0.17677669
      %v2435 = vmul.f32 %v2415, 0.17677669
      %v2436 = vmul.f32 %v2420, 0.17677669
      %v2437 = vmul.f32 %v2423, 0.17677669
      %v2438 = vsel %vm1031, -1e+30, %v2426
      %v2439 = vsel %vm1032, -1e+30, %v2427
      %v2440 = vsel %vm1033, -1e+30, %v2428
      %v2441 = vsel %vm1034, -1e+30, %v2429
      %v2442 = vsel %vm1035, -1e+30, %v2430
      %v2443 = vsel %vm1036, -1e+30, %v2431
      %v2444 = vsel %vm1037, -1e+30, %v2432
      %v2445 = vsel %vm1038, -1e+30, %v2433
      %v2446 = vsel %vm1039, -1e+30, %v2434
      %v2447 = vsel %vm1040, -1e+30, %v2435
      %v2448 = vsel %vm1041, -1e+30, %v2436
      %v2449 = vsel %vm1042, -1e+30, %v2437
      %v2450 = vsel %vm1727, %v2438, -inf
      %2451 = vmax.xlane.f32.xlu0 %v2450
      %v2452 = vpop.xlane.xlu0 %2451
      %v2453 = vsel %vm1727, %v2439, -inf
      %2454 = vmax.xlane.f32.xlu0 %v2453
      %v2455 = vpop.xlane.xlu0 %2454
      %v2456 = vsel %vm1727, %v2440, -inf
      %2457 = vmax.xlane.f32.xlu0 %v2456
      %v2458 = vpop.xlane.xlu0 %2457
      %v2459 = vsel %vm1727, %v2441, -inf
      %2460 = vmax.xlane.f32.xlu0 %v2459
      %v2461 = vpop.xlane.xlu0 %2460
      %v2462 = vsel %vm1727, %v2442, -inf
      %2463 = vmax.xlane.f32.xlu0 %v2462
      %v2464 = vpop.xlane.xlu0 %2463
      %v2465 = vsel %vm1727, %v2443, -inf
      %2466 = vmax.xlane.f32.xlu0 %v2465
      %v2467 = vpop.xlane.xlu0 %2466
      %v2468 = vsel %vm1727, %v2444, -inf
      %2469 = vmax.xlane.f32.xlu0 %v2468
      %v2470 = vpop.xlane.xlu0 %2469
      %v2471 = vsel %vm1727, %v2445, -inf
      %2472 = vmax.xlane.f32.xlu0 %v2471
      %v2473 = vpop.xlane.xlu0 %2472
      %v2474 = vsel %vm1727, %v2446, -inf
      %2475 = vmax.xlane.f32.xlu0 %v2474
      %v2476 = vpop.xlane.xlu0 %2475
      %v2477 = vsel %vm1727, %v2447, -inf
      %2478 = vmax.xlane.f32.xlu0 %v2477
      %v2479 = vpop.xlane.xlu0 %2478
      %v2480 = vsel %vm1727, %v2448, -inf
      %2481 = vmax.xlane.f32.xlu0 %v2480
      %v2482 = vpop.xlane.xlu0 %2481
      %v2483 = vsel %vm1727, %v2449, -inf
      %2484 = vmax.xlane.f32.xlu0 %v2483
      %v2485 = vpop.xlane.xlu0 %2484
      %v2486 = vsub.f32 %v2438, %v2452
      %v2487 = vsub.f32 %v2439, %v2455
      %v2488 = vsub.f32 %v2440, %v2458
      %v2489 = vsub.f32 %v2441, %v2461
      %v2490 = vsub.f32 %v2442, %v2464
      %v2491 = vsub.f32 %v2443, %v2467
      %v2492 = vsub.f32 %v2444, %v2470
      %v2493 = vsub.f32 %v2445, %v2473
      %v2494 = vsub.f32 %v2446, %v2476
      %v2495 = vsub.f32 %v2447, %v2479
      %v2496 = vsub.f32 %v2448, %v2482
      %v2497 = vsub.f32 %v2449, %v2485
      %v2498 = vmul.f32 %v2486, 1.442695
      %v2499 = vpow.pop %v2498
      %v2500 = vmul.f32 %v2487, 1.442695
      %v2501 = vpow.pop %v2500
      %v2502 = vmul.f32 %v2488, 1.442695
      %v2503 = vpow.pop %v2502
      %v2504 = vmul.f32 %v2489, 1.442695
      %v2505 = vpow.pop %v2504
      %v2506 = vmul.f32 %v2490, 1.442695
      %v2507 = vpow.pop %v2506
      %v2508 = vmul.f32 %v2491, 1.442695
      %v2509 = vpow.pop %v2508
      %v2510 = vmul.f32 %v2492, 1.442695
      %v2511 = vpow.pop %v2510
      %v2512 = vmul.f32 %v2493, 1.442695
      %v2513 = vpow.pop %v2512
      %v2514 = vmul.f32 %v2494, 1.442695
      %v2515 = vpow.pop %v2514
      %v2516 = vmul.f32 %v2495, 1.442695
      %v2517 = vpow.pop %v2516
      %v2518 = vmul.f32 %v2496, 1.442695
      %v2519 = vpow.pop %v2518
      %v2520 = vmul.f32 %v2497, 1.442695
      %v2521 = vpow.pop %v2520
      %v2522 = vsel %vm1727, %v2499, 0.0
      %2523 = vadd.xlane.f32.xlu0 %v2522
      %v2524 = vpop.xlane.xlu0 %2523
      %v2525 = vsel %vm1727, %v2501, 0.0
      %2526 = vadd.xlane.f32.xlu0 %v2525
      %v2527 = vpop.xlane.xlu0 %2526
      %v2528 = vsel %vm1727, %v2503, 0.0
      %2529 = vadd.xlane.f32.xlu0 %v2528
      %v2530 = vpop.xlane.xlu0 %2529
      %v2531 = vsel %vm1727, %v2505, 0.0
      %2532 = vadd.xlane.f32.xlu0 %v2531
      %v2533 = vpop.xlane.xlu0 %2532
      %v2534 = vsel %vm1727, %v2507, 0.0
      %2535 = vadd.xlane.f32.xlu0 %v2534
      %v2536 = vpop.xlane.xlu0 %2535
      %v2537 = vsel %vm1727, %v2509, 0.0
      %2538 = vadd.xlane.f32.xlu0 %v2537
      %v2539 = vpop.xlane.xlu0 %2538
      %v2540 = vsel %vm1727, %v2511, 0.0
      %2541 = vadd.xlane.f32.xlu0 %v2540
      %v2542 = vpop.xlane.xlu0 %2541
      %v2543 = vsel %vm1727, %v2513, 0.0
      %2544 = vadd.xlane.f32.xlu0 %v2543
      %v2545 = vpop.xlane.xlu0 %2544
      %v2546 = vsel %vm1727, %v2515, 0.0
      %2547 = vadd.xlane.f32.xlu0 %v2546
      %v2548 = vpop.xlane.xlu0 %2547
      %v2549 = vsel %vm1727, %v2517, 0.0
      %2550 = vadd.xlane.f32.xlu0 %v2549
      %v2551 = vpop.xlane.xlu0 %2550
      %v2552 = vsel %vm1727, %v2519, 0.0
      %2553 = vadd.xlane.f32.xlu0 %v2552
      %v2554 = vpop.xlane.xlu0 %2553
      %v2555 = vsel %vm1727, %v2521, 0.0
      %2556 = vadd.xlane.f32.xlu0 %v2555
      %v2557 = vpop.xlane.xlu0 %2556
      %v2558 = vpack.c.bf16 %v2501, %v2499
      %v2559 = vpack.c.bf16 %v2505, %v2503
      %v2560 = vpack.c.bf16 %v2509, %v2507
      %v2561 = vpack.c.bf16 %v2513, %v2511
      %v2562 = vpack.c.bf16 %v2517, %v2515
      %v2563 = vpack.c.bf16 %v2521, %v2519
      %v2564 = vpack.c.bf16 %v2254, %v2251
      %v2565 = vpack.c.bf16 %v2262, %v2259
      %v2566 = vpack.c.bf16 %v2270, %v2267
      %v2567 = vpack.c.bf16 %v2278, %v2275
      %v2568 = vpack.c.bf16 %v2286, %v2283
      %v2569 = vpack.c.bf16 %v2294, %v2291
      %v2571 = vsel %vm1727, %v2558, 0
      %v2574 = vsel %vm1727, %v2559, 0
      %v2577 = vsel %vm1727, %v2560, 0
      %v2580 = vsel %vm1727, %v2561, 0
      %v2583 = vsel %vm1727, %v2562, 0
      %v2586 = vsel %vm1727, %v2563, 0
      %2588 = vmatprep.subr.bf16.mxu0 0
      %2589 = vmatpush1.bf16.msra.mxu0 %v2564
      %2590 = vmatprep.subr.bf16.mxu0 0
      %2591 = vmatpush1.bf16.msra.mxu0 %v2565
      %2592 = vmatprep.subr.bf16.mxu0 0
      %2593 = vmatpush1.bf16.msra.mxu0 %v2566
      %2594 = vmatprep.subr.bf16.mxu0 0
      %2595 = vmatpush1.bf16.msra.mxu0 %v2567
      %2596 = vmatprep.subr.bf16.mxu0 0
      %2597 = vmatpush1.bf16.msra.mxu0 %v2568
      %2598 = vmatprep.subr.bf16.mxu0 0
      %2599 = vmatpush1.bf16.msra.mxu0 %v2569
      %2600 = vmatprep.subr.bf16.mxu0 0
      %2601 = vmatpush1.bf16.msra.mxu0 0
      %2602 = vmatprep.subr.bf16.mxu0 0
      %2603 = vmatpush1.bf16.msra.mxu0 0
      %2604 = vmatprep.subr.bf16.mxu0 0
      %2605 = vmatpush1.bf16.msra.mxu0 0
      %2606 = vmatprep.subr.bf16.mxu0 0
      %2607 = vmatpush1.bf16.msra.mxu0 0
      %2608 = vmatprep.subr.bf16.mxu0 0
      %2609 = vmatpush1.bf16.msra.mxu0 0
      %2610 = vmatprep.subr.bf16.mxu0 0
      %2611 = vmatpush1.bf16.msra.mxu0 0
      %2612 = vmatprep.subr.bf16.mxu0 0
      %2613 = vmatpush1.bf16.msra.mxu0 0
      %2614 = vmatprep.subr.bf16.mxu0 0
      %2615 = vmatpush1.bf16.msra.mxu0 0
      %2616 = vmatprep.subr.bf16.mxu0 0
      %2617 = vmatpush1.bf16.msra.mxu0 0
      %2618 = vmatprep.subr.bf16.mxu0 0
      %2619 = vmatpush1.bf16.msra.mxu0 0
      %2620 = vmatprep.mubr.bf16.mxu0 0
      %2621 = vmatmul.mubr.bf16.gmra.mrb[0].mxu0 %v2571
      %v2622 = vpop.f32.mrb[0].mxu0
      %v2623 = vadd.f32 0.0, %v2622
      %v2624 = vpop.f32.mrb[0].mxu0
      %v2625 = vpop.f32.mrb[0].mxu0
      %v2626 = vadd.f32 0.0, %v2625
      %v2627 = vpop.f32.mrb[0].mxu0
      %2628 = vmatprep.mubr.bf16.mxu0 0
      %2629 = vmatmul.mubr.bf16.gmra.mrb[0].mxu0 %v2574
      %v2630 = vpop.f32.mrb[0].mxu0
      %v2631 = vadd.f32 0.0, %v2630
      %v2632 = vpop.f32.mrb[0].mxu0
      %v2633 = vpop.f32.mrb[0].mxu0
      %v2634 = vadd.f32 0.0, %v2633
      %v2635 = vpop.f32.mrb[0].mxu0
      %2636 = vmatprep.mubr.bf16.mxu0 0
      %2637 = vmatmul.mubr.bf16.gmra.mrb[0].mxu0 %v2577
      %v2638 = vpop.f32.mrb[0].mxu0
      %v2639 = vadd.f32 0.0, %v2638
      %v2640 = vpop.f32.mrb[0].mxu0
      %v2641 = vpop.f32.mrb[0].mxu0
      %v2642 = vadd.f32 0.0, %v2641
      %v2643 = vpop.f32.mrb[0].mxu0
      %2644 = vmatprep.mubr.bf16.mxu0 0
      %2645 = vmatmul.mubr.bf16.gmra.mrb[0].mxu0 %v2580
      %v2646 = vpop.f32.mrb[0].mxu0
      %v2647 = vadd.f32 0.0, %v2646
      %v2648 = vpop.f32.mrb[0].mxu0
      %v2649 = vpop.f32.mrb[0].mxu0
      %v2650 = vadd.f32 0.0, %v2649
      %v2651 = vpop.f32.mrb[0].mxu0
      %2652 = vmatprep.mubr.bf16.mxu0 0
      %2653 = vmatmul.mubr.bf16.gmra.mrb[0].mxu0 %v2583
      %v2654 = vpop.f32.mrb[0].mxu0
      %v2655 = vadd.f32 0.0, %v2654
      %v2656 = vpop.f32.mrb[0].mxu0
      %v2657 = vpop.f32.mrb[0].mxu0
      %v2658 = vadd.f32 0.0, %v2657
      %v2659 = vpop.f32.mrb[0].mxu0
      %2660 = vmatprep.mubr.bf16.mxu0 0
      %2661 = vmatmul.mubr.bf16.gmra.mrb[0].mxu0 %v2586
      %v2662 = vpop.f32.mrb[0].mxu0
      %v2663 = vadd.f32 0.0, %v2662
      %v2664 = vpop.f32.mrb[0].mxu0
      %v2665 = vpop.f32.mrb[0].mxu0
      %v2666 = vadd.f32 0.0, %v2665
      %v2667 = vpop.f32.mrb[0].mxu0
      %2668 = vdwg.mxu0
      %v2669 = vrcp.pop %v2524
      %v2670 = vmul.f32 %v2623, %v2669
      %v2671 = vrcp.pop %v2527
      %v2672 = vmul.f32 %v2626, %v2671
      %v2673 = vrcp.pop %v2530
      %v2674 = vmul.f32 %v2631, %v2673
      %v2675 = vrcp.pop %v2533
      %v2676 = vmul.f32 %v2634, %v2675
      %v2677 = vrcp.pop %v2536
      %v2678 = vmul.f32 %v2639, %v2677
      %v2679 = vrcp.pop %v2539
      %v2680 = vmul.f32 %v2642, %v2679
      %v2681 = vrcp.pop %v2542
      %v2682 = vmul.f32 %v2647, %v2681
      %v2683 = vrcp.pop %v2545
      %v2684 = vmul.f32 %v2650, %v2683
      %v2685 = vrcp.pop %v2548
      %v2686 = vmul.f32 %v2655, %v2685
      %v2687 = vrcp.pop %v2551
      %v2688 = vmul.f32 %v2658, %v2687
      %v2689 = vrcp.pop %v2554
      %v2690 = vmul.f32 %v2663, %v2689
      %v2691 = vrcp.pop %v2557
      %v2692 = vmul.f32 %v2666, %v2691
      %s2693 = scalar_lea.vmem %s13, 8
      %v2694 = vld [vmem:[%s2693] sm:$0xf]
      %v2695 = vld [vmem:[%s2693 + $0x4] sm:$0xf]
      %v2696 = vpack.c.bf16 %v2672, %v2670
      %v2697 = vpack.c.bf16 %v2676, %v2674
      %v2698 = vpack.c.bf16 %v2680, %v2678
      %v2699 = vpack.c.bf16 %v2684, %v2682
      %v2700 = vpack.c.bf16 %v2688, %v2686
      %v2701 = vpack.c.bf16 %v2692, %v2690
      %v2704 = vunpack.c.l.b16 %v2694
      %v2705 = vunpack.c.l.b16 %v2695
      %v2706 = vpack.c.b16 %v2705, %v2704
      %v2709 = vsel %vm1585, %v2696, 0
      %v2712 = vsel %vm1585, %v2697, 0
      %v2715 = vsel %vm1585, %v2698, 0
      %v2718 = vsel %vm1585, %v2699, 0
      %v2721 = vsel %vm1585, %v2700, 0
      %v2724 = vsel %vm1585, %v2701, 0
      %2726 = vmatprep.subr.bf16.mxu0 0
      %2727 = vmatpush1.bf16.msra.mxu0 %v2706
      %2728 = vmatprep.subr.bf16.mxu0 0
      %2729 = vmatpush1.bf16.msra.mxu0 0
      %2730 = vmatprep.subr.bf16.mxu0 0
      %2731 = vmatpush1.bf16.msra.mxu0 0
      %2732 = vmatprep.subr.bf16.mxu0 0
      %2733 = vmatpush1.bf16.msra.mxu0 0
      %2734 = vmatprep.subr.bf16.mxu0 0
      %2735 = vmatpush1.bf16.msra.mxu0 0
      %2736 = vmatprep.subr.bf16.mxu0 0
      %2737 = vmatpush1.bf16.msra.mxu0 0
      %2738 = vmatprep.subr.bf16.mxu0 0
      %2739 = vmatpush1.bf16.msra.mxu0 0
      %2740 = vmatprep.subr.bf16.mxu0 0
      %2741 = vmatpush1.bf16.msra.mxu0 0
      %2742 = vmatprep.subr.bf16.mxu0 0
      %2743 = vmatpush1.bf16.msra.mxu0 0
      %2744 = vmatprep.subr.bf16.mxu0 0
      %2745 = vmatpush1.bf16.msra.mxu0 0
      %2746 = vmatprep.subr.bf16.mxu0 0
      %2747 = vmatpush1.bf16.msra.mxu0 0
      %2748 = vmatprep.subr.bf16.mxu0 0
      %2749 = vmatpush1.bf16.msra.mxu0 0
      %2750 = vmatprep.subr.bf16.mxu0 0
      %2751 = vmatpush1.bf16.msra.mxu0 0
      %2752 = vmatprep.subr.bf16.mxu0 0
      %2753 = vmatpush1.bf16.msra.mxu0 0
      %2754 = vmatprep.subr.bf16.mxu0 0
      %2755 = vmatpush1.bf16.msra.mxu0 0
      %2756 = vmatprep.subr.bf16.mxu0 0
      %2757 = vmatpush1.bf16.msra.mxu0 0
      %2758 = vmatprep.mubr.bf16.mxu0 0
      %2759 = vmatmul.mubr.bf16.gmra.mrb[0].mxu0 %v2709
      %v2760 = vpop.f32.mrb[0].mxu0
      %v2761 = vadd.f32 0.0, %v2760
      %v2762 = vpop.f32.mrb[0].mxu0
      %v2763 = vpop.f32.mrb[0].mxu0
      %v2764 = vadd.f32 0.0, %v2763
      %v2765 = vpop.f32.mrb[0].mxu0
      %2766 = vmatprep.mubr.bf16.mxu0 0
      %2767 = vmatmul.mubr.bf16.gmra.mrb[0].mxu0 %v2712
      %v2768 = vpop.f32.mrb[0].mxu0
      %v2769 = vadd.f32 0.0, %v2768
      %v2770 = vpop.f32.mrb[0].mxu0
      %v2771 = vpop.f32.mrb[0].mxu0
      %v2772 = vadd.f32 0.0, %v2771
      %v2773 = vpop.f32.mrb[0].mxu0
      %2774 = vmatprep.mubr.bf16.mxu0 0
      %2775 = vmatmul.mubr.bf16.gmra.mrb[0].mxu0 %v2715
      %v2776 = vpop.f32.mrb[0].mxu0
      %v2777 = vadd.f32 0.0, %v2776
      %v2778 = vpop.f32.mrb[0].mxu0
      %v2779 = vpop.f32.mrb[0].mxu0
      %v2780 = vadd.f32 0.0, %v2779
      %v2781 = vpop.f32.mrb[0].mxu0
      %2782 = vmatprep.mubr.bf16.mxu0 0
      %2783 = vmatmul.mubr.bf16.gmra.mrb[0].mxu0 %v2718
      %v2784 = vpop.f32.mrb[0].mxu0
      %v2785 = vadd.f32 0.0, %v2784
      %v2786 = vpop.f32.mrb[0].mxu0
      %v2787 = vpop.f32.mrb[0].mxu0
      %v2788 = vadd.f32 0.0, %v2787
      %v2789 = vpop.f32.mrb[0].mxu0
      %2790 = vmatprep.mubr.bf16.mxu0 0
      %2791 = vmatmul.mubr.bf16.gmra.mrb[0].mxu0 %v2721
      %v2792 = vpop.f32.mrb[0].mxu0
      %v2793 = vadd.f32 0.0, %v2792
      %v2794 = vpop.f32.mrb[0].mxu0
      %v2795 = vpop.f32.mrb[0].mxu0
      %v2796 = vadd.f32 0.0, %v2795
      %v2797 = vpop.f32.mrb[0].mxu0
      %2798 = vmatprep.mubr.bf16.mxu0 0
      %2799 = vmatmul.mubr.bf16.gmra.mrb[0].mxu0 %v2724
      %v2800 = vpop.f32.mrb[0].mxu0
      %v2801 = vadd.f32 0.0, %v2800
      %v2802 = vpop.f32.mrb[0].mxu0
      %v2803 = vpop.f32.mrb[0].mxu0
      %v2804 = vadd.f32 0.0, %v2803
      %v2805 = vpop.f32.mrb[0].mxu0
      %2806 = vdwg.mxu0
      %v2809 = vunpack.c.l.b16 %v1971
      %v2810 = vunpack.c.l.b16 %v1972
      %v2811 = vpack.c.b16 %v2810, %v2809
      %v2814 = vsel %vm1585, %v1973, 0
      %v2817 = vsel %vm1585, %v1974, 0
      %v2820 = vsel %vm1585, %v1975, 0
      %v2823 = vsel %vm1585, %v1976, 0
      %v2826 = vsel %vm1585, %v1977, 0
      %v2829 = vsel %vm1585, %v1978, 0
      %2831 = vmatprep.subr.bf16.mxu0 0
      %2832 = vmatpush1.bf16.msra.mxu0 %v2811
      %2833 = vmatprep.subr.bf16.mxu0 0
      %2834 = vmatpush1.bf16.msra.mxu0 0
      %2835 = vmatprep.subr.bf16.mxu0 0
      %2836 = vmatpush1.bf16.msra.mxu0 0
      %2837 = vmatprep.subr.bf16.mxu0 0
      %2838 = vmatpush1.bf16.msra.mxu0 0
      %2839 = vmatprep.subr.bf16.mxu0 0
      %2840 = vmatpush1.bf16.msra.mxu0 0
      %2841 = vmatprep.subr.bf16.mxu0 0
      %2842 = vmatpush1.bf16.msra.mxu0 0
      %2843 = vmatprep.subr.bf16.mxu0 0
      %2844 = vmatpush1.bf16.msra.mxu0 0
      %2845 = vmatprep.subr.bf16.mxu0 0
      %2846 = vmatpush1.bf16.msra.mxu0 0
      %2847 = vmatprep.subr.bf16.mxu0 0
      %2848 = vmatpush1.bf16.msra.mxu0 0
      %2849 = vmatprep.subr.bf16.mxu0 0
      %2850 = vmatpush1.bf16.msra.mxu0 0
      %2851 = vmatprep.subr.bf16.mxu0 0
      %2852 = vmatpush1.bf16.msra.mxu0 0
      %2853 = vmatprep.subr.bf16.mxu0 0
      %2854 = vmatpush1.bf16.msra.mxu0 0
      %2855 = vmatprep.subr.bf16.mxu0 0
      %2856 = vmatpush1.bf16.msra.mxu0 0
      %2857 = vmatprep.subr.bf16.mxu0 0
      %2858 = vmatpush1.bf16.msra.mxu0 0
      %2859 = vmatprep.subr.bf16.mxu0 0
      %2860 = vmatpush1.bf16.msra.mxu0 0
      %2861 = vmatprep.subr.bf16.mxu0 0
      %2862 = vmatpush1.bf16.msra.mxu0 0
      %2863 = vmatprep.mubr.bf16.mxu0 0
      %2864 = vmatmul.mubr.bf16.gmra.mrb[0].mxu0 %v2814
      %v2865 = vpop.f32.mrb[0].mxu0
      %v2866 = vadd.f32 %v2761, %v2865
      %v2867 = vpop.f32.mrb[0].mxu0
      %v2868 = vpop.f32.mrb[0].mxu0
      %v2869 = vadd.f32 %v2764, %v2868
      %v2870 = vpop.f32.mrb[0].mxu0
      %2871 = vmatprep.mubr.bf16.mxu0 0
      %2872 = vmatmul.mubr.bf16.gmra.mrb[0].mxu0 %v2817
      %v2873 = vpop.f32.mrb[0].mxu0
      %v2874 = vadd.f32 %v2769, %v2873
      %v2875 = vpop.f32.mrb[0].mxu0
      %v2876 = vpop.f32.mrb[0].mxu0
      %v2877 = vadd.f32 %v2772, %v2876
      %v2878 = vpop.f32.mrb[0].mxu0
      %2879 = vmatprep.mubr.bf16.mxu0 0
      %2880 = vmatmul.mubr.bf16.gmra.mrb[0].mxu0 %v2820
      %v2881 = vpop.f32.mrb[0].mxu0
      %v2882 = vadd.f32 %v2777, %v2881
      %v2883 = vpop.f32.mrb[0].mxu0
      %v2884 = vpop.f32.mrb[0].mxu0
      %v2885 = vadd.f32 %v2780, %v2884
      %v2886 = vpop.f32.mrb[0].mxu0
      %2887 = vmatprep.mubr.bf16.mxu0 0
      %2888 = vmatmul.mubr.bf16.gmra.mrb[0].mxu0 %v2823
      %v2889 = vpop.f32.mrb[0].mxu0
      %v2890 = vadd.f32 %v2785, %v2889
      %v2891 = vpop.f32.mrb[0].mxu0
      %v2892 = vpop.f32.mrb[0].mxu0
      %v2893 = vadd.f32 %v2788, %v2892
      %v2894 = vpop.f32.mrb[0].mxu0
      %2895 = vmatprep.mubr.bf16.mxu0 0
      %2896 = vmatmul.mubr.bf16.gmra.mrb[0].mxu0 %v2826
      %v2897 = vpop.f32.mrb[0].mxu0
      %v2898 = vadd.f32 %v2793, %v2897
      %v2899 = vpop.f32.mrb[0].mxu0
      %v2900 = vpop.f32.mrb[0].mxu0
      %v2901 = vadd.f32 %v2796, %v2900
      %v2902 = vpop.f32.mrb[0].mxu0
      %2903 = vmatprep.mubr.bf16.mxu0 0
      %2904 = vmatmul.mubr.bf16.gmra.mrb[0].mxu0 %v2829
      %v2905 = vpop.f32.mrb[0].mxu0
      %v2906 = vadd.f32 %v2801, %v2905
      %v2907 = vpop.f32.mrb[0].mxu0
      %v2908 = vpop.f32.mrb[0].mxu0
      %v2909 = vadd.f32 %v2804, %v2908
      %v2910 = vpop.f32.mrb[0].mxu0
      %2911 = vdwg.mxu0
      %v2912 = vadd.f32 %v991, %v2866
      %v2913 = vadd.f32 %v992, %v2869
      %v2914 = vadd.f32 %v993, %v2874
      %v2915 = vadd.f32 %v994, %v2877
      %v2916 = vadd.f32 %v995, %v2882
      %v2917 = vadd.f32 %v996, %v2885
      %v2918 = vadd.f32 %v997, %v2890
      %v2919 = vadd.f32 %v998, %v2893
      %v2920 = vadd.f32 %v999, %v2898
      %v2921 = vadd.f32 %v1000, %v2901
      %v2922 = vadd.f32 %v1001, %v2906
      %v2923 = vadd.f32 %v1002, %v2909
      %v2924 = vld [vmem:[%s14] sm:$0x1]
      %v2926 = vlaneseq
      %v2927 = vshrl.u32 %v2926, 7
      %v2928 = vsub.s32 0, %v2927
      %v2929 = vrot.slane %v2924, %v2928
      %v2931 = vadd.f32 %v2912, %v2929
      %v2932 = vadd.f32 %v2913, %v2929
      %v2933 = vadd.f32 %v2914, %v2929
      %v2934 = vadd.f32 %v2915, %v2929
      %v2935 = vadd.f32 %v2916, %v2929
      %v2936 = vadd.f32 %v2917, %v2929
      %v2937 = vadd.f32 %v2918, %v2929
      %v2938 = vadd.f32 %v2919, %v2929
      %v2939 = vadd.f32 %v2920, %v2929
      %v2940 = vadd.f32 %v2921, %v2929
      %v2941 = vadd.f32 %v2922, %v2929
      %v2942 = vadd.f32 %v2923, %v2929
      %v2943 = vld [vmem:[%s15] sm:$0x1]
      %v2944 = vld [vmem:[%s16] sm:$0x1]
      %v2945 = vsel %vm809, %v2931, 0.0
      %2946 = vadd.xlane.f32.xlu0 %v2945
      %v2947 = vpop.xlane.xlu0 %2946
      %v2948 = vsel %vm809, %v2932, 0.0
      %2949 = vadd.xlane.f32.xlu0 %v2948
      %v2950 = vpop.xlane.xlu0 %2949
      %v2951 = vsel %vm809, %v2933, 0.0
      %2952 = vadd.xlane.f32.xlu0 %v2951
      %v2953 = vpop.xlane.xlu0 %2952
      %v2954 = vsel %vm809, %v2934, 0.0
      %2955 = vadd.xlane.f32.xlu0 %v2954
      %v2956 = vpop.xlane.xlu0 %2955
      %v2957 = vsel %vm809, %v2935, 0.0
      %2958 = vadd.xlane.f32.xlu0 %v2957
      %v2959 = vpop.xlane.xlu0 %2958
      %v2960 = vsel %vm809, %v2936, 0.0
      %2961 = vadd.xlane.f32.xlu0 %v2960
      %v2962 = vpop.xlane.xlu0 %2961
      %v2963 = vsel %vm809, %v2937, 0.0
      %2964 = vadd.xlane.f32.xlu0 %v2963
      %v2965 = vpop.xlane.xlu0 %2964
      %v2966 = vsel %vm809, %v2938, 0.0
      %2967 = vadd.xlane.f32.xlu0 %v2966
      %v2968 = vpop.xlane.xlu0 %2967
      %v2969 = vsel %vm809, %v2939, 0.0
      %2970 = vadd.xlane.f32.xlu0 %v2969
      %v2971 = vpop.xlane.xlu0 %2970
      %v2972 = vsel %vm809, %v2940, 0.0
      %2973 = vadd.xlane.f32.xlu0 %v2972
      %v2974 = vpop.xlane.xlu0 %2973
      %v2975 = vsel %vm809, %v2941, 0.0
      %2976 = vadd.xlane.f32.xlu0 %v2975
      %v2977 = vpop.xlane.xlu0 %2976
      %v2978 = vsel %vm809, %v2942, 0.0
      %2979 = vadd.xlane.f32.xlu0 %v2978
      %v2980 = vpop.xlane.xlu0 %2979
      %v2981 = vmul.f32 %v2947, %v846
      %v2982 = vmul.f32 %v2950, %v846
      %v2983 = vmul.f32 %v2953, %v846
      %v2984 = vmul.f32 %v2956, %v846
      %v2985 = vmul.f32 %v2959, %v846
      %v2986 = vmul.f32 %v2962, %v846
      %v2987 = vmul.f32 %v2965, %v846
      %v2988 = vmul.f32 %v2968, %v846
      %v2989 = vmul.f32 %v2971, %v846
      %v2990 = vmul.f32 %v2974, %v846
      %v2991 = vmul.f32 %v2977, %v846
      %v2992 = vmul.f32 %v2980, %v846
      %v2993 = vsub.f32 %v2931, %v2981
      %v2994 = vsub.f32 %v2932, %v2982
      %v2995 = vsub.f32 %v2933, %v2983
      %v2996 = vsub.f32 %v2934, %v2984
      %v2997 = vsub.f32 %v2935, %v2985
      %v2998 = vsub.f32 %v2936, %v2986
      %v2999 = vsub.f32 %v2937, %v2987
      %v3000 = vsub.f32 %v2938, %v2988
      %v3001 = vsub.f32 %v2939, %v2989
      %v3002 = vsub.f32 %v2940, %v2990
      %v3003 = vsub.f32 %v2941, %v2991
      %v3004 = vsub.f32 %v2942, %v2992
      %v3005 = vmul.f32 %v2993, %v2993
      %v3006 = vmul.f32 %v2994, %v2994
      %v3007 = vmul.f32 %v2995, %v2995
      %v3008 = vmul.f32 %v2996, %v2996
      %v3009 = vmul.f32 %v2997, %v2997
      %v3010 = vmul.f32 %v2998, %v2998
      %v3011 = vmul.f32 %v2999, %v2999
      %v3012 = vmul.f32 %v3000, %v3000
      %v3013 = vmul.f32 %v3001, %v3001
      %v3014 = vmul.f32 %v3002, %v3002
      %v3015 = vmul.f32 %v3003, %v3003
      %v3016 = vmul.f32 %v3004, %v3004
      %v3017 = vsel %vm809, %v3005, 0.0
      %3018 = vadd.xlane.f32.xlu0 %v3017
      %v3019 = vpop.xlane.xlu0 %3018
      %v3020 = vsel %vm809, %v3006, 0.0
      %3021 = vadd.xlane.f32.xlu0 %v3020
      %v3022 = vpop.xlane.xlu0 %3021
      %v3023 = vsel %vm809, %v3007, 0.0
      %3024 = vadd.xlane.f32.xlu0 %v3023
      %v3025 = vpop.xlane.xlu0 %3024
      %v3026 = vsel %vm809, %v3008, 0.0
      %3027 = vadd.xlane.f32.xlu0 %v3026
      %v3028 = vpop.xlane.xlu0 %3027
      %v3029 = vsel %vm809, %v3009, 0.0
      %3030 = vadd.xlane.f32.xlu0 %v3029
      %v3031 = vpop.xlane.xlu0 %3030
      %v3032 = vsel %vm809, %v3010, 0.0
      %3033 = vadd.xlane.f32.xlu0 %v3032
      %v3034 = vpop.xlane.xlu0 %3033
      %v3035 = vsel %vm809, %v3011, 0.0
      %3036 = vadd.xlane.f32.xlu0 %v3035
      %v3037 = vpop.xlane.xlu0 %3036
      %v3038 = vsel %vm809, %v3012, 0.0
      %3039 = vadd.xlane.f32.xlu0 %v3038
      %v3040 = vpop.xlane.xlu0 %3039
      %v3041 = vsel %vm809, %v3013, 0.0
      %3042 = vadd.xlane.f32.xlu0 %v3041
      %v3043 = vpop.xlane.xlu0 %3042
      %v3044 = vsel %vm809, %v3014, 0.0
      %3045 = vadd.xlane.f32.xlu0 %v3044
      %v3046 = vpop.xlane.xlu0 %3045
      %v3047 = vsel %vm809, %v3015, 0.0
      %3048 = vadd.xlane.f32.xlu0 %v3047
      %v3049 = vpop.xlane.xlu0 %3048
      %v3050 = vsel %vm809, %v3016, 0.0
      %3051 = vadd.xlane.f32.xlu0 %v3050
      %v3052 = vpop.xlane.xlu0 %3051
      %v3053 = vmul.f32 %v3019, %v846
      %v3054 = vmul.f32 %v3022, %v846
      %v3055 = vmul.f32 %v3025, %v846
      %v3056 = vmul.f32 %v3028, %v846
      %v3057 = vmul.f32 %v3031, %v846
      %v3058 = vmul.f32 %v3034, %v846
      %v3059 = vmul.f32 %v3037, %v846
      %v3060 = vmul.f32 %v3040, %v846
      %v3061 = vmul.f32 %v3043, %v846
      %v3062 = vmul.f32 %v3046, %v846
      %v3063 = vmul.f32 %v3049, %v846
      %v3064 = vmul.f32 %v3052, %v846
      %v3065 = vadd.f32 %v3053, 1e-05
      %v3066 = vadd.f32 %v3054, 1e-05
      %v3067 = vadd.f32 %v3055, 1e-05
      %v3068 = vadd.f32 %v3056, 1e-05
      %v3069 = vadd.f32 %v3057, 1e-05
      %v3070 = vadd.f32 %v3058, 1e-05
      %v3071 = vadd.f32 %v3059, 1e-05
      %v3072 = vadd.f32 %v3060, 1e-05
      %v3073 = vadd.f32 %v3061, 1e-05
      %v3074 = vadd.f32 %v3062, 1e-05
      %v3075 = vadd.f32 %v3063, 1e-05
      %v3076 = vadd.f32 %v3064, 1e-05
      %v3077 = vrsqrt.pop %v3065
      %v3078 = vrsqrt.pop %v3066
      %v3079 = vrsqrt.pop %v3067
      %v3080 = vrsqrt.pop %v3068
      %v3081 = vrsqrt.pop %v3069
      %v3082 = vrsqrt.pop %v3070
      %v3083 = vrsqrt.pop %v3071
      %v3084 = vrsqrt.pop %v3072
      %v3085 = vrsqrt.pop %v3073
      %v3086 = vrsqrt.pop %v3074
      %v3087 = vrsqrt.pop %v3075
      %v3088 = vrsqrt.pop %v3076
      %v3089 = vmul.f32 %v2993, %v3077
      %v3090 = vmul.f32 %v2994, %v3078
      %v3091 = vmul.f32 %v2995, %v3079
      %v3092 = vmul.f32 %v2996, %v3080
      %v3093 = vmul.f32 %v2997, %v3081
      %v3094 = vmul.f32 %v2998, %v3082
      %v3095 = vmul.f32 %v2999, %v3083
      %v3096 = vmul.f32 %v3000, %v3084
      %v3097 = vmul.f32 %v3001, %v3085
      %v3098 = vmul.f32 %v3002, %v3086
      %v3099 = vmul.f32 %v3003, %v3087
      %v3100 = vmul.f32 %v3004, %v3088
      %v3102 = vlaneseq
      %v3103 = vshrl.u32 %v3102, 7
      %v3104 = vsub.s32 0, %v3103
      %v3105 = vrot.slane %v2943, %v3104
      %v3107 = vmul.f32 %v3089, %v3105
      %v3108 = vmul.f32 %v3090, %v3105
      %v3109 = vmul.f32 %v3091, %v3105
      %v3110 = vmul.f32 %v3092, %v3105
      %v3111 = vmul.f32 %v3093, %v3105
      %v3112 = vmul.f32 %v3094, %v3105
      %v3113 = vmul.f32 %v3095, %v3105
      %v3114 = vmul.f32 %v3096, %v3105
      %v3115 = vmul.f32 %v3097, %v3105
      %v3116 = vmul.f32 %v3098, %v3105
      %v3117 = vmul.f32 %v3099, %v3105
      %v3118 = vmul.f32 %v3100, %v3105
      %v3120 = vlaneseq
      %v3121 = vshrl.u32 %v3120, 7
      %v3122 = vsub.s32 0, %v3121
      %v3123 = vrot.slane %v2944, %v3122
      %v3125 = vadd.f32 %v3107, %v3123
      %v3126 = vadd.f32 %v3108, %v3123
      %v3127 = vadd.f32 %v3109, %v3123
      %v3128 = vadd.f32 %v3110, %v3123
      %v3129 = vadd.f32 %v3111, %v3123
      %v3130 = vadd.f32 %v3112, %v3123
      %v3131 = vadd.f32 %v3113, %v3123
      %v3132 = vadd.f32 %v3114, %v3123
      %v3133 = vadd.f32 %v3115, %v3123
      %v3134 = vadd.f32 %v3116, %v3123
      %v3135 = vadd.f32 %v3117, %v3123
      %v3136 = vadd.f32 %v3118, %v3123
      %v3137 = vld [vmem:[%s17] sm:$0xf]
      %v3138 = vld [vmem:[%s17 + $0x4] sm:$0xf]
      %v3139 = vld [vmem:[%s17 + $0x8] sm:$0xf]
      %v3140 = vld [vmem:[%s17 + $0xc] sm:$0xf]
      %v3141 = vpack.c.bf16 %v3126, %v3125
      %v3142 = vpack.c.bf16 %v3128, %v3127
      %v3143 = vpack.c.bf16 %v3130, %v3129
      %v3144 = vpack.c.bf16 %v3132, %v3131
      %v3145 = vpack.c.bf16 %v3134, %v3133
      %v3146 = vpack.c.bf16 %v3136, %v3135
      %v3147 = vld [vmem:[%s18] sm:$0x1]
      %v3149 = vlaneseq
      %v3150 = vshrl.u32 %v3149, 7
      %v3151 = vsub.s32 0, %v3150
      %v3152 = vrot.slane %v3147, %v3151
      %v3158 = vunpack.c.l.b16 %v3137
      %v3159 = vunpack.c.l.b16 %v3138
      %v3160 = vunpack.c.l.b16 %v3139
      %v3161 = vunpack.c.l.b16 %v3140
      %v3162 = vpack.c.b16 %v3159, %v3158
      %v3163 = vpack.c.b16 %v3161, %v3160
      %v3167 = vsel %vm809, %v3141, 0
      %v3170 = vsel %vm809, %v3142, 0
      %v3173 = vsel %vm809, %v3143, 0
      %v3176 = vsel %vm809, %v3144, 0
      %v3179 = vsel %vm809, %v3145, 0
      %v3182 = vsel %vm809, %v3146, 0
      %3184 = vmatprep.subr.bf16.mxu0 0
      %3185 = vmatpush1.bf16.msra.mxu0 %v3162
      %3186 = vmatprep.subr.bf16.mxu0 0
      %3187 = vmatpush1.bf16.msra.mxu0 %v3163
      %3188 = vmatprep.subr.bf16.mxu0 0
      %3189 = vmatpush1.bf16.msra.mxu0 0
      %3190 = vmatprep.subr.bf16.mxu0 0
      %3191 = vmatpush1.bf16.msra.mxu0 0
      %3192 = vmatprep.subr.bf16.mxu0 0
      %3193 = vmatpush1.bf16.msra.mxu0 0
      %3194 = vmatprep.subr.bf16.mxu0 0
      %3195 = vmatpush1.bf16.msra.mxu0 0
      %3196 = vmatprep.subr.bf16.mxu0 0
      %3197 = vmatpush1.bf16.msra.mxu0 0
      %3198 = vmatprep.subr.bf16.mxu0 0
      %3199 = vmatpush1.bf16.msra.mxu0 0
      %3200 = vmatprep.subr.bf16.mxu0 0
      %3201 = vmatpush1.bf16.msra.mxu0 0
      %3202 = vmatprep.subr.bf16.mxu0 0
      %3203 = vmatpush1.bf16.msra.mxu0 0
      %3204 = vmatprep.subr.bf16.mxu0 0
      %3205 = vmatpush1.bf16.msra.mxu0 0
      %3206 = vmatprep.subr.bf16.mxu0 0
      %3207 = vmatpush1.bf16.msra.mxu0 0
      %3208 = vmatprep.subr.bf16.mxu0 0
      %3209 = vmatpush1.bf16.msra.mxu0 0
      %3210 = vmatprep.subr.bf16.mxu0 0
      %3211 = vmatpush1.bf16.msra.mxu0 0
      %3212 = vmatprep.subr.bf16.mxu0 0
      %3213 = vmatpush1.bf16.msra.mxu0 0
      %3214 = vmatprep.subr.bf16.mxu0 0
      %3215 = vmatpush1.bf16.msra.mxu0 0
      %3216 = vmatprep.mubr.bf16.mxu0 0
      %3217 = vmatmul.mubr.bf16.gmra.mrb[0].mxu0 %v3167
      %v3218 = vpop.f32.mrb[0].mxu0
      %v3219 = vadd.f32 %v3152, %v3218
      %v3220 = vpop.f32.mrb[0].mxu0
      %v3221 = vpop.f32.mrb[0].mxu0
      %v3222 = vadd.f32 %v3152, %v3221
      %v3223 = vpop.f32.mrb[0].mxu0
      %3224 = vmatprep.mubr.bf16.mxu0 0
      %3225 = vmatmul.mubr.bf16.gmra.mrb[0].mxu0 %v3170
      %v3226 = vpop.f32.mrb[0].mxu0
      %v3227 = vadd.f32 %v3152, %v3226
      %v3228 = vpop.f32.mrb[0].mxu0
      %v3229 = vpop.f32.mrb[0].mxu0
      %v3230 = vadd.f32 %v3152, %v3229
      %v3231 = vpop.f32.mrb[0].mxu0
      %3232 = vmatprep.mubr.bf16.mxu0 0
      %3233 = vmatmul.mubr.bf16.gmra.mrb[0].mxu0 %v3173
      %v3234 = vpop.f32.mrb[0].mxu0
      %v3235 = vadd.f32 %v3152, %v3234
      %v3236 = vpop.f32.mrb[0].mxu0
      %v3237 = vpop.f32.mrb[0].mxu0
      %v3238 = vadd.f32 %v3152, %v3237
      %v3239 = vpop.f32.mrb[0].mxu0
      %3240 = vmatprep.mubr.bf16.mxu0 0
      %3241 = vmatmul.mubr.bf16.gmra.mrb[0].mxu0 %v3176
      %v3242 = vpop.f32.mrb[0].mxu0
      %v3243 = vadd.f32 %v3152, %v3242
      %v3244 = vpop.f32.mrb[0].mxu0
      %v3245 = vpop.f32.mrb[0].mxu0
      %v3246 = vadd.f32 %v3152, %v3245
      %v3247 = vpop.f32.mrb[0].mxu0
      %3248 = vmatprep.mubr.bf16.mxu0 0
      %3249 = vmatmul.mubr.bf16.gmra.mrb[0].mxu0 %v3179
      %v3250 = vpop.f32.mrb[0].mxu0
      %v3251 = vadd.f32 %v3152, %v3250
      %v3252 = vpop.f32.mrb[0].mxu0
      %v3253 = vpop.f32.mrb[0].mxu0
      %v3254 = vadd.f32 %v3152, %v3253
      %v3255 = vpop.f32.mrb[0].mxu0
      %3256 = vmatprep.mubr.bf16.mxu0 0
      %3257 = vmatmul.mubr.bf16.gmra.mrb[0].mxu0 %v3182
      %v3258 = vpop.f32.mrb[0].mxu0
      %v3259 = vadd.f32 %v3152, %v3258
      %v3260 = vpop.f32.mrb[0].mxu0
      %v3261 = vpop.f32.mrb[0].mxu0
      %v3262 = vadd.f32 %v3152, %v3261
      %v3263 = vpop.f32.mrb[0].mxu0
      %3264 = vdwg.mxu0
      %v3265 = vmul.f32 %v3219, %v3219
      %v3266 = vmul.f32 %v3222, %v3222
      %v3267 = vmul.f32 %v3227, %v3227
      %v3268 = vmul.f32 %v3230, %v3230
      %v3269 = vmul.f32 %v3235, %v3235
      %v3270 = vmul.f32 %v3238, %v3238
      %v3271 = vmul.f32 %v3243, %v3243
      %v3272 = vmul.f32 %v3246, %v3246
      %v3273 = vmul.f32 %v3251, %v3251
      %v3274 = vmul.f32 %v3254, %v3254
      %v3275 = vmul.f32 %v3259, %v3259
      %v3276 = vmul.f32 %v3262, %v3262
      %v3277 = vmul.f32 %v3219, %v3265
      %v3278 = vmul.f32 %v3222, %v3266
      %v3279 = vmul.f32 %v3227, %v3267
      %v3280 = vmul.f32 %v3230, %v3268
      %v3281 = vmul.f32 %v3235, %v3269
      %v3282 = vmul.f32 %v3238, %v3270
      %v3283 = vmul.f32 %v3243, %v3271
      %v3284 = vmul.f32 %v3246, %v3272
      %v3285 = vmul.f32 %v3251, %v3273
      %v3286 = vmul.f32 %v3254, %v3274
      %v3287 = vmul.f32 %v3259, %v3275
      %v3288 = vmul.f32 %v3262, %v3276
      %v3289 = vmul.f32 %v3277, 0.044715
      %v3290 = vmul.f32 %v3278, 0.044715
      %v3291 = vmul.f32 %v3279, 0.044715
      %v3292 = vmul.f32 %v3280, 0.044715
      %v3293 = vmul.f32 %v3281, 0.044715
      %v3294 = vmul.f32 %v3282, 0.044715
      %v3295 = vmul.f32 %v3283, 0.044715
      %v3296 = vmul.f32 %v3284, 0.044715
      %v3297 = vmul.f32 %v3285, 0.044715
      %v3298 = vmul.f32 %v3286, 0.044715
      %v3299 = vmul.f32 %v3287, 0.044715
      %v3300 = vmul.f32 %v3288, 0.044715
      %v3301 = vadd.f32 %v3219, %v3289
      %v3302 = vadd.f32 %v3222, %v3290
      %v3303 = vadd.f32 %v3227, %v3291
      %v3304 = vadd.f32 %v3230, %v3292
      %v3305 = vadd.f32 %v3235, %v3293
      %v3306 = vadd.f32 %v3238, %v3294
      %v3307 = vadd.f32 %v3243, %v3295
      %v3308 = vadd.f32 %v3246, %v3296
      %v3309 = vadd.f32 %v3251, %v3297
      %v3310 = vadd.f32 %v3254, %v3298
      %v3311 = vadd.f32 %v3259, %v3299
      %v3312 = vadd.f32 %v3262, %v3300
      %v3313 = vmul.f32 %v3301, 0.7978846
      %v3314 = vmul.f32 %v3302, 0.7978846
      %v3315 = vmul.f32 %v3303, 0.7978846
      %v3316 = vmul.f32 %v3304, 0.7978846
      %v3317 = vmul.f32 %v3305, 0.7978846
      %v3318 = vmul.f32 %v3306, 0.7978846
      %v3319 = vmul.f32 %v3307, 0.7978846
      %v3320 = vmul.f32 %v3308, 0.7978846
      %v3321 = vmul.f32 %v3309, 0.7978846
      %v3322 = vmul.f32 %v3310, 0.7978846
      %v3323 = vmul.f32 %v3311, 0.7978846
      %v3324 = vmul.f32 %v3312, 0.7978846
      %v3325 = vtanh.pop %v3313
      %v3326 = vtanh.pop %v3314
      %v3327 = vtanh.pop %v3315
      %v3328 = vtanh.pop %v3316
      %v3329 = vtanh.pop %v3317
      %v3330 = vtanh.pop %v3318
      %v3331 = vtanh.pop %v3319
      %v3332 = vtanh.pop %v3320
      %v3333 = vtanh.pop %v3321
      %v3334 = vtanh.pop %v3322
      %v3335 = vtanh.pop %v3323
      %v3336 = vtanh.pop %v3324
      %v3337 = vadd.f32 %v3325, 1.0
      %v3338 = vadd.f32 %v3326, 1.0
      %v3339 = vadd.f32 %v3327, 1.0
      %v3340 = vadd.f32 %v3328, 1.0
      %v3341 = vadd.f32 %v3329, 1.0
      %v3342 = vadd.f32 %v3330, 1.0
      %v3343 = vadd.f32 %v3331, 1.0
      %v3344 = vadd.f32 %v3332, 1.0
      %v3345 = vadd.f32 %v3333, 1.0
      %v3346 = vadd.f32 %v3334, 1.0
      %v3347 = vadd.f32 %v3335, 1.0
      %v3348 = vadd.f32 %v3336, 1.0
      %v3349 = vmul.f32 %v3337, 0.5
      %v3350 = vmul.f32 %v3338, 0.5
      %v3351 = vmul.f32 %v3339, 0.5
      %v3352 = vmul.f32 %v3340, 0.5
      %v3353 = vmul.f32 %v3341, 0.5
      %v3354 = vmul.f32 %v3342, 0.5
      %v3355 = vmul.f32 %v3343, 0.5
      %v3356 = vmul.f32 %v3344, 0.5
      %v3357 = vmul.f32 %v3345, 0.5
      %v3358 = vmul.f32 %v3346, 0.5
      %v3359 = vmul.f32 %v3347, 0.5
      %v3360 = vmul.f32 %v3348, 0.5
      %v3361 = vmul.f32 %v3219, %v3349
      %v3362 = vmul.f32 %v3222, %v3350
      %v3363 = vmul.f32 %v3227, %v3351
      %v3364 = vmul.f32 %v3230, %v3352
      %v3365 = vmul.f32 %v3235, %v3353
      %v3366 = vmul.f32 %v3238, %v3354
      %v3367 = vmul.f32 %v3243, %v3355
      %v3368 = vmul.f32 %v3246, %v3356
      %v3369 = vmul.f32 %v3251, %v3357
      %v3370 = vmul.f32 %v3254, %v3358
      %v3371 = vmul.f32 %v3259, %v3359
      %v3372 = vmul.f32 %v3262, %v3360
      %v3373 = vld [vmem:[%s19] sm:$0xf]
      %v3374 = vld [vmem:[%s19 + $0x4] sm:$0xf]
      %v3375 = vld [vmem:[%s19 + $0x8] sm:$0xf]
      %v3376 = vld [vmem:[%s19 + $0xc] sm:$0xf]
      %v3377 = vld [vmem:[%s19 + $0x10] sm:$0xf]
      %v3378 = vld [vmem:[%s19 + $0x14] sm:$0xf]
      %v3379 = vld [vmem:[%s19 + $0x18] sm:$0xf]
      %v3380 = vld [vmem:[%s19 + $0x1c] sm:$0xf]
      %v3381 = vpack.c.bf16 %v3362, %v3361
      %v3382 = vpack.c.bf16 %v3364, %v3363
      %v3383 = vpack.c.bf16 %v3366, %v3365
      %v3384 = vpack.c.bf16 %v3368, %v3367
      %v3385 = vpack.c.bf16 %v3370, %v3369
      %v3386 = vpack.c.bf16 %v3372, %v3371
      %v3387 = vld [vmem:[%s20] sm:$0x1]
      %v3389 = vlaneseq
      %v3390 = vshrl.u32 %v3389, 7
      %v3391 = vsub.s32 0, %v3390
      %v3392 = vrot.slane %v3387, %v3391
      %v3402 = vunpack.c.l.b16 %v3373
      %v3403 = vunpack.c.l.b16 %v3374
      %v3404 = vunpack.c.l.b16 %v3375
      %v3405 = vunpack.c.l.b16 %v3376
      %v3406 = vunpack.c.l.b16 %v3377
      %v3407 = vunpack.c.l.b16 %v3378
      %v3408 = vunpack.c.l.b16 %v3379
      %v3409 = vunpack.c.l.b16 %v3380
      %v3410 = vpack.c.b16 %v3403, %v3402
      %v3411 = vpack.c.b16 %v3405, %v3404
      %v3412 = vpack.c.b16 %v3407, %v3406
      %v3413 = vpack.c.b16 %v3409, %v3408
      %vm3418 = vcmask 523264
      %v3420 = vsel %vm3418, %v3381, 0
      %v3423 = vsel %vm3418, %v3382, 0
      %v3426 = vsel %vm3418, %v3383, 0
      %v3429 = vsel %vm3418, %v3384, 0
      %v3432 = vsel %vm3418, %v3385, 0
      %v3435 = vsel %vm3418, %v3386, 0
      %3437 = vmatprep.subr.bf16.mxu0 0
      %3438 = vmatpush1.bf16.msra.mxu0 %v3410
      %3439 = vmatprep.subr.bf16.mxu0 0
      %3440 = vmatpush1.bf16.msra.mxu0 %v3411
      %3441 = vmatprep.subr.bf16.mxu0 0
      %3442 = vmatpush1.bf16.msra.mxu0 %v3412
      %3443 = vmatprep.subr.bf16.mxu0 0
      %3444 = vmatpush1.bf16.msra.mxu0 %v3413
      %3445 = vmatprep.subr.bf16.mxu0 0
      %3446 = vmatpush1.bf16.msra.mxu0 0
      %3447 = vmatprep.subr.bf16.mxu0 0
      %3448 = vmatpush1.bf16.msra.mxu0 0
      %3449 = vmatprep.subr.bf16.mxu0 0
      %3450 = vmatpush1.bf16.msra.mxu0 0
      %3451 = vmatprep.subr.bf16.mxu0 0
      %3452 = vmatpush1.bf16.msra.mxu0 0
      %3453 = vmatprep.subr.bf16.mxu0 0
      %3454 = vmatpush1.bf16.msra.mxu0 0
      %3455 = vmatprep.subr.bf16.mxu0 0
      %3456 = vmatpush1.bf16.msra.mxu0 0
      %3457 = vmatprep.subr.bf16.mxu0 0
      %3458 = vmatpush1.bf16.msra.mxu0 0
      %3459 = vmatprep.subr.bf16.mxu0 0
      %3460 = vmatpush1.bf16.msra.mxu0 0
      %3461 = vmatprep.subr.bf16.mxu0 0
      %3462 = vmatpush1.bf16.msra.mxu0 0
      %3463 = vmatprep.subr.bf16.mxu0 0
      %3464 = vmatpush1.bf16.msra.mxu0 0
      %3465 = vmatprep.subr.bf16.mxu0 0
      %3466 = vmatpush1.bf16.msra.mxu0 0
      %3467 = vmatprep.subr.bf16.mxu0 0
      %3468 = vmatpush1.bf16.msra.mxu0 0
      %3469 = vmatprep.mubr.bf16.mxu0 0
      %3470 = vmatmul.mubr.bf16.gmra.mrb[0].mxu0 %v3420
      %v3471 = vpop.f32.mrb[0].mxu0
      %v3472 = vadd.f32 %v3392, %v3471
      %v3473 = vpop.f32.mrb[0].mxu0
      %v3474 = vpop.f32.mrb[0].mxu0
      %v3475 = vadd.f32 %v3392, %v3474
      %v3476 = vpop.f32.mrb[0].mxu0
      %3477 = vmatprep.mubr.bf16.mxu0 0
      %3478 = vmatmul.mubr.bf16.gmra.mrb[0].mxu0 %v3423
      %v3479 = vpop.f32.mrb[0].mxu0
      %v3480 = vadd.f32 %v3392, %v3479
      %v3481 = vpop.f32.mrb[0].mxu0
      %v3482 = vpop.f32.mrb[0].mxu0
      %v3483 = vadd.f32 %v3392, %v3482
      %v3484 = vpop.f32.mrb[0].mxu0
      %3485 = vmatprep.mubr.bf16.mxu0 0
      %3486 = vmatmul.mubr.bf16.gmra.mrb[0].mxu0 %v3426
      %v3487 = vpop.f32.mrb[0].mxu0
      %v3488 = vadd.f32 %v3392, %v3487
      %v3489 = vpop.f32.mrb[0].mxu0
      %v3490 = vpop.f32.mrb[0].mxu0
      %v3491 = vadd.f32 %v3392, %v3490
      %v3492 = vpop.f32.mrb[0].mxu0
      %3493 = vmatprep.mubr.bf16.mxu0 0
      %3494 = vmatmul.mubr.bf16.gmra.mrb[0].mxu0 %v3429
      %v3495 = vpop.f32.mrb[0].mxu0
      %v3496 = vadd.f32 %v3392, %v3495
      %v3497 = vpop.f32.mrb[0].mxu0
      %v3498 = vpop.f32.mrb[0].mxu0
      %v3499 = vadd.f32 %v3392, %v3498
      %v3500 = vpop.f32.mrb[0].mxu0
      %3501 = vmatprep.mubr.bf16.mxu0 0
      %3502 = vmatmul.mubr.bf16.gmra.mrb[0].mxu0 %v3432
      %v3503 = vpop.f32.mrb[0].mxu0
      %v3504 = vadd.f32 %v3392, %v3503
      %v3505 = vpop.f32.mrb[0].mxu0
      %v3506 = vpop.f32.mrb[0].mxu0
      %v3507 = vadd.f32 %v3392, %v3506
      %v3508 = vpop.f32.mrb[0].mxu0
      %3509 = vmatprep.mubr.bf16.mxu0 0
      %3510 = vmatmul.mubr.bf16.gmra.mrb[0].mxu0 %v3435
      %v3511 = vpop.f32.mrb[0].mxu0
      %v3512 = vadd.f32 %v3392, %v3511
      %v3513 = vpop.f32.mrb[0].mxu0
      %v3514 = vpop.f32.mrb[0].mxu0
      %v3515 = vadd.f32 %v3392, %v3514
      %v3516 = vpop.f32.mrb[0].mxu0
      %3517 = vdwg.mxu0
      %v3518 = vadd.f32 %v2931, %v3472
      %v3519 = vadd.f32 %v2932, %v3475
      %v3520 = vadd.f32 %v2933, %v3480
      %v3521 = vadd.f32 %v2934, %v3483
      %v3522 = vadd.f32 %v2935, %v3488
      %v3523 = vadd.f32 %v2936, %v3491
      %v3524 = vadd.f32 %v2937, %v3496
      %v3525 = vadd.f32 %v2938, %v3499
      %v3526 = vadd.f32 %v2939, %v3504
      %v3527 = vadd.f32 %v2940, %v3507
      %v3528 = vadd.f32 %v2941, %v3512
      %v3529 = vadd.f32 %v2942, %v3515
      %s3530 = scalar_lea.vmem %s5, 1
      %v3531 = vld [vmem:[%s3530] sm:$0x1]
      %s3532 = scalar_lea.vmem %s6, 1
      %v3533 = vld [vmem:[%s3532] sm:$0x1]
      %v3534 = vsel %vm809, %v3518, 0.0
      %3535 = vadd.xlane.f32.xlu0 %v3534
      %v3536 = vpop.xlane.xlu0 %3535
      %v3537 = vsel %vm809, %v3519, 0.0
      %3538 = vadd.xlane.f32.xlu0 %v3537
      %v3539 = vpop.xlane.xlu0 %3538
      %v3540 = vsel %vm809, %v3520, 0.0
      %3541 = vadd.xlane.f32.xlu0 %v3540
      %v3542 = vpop.xlane.xlu0 %3541
      %v3543 = vsel %vm809, %v3521, 0.0
      %3544 = vadd.xlane.f32.xlu0 %v3543
      %v3545 = vpop.xlane.xlu0 %3544
      %v3546 = vsel %vm809, %v3522, 0.0
      %3547 = vadd.xlane.f32.xlu0 %v3546
      %v3548 = vpop.xlane.xlu0 %3547
      %v3549 = vsel %vm809, %v3523, 0.0
      %3550 = vadd.xlane.f32.xlu0 %v3549
      %v3551 = vpop.xlane.xlu0 %3550
      %v3552 = vsel %vm809, %v3524, 0.0
      %3553 = vadd.xlane.f32.xlu0 %v3552
      %v3554 = vpop.xlane.xlu0 %3553
      %v3555 = vsel %vm809, %v3525, 0.0
      %3556 = vadd.xlane.f32.xlu0 %v3555
      %v3557 = vpop.xlane.xlu0 %3556
      %v3558 = vsel %vm809, %v3526, 0.0
      %3559 = vadd.xlane.f32.xlu0 %v3558
      %v3560 = vpop.xlane.xlu0 %3559
      %v3561 = vsel %vm809, %v3527, 0.0
      %3562 = vadd.xlane.f32.xlu0 %v3561
      %v3563 = vpop.xlane.xlu0 %3562
      %v3564 = vsel %vm809, %v3528, 0.0
      %3565 = vadd.xlane.f32.xlu0 %v3564
      %v3566 = vpop.xlane.xlu0 %3565
      %v3567 = vsel %vm809, %v3529, 0.0
      %3568 = vadd.xlane.f32.xlu0 %v3567
      %v3569 = vpop.xlane.xlu0 %3568
      %v3570 = vmul.f32 %v3536, %v846
      %v3571 = vmul.f32 %v3539, %v846
      %v3572 = vmul.f32 %v3542, %v846
      %v3573 = vmul.f32 %v3545, %v846
      %v3574 = vmul.f32 %v3548, %v846
      %v3575 = vmul.f32 %v3551, %v846
      %v3576 = vmul.f32 %v3554, %v846
      %v3577 = vmul.f32 %v3557, %v846
      %v3578 = vmul.f32 %v3560, %v846
      %v3579 = vmul.f32 %v3563, %v846
      %v3580 = vmul.f32 %v3566, %v846
      %v3581 = vmul.f32 %v3569, %v846
      %v3582 = vsub.f32 %v3518, %v3570
      %v3583 = vsub.f32 %v3519, %v3571
      %v3584 = vsub.f32 %v3520, %v3572
      %v3585 = vsub.f32 %v3521, %v3573
      %v3586 = vsub.f32 %v3522, %v3574
      %v3587 = vsub.f32 %v3523, %v3575
      %v3588 = vsub.f32 %v3524, %v3576
      %v3589 = vsub.f32 %v3525, %v3577
      %v3590 = vsub.f32 %v3526, %v3578
      %v3591 = vsub.f32 %v3527, %v3579
      %v3592 = vsub.f32 %v3528, %v3580
      %v3593 = vsub.f32 %v3529, %v3581
      %v3594 = vmul.f32 %v3582, %v3582
      %v3595 = vmul.f32 %v3583, %v3583
      %v3596 = vmul.f32 %v3584, %v3584
      %v3597 = vmul.f32 %v3585, %v3585
      %v3598 = vmul.f32 %v3586, %v3586
      %v3599 = vmul.f32 %v3587, %v3587
      %v3600 = vmul.f32 %v3588, %v3588
      %v3601 = vmul.f32 %v3589, %v3589
      %v3602 = vmul.f32 %v3590, %v3590
      %v3603 = vmul.f32 %v3591, %v3591
      %v3604 = vmul.f32 %v3592, %v3592
      %v3605 = vmul.f32 %v3593, %v3593
      %v3606 = vsel %vm809, %v3594, 0.0
      %3607 = vadd.xlane.f32.xlu0 %v3606
      %v3608 = vpop.xlane.xlu0 %3607
      %v3609 = vsel %vm809, %v3595, 0.0
      %3610 = vadd.xlane.f32.xlu0 %v3609
      %v3611 = vpop.xlane.xlu0 %3610
      %v3612 = vsel %vm809, %v3596, 0.0
      %3613 = vadd.xlane.f32.xlu0 %v3612
      %v3614 = vpop.xlane.xlu0 %3613
      %v3615 = vsel %vm809, %v3597, 0.0
      %3616 = vadd.xlane.f32.xlu0 %v3615
      %v3617 = vpop.xlane.xlu0 %3616
      %v3618 = vsel %vm809, %v3598, 0.0
      %3619 = vadd.xlane.f32.xlu0 %v3618
      %v3620 = vpop.xlane.xlu0 %3619
      %v3621 = vsel %vm809, %v3599, 0.0
      %3622 = vadd.xlane.f32.xlu0 %v3621
      %v3623 = vpop.xlane.xlu0 %3622
      %v3624 = vsel %vm809, %v3600, 0.0
      %3625 = vadd.xlane.f32.xlu0 %v3624
      %v3626 = vpop.xlane.xlu0 %3625
      %v3627 = vsel %vm809, %v3601, 0.0
      %3628 = vadd.xlane.f32.xlu0 %v3627
      %v3629 = vpop.xlane.xlu0 %3628
      %v3630 = vsel %vm809, %v3602, 0.0
      %3631 = vadd.xlane.f32.xlu0 %v3630
      %v3632 = vpop.xlane.xlu0 %3631
      %v3633 = vsel %vm809, %v3603, 0.0
      %3634 = vadd.xlane.f32.xlu0 %v3633
      %v3635 = vpop.xlane.xlu0 %3634
      %v3636 = vsel %vm809, %v3604, 0.0
      %3637 = vadd.xlane.f32.xlu0 %v3636
      %v3638 = vpop.xlane.xlu0 %3637
      %v3639 = vsel %vm809, %v3605, 0.0
      %3640 = vadd.xlane.f32.xlu0 %v3639
      %v3641 = vpop.xlane.xlu0 %3640
      %v3642 = vmul.f32 %v3608, %v846
      %v3643 = vmul.f32 %v3611, %v846
      %v3644 = vmul.f32 %v3614, %v846
      %v3645 = vmul.f32 %v3617, %v846
      %v3646 = vmul.f32 %v3620, %v846
      %v3647 = vmul.f32 %v3623, %v846
      %v3648 = vmul.f32 %v3626, %v846
      %v3649 = vmul.f32 %v3629, %v846
      %v3650 = vmul.f32 %v3632, %v846
      %v3651 = vmul.f32 %v3635, %v846
      %v3652 = vmul.f32 %v3638, %v846
      %v3653 = vmul.f32 %v3641, %v846
      %v3654 = vadd.f32 %v3642, 1e-05
      %v3655 = vadd.f32 %v3643, 1e-05
      %v3656 = vadd.f32 %v3644, 1e-05
      %v3657 = vadd.f32 %v3645, 1e-05
      %v3658 = vadd.f32 %v3646, 1e-05
      %v3659 = vadd.f32 %v3647, 1e-05
      %v3660 = vadd.f32 %v3648, 1e-05
      %v3661 = vadd.f32 %v3649, 1e-05
      %v3662 = vadd.f32 %v3650, 1e-05
      %v3663 = vadd.f32 %v3651, 1e-05
      %v3664 = vadd.f32 %v3652, 1e-05
      %v3665 = vadd.f32 %v3653, 1e-05
      %v3666 = vrsqrt.pop %v3654
      %v3667 = vrsqrt.pop %v3655
      %v3668 = vrsqrt.pop %v3656
      %v3669 = vrsqrt.pop %v3657
      %v3670 = vrsqrt.pop %v3658
      %v3671 = vrsqrt.pop %v3659
      %v3672 = vrsqrt.pop %v3660
      %v3673 = vrsqrt.pop %v3661
      %v3674 = vrsqrt.pop %v3662
      %v3675 = vrsqrt.pop %v3663
      %v3676 = vrsqrt.pop %v3664
      %v3677 = vrsqrt.pop %v3665
      %v3678 = vmul.f32 %v3582, %v3666
      %v3679 = vmul.f32 %v3583, %v3667
      %v3680 = vmul.f32 %v3584, %v3668
      %v3681 = vmul.f32 %v3585, %v3669
      %v3682 = vmul.f32 %v3586, %v3670
      %v3683 = vmul.f32 %v3587, %v3671
      %v3684 = vmul.f32 %v3588, %v3672
      %v3685 = vmul.f32 %v3589, %v3673
      %v3686 = vmul.f32 %v3590, %v3674
      %v3687 = vmul.f32 %v3591, %v3675
      %v3688 = vmul.f32 %v3592, %v3676
      %v3689 = vmul.f32 %v3593, %v3677
      %v3691 = vlaneseq
      %v3692 = vshrl.u32 %v3691, 7
      %v3693 = vsub.s32 0, %v3692
      %v3694 = vrot.slane %v3531, %v3693
      %v3696 = vmul.f32 %v3678, %v3694
      %v3697 = vmul.f32 %v3679, %v3694
      %v3698 = vmul.f32 %v3680, %v3694
      %v3699 = vmul.f32 %v3681, %v3694
      %v3700 = vmul.f32 %v3682, %v3694
      %v3701 = vmul.f32 %v3683, %v3694
      %v3702 = vmul.f32 %v3684, %v3694
      %v3703 = vmul.f32 %v3685, %v3694
      %v3704 = vmul.f32 %v3686, %v3694
      %v3705 = vmul.f32 %v3687, %v3694
      %v3706 = vmul.f32 %v3688, %v3694
      %v3707 = vmul.f32 %v3689, %v3694
      %v3709 = vlaneseq
      %v3710 = vshrl.u32 %v3709, 7
      %v3711 = vsub.s32 0, %v3710
      %v3712 = vrot.slane %v3533, %v3711
      %v3714 = vadd.f32 %v3696, %v3712
      %v3715 = vadd.f32 %v3697, %v3712
      %v3716 = vadd.f32 %v3698, %v3712
      %v3717 = vadd.f32 %v3699, %v3712
      %v3718 = vadd.f32 %v3700, %v3712
      %v3719 = vadd.f32 %v3701, %v3712
      %v3720 = vadd.f32 %v3702, %v3712
      %v3721 = vadd.f32 %v3703, %v3712
      %v3722 = vadd.f32 %v3704, %v3712
      %v3723 = vadd.f32 %v3705, %v3712
      %v3724 = vadd.f32 %v3706, %v3712
      %v3725 = vadd.f32 %v3707, %v3712
      %s3726 = scalar_lea.vmem %s7, 32
      %v3727 = vld [vmem:[%s3726] sm:$0xf]
      %v3728 = vld [vmem:[%s3726 + $0x4] sm:$0xf]
      %v3729 = vld [vmem:[%s3726 + $0x8] sm:$0xf]
      %v3730 = vld [vmem:[%s3726 + $0xc] sm:$0xf]
      %v3731 = vpack.c.bf16 %v3715, %v3714
      %v3732 = vpack.c.bf16 %v3717, %v3716
      %v3733 = vpack.c.bf16 %v3719, %v3718
      %v3734 = vpack.c.bf16 %v3721, %v3720
      %v3735 = vpack.c.bf16 %v3723, %v3722
      %v3736 = vpack.c.bf16 %v3725, %v3724
      %s3737 = scalar_lea.vmem %s8, 2
      %v3738 = vld [vmem:[%s3737] sm:$0x1]
      %v3740 = vlaneseq
      %v3741 = vshrl.u32 %v3740, 7
      %v3742 = vsub.s32 0, %v3741
      %v3743 = vrot.slane %v3738, %v3742
      %v3749 = vunpack.c.l.b16 %v3727
      %v3750 = vunpack.c.l.b16 %v3728
      %v3751 = vunpack.c.l.b16 %v3729
      %v3752 = vunpack.c.l.b16 %v3730
      %v3753 = vpack.c.b16 %v3750, %v3749
      %v3754 = vpack.c.b16 %v3752, %v3751
      %v3758 = vsel %vm809, %v3731, 0
      %v3761 = vsel %vm809, %v3732, 0
      %v3764 = vsel %vm809, %v3733, 0
      %v3767 = vsel %vm809, %v3734, 0
      %v3770 = vsel %vm809, %v3735, 0
      %v3773 = vsel %vm809, %v3736, 0
      %3775 = vmatprep.subr.bf16.mxu0 0
      %3776 = vmatpush1.bf16.msra.mxu0 %v3753
      %3777 = vmatprep.subr.bf16.mxu0 0
      %3778 = vmatpush1.bf16.msra.mxu0 %v3754
      %3779 = vmatprep.subr.bf16.mxu0 0
      %3780 = vmatpush1.bf16.msra.mxu0 0
      %3781 = vmatprep.subr.bf16.mxu0 0
      %3782 = vmatpush1.bf16.msra.mxu0 0
      %3783 = vmatprep.subr.bf16.mxu0 0
      %3784 = vmatpush1.bf16.msra.mxu0 0
      %3785 = vmatprep.subr.bf16.mxu0 0
      %3786 = vmatpush1.bf16.msra.mxu0 0
      %3787 = vmatprep.subr.bf16.mxu0 0
      %3788 = vmatpush1.bf16.msra.mxu0 0
      %3789 = vmatprep.subr.bf16.mxu0 0
      %3790 = vmatpush1.bf16.msra.mxu0 0
      %3791 = vmatprep.subr.bf16.mxu0 0
      %3792 = vmatpush1.bf16.msra.mxu0 0
      %3793 = vmatprep.subr.bf16.mxu0 0
      %3794 = vmatpush1.bf16.msra.mxu0 0
      %3795 = vmatprep.subr.bf16.mxu0 0
      %3796 = vmatpush1.bf16.msra.mxu0 0
      %3797 = vmatprep.subr.bf16.mxu0 0
      %3798 = vmatpush1.bf16.msra.mxu0 0
      %3799 = vmatprep.subr.bf16.mxu0 0
      %3800 = vmatpush1.bf16.msra.mxu0 0
      %3801 = vmatprep.subr.bf16.mxu0 0
      %3802 = vmatpush1.bf16.msra.mxu0 0
      %3803 = vmatprep.subr.bf16.mxu0 0
      %3804 = vmatpush1.bf16.msra.mxu0 0
      %3805 = vmatprep.subr.bf16.mxu0 0
      %3806 = vmatpush1.bf16.msra.mxu0 0
      %3807 = vmatprep.mubr.bf16.mxu0 0
      %3808 = vmatmul.mubr.bf16.gmra.mrb[0].mxu0 %v3758
      %v3809 = vpop.f32.mrb[0].mxu0
      %v3810 = vadd.f32 %v3743, %v3809
      %v3811 = vpop.f32.mrb[0].mxu0
      %v3812 = vpop.f32.mrb[0].mxu0
      %v3813 = vadd.f32 %v3743, %v3812
      %v3814 = vpop.f32.mrb[0].mxu0
      %3815 = vmatprep.mubr.bf16.mxu0 0
      %3816 = vmatmul.mubr.bf16.gmra.mrb[0].mxu0 %v3761
      %v3817 = vpop.f32.mrb[0].mxu0
      %v3818 = vadd.f32 %v3743, %v3817
      %v3819 = vpop.f32.mrb[0].mxu0
      %v3820 = vpop.f32.mrb[0].mxu0
      %v3821 = vadd.f32 %v3743, %v3820
      %v3822 = vpop.f32.mrb[0].mxu0
      %3823 = vmatprep.mubr.bf16.mxu0 0
      %3824 = vmatmul.mubr.bf16.gmra.mrb[0].mxu0 %v3764
      %v3825 = vpop.f32.mrb[0].mxu0
      %v3826 = vadd.f32 %v3743, %v3825
      %v3827 = vpop.f32.mrb[0].mxu0
      %v3828 = vpop.f32.mrb[0].mxu0
      %v3829 = vadd.f32 %v3743, %v3828
      %v3830 = vpop.f32.mrb[0].mxu0
      %3831 = vmatprep.mubr.bf16.mxu0 0
      %3832 = vmatmul.mubr.bf16.gmra.mrb[0].mxu0 %v3767
      %v3833 = vpop.f32.mrb[0].mxu0
      %v3834 = vadd.f32 %v3743, %v3833
      %v3835 = vpop.f32.mrb[0].mxu0
      %v3836 = vpop.f32.mrb[0].mxu0
      %v3837 = vadd.f32 %v3743, %v3836
      %v3838 = vpop.f32.mrb[0].mxu0
      %3839 = vmatprep.mubr.bf16.mxu0 0
      %3840 = vmatmul.mubr.bf16.gmra.mrb[0].mxu0 %v3770
      %v3841 = vpop.f32.mrb[0].mxu0
      %v3842 = vadd.f32 %v3743, %v3841
      %v3843 = vpop.f32.mrb[0].mxu0
      %v3844 = vpop.f32.mrb[0].mxu0
      %v3845 = vadd.f32 %v3743, %v3844
      %v3846 = vpop.f32.mrb[0].mxu0
      %3847 = vmatprep.mubr.bf16.mxu0 0
      %3848 = vmatmul.mubr.bf16.gmra.mrb[0].mxu0 %v3773
      %v3849 = vpop.f32.mrb[0].mxu0
      %v3850 = vadd.f32 %v3743, %v3849
      %v3851 = vpop.f32.mrb[0].mxu0
      %v3852 = vpop.f32.mrb[0].mxu0
      %v3853 = vadd.f32 %v3743, %v3852
      %v3854 = vpop.f32.mrb[0].mxu0
      %3855 = vdwg.mxu0
      %s3856 = scalar_lea.vmem %s9, 32
      %v3857 = vld [vmem:[%s3856] sm:$0xf]
      %v3858 = vld [vmem:[%s3856 + $0x4] sm:$0xf]
      %v3859 = vld [vmem:[%s3856 + $0x8] sm:$0xf]
      %v3860 = vld [vmem:[%s3856 + $0xc] sm:$0xf]
      %s3861 = scalar_lea.vmem %s10, 2
      %v3862 = vld [vmem:[%s3861] sm:$0x1]
      %v3864 = vlaneseq
      %v3865 = vshrl.u32 %v3864, 7
      %v3866 = vsub.s32 0, %v3865
      %v3867 = vrot.slane %v3862, %v3866
      %v3873 = vunpack.c.l.b16 %v3857
      %v3874 = vunpack.c.l.b16 %v3858
      %v3875 = vunpack.c.l.b16 %v3859
      %v3876 = vunpack.c.l.b16 %v3860
      %v3877 = vpack.c.b16 %v3874, %v3873
      %v3878 = vpack.c.b16 %v3876, %v3875
      %3881 = vmatprep.subr.bf16.mxu0 0
      %3882 = vmatpush1.bf16.msra.mxu0 %v3877
      %3883 = vmatprep.subr.bf16.mxu0 0
      %3884 = vmatpush1.bf16.msra.mxu0 %v3878
      %3885 = vmatprep.subr.bf16.mxu0 0
      %3886 = vmatpush1.bf16.msra.mxu0 0
      %3887 = vmatprep.subr.bf16.mxu0 0
      %3888 = vmatpush1.bf16.msra.mxu0 0
      %3889 = vmatprep.subr.bf16.mxu0 0
      %3890 = vmatpush1.bf16.msra.mxu0 0
      %3891 = vmatprep.subr.bf16.mxu0 0
      %3892 = vmatpush1.bf16.msra.mxu0 0
      %3893 = vmatprep.subr.bf16.mxu0 0
      %3894 = vmatpush1.bf16.msra.mxu0 0
      %3895 = vmatprep.subr.bf16.mxu0 0
      %3896 = vmatpush1.bf16.msra.mxu0 0
      %3897 = vmatprep.subr.bf16.mxu0 0
      %3898 = vmatpush1.bf16.msra.mxu0 0
      %3899 = vmatprep.subr.bf16.mxu0 0
      %3900 = vmatpush1.bf16.msra.mxu0 0
      %3901 = vmatprep.subr.bf16.mxu0 0
      %3902 = vmatpush1.bf16.msra.mxu0 0
      %3903 = vmatprep.subr.bf16.mxu0 0
      %3904 = vmatpush1.bf16.msra.mxu0 0
      %3905 = vmatprep.subr.bf16.mxu0 0
      %3906 = vmatpush1.bf16.msra.mxu0 0
      %3907 = vmatprep.subr.bf16.mxu0 0
      %3908 = vmatpush1.bf16.msra.mxu0 0
      %3909 = vmatprep.subr.bf16.mxu0 0
      %3910 = vmatpush1.bf16.msra.mxu0 0
      %3911 = vmatprep.subr.bf16.mxu0 0
      %3912 = vmatpush1.bf16.msra.mxu0 0
      %3913 = vmatprep.mubr.bf16.mxu0 0
      %3914 = vmatmul.mubr.bf16.gmra.mrb[0].mxu0 %v3758
      %v3915 = vpop.f32.mrb[0].mxu0
      %v3916 = vadd.f32 %v3867, %v3915
      %v3917 = vpop.f32.mrb[0].mxu0
      %v3918 = vpop.f32.mrb[0].mxu0
      %v3919 = vadd.f32 %v3867, %v3918
      %v3920 = vpop.f32.mrb[0].mxu0
      %3921 = vmatprep.mubr.bf16.mxu0 0
      %3922 = vmatmul.mubr.bf16.gmra.mrb[0].mxu0 %v3761
      %v3923 = vpop.f32.mrb[0].mxu0
      %v3924 = vadd.f32 %v3867, %v3923
      %v3925 = vpop.f32.mrb[0].mxu0
      %v3926 = vpop.f32.mrb[0].mxu0
      %v3927 = vadd.f32 %v3867, %v3926
      %v3928 = vpop.f32.mrb[0].mxu0
      %3929 = vmatprep.mubr.bf16.mxu0 0
      %3930 = vmatmul.mubr.bf16.gmra.mrb[0].mxu0 %v3764
      %v3931 = vpop.f32.mrb[0].mxu0
      %v3932 = vadd.f32 %v3867, %v3931
      %v3933 = vpop.f32.mrb[0].mxu0
      %v3934 = vpop.f32.mrb[0].mxu0
      %v3935 = vadd.f32 %v3867, %v3934
      %v3936 = vpop.f32.mrb[0].mxu0
      %3937 = vmatprep.mubr.bf16.mxu0 0
      %3938 = vmatmul.mubr.bf16.gmra.mrb[0].mxu0 %v3767
      %v3939 = vpop.f32.mrb[0].mxu0
      %v3940 = vadd.f32 %v3867, %v3939
      %v3941 = vpop.f32.mrb[0].mxu0
      %v3942 = vpop.f32.mrb[0].mxu0
      %v3943 = vadd.f32 %v3867, %v3942
      %v3944 = vpop.f32.mrb[0].mxu0
      %3945 = vmatprep.mubr.bf16.mxu0 0
      %3946 = vmatmul.mubr.bf16.gmra.mrb[0].mxu0 %v3770
      %v3947 = vpop.f32.mrb[0].mxu0
      %v3948 = vadd.f32 %v3867, %v3947
      %v3949 = vpop.f32.mrb[0].mxu0
      %v3950 = vpop.f32.mrb[0].mxu0
      %v3951 = vadd.f32 %v3867, %v3950
      %v3952 = vpop.f32.mrb[0].mxu0
      %3953 = vmatprep.mubr.bf16.mxu0 0
      %3954 = vmatmul.mubr.bf16.gmra.mrb[0].mxu0 %v3773
      %v3955 = vpop.f32.mrb[0].mxu0
      %v3956 = vadd.f32 %v3867, %v3955
      %v3957 = vpop.f32.mrb[0].mxu0
      %v3958 = vpop.f32.mrb[0].mxu0
      %v3959 = vadd.f32 %v3867, %v3958
      %v3960 = vpop.f32.mrb[0].mxu0
      %3961 = vdwg.mxu0
      %s3962 = scalar_lea.vmem %s11, 32
      %v3963 = vld [vmem:[%s3962] sm:$0xf]
      %v3964 = vld [vmem:[%s3962 + $0x4] sm:$0xf]
      %v3965 = vld [vmem:[%s3962 + $0x8] sm:$0xf]
      %v3966 = vld [vmem:[%s3962 + $0xc] sm:$0xf]
      %s3967 = scalar_lea.vmem %s12, 2
      %v3968 = vld [vmem:[%s3967] sm:$0x1]
      %v3970 = vlaneseq
      %v3971 = vshrl.u32 %v3970, 7
      %v3972 = vsub.s32 0, %v3971
      %v3973 = vrot.slane %v3968, %v3972
      %v3979 = vunpack.c.l.b16 %v3963
      %v3980 = vunpack.c.l.b16 %v3964
      %v3981 = vunpack.c.l.b16 %v3965
      %v3982 = vunpack.c.l.b16 %v3966
      %v3983 = vpack.c.b16 %v3980, %v3979
      %v3984 = vpack.c.b16 %v3982, %v3981
      %3987 = vmatprep.subr.bf16.mxu0 0
      %3988 = vmatpush1.bf16.msra.mxu0 %v3983
      %3989 = vmatprep.subr.bf16.mxu0 0
      %3990 = vmatpush1.bf16.msra.mxu0 %v3984
      %3991 = vmatprep.subr.bf16.mxu0 0
      %3992 = vmatpush1.bf16.msra.mxu0 0
      %3993 = vmatprep.subr.bf16.mxu0 0
      %3994 = vmatpush1.bf16.msra.mxu0 0
      %3995 = vmatprep.subr.bf16.mxu0 0
      %3996 = vmatpush1.bf16.msra.mxu0 0
      %3997 = vmatprep.subr.bf16.mxu0 0
      %3998 = vmatpush1.bf16.msra.mxu0 0
      %3999 = vmatprep.subr.bf16.mxu0 0
      %4000 = vmatpush1.bf16.msra.mxu0 0
      %4001 = vmatprep.subr.bf16.mxu0 0
      %4002 = vmatpush1.bf16.msra.mxu0 0
      %4003 = vmatprep.subr.bf16.mxu0 0
      %4004 = vmatpush1.bf16.msra.mxu0 0
      %4005 = vmatprep.subr.bf16.mxu0 0
      %4006 = vmatpush1.bf16.msra.mxu0 0
      %4007 = vmatprep.subr.bf16.mxu0 0
      %4008 = vmatpush1.bf16.msra.mxu0 0
      %4009 = vmatprep.subr.bf16.mxu0 0
      %4010 = vmatpush1.bf16.msra.mxu0 0
      %4011 = vmatprep.subr.bf16.mxu0 0
      %4012 = vmatpush1.bf16.msra.mxu0 0
      %4013 = vmatprep.subr.bf16.mxu0 0
      %4014 = vmatpush1.bf16.msra.mxu0 0
      %4015 = vmatprep.subr.bf16.mxu0 0
      %4016 = vmatpush1.bf16.msra.mxu0 0
      %4017 = vmatprep.subr.bf16.mxu0 0
      %4018 = vmatpush1.bf16.msra.mxu0 0
      %4019 = vmatprep.mubr.bf16.mxu0 0
      %4020 = vmatmul.mubr.bf16.gmra.mrb[0].mxu0 %v3758
      %v4021 = vpop.f32.mrb[0].mxu0
      %v4022 = vadd.f32 %v3973, %v4021
      %v4023 = vpop.f32.mrb[0].mxu0
      %v4024 = vpop.f32.mrb[0].mxu0
      %v4025 = vadd.f32 %v3973, %v4024
      %v4026 = vpop.f32.mrb[0].mxu0
      %4027 = vmatprep.mubr.bf16.mxu0 0
      %4028 = vmatmul.mubr.bf16.gmra.mrb[0].mxu0 %v3761
      %v4029 = vpop.f32.mrb[0].mxu0
      %v4030 = vadd.f32 %v3973, %v4029
      %v4031 = vpop.f32.mrb[0].mxu0
      %v4032 = vpop.f32.mrb[0].mxu0
      %v4033 = vadd.f32 %v3973, %v4032
      %v4034 = vpop.f32.mrb[0].mxu0
      %4035 = vmatprep.mubr.bf16.mxu0 0
      %4036 = vmatmul.mubr.bf16.gmra.mrb[0].mxu0 %v3764
      %v4037 = vpop.f32.mrb[0].mxu0
      %v4038 = vadd.f32 %v3973, %v4037
      %v4039 = vpop.f32.mrb[0].mxu0
      %v4040 = vpop.f32.mrb[0].mxu0
      %v4041 = vadd.f32 %v3973, %v4040
      %v4042 = vpop.f32.mrb[0].mxu0
      %4043 = vmatprep.mubr.bf16.mxu0 0
      %4044 = vmatmul.mubr.bf16.gmra.mrb[0].mxu0 %v3767
      %v4045 = vpop.f32.mrb[0].mxu0
      %v4046 = vadd.f32 %v3973, %v4045
      %v4047 = vpop.f32.mrb[0].mxu0
      %v4048 = vpop.f32.mrb[0].mxu0
      %v4049 = vadd.f32 %v3973, %v4048
      %v4050 = vpop.f32.mrb[0].mxu0
      %4051 = vmatprep.mubr.bf16.mxu0 0
      %4052 = vmatmul.mubr.bf16.gmra.mrb[0].mxu0 %v3770
      %v4053 = vpop.f32.mrb[0].mxu0
      %v4054 = vadd.f32 %v3973, %v4053
      %v4055 = vpop.f32.mrb[0].mxu0
      %v4056 = vpop.f32.mrb[0].mxu0
      %v4057 = vadd.f32 %v3973, %v4056
      %v4058 = vpop.f32.mrb[0].mxu0
      %4059 = vmatprep.mubr.bf16.mxu0 0
      %4060 = vmatmul.mubr.bf16.gmra.mrb[0].mxu0 %v3773
      %v4061 = vpop.f32.mrb[0].mxu0
      %v4062 = vadd.f32 %v3973, %v4061
      %v4063 = vpop.f32.mrb[0].mxu0
      %v4064 = vpop.f32.mrb[0].mxu0
      %v4065 = vadd.f32 %v3973, %v4064
      %v4066 = vpop.f32.mrb[0].mxu0
      %4067 = vdwg.mxu0
      %v4068 = vpack.c.bf16 %v3813, %v3810
      %v4069 = vpack.c.bf16 %v3821, %v3818
      %v4070 = vpack.c.bf16 %v3829, %v3826
      %v4071 = vpack.c.bf16 %v3837, %v3834
      %v4072 = vpack.c.bf16 %v3845, %v3842
      %v4073 = vpack.c.bf16 %v3853, %v3850
      %v4074 = vpack.c.bf16 %v3919, %v3916
      %v4075 = vpack.c.bf16 %v3927, %v3924
      %v4076 = vpack.c.bf16 %v3935, %v3932
      %v4077 = vpack.c.bf16 %v3943, %v3940
      %v4078 = vpack.c.bf16 %v3951, %v3948
      %v4079 = vpack.c.bf16 %v3959, %v3956
      %v4081 = vsel %vm1585, %v4068, 0
      %v4084 = vsel %vm1585, %v4069, 0
      %v4087 = vsel %vm1585, %v4070, 0
      %v4090 = vsel %vm1585, %v4071, 0
      %v4093 = vsel %vm1585, %v4072, 0
      %v4096 = vsel %vm1585, %v4073, 0
      %v4099 = vsel %vm1585, %v4074, 0
      %v4102 = vsel %vm1585, %v4075, 0
      %v4105 = vsel %vm1585, %v4076, 0
      %v4108 = vsel %vm1585, %v4077, 0
      %v4111 = vsel %vm1585, %v4078, 0
      %v4114 = vsel %vm1585, %v4079, 0
      %4116 = vmatprep.subr.bf16.mxu0 0
      %4117 = vmatpush1.bf16.xpose.msra.mxu0 %v4099
      %4118 = vmatprep.subr.bf16.mxu0 0
      %4119 = vmatpush1.bf16.xpose.msra.mxu0 %v4102
      %4120 = vmatprep.subr.bf16.mxu0 0
      %4121 = vmatpush1.bf16.xpose.msra.mxu0 %v4105
      %4122 = vmatprep.subr.bf16.mxu0 0
      %4123 = vmatpush1.bf16.xpose.msra.mxu0 %v4108
      %4124 = vmatprep.subr.bf16.mxu0 0
      %4125 = vmatpush1.bf16.xpose.msra.mxu0 %v4111
      %4126 = vmatprep.subr.bf16.mxu0 0
      %4127 = vmatpush1.bf16.xpose.msra.mxu0 %v4114
      %4128 = vmatprep.subr.bf16.mxu0 0
      %4129 = vmatpush1.bf16.xpose.msra.mxu0 0
      %4130 = vmatprep.subr.bf16.mxu0 0
      %4131 = vmatpush1.bf16.xpose.msra.mxu0 0
      %4132 = vmatprep.subr.bf16.mxu0 0
      %4133 = vmatpush1.bf16.xpose.msra.mxu0 0
      %4134 = vmatprep.subr.bf16.mxu0 0
      %4135 = vmatpush1.bf16.xpose.msra.mxu0 0
      %4136 = vmatprep.subr.bf16.mxu0 0
      %4137 = vmatpush1.bf16.xpose.msra.mxu0 0
      %4138 = vmatprep.subr.bf16.mxu0 0
      %4139 = vmatpush1.bf16.xpose.msra.mxu0 0
      %4140 = vmatprep.subr.bf16.mxu0 0
      %4141 = vmatpush1.bf16.xpose.msra.mxu0 0
      %4142 = vmatprep.subr.bf16.mxu0 0
      %4143 = vmatpush1.bf16.xpose.msra.mxu0 0
      %4144 = vmatprep.subr.bf16.mxu0 0
      %4145 = vmatpush1.bf16.xpose.msra.mxu0 0
      %4146 = vmatprep.subr.bf16.mxu0 0
      %4147 = vmatpush1.bf16.xpose.msra.mxu0 0
      %4148 = vmatprep.mubr.bf16.mxu0 0
      %4149 = vmatmul.mubr.bf16.gmra.mrb[0].mxu0 %v4081
      %v4150 = vpop.f32.mrb[0].mxu0
      %v4151 = vadd.f32 0.0, %v4150
      %v4152 = vpop.f32.mrb[0].mxu0
      %v4153 = vpop.f32.mrb[0].mxu0
      %v4154 = vadd.f32 0.0, %v4153
      %v4155 = vpop.f32.mrb[0].mxu0
      %4156 = vmatprep.mubr.bf16.mxu0 0
      %4157 = vmatmul.mubr.bf16.gmra.mrb[0].mxu0 %v4084
      %v4158 = vpop.f32.mrb[0].mxu0
      %v4159 = vadd.f32 0.0, %v4158
      %v4160 = vpop.f32.mrb[0].mxu0
      %v4161 = vpop.f32.mrb[0].mxu0
      %v4162 = vadd.f32 0.0, %v4161
      %v4163 = vpop.f32.mrb[0].mxu0
      %4164 = vmatprep.mubr.bf16.mxu0 0
      %4165 = vmatmul.mubr.bf16.gmra.mrb[0].mxu0 %v4087
      %v4166 = vpop.f32.mrb[0].mxu0
      %v4167 = vadd.f32 0.0, %v4166
      %v4168 = vpop.f32.mrb[0].mxu0
      %v4169 = vpop.f32.mrb[0].mxu0
      %v4170 = vadd.f32 0.0, %v4169
      %v4171 = vpop.f32.mrb[0].mxu0
      %4172 = vmatprep.mubr.bf16.mxu0 0
      %4173 = vmatmul.mubr.bf16.gmra.mrb[0].mxu0 %v4090
      %v4174 = vpop.f32.mrb[0].mxu0
      %v4175 = vadd.f32 0.0, %v4174
      %v4176 = vpop.f32.mrb[0].mxu0
      %v4177 = vpop.f32.mrb[0].mxu0
      %v4178 = vadd.f32 0.0, %v4177
      %v4179 = vpop.f32.mrb[0].mxu0
      %4180 = vmatprep.mubr.bf16.mxu0 0
      %4181 = vmatmul.mubr.bf16.gmra.mrb[0].mxu0 %v4093
      %v4182 = vpop.f32.mrb[0].mxu0
      %v4183 = vadd.f32 0.0, %v4182
      %v4184 = vpop.f32.mrb[0].mxu0
      %v4185 = vpop.f32.mrb[0].mxu0
      %v4186 = vadd.f32 0.0, %v4185
      %v4187 = vpop.f32.mrb[0].mxu0
      %4188 = vmatprep.mubr.bf16.mxu0 0
      %4189 = vmatmul.mubr.bf16.gmra.mrb[0].mxu0 %v4096
      %v4190 = vpop.f32.mrb[0].mxu0
      %v4191 = vadd.f32 0.0, %v4190
      %v4192 = vpop.f32.mrb[0].mxu0
      %v4193 = vpop.f32.mrb[0].mxu0
      %v4194 = vadd.f32 0.0, %v4193
      %v4195 = vpop.f32.mrb[0].mxu0
      %4196 = vdwg.mxu0
      %v4197 = vmul.f32 %v4151, 0.17677669
      %v4198 = vmul.f32 %v4154, 0.17677669
      %v4199 = vmul.f32 %v4159, 0.17677669
      %v4200 = vmul.f32 %v4162, 0.17677669
      %v4201 = vmul.f32 %v4167, 0.17677669
      %v4202 = vmul.f32 %v4170, 0.17677669
      %v4203 = vmul.f32 %v4175, 0.17677669
      %v4204 = vmul.f32 %v4178, 0.17677669
      %v4205 = vmul.f32 %v4183, 0.17677669
      %v4206 = vmul.f32 %v4186, 0.17677669
      %v4207 = vmul.f32 %v4191, 0.17677669
      %v4208 = vmul.f32 %v4194, 0.17677669
      %v4209 = vsel %vm1031, -1e+30, %v4197
      %v4210 = vsel %vm1032, -1e+30, %v4198
      %v4211 = vsel %vm1033, -1e+30, %v4199
      %v4212 = vsel %vm1034, -1e+30, %v4200
      %v4213 = vsel %vm1035, -1e+30, %v4201
      %v4214 = vsel %vm1036, -1e+30, %v4202
      %v4215 = vsel %vm1037, -1e+30, %v4203
      %v4216 = vsel %vm1038, -1e+30, %v4204
      %v4217 = vsel %vm1039, -1e+30, %v4205
      %v4218 = vsel %vm1040, -1e+30, %v4206
      %v4219 = vsel %vm1041, -1e+30, %v4207
      %v4220 = vsel %vm1042, -1e+30, %v4208
      %v4221 = vsel %vm1727, %v4209, -inf
      %4222 = vmax.xlane.f32.xlu0 %v4221
      %v4223 = vpop.xlane.xlu0 %4222
      %v4224 = vsel %vm1727, %v4210, -inf
      %4225 = vmax.xlane.f32.xlu0 %v4224
      %v4226 = vpop.xlane.xlu0 %4225
      %v4227 = vsel %vm1727, %v4211, -inf
      %4228 = vmax.xlane.f32.xlu0 %v4227
      %v4229 = vpop.xlane.xlu0 %4228
      %v4230 = vsel %vm1727, %v4212, -inf
      %4231 = vmax.xlane.f32.xlu0 %v4230
      %v4232 = vpop.xlane.xlu0 %4231
      %v4233 = vsel %vm1727, %v4213, -inf
      %4234 = vmax.xlane.f32.xlu0 %v4233
      %v4235 = vpop.xlane.xlu0 %4234
      %v4236 = vsel %vm1727, %v4214, -inf
      %4237 = vmax.xlane.f32.xlu0 %v4236
      %v4238 = vpop.xlane.xlu0 %4237
      %v4239 = vsel %vm1727, %v4215, -inf
      %4240 = vmax.xlane.f32.xlu0 %v4239
      %v4241 = vpop.xlane.xlu0 %4240
      %v4242 = vsel %vm1727, %v4216, -inf
      %4243 = vmax.xlane.f32.xlu0 %v4242
      %v4244 = vpop.xlane.xlu0 %4243
      %v4245 = vsel %vm1727, %v4217, -inf
      %4246 = vmax.xlane.f32.xlu0 %v4245
      %v4247 = vpop.xlane.xlu0 %4246
      %v4248 = vsel %vm1727, %v4218, -inf
      %4249 = vmax.xlane.f32.xlu0 %v4248
      %v4250 = vpop.xlane.xlu0 %4249
      %v4251 = vsel %vm1727, %v4219, -inf
      %4252 = vmax.xlane.f32.xlu0 %v4251
      %v4253 = vpop.xlane.xlu0 %4252
      %v4254 = vsel %vm1727, %v4220, -inf
      %4255 = vmax.xlane.f32.xlu0 %v4254
      %v4256 = vpop.xlane.xlu0 %4255
      %v4257 = vsub.f32 %v4209, %v4223
      %v4258 = vsub.f32 %v4210, %v4226
      %v4259 = vsub.f32 %v4211, %v4229
      %v4260 = vsub.f32 %v4212, %v4232
      %v4261 = vsub.f32 %v4213, %v4235
      %v4262 = vsub.f32 %v4214, %v4238
      %v4263 = vsub.f32 %v4215, %v4241
      %v4264 = vsub.f32 %v4216, %v4244
      %v4265 = vsub.f32 %v4217, %v4247
      %v4266 = vsub.f32 %v4218, %v4250
      %v4267 = vsub.f32 %v4219, %v4253
      %v4268 = vsub.f32 %v4220, %v4256
      %v4269 = vmul.f32 %v4257, 1.442695
      %v4270 = vpow.pop %v4269
      %v4271 = vmul.f32 %v4258, 1.442695
      %v4272 = vpow.pop %v4271
      %v4273 = vmul.f32 %v4259, 1.442695
      %v4274 = vpow.pop %v4273
      %v4275 = vmul.f32 %v4260, 1.442695
      %v4276 = vpow.pop %v4275
      %v4277 = vmul.f32 %v4261, 1.442695
      %v4278 = vpow.pop %v4277
      %v4279 = vmul.f32 %v4262, 1.442695
      %v4280 = vpow.pop %v4279
      %v4281 = vmul.f32 %v4263, 1.442695
      %v4282 = vpow.pop %v4281
      %v4283 = vmul.f32 %v4264, 1.442695
      %v4284 = vpow.pop %v4283
      %v4285 = vmul.f32 %v4265, 1.442695
      %v4286 = vpow.pop %v4285
      %v4287 = vmul.f32 %v4266, 1.442695
      %v4288 = vpow.pop %v4287
      %v4289 = vmul.f32 %v4267, 1.442695
      %v4290 = vpow.pop %v4289
      %v4291 = vmul.f32 %v4268, 1.442695
      %v4292 = vpow.pop %v4291
      %v4293 = vsel %vm1727, %v4270, 0.0
      %4294 = vadd.xlane.f32.xlu0 %v4293
      %v4295 = vpop.xlane.xlu0 %4294
      %v4296 = vsel %vm1727, %v4272, 0.0
      %4297 = vadd.xlane.f32.xlu0 %v4296
      %v4298 = vpop.xlane.xlu0 %4297
      %v4299 = vsel %vm1727, %v4274, 0.0
      %4300 = vadd.xlane.f32.xlu0 %v4299
      %v4301 = vpop.xlane.xlu0 %4300
      %v4302 = vsel %vm1727, %v4276, 0.0
      %4303 = vadd.xlane.f32.xlu0 %v4302
      %v4304 = vpop.xlane.xlu0 %4303
      %v4305 = vsel %vm1727, %v4278, 0.0
      %4306 = vadd.xlane.f32.xlu0 %v4305
      %v4307 = vpop.xlane.xlu0 %4306
      %v4308 = vsel %vm1727, %v4280, 0.0
      %4309 = vadd.xlane.f32.xlu0 %v4308
      %v4310 = vpop.xlane.xlu0 %4309
      %v4311 = vsel %vm1727, %v4282, 0.0
      %4312 = vadd.xlane.f32.xlu0 %v4311
      %v4313 = vpop.xlane.xlu0 %4312
      %v4314 = vsel %vm1727, %v4284, 0.0
      %4315 = vadd.xlane.f32.xlu0 %v4314
      %v4316 = vpop.xlane.xlu0 %4315
      %v4317 = vsel %vm1727, %v4286, 0.0
      %4318 = vadd.xlane.f32.xlu0 %v4317
      %v4319 = vpop.xlane.xlu0 %4318
      %v4320 = vsel %vm1727, %v4288, 0.0
      %4321 = vadd.xlane.f32.xlu0 %v4320
      %v4322 = vpop.xlane.xlu0 %4321
      %v4323 = vsel %vm1727, %v4290, 0.0
      %4324 = vadd.xlane.f32.xlu0 %v4323
      %v4325 = vpop.xlane.xlu0 %4324
      %v4326 = vsel %vm1727, %v4292, 0.0
      %4327 = vadd.xlane.f32.xlu0 %v4326
      %v4328 = vpop.xlane.xlu0 %4327
      %v4329 = vpack.c.bf16 %v4272, %v4270
      %v4330 = vpack.c.bf16 %v4276, %v4274
      %v4331 = vpack.c.bf16 %v4280, %v4278
      %v4332 = vpack.c.bf16 %v4284, %v4282
      %v4333 = vpack.c.bf16 %v4288, %v4286
      %v4334 = vpack.c.bf16 %v4292, %v4290
      %v4335 = vpack.c.bf16 %v4025, %v4022
      %v4336 = vpack.c.bf16 %v4033, %v4030
      %v4337 = vpack.c.bf16 %v4041, %v4038
      %v4338 = vpack.c.bf16 %v4049, %v4046
      %v4339 = vpack.c.bf16 %v4057, %v4054
      %v4340 = vpack.c.bf16 %v4065, %v4062
      %v4342 = vsel %vm1727, %v4329, 0
      %v4345 = vsel %vm1727, %v4330, 0
      %v4348 = vsel %vm1727, %v4331, 0
      %v4351 = vsel %vm1727, %v4332, 0
      %v4354 = vsel %vm1727, %v4333, 0
      %v4357 = vsel %vm1727, %v4334, 0
      %4359 = vmatprep.subr.bf16.mxu0 0
      %4360 = vmatpush1.bf16.msra.mxu0 %v4335
      %4361 = vmatprep.subr.bf16.mxu0 0
      %4362 = vmatpush1.bf16.msra.mxu0 %v4336
      %4363 = vmatprep.subr.bf16.mxu0 0
      %4364 = vmatpush1.bf16.msra.mxu0 %v4337
      %4365 = vmatprep.subr.bf16.mxu0 0
      %4366 = vmatpush1.bf16.msra.mxu0 %v4338
      %4367 = vmatprep.subr.bf16.mxu0 0
      %4368 = vmatpush1.bf16.msra.mxu0 %v4339
      %4369 = vmatprep.subr.bf16.mxu0 0
      %4370 = vmatpush1.bf16.msra.mxu0 %v4340
      %4371 = vmatprep.subr.bf16.mxu0 0
      %4372 = vmatpush1.bf16.msra.mxu0 0
      %4373 = vmatprep.subr.bf16.mxu0 0
      %4374 = vmatpush1.bf16.msra.mxu0 0
      %4375 = vmatprep.subr.bf16.mxu0 0
      %4376 = vmatpush1.bf16.msra.mxu0 0
      %4377 = vmatprep.subr.bf16.mxu0 0
      %4378 = vmatpush1.bf16.msra.mxu0 0
      %4379 = vmatprep.subr.bf16.mxu0 0
      %4380 = vmatpush1.bf16.msra.mxu0 0
      %4381 = vmatprep.subr.bf16.mxu0 0
      %4382 = vmatpush1.bf16.msra.mxu0 0
      %4383 = vmatprep.subr.bf16.mxu0 0
      %4384 = vmatpush1.bf16.msra.mxu0 0
      %4385 = vmatprep.subr.bf16.mxu0 0
      %4386 = vmatpush1.bf16.msra.mxu0 0
      %4387 = vmatprep.subr.bf16.mxu0 0
      %4388 = vmatpush1.bf16.msra.mxu0 0
      %4389 = vmatprep.subr.bf16.mxu0 0
      %4390 = vmatpush1.bf16.msra.mxu0 0
      %4391 = vmatprep.mubr.bf16.mxu0 0
      %4392 = vmatmul.mubr.bf16.gmra.mrb[0].mxu0 %v4342
      %v4393 = vpop.f32.mrb[0].mxu0
      %v4394 = vadd.f32 0.0, %v4393
      %v4395 = vpop.f32.mrb[0].mxu0
      %v4396 = vpop.f32.mrb[0].mxu0
      %v4397 = vadd.f32 0.0, %v4396
      %v4398 = vpop.f32.mrb[0].mxu0
      %4399 = vmatprep.mubr.bf16.mxu0 0
      %4400 = vmatmul.mubr.bf16.gmra.mrb[0].mxu0 %v4345
      %v4401 = vpop.f32.mrb[0].mxu0
      %v4402 = vadd.f32 0.0, %v4401
      %v4403 = vpop.f32.mrb[0].mxu0
      %v4404 = vpop.f32.mrb[0].mxu0
      %v4405 = vadd.f32 0.0, %v4404
      %v4406 = vpop.f32.mrb[0].mxu0
      %4407 = vmatprep.mubr.bf16.mxu0 0
      %4408 = vmatmul.mubr.bf16.gmra.mrb[0].mxu0 %v4348
      %v4409 = vpop.f32.mrb[0].mxu0
      %v4410 = vadd.f32 0.0, %v4409
      %v4411 = vpop.f32.mrb[0].mxu0
      %v4412 = vpop.f32.mrb[0].mxu0
      %v4413 = vadd.f32 0.0, %v4412
      %v4414 = vpop.f32.mrb[0].mxu0
      %4415 = vmatprep.mubr.bf16.mxu0 0
      %4416 = vmatmul.mubr.bf16.gmra.mrb[0].mxu0 %v4351
      %v4417 = vpop.f32.mrb[0].mxu0
      %v4418 = vadd.f32 0.0, %v4417
      %v4419 = vpop.f32.mrb[0].mxu0
      %v4420 = vpop.f32.mrb[0].mxu0
      %v4421 = vadd.f32 0.0, %v4420
      %v4422 = vpop.f32.mrb[0].mxu0
      %4423 = vmatprep.mubr.bf16.mxu0 0
      %4424 = vmatmul.mubr.bf16.gmra.mrb[0].mxu0 %v4354
      %v4425 = vpop.f32.mrb[0].mxu0
      %v4426 = vadd.f32 0.0, %v4425
      %v4427 = vpop.f32.mrb[0].mxu0
      %v4428 = vpop.f32.mrb[0].mxu0
      %v4429 = vadd.f32 0.0, %v4428
      %v4430 = vpop.f32.mrb[0].mxu0
      %4431 = vmatprep.mubr.bf16.mxu0 0
      %4432 = vmatmul.mubr.bf16.gmra.mrb[0].mxu0 %v4357
      %v4433 = vpop.f32.mrb[0].mxu0
      %v4434 = vadd.f32 0.0, %v4433
      %v4435 = vpop.f32.mrb[0].mxu0
      %v4436 = vpop.f32.mrb[0].mxu0
      %v4437 = vadd.f32 0.0, %v4436
      %v4438 = vpop.f32.mrb[0].mxu0
      %4439 = vdwg.mxu0
      %v4440 = vrcp.pop %v4295
      %v4441 = vmul.f32 %v4394, %v4440
      %v4442 = vrcp.pop %v4298
      %v4443 = vmul.f32 %v4397, %v4442
      %v4444 = vrcp.pop %v4301
      %v4445 = vmul.f32 %v4402, %v4444
      %v4446 = vrcp.pop %v4304
      %v4447 = vmul.f32 %v4405, %v4446
      %v4448 = vrcp.pop %v4307
      %v4449 = vmul.f32 %v4410, %v4448
      %v4450 = vrcp.pop %v4310
      %v4451 = vmul.f32 %v4413, %v4450
      %v4452 = vrcp.pop %v4313
      %v4453 = vmul.f32 %v4418, %v4452
      %v4454 = vrcp.pop %v4316
      %v4455 = vmul.f32 %v4421, %v4454
      %v4456 = vrcp.pop %v4319
      %v4457 = vmul.f32 %v4426, %v4456
      %v4458 = vrcp.pop %v4322
      %v4459 = vmul.f32 %v4429, %v4458
      %v4460 = vrcp.pop %v4325
      %v4461 = vmul.f32 %v4434, %v4460
      %v4462 = vrcp.pop %v4328
      %v4463 = vmul.f32 %v4437, %v4462
      %s4464 = scalar_lea.vmem %s13, 16
      %v4465 = vld [vmem:[%s4464] sm:$0xf]
      %v4466 = vld [vmem:[%s4464 + $0x4] sm:$0xf]
      %v4467 = vpack.c.bf16 %v4443, %v4441
      %v4468 = vpack.c.bf16 %v4447, %v4445
      %v4469 = vpack.c.bf16 %v4451, %v4449
      %v4470 = vpack.c.bf16 %v4455, %v4453
      %v4471 = vpack.c.bf16 %v4459, %v4457
      %v4472 = vpack.c.bf16 %v4463, %v4461
      %s4473 = scalar_lea.vmem %s7, 48
      %v4474 = vld [vmem:[%s4473] sm:$0xf]
      %v4475 = vld [vmem:[%s4473 + $0x4] sm:$0xf]
      %v4476 = vld [vmem:[%s4473 + $0x8] sm:$0xf]
      %v4477 = vld [vmem:[%s4473 + $0xc] sm:$0xf]
      %s4478 = scalar_lea.vmem %s8, 3
      %v4479 = vld [vmem:[%s4478] sm:$0x1]
      %v4481 = vlaneseq
      %v4482 = vshrl.u32 %v4481, 7
      %v4483 = vsub.s32 0, %v4482
      %v4484 = vrot.slane %v4479, %v4483
      %v4490 = vunpack.c.l.b16 %v4474
      %v4491 = vunpack.c.l.b16 %v4475
      %v4492 = vunpack.c.l.b16 %v4476
      %v4493 = vunpack.c.l.b16 %v4477
      %v4494 = vpack.c.b16 %v4491, %v4490
      %v4495 = vpack.c.b16 %v4493, %v4492
      %4498 = vmatprep.subr.bf16.mxu0 0
      %4499 = vmatpush1.bf16.msra.mxu0 %v4494
      %4500 = vmatprep.subr.bf16.mxu0 0
      %4501 = vmatpush1.bf16.msra.mxu0 %v4495
      %4502 = vmatprep.subr.bf16.mxu0 0
      %4503 = vmatpush1.bf16.msra.mxu0 0
      %4504 = vmatprep.subr.bf16.mxu0 0
      %4505 = vmatpush1.bf16.msra.mxu0 0
      %4506 = vmatprep.subr.bf16.mxu0 0
      %4507 = vmatpush1.bf16.msra.mxu0 0
      %4508 = vmatprep.subr.bf16.mxu0 0
      %4509 = vmatpush1.bf16.msra.mxu0 0
      %4510 = vmatprep.subr.bf16.mxu0 0
      %4511 = vmatpush1.bf16.msra.mxu0 0
      %4512 = vmatprep.subr.bf16.mxu0 0
      %4513 = vmatpush1.bf16.msra.mxu0 0
      %4514 = vmatprep.subr.bf16.mxu0 0
      %4515 = vmatpush1.bf16.msra.mxu0 0
      %4516 = vmatprep.subr.bf16.mxu0 0
      %4517 = vmatpush1.bf16.msra.mxu0 0
      %4518 = vmatprep.subr.bf16.mxu0 0
      %4519 = vmatpush1.bf16.msra.mxu0 0
      %4520 = vmatprep.subr.bf16.mxu0 0
      %4521 = vmatpush1.bf16.msra.mxu0 0
      %4522 = vmatprep.subr.bf16.mxu0 0
      %4523 = vmatpush1.bf16.msra.mxu0 0
      %4524 = vmatprep.subr.bf16.mxu0 0
      %4525 = vmatpush1.bf16.msra.mxu0 0
      %4526 = vmatprep.subr.bf16.mxu0 0
      %4527 = vmatpush1.bf16.msra.mxu0 0
      %4528 = vmatprep.subr.bf16.mxu0 0
      %4529 = vmatpush1.bf16.msra.mxu0 0
      %4530 = vmatprep.mubr.bf16.mxu0 0
      %4531 = vmatmul.mubr.bf16.gmra.mrb[0].mxu0 %v3758
      %v4532 = vpop.f32.mrb[0].mxu0
      %v4533 = vadd.f32 %v4484, %v4532
      %v4534 = vpop.f32.mrb[0].mxu0
      %v4535 = vpop.f32.mrb[0].mxu0
      %v4536 = vadd.f32 %v4484, %v4535
      %v4537 = vpop.f32.mrb[0].mxu0
      %4538 = vmatprep.mubr.bf16.mxu0 0
      %4539 = vmatmul.mubr.bf16.gmra.mrb[0].mxu0 %v3761
      %v4540 = vpop.f32.mrb[0].mxu0
      %v4541 = vadd.f32 %v4484, %v4540
      %v4542 = vpop.f32.mrb[0].mxu0
      %v4543 = vpop.f32.mrb[0].mxu0
      %v4544 = vadd.f32 %v4484, %v4543
      %v4545 = vpop.f32.mrb[0].mxu0
      %4546 = vmatprep.mubr.bf16.mxu0 0
      %4547 = vmatmul.mubr.bf16.gmra.mrb[0].mxu0 %v3764
      %v4548 = vpop.f32.mrb[0].mxu0
      %v4549 = vadd.f32 %v4484, %v4548
      %v4550 = vpop.f32.mrb[0].mxu0
      %v4551 = vpop.f32.mrb[0].mxu0
      %v4552 = vadd.f32 %v4484, %v4551
      %v4553 = vpop.f32.mrb[0].mxu0
      %4554 = vmatprep.mubr.bf16.mxu0 0
      %4555 = vmatmul.mubr.bf16.gmra.mrb[0].mxu0 %v3767
      %v4556 = vpop.f32.mrb[0].mxu0
      %v4557 = vadd.f32 %v4484, %v4556
      %v4558 = vpop.f32.mrb[0].mxu0
      %v4559 = vpop.f32.mrb[0].mxu0
      %v4560 = vadd.f32 %v4484, %v4559
      %v4561 = vpop.f32.mrb[0].mxu0
      %4562 = vmatprep.mubr.bf16.mxu0 0
      %4563 = vmatmul.mubr.bf16.gmra.mrb[0].mxu0 %v3770
      %v4564 = vpop.f32.mrb[0].mxu0
      %v4565 = vadd.f32 %v4484, %v4564
      %v4566 = vpop.f32.mrb[0].mxu0
      %v4567 = vpop.f32.mrb[0].mxu0
      %v4568 = vadd.f32 %v4484, %v4567
      %v4569 = vpop.f32.mrb[0].mxu0
      %4570 = vmatprep.mubr.bf16.mxu0 0
      %4571 = vmatmul.mubr.bf16.gmra.mrb[0].mxu0 %v3773
      %v4572 = vpop.f32.mrb[0].mxu0
      %v4573 = vadd.f32 %v4484, %v4572
      %v4574 = vpop.f32.mrb[0].mxu0
      %v4575 = vpop.f32.mrb[0].mxu0
      %v4576 = vadd.f32 %v4484, %v4575
      %v4577 = vpop.f32.mrb[0].mxu0
      %4578 = vdwg.mxu0
      %s4579 = scalar_lea.vmem %s9, 48
      %v4580 = vld [vmem:[%s4579] sm:$0xf]
      %v4581 = vld [vmem:[%s4579 + $0x4] sm:$0xf]
      %v4582 = vld [vmem:[%s4579 + $0x8] sm:$0xf]
      %v4583 = vld [vmem:[%s4579 + $0xc] sm:$0xf]
      %s4584 = scalar_lea.vmem %s10, 3
      %v4585 = vld [vmem:[%s4584] sm:$0x1]
      %v4587 = vlaneseq
      %v4588 = vshrl.u32 %v4587, 7
      %v4589 = vsub.s32 0, %v4588
      %v4590 = vrot.slane %v4585, %v4589
      %v4596 = vunpack.c.l.b16 %v4580
      %v4597 = vunpack.c.l.b16 %v4581
      %v4598 = vunpack.c.l.b16 %v4582
      %v4599 = vunpack.c.l.b16 %v4583
      %v4600 = vpack.c.b16 %v4597, %v4596
      %v4601 = vpack.c.b16 %v4599, %v4598
      %4604 = vmatprep.subr.bf16.mxu0 0
      %4605 = vmatpush1.bf16.msra.mxu0 %v4600
      %4606 = vmatprep.subr.bf16.mxu0 0
      %4607 = vmatpush1.bf16.msra.mxu0 %v4601
      %4608 = vmatprep.subr.bf16.mxu0 0
      %4609 = vmatpush1.bf16.msra.mxu0 0
      %4610 = vmatprep.subr.bf16.mxu0 0
      %4611 = vmatpush1.bf16.msra.mxu0 0
      %4612 = vmatprep.subr.bf16.mxu0 0
      %4613 = vmatpush1.bf16.msra.mxu0 0
      %4614 = vmatprep.subr.bf16.mxu0 0
      %4615 = vmatpush1.bf16.msra.mxu0 0
      %4616 = vmatprep.subr.bf16.mxu0 0
      %4617 = vmatpush1.bf16.msra.mxu0 0
      %4618 = vmatprep.subr.bf16.mxu0 0
      %4619 = vmatpush1.bf16.msra.mxu0 0
      %4620 = vmatprep.subr.bf16.mxu0 0
      %4621 = vmatpush1.bf16.msra.mxu0 0
      %4622 = vmatprep.subr.bf16.mxu0 0
      %4623 = vmatpush1.bf16.msra.mxu0 0
      %4624 = vmatprep.subr.bf16.mxu0 0
      %4625 = vmatpush1.bf16.msra.mxu0 0
      %4626 = vmatprep.subr.bf16.mxu0 0
      %4627 = vmatpush1.bf16.msra.mxu0 0
      %4628 = vmatprep.subr.bf16.mxu0 0
      %4629 = vmatpush1.bf16.msra.mxu0 0
      %4630 = vmatprep.subr.bf16.mxu0 0
      %4631 = vmatpush1.bf16.msra.mxu0 0
      %4632 = vmatprep.subr.bf16.mxu0 0
      %4633 = vmatpush1.bf16.msra.mxu0 0
      %4634 = vmatprep.subr.bf16.mxu0 0
      %4635 = vmatpush1.bf16.msra.mxu0 0
      %4636 = vmatprep.mubr.bf16.mxu0 0
      %4637 = vmatmul.mubr.bf16.gmra.mrb[0].mxu0 %v3758
      %v4638 = vpop.f32.mrb[0].mxu0
      %v4639 = vadd.f32 %v4590, %v4638
      %v4640 = vpop.f32.mrb[0].mxu0
      %v4641 = vpop.f32.mrb[0].mxu0
      %v4642 = vadd.f32 %v4590, %v4641
      %v4643 = vpop.f32.mrb[0].mxu0
      %4644 = vmatprep.mubr.bf16.mxu0 0
      %4645 = vmatmul.mubr.bf16.gmra.mrb[0].mxu0 %v3761
      %v4646 = vpop.f32.mrb[0].mxu0
      %v4647 = vadd.f32 %v4590, %v4646
      %v4648 = vpop.f32.mrb[0].mxu0
      %v4649 = vpop.f32.mrb[0].mxu0
      %v4650 = vadd.f32 %v4590, %v4649
      %v4651 = vpop.f32.mrb[0].mxu0
      %4652 = vmatprep.mubr.bf16.mxu0 0
      %4653 = vmatmul.mubr.bf16.gmra.mrb[0].mxu0 %v3764
      %v4654 = vpop.f32.mrb[0].mxu0
      %v4655 = vadd.f32 %v4590, %v4654
      %v4656 = vpop.f32.mrb[0].mxu0
      %v4657 = vpop.f32.mrb[0].mxu0
      %v4658 = vadd.f32 %v4590, %v4657
      %v4659 = vpop.f32.mrb[0].mxu0
      %4660 = vmatprep.mubr.bf16.mxu0 0
      %4661 = vmatmul.mubr.bf16.gmra.mrb[0].mxu0 %v3767
      %v4662 = vpop.f32.mrb[0].mxu0
      %v4663 = vadd.f32 %v4590, %v4662
      %v4664 = vpop.f32.mrb[0].mxu0
      %v4665 = vpop.f32.mrb[0].mxu0
      %v4666 = vadd.f32 %v4590, %v4665
      %v4667 = vpop.f32.mrb[0].mxu0
      %4668 = vmatprep.mubr.bf16.mxu0 0
      %4669 = vmatmul.mubr.bf16.gmra.mrb[0].mxu0 %v3770
      %v4670 = vpop.f32.mrb[0].mxu0
      %v4671 = vadd.f32 %v4590, %v4670
      %v4672 = vpop.f32.mrb[0].mxu0
      %v4673 = vpop.f32.mrb[0].mxu0
      %v4674 = vadd.f32 %v4590, %v4673
      %v4675 = vpop.f32.mrb[0].mxu0
      %4676 = vmatprep.mubr.bf16.mxu0 0
      %4677 = vmatmul.mubr.bf16.gmra.mrb[0].mxu0 %v3773
      %v4678 = vpop.f32.mrb[0].mxu0
      %v4679 = vadd.f32 %v4590, %v4678
      %v4680 = vpop.f32.mrb[0].mxu0
      %v4681 = vpop.f32.mrb[0].mxu0
      %v4682 = vadd.f32 %v4590, %v4681
      %v4683 = vpop.f32.mrb[0].mxu0
      %4684 = vdwg.mxu0
      %s4685 = scalar_lea.vmem %s11, 48
      %v4686 = vld [vmem:[%s4685] sm:$0xf]
      %v4687 = vld [vmem:[%s4685 + $0x4] sm:$0xf]
      %v4688 = vld [vmem:[%s4685 + $0x8] sm:$0xf]
      %v4689 = vld [vmem:[%s4685 + $0xc] sm:$0xf]
      %s4690 = scalar_lea.vmem %s12, 3
      %v4691 = vld [vmem:[%s4690] sm:$0x1]
      %v4693 = vlaneseq
      %v4694 = vshrl.u32 %v4693, 7
      %v4695 = vsub.s32 0, %v4694
      %v4696 = vrot.slane %v4691, %v4695
      %v4702 = vunpack.c.l.b16 %v4686
      %v4703 = vunpack.c.l.b16 %v4687
      %v4704 = vunpack.c.l.b16 %v4688
      %v4705 = vunpack.c.l.b16 %v4689
      %v4706 = vpack.c.b16 %v4703, %v4702
      %v4707 = vpack.c.b16 %v4705, %v4704
      %4710 = vmatprep.subr.bf16.mxu0 0
      %4711 = vmatpush1.bf16.msra.mxu0 %v4706
      %4712 = vmatprep.subr.bf16.mxu0 0
      %4713 = vmatpush1.bf16.msra.mxu0 %v4707
      %4714 = vmatprep.subr.bf16.mxu0 0
      %4715 = vmatpush1.bf16.msra.mxu0 0
      %4716 = vmatprep.subr.bf16.mxu0 0
      %4717 = vmatpush1.bf16.msra.mxu0 0
      %4718 = vmatprep.subr.bf16.mxu0 0
      %4719 = vmatpush1.bf16.msra.mxu0 0
      %4720 = vmatprep.subr.bf16.mxu0 0
      %4721 = vmatpush1.bf16.msra.mxu0 0
      %4722 = vmatprep.subr.bf16.mxu0 0
      %4723 = vmatpush1.bf16.msra.mxu0 0
      %4724 = vmatprep.subr.bf16.mxu0 0
      %4725 = vmatpush1.bf16.msra.mxu0 0
      %4726 = vmatprep.subr.bf16.mxu0 0
      %4727 = vmatpush1.bf16.msra.mxu0 0
      %4728 = vmatprep.subr.bf16.mxu0 0
      %4729 = vmatpush1.bf16.msra.mxu0 0
      %4730 = vmatprep.subr.bf16.mxu0 0
      %4731 = vmatpush1.bf16.msra.mxu0 0
      %4732 = vmatprep.subr.bf16.mxu0 0
      %4733 = vmatpush1.bf16.msra.mxu0 0
      %4734 = vmatprep.subr.bf16.mxu0 0
      %4735 = vmatpush1.bf16.msra.mxu0 0
      %4736 = vmatprep.subr.bf16.mxu0 0
      %4737 = vmatpush1.bf16.msra.mxu0 0
      %4738 = vmatprep.subr.bf16.mxu0 0
      %4739 = vmatpush1.bf16.msra.mxu0 0
      %4740 = vmatprep.subr.bf16.mxu0 0
      %4741 = vmatpush1.bf16.msra.mxu0 0
      %4742 = vmatprep.mubr.bf16.mxu0 0
      %4743 = vmatmul.mubr.bf16.gmra.mrb[0].mxu0 %v3758
      %v4744 = vpop.f32.mrb[0].mxu0
      %v4745 = vadd.f32 %v4696, %v4744
      %v4746 = vpop.f32.mrb[0].mxu0
      %v4747 = vpop.f32.mrb[0].mxu0
      %v4748 = vadd.f32 %v4696, %v4747
      %v4749 = vpop.f32.mrb[0].mxu0
      %4750 = vmatprep.mubr.bf16.mxu0 0
      %4751 = vmatmul.mubr.bf16.gmra.mrb[0].mxu0 %v3761
      %v4752 = vpop.f32.mrb[0].mxu0
      %v4753 = vadd.f32 %v4696, %v4752
      %v4754 = vpop.f32.mrb[0].mxu0
      %v4755 = vpop.f32.mrb[0].mxu0
      %v4756 = vadd.f32 %v4696, %v4755
      %v4757 = vpop.f32.mrb[0].mxu0
      %4758 = vmatprep.mubr.bf16.mxu0 0
      %4759 = vmatmul.mubr.bf16.gmra.mrb[0].mxu0 %v3764
      %v4760 = vpop.f32.mrb[0].mxu0
      %v4761 = vadd.f32 %v4696, %v4760
      %v4762 = vpop.f32.mrb[0].mxu0
      %v4763 = vpop.f32.mrb[0].mxu0
      %v4764 = vadd.f32 %v4696, %v4763
      %v4765 = vpop.f32.mrb[0].mxu0
      %4766 = vmatprep.mubr.bf16.mxu0 0
      %4767 = vmatmul.mubr.bf16.gmra.mrb[0].mxu0 %v3767
      %v4768 = vpop.f32.mrb[0].mxu0
      %v4769 = vadd.f32 %v4696, %v4768
      %v4770 = vpop.f32.mrb[0].mxu0
      %v4771 = vpop.f32.mrb[0].mxu0
      %v4772 = vadd.f32 %v4696, %v4771
      %v4773 = vpop.f32.mrb[0].mxu0
      %4774 = vmatprep.mubr.bf16.mxu0 0
      %4775 = vmatmul.mubr.bf16.gmra.mrb[0].mxu0 %v3770
      %v4776 = vpop.f32.mrb[0].mxu0
      %v4777 = vadd.f32 %v4696, %v4776
      %v4778 = vpop.f32.mrb[0].mxu0
      %v4779 = vpop.f32.mrb[0].mxu0
      %v4780 = vadd.f32 %v4696, %v4779
      %v4781 = vpop.f32.mrb[0].mxu0
      %4782 = vmatprep.mubr.bf16.mxu0 0
      %4783 = vmatmul.mubr.bf16.gmra.mrb[0].mxu0 %v3773
      %v4784 = vpop.f32.mrb[0].mxu0
      %v4785 = vadd.f32 %v4696, %v4784
      %v4786 = vpop.f32.mrb[0].mxu0
      %v4787 = vpop.f32.mrb[0].mxu0
      %v4788 = vadd.f32 %v4696, %v4787
      %v4789 = vpop.f32.mrb[0].mxu0
      %4790 = vdwg.mxu0
      %v4791 = vpack.c.bf16 %v4536, %v4533
      %v4792 = vpack.c.bf16 %v4544, %v4541
      %v4793 = vpack.c.bf16 %v4552, %v4549
      %v4794 = vpack.c.bf16 %v4560, %v4557
      %v4795 = vpack.c.bf16 %v4568, %v4565
      %v4796 = vpack.c.bf16 %v4576, %v4573
      %v4797 = vpack.c.bf16 %v4642, %v4639
      %v4798 = vpack.c.bf16 %v4650, %v4647
      %v4799 = vpack.c.bf16 %v4658, %v4655
      %v4800 = vpack.c.bf16 %v4666, %v4663
      %v4801 = vpack.c.bf16 %v4674, %v4671
      %v4802 = vpack.c.bf16 %v4682, %v4679
      %v4804 = vsel %vm1585, %v4791, 0
      %v4807 = vsel %vm1585, %v4792, 0
      %v4810 = vsel %vm1585, %v4793, 0
      %v4813 = vsel %vm1585, %v4794, 0
      %v4816 = vsel %vm1585, %v4795, 0
      %v4819 = vsel %vm1585, %v4796, 0
      %v4822 = vsel %vm1585, %v4797, 0
      %v4825 = vsel %vm1585, %v4798, 0
      %v4828 = vsel %vm1585, %v4799, 0
      %v4831 = vsel %vm1585, %v4800, 0
      %v4834 = vsel %vm1585, %v4801, 0
      %v4837 = vsel %vm1585, %v4802, 0
      %4839 = vmatprep.subr.bf16.mxu0 0
      %4840 = vmatpush1.bf16.xpose.msra.mxu0 %v4822
      %4841 = vmatprep.subr.bf16.mxu0 0
      %4842 = vmatpush1.bf16.xpose.msra.mxu0 %v4825
      %4843 = vmatprep.subr.bf16.mxu0 0
      %4844 = vmatpush1.bf16.xpose.msra.mxu0 %v4828
      %4845 = vmatprep.subr.bf16.mxu0 0
      %4846 = vmatpush1.bf16.xpose.msra.mxu0 %v4831
      %4847 = vmatprep.subr.bf16.mxu0 0
      %4848 = vmatpush1.bf16.xpose.msra.mxu0 %v4834
      %4849 = vmatprep.subr.bf16.mxu0 0
      %4850 = vmatpush1.bf16.xpose.msra.mxu0 %v4837
      %4851 = vmatprep.subr.bf16.mxu0 0
      %4852 = vmatpush1.bf16.xpose.msra.mxu0 0
      %4853 = vmatprep.subr.bf16.mxu0 0
      %4854 = vmatpush1.bf16.xpose.msra.mxu0 0
      %4855 = vmatprep.subr.bf16.mxu0 0
      %4856 = vmatpush1.bf16.xpose.msra.mxu0 0
      %4857 = vmatprep.subr.bf16.mxu0 0
      %4858 = vmatpush1.bf16.xpose.msra.mxu0 0
      %4859 = vmatprep.subr.bf16.mxu0 0
      %4860 = vmatpush1.bf16.xpose.msra.mxu0 0
      %4861 = vmatprep.subr.bf16.mxu0 0
      %4862 = vmatpush1.bf16.xpose.msra.mxu0 0
      %4863 = vmatprep.subr.bf16.mxu0 0
      %4864 = vmatpush1.bf16.xpose.msra.mxu0 0
      %4865 = vmatprep.subr.bf16.mxu0 0
      %4866 = vmatpush1.bf16.xpose.msra.mxu0 0
      %4867 = vmatprep.subr.bf16.mxu0 0
      %4868 = vmatpush1.bf16.xpose.msra.mxu0 0
      %4869 = vmatprep.subr.bf16.mxu0 0
      %4870 = vmatpush1.bf16.xpose.msra.mxu0 0
      %4871 = vmatprep.mubr.bf16.mxu0 0
      %4872 = vmatmul.mubr.bf16.gmra.mrb[0].mxu0 %v4804
      %v4873 = vpop.f32.mrb[0].mxu0
      %v4874 = vadd.f32 0.0, %v4873
      %v4875 = vpop.f32.mrb[0].mxu0
      %v4876 = vpop.f32.mrb[0].mxu0
      %v4877 = vadd.f32 0.0, %v4876
      %v4878 = vpop.f32.mrb[0].mxu0
      %4879 = vmatprep.mubr.bf16.mxu0 0
      %4880 = vmatmul.mubr.bf16.gmra.mrb[0].mxu0 %v4807
      %v4881 = vpop.f32.mrb[0].mxu0
      %v4882 = vadd.f32 0.0, %v4881
      %v4883 = vpop.f32.mrb[0].mxu0
      %v4884 = vpop.f32.mrb[0].mxu0
      %v4885 = vadd.f32 0.0, %v4884
      %v4886 = vpop.f32.mrb[0].mxu0
      %4887 = vmatprep.mubr.bf16.mxu0 0
      %4888 = vmatmul.mubr.bf16.gmra.mrb[0].mxu0 %v4810
      %v4889 = vpop.f32.mrb[0].mxu0
      %v4890 = vadd.f32 0.0, %v4889
      %v4891 = vpop.f32.mrb[0].mxu0
      %v4892 = vpop.f32.mrb[0].mxu0
      %v4893 = vadd.f32 0.0, %v4892
      %v4894 = vpop.f32.mrb[0].mxu0
      %4895 = vmatprep.mubr.bf16.mxu0 0
      %4896 = vmatmul.mubr.bf16.gmra.mrb[0].mxu0 %v4813
      %v4897 = vpop.f32.mrb[0].mxu0
      %v4898 = vadd.f32 0.0, %v4897
      %v4899 = vpop.f32.mrb[0].mxu0
      %v4900 = vpop.f32.mrb[0].mxu0
      %v4901 = vadd.f32 0.0, %v4900
      %v4902 = vpop.f32.mrb[0].mxu0
      %4903 = vmatprep.mubr.bf16.mxu0 0
      %4904 = vmatmul.mubr.bf16.gmra.mrb[0].mxu0 %v4816
      %v4905 = vpop.f32.mrb[0].mxu0
      %v4906 = vadd.f32 0.0, %v4905
      %v4907 = vpop.f32.mrb[0].mxu0
      %v4908 = vpop.f32.mrb[0].mxu0
      %v4909 = vadd.f32 0.0, %v4908
      %v4910 = vpop.f32.mrb[0].mxu0
      %4911 = vmatprep.mubr.bf16.mxu0 0
      %4912 = vmatmul.mubr.bf16.gmra.mrb[0].mxu0 %v4819
      %v4913 = vpop.f32.mrb[0].mxu0
      %v4914 = vadd.f32 0.0, %v4913
      %v4915 = vpop.f32.mrb[0].mxu0
      %v4916 = vpop.f32.mrb[0].mxu0
      %v4917 = vadd.f32 0.0, %v4916
      %v4918 = vpop.f32.mrb[0].mxu0
      %4919 = vdwg.mxu0
      %v4920 = vmul.f32 %v4874, 0.17677669
      %v4921 = vmul.f32 %v4877, 0.17677669
      %v4922 = vmul.f32 %v4882, 0.17677669
      %v4923 = vmul.f32 %v4885, 0.17677669
      %v4924 = vmul.f32 %v4890, 0.17677669
      %v4925 = vmul.f32 %v4893, 0.17677669
      %v4926 = vmul.f32 %v4898, 0.17677669
      %v4927 = vmul.f32 %v4901, 0.17677669
      %v4928 = vmul.f32 %v4906, 0.17677669
      %v4929 = vmul.f32 %v4909, 0.17677669
      %v4930 = vmul.f32 %v4914, 0.17677669
      %v4931 = vmul.f32 %v4917, 0.17677669
      %v4932 = vsel %vm1031, -1e+30, %v4920
      %v4933 = vsel %vm1032, -1e+30, %v4921
      %v4934 = vsel %vm1033, -1e+30, %v4922
      %v4935 = vsel %vm1034, -1e+30, %v4923
      %v4936 = vsel %vm1035, -1e+30, %v4924
      %v4937 = vsel %vm1036, -1e+30, %v4925
      %v4938 = vsel %vm1037, -1e+30, %v4926
      %v4939 = vsel %vm1038, -1e+30, %v4927
      %v4940 = vsel %vm1039, -1e+30, %v4928
      %v4941 = vsel %vm1040, -1e+30, %v4929
      %v4942 = vsel %vm1041, -1e+30, %v4930
      %v4943 = vsel %vm1042, -1e+30, %v4931
      %v4944 = vsel %vm1727, %v4932, -inf
      %4945 = vmax.xlane.f32.xlu0 %v4944
      %v4946 = vpop.xlane.xlu0 %4945
      %v4947 = vsel %vm1727, %v4933, -inf
      %4948 = vmax.xlane.f32.xlu0 %v4947
      %v4949 = vpop.xlane.xlu0 %4948
      %v4950 = vsel %vm1727, %v4934, -inf
      %4951 = vmax.xlane.f32.xlu0 %v4950
      %v4952 = vpop.xlane.xlu0 %4951
      %v4953 = vsel %vm1727, %v4935, -inf
      %4954 = vmax.xlane.f32.xlu0 %v4953
      %v4955 = vpop.xlane.xlu0 %4954
      %v4956 = vsel %vm1727, %v4936, -inf
      %4957 = vmax.xlane.f32.xlu0 %v4956
      %v4958 = vpop.xlane.xlu0 %4957
      %v4959 = vsel %vm1727, %v4937, -inf
      %4960 = vmax.xlane.f32.xlu0 %v4959
      %v4961 = vpop.xlane.xlu0 %4960
      %v4962 = vsel %vm1727, %v4938, -inf
      %4963 = vmax.xlane.f32.xlu0 %v4962
      %v4964 = vpop.xlane.xlu0 %4963
      %v4965 = vsel %vm1727, %v4939, -inf
      %4966 = vmax.xlane.f32.xlu0 %v4965
      %v4967 = vpop.xlane.xlu0 %4966
      %v4968 = vsel %vm1727, %v4940, -inf
      %4969 = vmax.xlane.f32.xlu0 %v4968
      %v4970 = vpop.xlane.xlu0 %4969
      %v4971 = vsel %vm1727, %v4941, -inf
      %4972 = vmax.xlane.f32.xlu0 %v4971
      %v4973 = vpop.xlane.xlu0 %4972
      %v4974 = vsel %vm1727, %v4942, -inf
      %4975 = vmax.xlane.f32.xlu0 %v4974
      %v4976 = vpop.xlane.xlu0 %4975
      %v4977 = vsel %vm1727, %v4943, -inf
      %4978 = vmax.xlane.f32.xlu0 %v4977
      %v4979 = vpop.xlane.xlu0 %4978
      %v4980 = vsub.f32 %v4932, %v4946
      %v4981 = vsub.f32 %v4933, %v4949
      %v4982 = vsub.f32 %v4934, %v4952
      %v4983 = vsub.f32 %v4935, %v4955
      %v4984 = vsub.f32 %v4936, %v4958
      %v4985 = vsub.f32 %v4937, %v4961
      %v4986 = vsub.f32 %v4938, %v4964
      %v4987 = vsub.f32 %v4939, %v4967
      %v4988 = vsub.f32 %v4940, %v4970
      %v4989 = vsub.f32 %v4941, %v4973
      %v4990 = vsub.f32 %v4942, %v4976
      %v4991 = vsub.f32 %v4943, %v4979
      %v4992 = vmul.f32 %v4980, 1.442695
      %v4993 = vpow.pop %v4992
      %v4994 = vmul.f32 %v4981, 1.442695
      %v4995 = vpow.pop %v4994
      %v4996 = vmul.f32 %v4982, 1.442695
      %v4997 = vpow.pop %v4996
      %v4998 = vmul.f32 %v4983, 1.442695
      %v4999 = vpow.pop %v4998
      %v5000 = vmul.f32 %v4984, 1.442695
      %v5001 = vpow.pop %v5000
      %v5002 = vmul.f32 %v4985, 1.442695
      %v5003 = vpow.pop %v5002
      %v5004 = vmul.f32 %v4986, 1.442695
      %v5005 = vpow.pop %v5004
      %v5006 = vmul.f32 %v4987, 1.442695
      %v5007 = vpow.pop %v5006
      %v5008 = vmul.f32 %v4988, 1.442695
      %v5009 = vpow.pop %v5008
      %v5010 = vmul.f32 %v4989, 1.442695
      %v5011 = vpow.pop %v5010
      %v5012 = vmul.f32 %v4990, 1.442695
      %v5013 = vpow.pop %v5012
      %v5014 = vmul.f32 %v4991, 1.442695
      %v5015 = vpow.pop %v5014
      %v5016 = vsel %vm1727, %v4993, 0.0
      %5017 = vadd.xlane.f32.xlu0 %v5016
      %v5018 = vpop.xlane.xlu0 %5017
      %v5019 = vsel %vm1727, %v4995, 0.0
      %5020 = vadd.xlane.f32.xlu0 %v5019
      %v5021 = vpop.xlane.xlu0 %5020
      %v5022 = vsel %vm1727, %v4997, 0.0
      %5023 = vadd.xlane.f32.xlu0 %v5022
      %v5024 = vpop.xlane.xlu0 %5023
      %v5025 = vsel %vm1727, %v4999, 0.0
      %5026 = vadd.xlane.f32.xlu0 %v5025
      %v5027 = vpop.xlane.xlu0 %5026
      %v5028 = vsel %vm1727, %v5001, 0.0
      %5029 = vadd.xlane.f32.xlu0 %v5028
      %v5030 = vpop.xlane.xlu0 %5029
      %v5031 = vsel %vm1727, %v5003, 0.0
      %5032 = vadd.xlane.f32.xlu0 %v5031
      %v5033 = vpop.xlane.xlu0 %5032
      %v5034 = vsel %vm1727, %v5005, 0.0
      %5035 = vadd.xlane.f32.xlu0 %v5034
      %v5036 = vpop.xlane.xlu0 %5035
      %v5037 = vsel %vm1727, %v5007, 0.0
      %5038 = vadd.xlane.f32.xlu0 %v5037
      %v5039 = vpop.xlane.xlu0 %5038
      %v5040 = vsel %vm1727, %v5009, 0.0
      %5041 = vadd.xlane.f32.xlu0 %v5040
      %v5042 = vpop.xlane.xlu0 %5041
      %v5043 = vsel %vm1727, %v5011, 0.0
      %5044 = vadd.xlane.f32.xlu0 %v5043
      %v5045 = vpop.xlane.xlu0 %5044
      %v5046 = vsel %vm1727, %v5013, 0.0
      %5047 = vadd.xlane.f32.xlu0 %v5046
      %v5048 = vpop.xlane.xlu0 %5047
      %v5049 = vsel %vm1727, %v5015, 0.0
      %5050 = vadd.xlane.f32.xlu0 %v5049
      %v5051 = vpop.xlane.xlu0 %5050
      %v5052 = vpack.c.bf16 %v4995, %v4993
      %v5053 = vpack.c.bf16 %v4999, %v4997
      %v5054 = vpack.c.bf16 %v5003, %v5001
      %v5055 = vpack.c.bf16 %v5007, %v5005
      %v5056 = vpack.c.bf16 %v5011, %v5009
      %v5057 = vpack.c.bf16 %v5015, %v5013
      %v5058 = vpack.c.bf16 %v4748, %v4745
      %v5059 = vpack.c.bf16 %v4756, %v4753
      %v5060 = vpack.c.bf16 %v4764, %v4761
      %v5061 = vpack.c.bf16 %v4772, %v4769
      %v5062 = vpack.c.bf16 %v4780, %v4777
      %v5063 = vpack.c.bf16 %v4788, %v4785
      %v5065 = vsel %vm1727, %v5052, 0
      %v5068 = vsel %vm1727, %v5053, 0
      %v5071 = vsel %vm1727, %v5054, 0
      %v5074 = vsel %vm1727, %v5055, 0
      %v5077 = vsel %vm1727, %v5056, 0
      %v5080 = vsel %vm1727, %v5057, 0
      %5082 = vmatprep.subr.bf16.mxu0 0
      %5083 = vmatpush1.bf16.msra.mxu0 %v5058
      %5084 = vmatprep.subr.bf16.mxu0 0
      %5085 = vmatpush1.bf16.msra.mxu0 %v5059
      %5086 = vmatprep.subr.bf16.mxu0 0
      %5087 = vmatpush1.bf16.msra.mxu0 %v5060
      %5088 = vmatprep.subr.bf16.mxu0 0
      %5089 = vmatpush1.bf16.msra.mxu0 %v5061
      %5090 = vmatprep.subr.bf16.mxu0 0
      %5091 = vmatpush1.bf16.msra.mxu0 %v5062
      %5092 = vmatprep.subr.bf16.mxu0 0
      %5093 = vmatpush1.bf16.msra.mxu0 %v5063
      %5094 = vmatprep.subr.bf16.mxu0 0
      %5095 = vmatpush1.bf16.msra.mxu0 0
      %5096 = vmatprep.subr.bf16.mxu0 0
      %5097 = vmatpush1.bf16.msra.mxu0 0
      %5098 = vmatprep.subr.bf16.mxu0 0
      %5099 = vmatpush1.bf16.msra.mxu0 0
      %5100 = vmatprep.subr.bf16.mxu0 0
      %5101 = vmatpush1.bf16.msra.mxu0 0
      %5102 = vmatprep.subr.bf16.mxu0 0
      %5103 = vmatpush1.bf16.msra.mxu0 0
      %5104 = vmatprep.subr.bf16.mxu0 0
      %5105 = vmatpush1.bf16.msra.mxu0 0
      %5106 = vmatprep.subr.bf16.mxu0 0
      %5107 = vmatpush1.bf16.msra.mxu0 0
      %5108 = vmatprep.subr.bf16.mxu0 0
      %5109 = vmatpush1.bf16.msra.mxu0 0
      %5110 = vmatprep.subr.bf16.mxu0 0
      %5111 = vmatpush1.bf16.msra.mxu0 0
      %5112 = vmatprep.subr.bf16.mxu0 0
      %5113 = vmatpush1.bf16.msra.mxu0 0
      %5114 = vmatprep.mubr.bf16.mxu0 0
      %5115 = vmatmul.mubr.bf16.gmra.mrb[0].mxu0 %v5065
      %v5116 = vpop.f32.mrb[0].mxu0
      %v5117 = vadd.f32 0.0, %v5116
      %v5118 = vpop.f32.mrb[0].mxu0
      %v5119 = vpop.f32.mrb[0].mxu0
      %v5120 = vadd.f32 0.0, %v5119
      %v5121 = vpop.f32.mrb[0].mxu0
      %5122 = vmatprep.mubr.bf16.mxu0 0
      %5123 = vmatmul.mubr.bf16.gmra.mrb[0].mxu0 %v5068
      %v5124 = vpop.f32.mrb[0].mxu0
      %v5125 = vadd.f32 0.0, %v5124
      %v5126 = vpop.f32.mrb[0].mxu0
      %v5127 = vpop.f32.mrb[0].mxu0
      %v5128 = vadd.f32 0.0, %v5127
      %v5129 = vpop.f32.mrb[0].mxu0
      %5130 = vmatprep.mubr.bf16.mxu0 0
      %5131 = vmatmul.mubr.bf16.gmra.mrb[0].mxu0 %v5071
      %v5132 = vpop.f32.mrb[0].mxu0
      %v5133 = vadd.f32 0.0, %v5132
      %v5134 = vpop.f32.mrb[0].mxu0
      %v5135 = vpop.f32.mrb[0].mxu0
      %v5136 = vadd.f32 0.0, %v5135
      %v5137 = vpop.f32.mrb[0].mxu0
      %5138 = vmatprep.mubr.bf16.mxu0 0
      %5139 = vmatmul.mubr.bf16.gmra.mrb[0].mxu0 %v5074
      %v5140 = vpop.f32.mrb[0].mxu0
      %v5141 = vadd.f32 0.0, %v5140
      %v5142 = vpop.f32.mrb[0].mxu0
      %v5143 = vpop.f32.mrb[0].mxu0
      %v5144 = vadd.f32 0.0, %v5143
      %v5145 = vpop.f32.mrb[0].mxu0
      %5146 = vmatprep.mubr.bf16.mxu0 0
      %5147 = vmatmul.mubr.bf16.gmra.mrb[0].mxu0 %v5077
      %v5148 = vpop.f32.mrb[0].mxu0
      %v5149 = vadd.f32 0.0, %v5148
      %v5150 = vpop.f32.mrb[0].mxu0
      %v5151 = vpop.f32.mrb[0].mxu0
      %v5152 = vadd.f32 0.0, %v5151
      %v5153 = vpop.f32.mrb[0].mxu0
      %5154 = vmatprep.mubr.bf16.mxu0 0
      %5155 = vmatmul.mubr.bf16.gmra.mrb[0].mxu0 %v5080
      %v5156 = vpop.f32.mrb[0].mxu0
      %v5157 = vadd.f32 0.0, %v5156
      %v5158 = vpop.f32.mrb[0].mxu0
      %v5159 = vpop.f32.mrb[0].mxu0
      %v5160 = vadd.f32 0.0, %v5159
      %v5161 = vpop.f32.mrb[0].mxu0
      %5162 = vdwg.mxu0
      %v5163 = vrcp.pop %v5018
      %v5164 = vmul.f32 %v5117, %v5163
      %v5165 = vrcp.pop %v5021
      %v5166 = vmul.f32 %v5120, %v5165
      %v5167 = vrcp.pop %v5024
      %v5168 = vmul.f32 %v5125, %v5167
      %v5169 = vrcp.pop %v5027
      %v5170 = vmul.f32 %v5128, %v5169
      %v5171 = vrcp.pop %v5030
      %v5172 = vmul.f32 %v5133, %v5171
      %v5173 = vrcp.pop %v5033
      %v5174 = vmul.f32 %v5136, %v5173
      %v5175 = vrcp.pop %v5036
      %v5176 = vmul.f32 %v5141, %v5175
      %v5177 = vrcp.pop %v5039
      %v5178 = vmul.f32 %v5144, %v5177
      %v5179 = vrcp.pop %v5042
      %v5180 = vmul.f32 %v5149, %v5179
      %v5181 = vrcp.pop %v5045
      %v5182 = vmul.f32 %v5152, %v5181
      %v5183 = vrcp.pop %v5048
      %v5184 = vmul.f32 %v5157, %v5183
      %v5185 = vrcp.pop %v5051
      %v5186 = vmul.f32 %v5160, %v5185
      %s5187 = scalar_lea.vmem %s13, 24
      %v5188 = vld [vmem:[%s5187] sm:$0xf]
      %v5189 = vld [vmem:[%s5187 + $0x4] sm:$0xf]
      %v5190 = vpack.c.bf16 %v5166, %v5164
      %v5191 = vpack.c.bf16 %v5170, %v5168
      %v5192 = vpack.c.bf16 %v5174, %v5172
      %v5193 = vpack.c.bf16 %v5178, %v5176
      %v5194 = vpack.c.bf16 %v5182, %v5180
      %v5195 = vpack.c.bf16 %v5186, %v5184
      %v5198 = vunpack.c.l.b16 %v5188
      %v5199 = vunpack.c.l.b16 %v5189
      %v5200 = vpack.c.b16 %v5199, %v5198
      %v5203 = vsel %vm1585, %v5190, 0
      %v5206 = vsel %vm1585, %v5191, 0
      %v5209 = vsel %vm1585, %v5192, 0
      %v5212 = vsel %vm1585, %v5193, 0
      %v5215 = vsel %vm1585, %v5194, 0
      %v5218 = vsel %vm1585, %v5195, 0
      %5220 = vmatprep.subr.bf16.mxu0 0
      %5221 = vmatpush1.bf16.msra.mxu0 %v5200
      %5222 = vmatprep.subr.bf16.mxu0 0
      %5223 = vmatpush1.bf16.msra.mxu0 0
      %5224 = vmatprep.subr.bf16.mxu0 0
      %5225 = vmatpush1.bf16.msra.mxu0 0
      %5226 = vmatprep.subr.bf16.mxu0 0
      %5227 = vmatpush1.bf16.msra.mxu0 0
      %5228 = vmatprep.subr.bf16.mxu0 0
      %5229 = vmatpush1.bf16.msra.mxu0 0
      %5230 = vmatprep.subr.bf16.mxu0 0
      %5231 = vmatpush1.bf16.msra.mxu0 0
      %5232 = vmatprep.subr.bf16.mxu0 0
      %5233 = vmatpush1.bf16.msra.mxu0 0
      %5234 = vmatprep.subr.bf16.mxu0 0
      %5235 = vmatpush1.bf16.msra.mxu0 0
      %5236 = vmatprep.subr.bf16.mxu0 0
      %5237 = vmatpush1.bf16.msra.mxu0 0
      %5238 = vmatprep.subr.bf16.mxu0 0
      %5239 = vmatpush1.bf16.msra.mxu0 0
      %5240 = vmatprep.subr.bf16.mxu0 0
      %5241 = vmatpush1.bf16.msra.mxu0 0
      %5242 = vmatprep.subr.bf16.mxu0 0
      %5243 = vmatpush1.bf16.msra.mxu0 0
      %5244 = vmatprep.subr.bf16.mxu0 0
      %5245 = vmatpush1.bf16.msra.mxu0 0
      %5246 = vmatprep.subr.bf16.mxu0 0
      %5247 = vmatpush1.bf16.msra.mxu0 0
      %5248 = vmatprep.subr.bf16.mxu0 0
      %5249 = vmatpush1.bf16.msra.mxu0 0
      %5250 = vmatprep.subr.bf16.mxu0 0
      %5251 = vmatpush1.bf16.msra.mxu0 0
      %5252 = vmatprep.mubr.bf16.mxu0 0
      %5253 = vmatmul.mubr.bf16.gmra.mrb[0].mxu0 %v5203
      %v5254 = vpop.f32.mrb[0].mxu0
      %v5255 = vadd.f32 0.0, %v5254
      %v5256 = vpop.f32.mrb[0].mxu0
      %v5257 = vpop.f32.mrb[0].mxu0
      %v5258 = vadd.f32 0.0, %v5257
      %v5259 = vpop.f32.mrb[0].mxu0
      %5260 = vmatprep.mubr.bf16.mxu0 0
      %5261 = vmatmul.mubr.bf16.gmra.mrb[0].mxu0 %v5206
      %v5262 = vpop.f32.mrb[0].mxu0
      %v5263 = vadd.f32 0.0, %v5262
      %v5264 = vpop.f32.mrb[0].mxu0
      %v5265 = vpop.f32.mrb[0].mxu0
      %v5266 = vadd.f32 0.0, %v5265
      %v5267 = vpop.f32.mrb[0].mxu0
      %5268 = vmatprep.mubr.bf16.mxu0 0
      %5269 = vmatmul.mubr.bf16.gmra.mrb[0].mxu0 %v5209
      %v5270 = vpop.f32.mrb[0].mxu0
      %v5271 = vadd.f32 0.0, %v5270
      %v5272 = vpop.f32.mrb[0].mxu0
      %v5273 = vpop.f32.mrb[0].mxu0
      %v5274 = vadd.f32 0.0, %v5273
      %v5275 = vpop.f32.mrb[0].mxu0
      %5276 = vmatprep.mubr.bf16.mxu0 0
      %5277 = vmatmul.mubr.bf16.gmra.mrb[0].mxu0 %v5212
      %v5278 = vpop.f32.mrb[0].mxu0
      %v5279 = vadd.f32 0.0, %v5278
      %v5280 = vpop.f32.mrb[0].mxu0
      %v5281 = vpop.f32.mrb[0].mxu0
      %v5282 = vadd.f32 0.0, %v5281
      %v5283 = vpop.f32.mrb[0].mxu0
      %5284 = vmatprep.mubr.bf16.mxu0 0
      %5285 = vmatmul.mubr.bf16.gmra.mrb[0].mxu0 %v5215
      %v5286 = vpop.f32.mrb[0].mxu0
      %v5287 = vadd.f32 0.0, %v5286
      %v5288 = vpop.f32.mrb[0].mxu0
      %v5289 = vpop.f32.mrb[0].mxu0
      %v5290 = vadd.f32 0.0, %v5289
      %v5291 = vpop.f32.mrb[0].mxu0
      %5292 = vmatprep.mubr.bf16.mxu0 0
      %5293 = vmatmul.mubr.bf16.gmra.mrb[0].mxu0 %v5218
      %v5294 = vpop.f32.mrb[0].mxu0
      %v5295 = vadd.f32 0.0, %v5294
      %v5296 = vpop.f32.mrb[0].mxu0
      %v5297 = vpop.f32.mrb[0].mxu0
      %v5298 = vadd.f32 0.0, %v5297
      %v5299 = vpop.f32.mrb[0].mxu0
      %5300 = vdwg.mxu0
      %v5303 = vunpack.c.l.b16 %v4465
      %v5304 = vunpack.c.l.b16 %v4466
      %v5305 = vpack.c.b16 %v5304, %v5303
      %v5308 = vsel %vm1585, %v4467, 0
      %v5311 = vsel %vm1585, %v4468, 0
      %v5314 = vsel %vm1585, %v4469, 0
      %v5317 = vsel %vm1585, %v4470, 0
      %v5320 = vsel %vm1585, %v4471, 0
      %v5323 = vsel %vm1585, %v4472, 0
      %5325 = vmatprep.subr.bf16.mxu0 0
      %5326 = vmatpush1.bf16.msra.mxu0 %v5305
      %5327 = vmatprep.subr.bf16.mxu0 0
      %5328 = vmatpush1.bf16.msra.mxu0 0
      %5329 = vmatprep.subr.bf16.mxu0 0
      %5330 = vmatpush1.bf16.msra.mxu0 0
      %5331 = vmatprep.subr.bf16.mxu0 0
      %5332 = vmatpush1.bf16.msra.mxu0 0
      %5333 = vmatprep.subr.bf16.mxu0 0
      %5334 = vmatpush1.bf16.msra.mxu0 0
      %5335 = vmatprep.subr.bf16.mxu0 0
      %5336 = vmatpush1.bf16.msra.mxu0 0
      %5337 = vmatprep.subr.bf16.mxu0 0
      %5338 = vmatpush1.bf16.msra.mxu0 0
      %5339 = vmatprep.subr.bf16.mxu0 0
      %5340 = vmatpush1.bf16.msra.mxu0 0
      %5341 = vmatprep.subr.bf16.mxu0 0
      %5342 = vmatpush1.bf16.msra.mxu0 0
      %5343 = vmatprep.subr.bf16.mxu0 0
      %5344 = vmatpush1.bf16.msra.mxu0 0
      %5345 = vmatprep.subr.bf16.mxu0 0
      %5346 = vmatpush1.bf16.msra.mxu0 0
      %5347 = vmatprep.subr.bf16.mxu0 0
      %5348 = vmatpush1.bf16.msra.mxu0 0
      %5349 = vmatprep.subr.bf16.mxu0 0
      %5350 = vmatpush1.bf16.msra.mxu0 0
      %5351 = vmatprep.subr.bf16.mxu0 0
      %5352 = vmatpush1.bf16.msra.mxu0 0
      %5353 = vmatprep.subr.bf16.mxu0 0
      %5354 = vmatpush1.bf16.msra.mxu0 0
      %5355 = vmatprep.subr.bf16.mxu0 0
      %5356 = vmatpush1.bf16.msra.mxu0 0
      %5357 = vmatprep.mubr.bf16.mxu0 0
      %5358 = vmatmul.mubr.bf16.gmra.mrb[0].mxu0 %v5308
      %v5359 = vpop.f32.mrb[0].mxu0
      %v5360 = vadd.f32 %v5255, %v5359
      %v5361 = vpop.f32.mrb[0].mxu0
      %v5362 = vpop.f32.mrb[0].mxu0
      %v5363 = vadd.f32 %v5258, %v5362
      %v5364 = vpop.f32.mrb[0].mxu0
      %5365 = vmatprep.mubr.bf16.mxu0 0
      %5366 = vmatmul.mubr.bf16.gmra.mrb[0].mxu0 %v5311
      %v5367 = vpop.f32.mrb[0].mxu0
      %v5368 = vadd.f32 %v5263, %v5367
      %v5369 = vpop.f32.mrb[0].mxu0
      %v5370 = vpop.f32.mrb[0].mxu0
      %v5371 = vadd.f32 %v5266, %v5370
      %v5372 = vpop.f32.mrb[0].mxu0
      %5373 = vmatprep.mubr.bf16.mxu0 0
      %5374 = vmatmul.mubr.bf16.gmra.mrb[0].mxu0 %v5314
      %v5375 = vpop.f32.mrb[0].mxu0
      %v5376 = vadd.f32 %v5271, %v5375
      %v5377 = vpop.f32.mrb[0].mxu0
      %v5378 = vpop.f32.mrb[0].mxu0
      %v5379 = vadd.f32 %v5274, %v5378
      %v5380 = vpop.f32.mrb[0].mxu0
      %5381 = vmatprep.mubr.bf16.mxu0 0
      %5382 = vmatmul.mubr.bf16.gmra.mrb[0].mxu0 %v5317
      %v5383 = vpop.f32.mrb[0].mxu0
      %v5384 = vadd.f32 %v5279, %v5383
      %v5385 = vpop.f32.mrb[0].mxu0
      %v5386 = vpop.f32.mrb[0].mxu0
      %v5387 = vadd.f32 %v5282, %v5386
      %v5388 = vpop.f32.mrb[0].mxu0
      %5389 = vmatprep.mubr.bf16.mxu0 0
      %5390 = vmatmul.mubr.bf16.gmra.mrb[0].mxu0 %v5320
      %v5391 = vpop.f32.mrb[0].mxu0
      %v5392 = vadd.f32 %v5287, %v5391
      %v5393 = vpop.f32.mrb[0].mxu0
      %v5394 = vpop.f32.mrb[0].mxu0
      %v5395 = vadd.f32 %v5290, %v5394
      %v5396 = vpop.f32.mrb[0].mxu0
      %5397 = vmatprep.mubr.bf16.mxu0 0
      %5398 = vmatmul.mubr.bf16.gmra.mrb[0].mxu0 %v5323
      %v5399 = vpop.f32.mrb[0].mxu0
      %v5400 = vadd.f32 %v5295, %v5399
      %v5401 = vpop.f32.mrb[0].mxu0
      %v5402 = vpop.f32.mrb[0].mxu0
      %v5403 = vadd.f32 %v5298, %v5402
      %v5404 = vpop.f32.mrb[0].mxu0
      %5405 = vdwg.mxu0
      %v5406 = vadd.f32 %v3518, %v5360
      %v5407 = vadd.f32 %v3519, %v5363
      %v5408 = vadd.f32 %v3520, %v5368
      %v5409 = vadd.f32 %v3521, %v5371
      %v5410 = vadd.f32 %v3522, %v5376
      %v5411 = vadd.f32 %v3523, %v5379
      %v5412 = vadd.f32 %v3524, %v5384
      %v5413 = vadd.f32 %v3525, %v5387
      %v5414 = vadd.f32 %v3526, %v5392
      %v5415 = vadd.f32 %v3527, %v5395
      %v5416 = vadd.f32 %v3528, %v5400
      %v5417 = vadd.f32 %v3529, %v5403
      %s5418 = scalar_lea.vmem %s14, 1
      %v5419 = vld [vmem:[%s5418] sm:$0x1]
      %v5421 = vlaneseq
      %v5422 = vshrl.u32 %v5421, 7
      %v5423 = vsub.s32 0, %v5422
      %v5424 = vrot.slane %v5419, %v5423
      %v5426 = vadd.f32 %v5406, %v5424
      %v5427 = vadd.f32 %v5407, %v5424
      %v5428 = vadd.f32 %v5408, %v5424
      %v5429 = vadd.f32 %v5409, %v5424
      %v5430 = vadd.f32 %v5410, %v5424
      %v5431 = vadd.f32 %v5411, %v5424
      %v5432 = vadd.f32 %v5412, %v5424
      %v5433 = vadd.f32 %v5413, %v5424
      %v5434 = vadd.f32 %v5414, %v5424
      %v5435 = vadd.f32 %v5415, %v5424
      %v5436 = vadd.f32 %v5416, %v5424
      %v5437 = vadd.f32 %v5417, %v5424
      %s5438 = scalar_lea.vmem %s15, 1
      %v5439 = vld [vmem:[%s5438] sm:$0x1]
      %s5440 = scalar_lea.vmem %s16, 1
      %v5441 = vld [vmem:[%s5440] sm:$0x1]
      %v5442 = vsel %vm809, %v5426, 0.0
      %5443 = vadd.xlane.f32.xlu0 %v5442
      %v5444 = vpop.xlane.xlu0 %5443
      %v5445 = vsel %vm809, %v5427, 0.0
      %5446 = vadd.xlane.f32.xlu0 %v5445
      %v5447 = vpop.xlane.xlu0 %5446
      %v5448 = vsel %vm809, %v5428, 0.0
      %5449 = vadd.xlane.f32.xlu0 %v5448
      %v5450 = vpop.xlane.xlu0 %5449
      %v5451 = vsel %vm809, %v5429, 0.0
      %5452 = vadd.xlane.f32.xlu0 %v5451
      %v5453 = vpop.xlane.xlu0 %5452
      %v5454 = vsel %vm809, %v5430, 0.0
      %5455 = vadd.xlane.f32.xlu0 %v5454
      %v5456 = vpop.xlane.xlu0 %5455
      %v5457 = vsel %vm809, %v5431, 0.0
      %5458 = vadd.xlane.f32.xlu0 %v5457
      %v5459 = vpop.xlane.xlu0 %5458
      %v5460 = vsel %vm809, %v5432, 0.0
      %5461 = vadd.xlane.f32.xlu0 %v5460
      %v5462 = vpop.xlane.xlu0 %5461
      %v5463 = vsel %vm809, %v5433, 0.0
      %5464 = vadd.xlane.f32.xlu0 %v5463
      %v5465 = vpop.xlane.xlu0 %5464
      %v5466 = vsel %vm809, %v5434, 0.0
      %5467 = vadd.xlane.f32.xlu0 %v5466
      %v5468 = vpop.xlane.xlu0 %5467
      %v5469 = vsel %vm809, %v5435, 0.0
      %5470 = vadd.xlane.f32.xlu0 %v5469
      %v5471 = vpop.xlane.xlu0 %5470
      %v5472 = vsel %vm809, %v5436, 0.0
      %5473 = vadd.xlane.f32.xlu0 %v5472
      %v5474 = vpop.xlane.xlu0 %5473
      %v5475 = vsel %vm809, %v5437, 0.0
      %5476 = vadd.xlane.f32.xlu0 %v5475
      %v5477 = vpop.xlane.xlu0 %5476
      %v5478 = vmul.f32 %v5444, %v846
      %v5479 = vmul.f32 %v5447, %v846
      %v5480 = vmul.f32 %v5450, %v846
      %v5481 = vmul.f32 %v5453, %v846
      %v5482 = vmul.f32 %v5456, %v846
      %v5483 = vmul.f32 %v5459, %v846
      %v5484 = vmul.f32 %v5462, %v846
      %v5485 = vmul.f32 %v5465, %v846
      %v5486 = vmul.f32 %v5468, %v846
      %v5487 = vmul.f32 %v5471, %v846
      %v5488 = vmul.f32 %v5474, %v846
      %v5489 = vmul.f32 %v5477, %v846
      %v5490 = vsub.f32 %v5426, %v5478
      %v5491 = vsub.f32 %v5427, %v5479
      %v5492 = vsub.f32 %v5428, %v5480
      %v5493 = vsub.f32 %v5429, %v5481
      %v5494 = vsub.f32 %v5430, %v5482
      %v5495 = vsub.f32 %v5431, %v5483
      %v5496 = vsub.f32 %v5432, %v5484
      %v5497 = vsub.f32 %v5433, %v5485
      %v5498 = vsub.f32 %v5434, %v5486
      %v5499 = vsub.f32 %v5435, %v5487
      %v5500 = vsub.f32 %v5436, %v5488
      %v5501 = vsub.f32 %v5437, %v5489
      %v5502 = vmul.f32 %v5490, %v5490
      %v5503 = vmul.f32 %v5491, %v5491
      %v5504 = vmul.f32 %v5492, %v5492
      %v5505 = vmul.f32 %v5493, %v5493
      %v5506 = vmul.f32 %v5494, %v5494
      %v5507 = vmul.f32 %v5495, %v5495
      %v5508 = vmul.f32 %v5496, %v5496
      %v5509 = vmul.f32 %v5497, %v5497
      %v5510 = vmul.f32 %v5498, %v5498
      %v5511 = vmul.f32 %v5499, %v5499
      %v5512 = vmul.f32 %v5500, %v5500
      %v5513 = vmul.f32 %v5501, %v5501
      %v5514 = vsel %vm809, %v5502, 0.0
      %5515 = vadd.xlane.f32.xlu0 %v5514
      %v5516 = vpop.xlane.xlu0 %5515
      %v5517 = vsel %vm809, %v5503, 0.0
      %5518 = vadd.xlane.f32.xlu0 %v5517
      %v5519 = vpop.xlane.xlu0 %5518
      %v5520 = vsel %vm809, %v5504, 0.0
      %5521 = vadd.xlane.f32.xlu0 %v5520
      %v5522 = vpop.xlane.xlu0 %5521
      %v5523 = vsel %vm809, %v5505, 0.0
      %5524 = vadd.xlane.f32.xlu0 %v5523
      %v5525 = vpop.xlane.xlu0 %5524
      %v5526 = vsel %vm809, %v5506, 0.0
      %5527 = vadd.xlane.f32.xlu0 %v5526
      %v5528 = vpop.xlane.xlu0 %5527
      %v5529 = vsel %vm809, %v5507, 0.0
      %5530 = vadd.xlane.f32.xlu0 %v5529
      %v5531 = vpop.xlane.xlu0 %5530
      %v5532 = vsel %vm809, %v5508, 0.0
      %5533 = vadd.xlane.f32.xlu0 %v5532
      %v5534 = vpop.xlane.xlu0 %5533
      %v5535 = vsel %vm809, %v5509, 0.0
      %5536 = vadd.xlane.f32.xlu0 %v5535
      %v5537 = vpop.xlane.xlu0 %5536
      %v5538 = vsel %vm809, %v5510, 0.0
      %5539 = vadd.xlane.f32.xlu0 %v5538
      %v5540 = vpop.xlane.xlu0 %5539
      %v5541 = vsel %vm809, %v5511, 0.0
      %5542 = vadd.xlane.f32.xlu0 %v5541
      %v5543 = vpop.xlane.xlu0 %5542
      %v5544 = vsel %vm809, %v5512, 0.0
      %5545 = vadd.xlane.f32.xlu0 %v5544
      %v5546 = vpop.xlane.xlu0 %5545
      %v5547 = vsel %vm809, %v5513, 0.0
      %5548 = vadd.xlane.f32.xlu0 %v5547
      %v5549 = vpop.xlane.xlu0 %5548
      %v5550 = vmul.f32 %v5516, %v846
      %v5551 = vmul.f32 %v5519, %v846
      %v5552 = vmul.f32 %v5522, %v846
      %v5553 = vmul.f32 %v5525, %v846
      %v5554 = vmul.f32 %v5528, %v846
      %v5555 = vmul.f32 %v5531, %v846
      %v5556 = vmul.f32 %v5534, %v846
      %v5557 = vmul.f32 %v5537, %v846
      %v5558 = vmul.f32 %v5540, %v846
      %v5559 = vmul.f32 %v5543, %v846
      %v5560 = vmul.f32 %v5546, %v846
      %v5561 = vmul.f32 %v5549, %v846
      %v5562 = vadd.f32 %v5550, 1e-05
      %v5563 = vadd.f32 %v5551, 1e-05
      %v5564 = vadd.f32 %v5552, 1e-05
      %v5565 = vadd.f32 %v5553, 1e-05
      %v5566 = vadd.f32 %v5554, 1e-05
      %v5567 = vadd.f32 %v5555, 1e-05
      %v5568 = vadd.f32 %v5556, 1e-05
      %v5569 = vadd.f32 %v5557, 1e-05
      %v5570 = vadd.f32 %v5558, 1e-05
      %v5571 = vadd.f32 %v5559, 1e-05
      %v5572 = vadd.f32 %v5560, 1e-05
      %v5573 = vadd.f32 %v5561, 1e-05
      %v5574 = vrsqrt.pop %v5562
      %v5575 = vrsqrt.pop %v5563
      %v5576 = vrsqrt.pop %v5564
      %v5577 = vrsqrt.pop %v5565
      %v5578 = vrsqrt.pop %v5566
      %v5579 = vrsqrt.pop %v5567
      %v5580 = vrsqrt.pop %v5568
      %v5581 = vrsqrt.pop %v5569
      %v5582 = vrsqrt.pop %v5570
      %v5583 = vrsqrt.pop %v5571
      %v5584 = vrsqrt.pop %v5572
      %v5585 = vrsqrt.pop %v5573
      %v5586 = vmul.f32 %v5490, %v5574
      %v5587 = vmul.f32 %v5491, %v5575
      %v5588 = vmul.f32 %v5492, %v5576
      %v5589 = vmul.f32 %v5493, %v5577
      %v5590 = vmul.f32 %v5494, %v5578
      %v5591 = vmul.f32 %v5495, %v5579
      %v5592 = vmul.f32 %v5496, %v5580
      %v5593 = vmul.f32 %v5497, %v5581
      %v5594 = vmul.f32 %v5498, %v5582
      %v5595 = vmul.f32 %v5499, %v5583
      %v5596 = vmul.f32 %v5500, %v5584
      %v5597 = vmul.f32 %v5501, %v5585
      %v5599 = vlaneseq
      %v5600 = vshrl.u32 %v5599, 7
      %v5601 = vsub.s32 0, %v5600
      %v5602 = vrot.slane %v5439, %v5601
      %v5604 = vmul.f32 %v5586, %v5602
      %v5605 = vmul.f32 %v5587, %v5602
      %v5606 = vmul.f32 %v5588, %v5602
      %v5607 = vmul.f32 %v5589, %v5602
      %v5608 = vmul.f32 %v5590, %v5602
      %v5609 = vmul.f32 %v5591, %v5602
      %v5610 = vmul.f32 %v5592, %v5602
      %v5611 = vmul.f32 %v5593, %v5602
      %v5612 = vmul.f32 %v5594, %v5602
      %v5613 = vmul.f32 %v5595, %v5602
      %v5614 = vmul.f32 %v5596, %v5602
      %v5615 = vmul.f32 %v5597, %v5602
      %v5617 = vlaneseq
      %v5618 = vshrl.u32 %v5617, 7
      %v5619 = vsub.s32 0, %v5618
      %v5620 = vrot.slane %v5441, %v5619
      %v5622 = vadd.f32 %v5604, %v5620
      %v5623 = vadd.f32 %v5605, %v5620
      %v5624 = vadd.f32 %v5606, %v5620
      %v5625 = vadd.f32 %v5607, %v5620
      %v5626 = vadd.f32 %v5608, %v5620
      %v5627 = vadd.f32 %v5609, %v5620
      %v5628 = vadd.f32 %v5610, %v5620
      %v5629 = vadd.f32 %v5611, %v5620
      %v5630 = vadd.f32 %v5612, %v5620
      %v5631 = vadd.f32 %v5613, %v5620
      %v5632 = vadd.f32 %v5614, %v5620
      %v5633 = vadd.f32 %v5615, %v5620
      %s5634 = scalar_lea.vmem %s17, 16
      %v5635 = vld [vmem:[%s5634] sm:$0xf]
      %v5636 = vld [vmem:[%s5634 + $0x4] sm:$0xf]
      %v5637 = vld [vmem:[%s5634 + $0x8] sm:$0xf]
      %v5638 = vld [vmem:[%s5634 + $0xc] sm:$0xf]
      %v5639 = vpack.c.bf16 %v5623, %v5622
      %v5640 = vpack.c.bf16 %v5625, %v5624
      %v5641 = vpack.c.bf16 %v5627, %v5626
      %v5642 = vpack.c.bf16 %v5629, %v5628
      %v5643 = vpack.c.bf16 %v5631, %v5630
      %v5644 = vpack.c.bf16 %v5633, %v5632
      %s5645 = scalar_lea.vmem %s18, 1
      %v5646 = vld [vmem:[%s5645] sm:$0x1]
      %v5648 = vlaneseq
      %v5649 = vshrl.u32 %v5648, 7
      %v5650 = vsub.s32 0, %v5649
      %v5651 = vrot.slane %v5646, %v5650
      %v5657 = vunpack.c.l.b16 %v5635
      %v5658 = vunpack.c.l.b16 %v5636
      %v5659 = vunpack.c.l.b16 %v5637
      %v5660 = vunpack.c.l.b16 %v5638
      %v5661 = vpack.c.b16 %v5658, %v5657
      %v5662 = vpack.c.b16 %v5660, %v5659
      %v5666 = vsel %vm809, %v5639, 0
      %v5669 = vsel %vm809, %v5640, 0
      %v5672 = vsel %vm809, %v5641, 0
      %v5675 = vsel %vm809, %v5642, 0
      %v5678 = vsel %vm809, %v5643, 0
      %v5681 = vsel %vm809, %v5644, 0
      %5683 = vmatprep.subr.bf16.mxu0 0
      %5684 = vmatpush1.bf16.msra.mxu0 %v5661
      %5685 = vmatprep.subr.bf16.mxu0 0
      %5686 = vmatpush1.bf16.msra.mxu0 %v5662
      %5687 = vmatprep.subr.bf16.mxu0 0
      %5688 = vmatpush1.bf16.msra.mxu0 0
      %5689 = vmatprep.subr.bf16.mxu0 0
      %5690 = vmatpush1.bf16.msra.mxu0 0
      %5691 = vmatprep.subr.bf16.mxu0 0
      %5692 = vmatpush1.bf16.msra.mxu0 0
      %5693 = vmatprep.subr.bf16.mxu0 0
      %5694 = vmatpush1.bf16.msra.mxu0 0
      %5695 = vmatprep.subr.bf16.mxu0 0
      %5696 = vmatpush1.bf16.msra.mxu0 0
      %5697 = vmatprep.subr.bf16.mxu0 0
      %5698 = vmatpush1.bf16.msra.mxu0 0
      %5699 = vmatprep.subr.bf16.mxu0 0
      %5700 = vmatpush1.bf16.msra.mxu0 0
      %5701 = vmatprep.subr.bf16.mxu0 0
      %5702 = vmatpush1.bf16.msra.mxu0 0
      %5703 = vmatprep.subr.bf16.mxu0 0
      %5704 = vmatpush1.bf16.msra.mxu0 0
      %5705 = vmatprep.subr.bf16.mxu0 0
      %5706 = vmatpush1.bf16.msra.mxu0 0
      %5707 = vmatprep.subr.bf16.mxu0 0
      %5708 = vmatpush1.bf16.msra.mxu0 0
      %5709 = vmatprep.subr.bf16.mxu0 0
      %5710 = vmatpush1.bf16.msra.mxu0 0
      %5711 = vmatprep.subr.bf16.mxu0 0
      %5712 = vmatpush1.bf16.msra.mxu0 0
      %5713 = vmatprep.subr.bf16.mxu0 0
      %5714 = vmatpush1.bf16.msra.mxu0 0
      %5715 = vmatprep.mubr.bf16.mxu0 0
      %5716 = vmatmul.mubr.bf16.gmra.mrb[0].mxu0 %v5666
      %v5717 = vpop.f32.mrb[0].mxu0
      %v5718 = vadd.f32 %v5651, %v5717
      %v5719 = vpop.f32.mrb[0].mxu0
      %v5720 = vpop.f32.mrb[0].mxu0
      %v5721 = vadd.f32 %v5651, %v5720
      %v5722 = vpop.f32.mrb[0].mxu0
      %5723 = vmatprep.mubr.bf16.mxu0 0
      %5724 = vmatmul.mubr.bf16.gmra.mrb[0].mxu0 %v5669
      %v5725 = vpop.f32.mrb[0].mxu0
      %v5726 = vadd.f32 %v5651, %v5725
      %v5727 = vpop.f32.mrb[0].mxu0
      %v5728 = vpop.f32.mrb[0].mxu0
      %v5729 = vadd.f32 %v5651, %v5728
      %v5730 = vpop.f32.mrb[0].mxu0
      %5731 = vmatprep.mubr.bf16.mxu0 0
      %5732 = vmatmul.mubr.bf16.gmra.mrb[0].mxu0 %v5672
      %v5733 = vpop.f32.mrb[0].mxu0
      %v5734 = vadd.f32 %v5651, %v5733
      %v5735 = vpop.f32.mrb[0].mxu0
      %v5736 = vpop.f32.mrb[0].mxu0
      %v5737 = vadd.f32 %v5651, %v5736
      %v5738 = vpop.f32.mrb[0].mxu0
      %5739 = vmatprep.mubr.bf16.mxu0 0
      %5740 = vmatmul.mubr.bf16.gmra.mrb[0].mxu0 %v5675
      %v5741 = vpop.f32.mrb[0].mxu0
      %v5742 = vadd.f32 %v5651, %v5741
      %v5743 = vpop.f32.mrb[0].mxu0
      %v5744 = vpop.f32.mrb[0].mxu0
      %v5745 = vadd.f32 %v5651, %v5744
      %v5746 = vpop.f32.mrb[0].mxu0
      %5747 = vmatprep.mubr.bf16.mxu0 0
      %5748 = vmatmul.mubr.bf16.gmra.mrb[0].mxu0 %v5678
      %v5749 = vpop.f32.mrb[0].mxu0
      %v5750 = vadd.f32 %v5651, %v5749
      %v5751 = vpop.f32.mrb[0].mxu0
      %v5752 = vpop.f32.mrb[0].mxu0
      %v5753 = vadd.f32 %v5651, %v5752
      %v5754 = vpop.f32.mrb[0].mxu0
      %5755 = vmatprep.mubr.bf16.mxu0 0
      %5756 = vmatmul.mubr.bf16.gmra.mrb[0].mxu0 %v5681
      %v5757 = vpop.f32.mrb[0].mxu0
      %v5758 = vadd.f32 %v5651, %v5757
      %v5759 = vpop.f32.mrb[0].mxu0
      %v5760 = vpop.f32.mrb[0].mxu0
      %v5761 = vadd.f32 %v5651, %v5760
      %v5762 = vpop.f32.mrb[0].mxu0
      %5763 = vdwg.mxu0
      %v5764 = vmul.f32 %v5718, %v5718
      %v5765 = vmul.f32 %v5721, %v5721
      %v5766 = vmul.f32 %v5726, %v5726
      %v5767 = vmul.f32 %v5729, %v5729
      %v5768 = vmul.f32 %v5734, %v5734
      %v5769 = vmul.f32 %v5737, %v5737
      %v5770 = vmul.f32 %v5742, %v5742
      %v5771 = vmul.f32 %v5745, %v5745
      %v5772 = vmul.f32 %v5750, %v5750
      %v5773 = vmul.f32 %v5753, %v5753
      %v5774 = vmul.f32 %v5758, %v5758
      %v5775 = vmul.f32 %v5761, %v5761
      %v5776 = vmul.f32 %v5718, %v5764
      %v5777 = vmul.f32 %v5721, %v5765
      %v5778 = vmul.f32 %v5726, %v5766
      %v5779 = vmul.f32 %v5729, %v5767
      %v5780 = vmul.f32 %v5734, %v5768
      %v5781 = vmul.f32 %v5737, %v5769
      %v5782 = vmul.f32 %v5742, %v5770
      %v5783 = vmul.f32 %v5745, %v5771
      %v5784 = vmul.f32 %v5750, %v5772
      %v5785 = vmul.f32 %v5753, %v5773
      %v5786 = vmul.f32 %v5758, %v5774
      %v5787 = vmul.f32 %v5761, %v5775
      %v5788 = vmul.f32 %v5776, 0.044715
      %v5789 = vmul.f32 %v5777, 0.044715
      %v5790 = vmul.f32 %v5778, 0.044715
      %v5791 = vmul.f32 %v5779, 0.044715
      %v5792 = vmul.f32 %v5780, 0.044715
      %v5793 = vmul.f32 %v5781, 0.044715
      %v5794 = vmul.f32 %v5782, 0.044715
      %v5795 = vmul.f32 %v5783, 0.044715
      %v5796 = vmul.f32 %v5784, 0.044715
      %v5797 = vmul.f32 %v5785, 0.044715
      %v5798 = vmul.f32 %v5786, 0.044715
      %v5799 = vmul.f32 %v5787, 0.044715
      %v5800 = vadd.f32 %v5718, %v5788
      %v5801 = vadd.f32 %v5721, %v5789
      %v5802 = vadd.f32 %v5726, %v5790
      %v5803 = vadd.f32 %v5729, %v5791
      %v5804 = vadd.f32 %v5734, %v5792
      %v5805 = vadd.f32 %v5737, %v5793
      %v5806 = vadd.f32 %v5742, %v5794
      %v5807 = vadd.f32 %v5745, %v5795
      %v5808 = vadd.f32 %v5750, %v5796
      %v5809 = vadd.f32 %v5753, %v5797
      %v5810 = vadd.f32 %v5758, %v5798
      %v5811 = vadd.f32 %v5761, %v5799
      %v5812 = vmul.f32 %v5800, 0.7978846
      %v5813 = vmul.f32 %v5801, 0.7978846
      %v5814 = vmul.f32 %v5802, 0.7978846
      %v5815 = vmul.f32 %v5803, 0.7978846
      %v5816 = vmul.f32 %v5804, 0.7978846
      %v5817 = vmul.f32 %v5805, 0.7978846
      %v5818 = vmul.f32 %v5806, 0.7978846
      %v5819 = vmul.f32 %v5807, 0.7978846
      %v5820 = vmul.f32 %v5808, 0.7978846
      %v5821 = vmul.f32 %v5809, 0.7978846
      %v5822 = vmul.f32 %v5810, 0.7978846
      %v5823 = vmul.f32 %v5811, 0.7978846
      %v5824 = vtanh.pop %v5812
      %v5825 = vtanh.pop %v5813
      %v5826 = vtanh.pop %v5814
      %v5827 = vtanh.pop %v5815
      %v5828 = vtanh.pop %v5816
      %v5829 = vtanh.pop %v5817
      %v5830 = vtanh.pop %v5818
      %v5831 = vtanh.pop %v5819
      %v5832 = vtanh.pop %v5820
      %v5833 = vtanh.pop %v5821
      %v5834 = vtanh.pop %v5822
      %v5835 = vtanh.pop %v5823
      %v5836 = vadd.f32 %v5824, 1.0
      %v5837 = vadd.f32 %v5825, 1.0
      %v5838 = vadd.f32 %v5826, 1.0
      %v5839 = vadd.f32 %v5827, 1.0
      %v5840 = vadd.f32 %v5828, 1.0
      %v5841 = vadd.f32 %v5829, 1.0
      %v5842 = vadd.f32 %v5830, 1.0
      %v5843 = vadd.f32 %v5831, 1.0
      %v5844 = vadd.f32 %v5832, 1.0
      %v5845 = vadd.f32 %v5833, 1.0
      %v5846 = vadd.f32 %v5834, 1.0
      %v5847 = vadd.f32 %v5835, 1.0
      %v5848 = vmul.f32 %v5836, 0.5
      %v5849 = vmul.f32 %v5837, 0.5
      %v5850 = vmul.f32 %v5838, 0.5
      %v5851 = vmul.f32 %v5839, 0.5
      %v5852 = vmul.f32 %v5840, 0.5
      %v5853 = vmul.f32 %v5841, 0.5
      %v5854 = vmul.f32 %v5842, 0.5
      %v5855 = vmul.f32 %v5843, 0.5
      %v5856 = vmul.f32 %v5844, 0.5
      %v5857 = vmul.f32 %v5845, 0.5
      %v5858 = vmul.f32 %v5846, 0.5
      %v5859 = vmul.f32 %v5847, 0.5
      %v5860 = vmul.f32 %v5718, %v5848
      %v5861 = vmul.f32 %v5721, %v5849
      %v5862 = vmul.f32 %v5726, %v5850
      %v5863 = vmul.f32 %v5729, %v5851
      %v5864 = vmul.f32 %v5734, %v5852
      %v5865 = vmul.f32 %v5737, %v5853
      %v5866 = vmul.f32 %v5742, %v5854
      %v5867 = vmul.f32 %v5745, %v5855
      %v5868 = vmul.f32 %v5750, %v5856
      %v5869 = vmul.f32 %v5753, %v5857
      %v5870 = vmul.f32 %v5758, %v5858
      %v5871 = vmul.f32 %v5761, %v5859
      %s5872 = scalar_lea.vmem %s19, 32
      %v5873 = vld [vmem:[%s5872] sm:$0xf]
      %v5874 = vld [vmem:[%s5872 + $0x4] sm:$0xf]
      %v5875 = vld [vmem:[%s5872 + $0x8] sm:$0xf]
      %v5876 = vld [vmem:[%s5872 + $0xc] sm:$0xf]
      %v5877 = vld [vmem:[%s5872 + $0x10] sm:$0xf]
      %v5878 = vld [vmem:[%s5872 + $0x14] sm:$0xf]
      %v5879 = vld [vmem:[%s5872 + $0x18] sm:$0xf]
      %v5880 = vld [vmem:[%s5872 + $0x1c] sm:$0xf]
      %v5881 = vpack.c.bf16 %v5861, %v5860
      %v5882 = vpack.c.bf16 %v5863, %v5862
      %v5883 = vpack.c.bf16 %v5865, %v5864
      %v5884 = vpack.c.bf16 %v5867, %v5866
      %v5885 = vpack.c.bf16 %v5869, %v5868
      %v5886 = vpack.c.bf16 %v5871, %v5870
      %s5887 = scalar_lea.vmem %s20, 1
      %v5888 = vld [vmem:[%s5887] sm:$0x1]
      %v5890 = vlaneseq
      %v5891 = vshrl.u32 %v5890, 7
      %v5892 = vsub.s32 0, %v5891
      %v5893 = vrot.slane %v5888, %v5892
      %v5903 = vunpack.c.l.b16 %v5873
      %v5904 = vunpack.c.l.b16 %v5874
      %v5905 = vunpack.c.l.b16 %v5875
      %v5906 = vunpack.c.l.b16 %v5876
      %v5907 = vunpack.c.l.b16 %v5877
      %v5908 = vunpack.c.l.b16 %v5878
      %v5909 = vunpack.c.l.b16 %v5879
      %v5910 = vunpack.c.l.b16 %v5880
      %v5911 = vpack.c.b16 %v5904, %v5903
      %v5912 = vpack.c.b16 %v5906, %v5905
      %v5913 = vpack.c.b16 %v5908, %v5907
      %v5914 = vpack.c.b16 %v5910, %v5909
      %v5920 = vsel %vm3418, %v5881, 0
      %v5923 = vsel %vm3418, %v5882, 0
      %v5926 = vsel %vm3418, %v5883, 0
      %v5929 = vsel %vm3418, %v5884, 0
      %v5932 = vsel %vm3418, %v5885, 0
      %v5935 = vsel %vm3418, %v5886, 0
      %5937 = vmatprep.subr.bf16.mxu0 0
      %5938 = vmatpush1.bf16.msra.mxu0 %v5911
      %5939 = vmatprep.subr.bf16.mxu0 0
      %5940 = vmatpush1.bf16.msra.mxu0 %v5912
      %5941 = vmatprep.subr.bf16.mxu0 0
      %5942 = vmatpush1.bf16.msra.mxu0 %v5913
      %5943 = vmatprep.subr.bf16.mxu0 0
      %5944 = vmatpush1.bf16.msra.mxu0 %v5914
      %5945 = vmatprep.subr.bf16.mxu0 0
      %5946 = vmatpush1.bf16.msra.mxu0 0
      %5947 = vmatprep.subr.bf16.mxu0 0
      %5948 = vmatpush1.bf16.msra.mxu0 0
      %5949 = vmatprep.subr.bf16.mxu0 0
      %5950 = vmatpush1.bf16.msra.mxu0 0
      %5951 = vmatprep.subr.bf16.mxu0 0
      %5952 = vmatpush1.bf16.msra.mxu0 0
      %5953 = vmatprep.subr.bf16.mxu0 0
      %5954 = vmatpush1.bf16.msra.mxu0 0
      %5955 = vmatprep.subr.bf16.mxu0 0
      %5956 = vmatpush1.bf16.msra.mxu0 0
      %5957 = vmatprep.subr.bf16.mxu0 0
      %5958 = vmatpush1.bf16.msra.mxu0 0
      %5959 = vmatprep.subr.bf16.mxu0 0
      %5960 = vmatpush1.bf16.msra.mxu0 0
      %5961 = vmatprep.subr.bf16.mxu0 0
      %5962 = vmatpush1.bf16.msra.mxu0 0
      %5963 = vmatprep.subr.bf16.mxu0 0
      %5964 = vmatpush1.bf16.msra.mxu0 0
      %5965 = vmatprep.subr.bf16.mxu0 0
      %5966 = vmatpush1.bf16.msra.mxu0 0
      %5967 = vmatprep.subr.bf16.mxu0 0
      %5968 = vmatpush1.bf16.msra.mxu0 0
      %5969 = vmatprep.mubr.bf16.mxu0 0
      %5970 = vmatmul.mubr.bf16.gmra.mrb[0].mxu0 %v5920
      %v5971 = vpop.f32.mrb[0].mxu0
      %v5972 = vadd.f32 %v5893, %v5971
      %v5973 = vpop.f32.mrb[0].mxu0
      %v5974 = vpop.f32.mrb[0].mxu0
      %v5975 = vadd.f32 %v5893, %v5974
      %v5976 = vpop.f32.mrb[0].mxu0
      %5977 = vmatprep.mubr.bf16.mxu0 0
      %5978 = vmatmul.mubr.bf16.gmra.mrb[0].mxu0 %v5923
      %v5979 = vpop.f32.mrb[0].mxu0
      %v5980 = vadd.f32 %v5893, %v5979
      %v5981 = vpop.f32.mrb[0].mxu0
      %v5982 = vpop.f32.mrb[0].mxu0
      %v5983 = vadd.f32 %v5893, %v5982
      %v5984 = vpop.f32.mrb[0].mxu0
      %5985 = vmatprep.mubr.bf16.mxu0 0
      %5986 = vmatmul.mubr.bf16.gmra.mrb[0].mxu0 %v5926
      %v5987 = vpop.f32.mrb[0].mxu0
      %v5988 = vadd.f32 %v5893, %v5987
      %v5989 = vpop.f32.mrb[0].mxu0
      %v5990 = vpop.f32.mrb[0].mxu0
      %v5991 = vadd.f32 %v5893, %v5990
      %v5992 = vpop.f32.mrb[0].mxu0
      %5993 = vmatprep.mubr.bf16.mxu0 0
      %5994 = vmatmul.mubr.bf16.gmra.mrb[0].mxu0 %v5929
      %v5995 = vpop.f32.mrb[0].mxu0
      %v5996 = vadd.f32 %v5893, %v5995
      %v5997 = vpop.f32.mrb[0].mxu0
      %v5998 = vpop.f32.mrb[0].mxu0
      %v5999 = vadd.f32 %v5893, %v5998
      %v6000 = vpop.f32.mrb[0].mxu0
      %6001 = vmatprep.mubr.bf16.mxu0 0
      %6002 = vmatmul.mubr.bf16.gmra.mrb[0].mxu0 %v5932
      %v6003 = vpop.f32.mrb[0].mxu0
      %v6004 = vadd.f32 %v5893, %v6003
      %v6005 = vpop.f32.mrb[0].mxu0
      %v6006 = vpop.f32.mrb[0].mxu0
      %v6007 = vadd.f32 %v5893, %v6006
      %v6008 = vpop.f32.mrb[0].mxu0
      %6009 = vmatprep.mubr.bf16.mxu0 0
      %6010 = vmatmul.mubr.bf16.gmra.mrb[0].mxu0 %v5935
      %v6011 = vpop.f32.mrb[0].mxu0
      %v6012 = vadd.f32 %v5893, %v6011
      %v6013 = vpop.f32.mrb[0].mxu0
      %v6014 = vpop.f32.mrb[0].mxu0
      %v6015 = vadd.f32 %v5893, %v6014
      %v6016 = vpop.f32.mrb[0].mxu0
      %6017 = vdwg.mxu0
      %v6018 = vadd.f32 %v5426, %v5972
      %v6019 = vadd.f32 %v5427, %v5975
      %v6020 = vadd.f32 %v5428, %v5980
      %v6021 = vadd.f32 %v5429, %v5983
      %v6022 = vadd.f32 %v5430, %v5988
      %v6023 = vadd.f32 %v5431, %v5991
      %v6024 = vadd.f32 %v5432, %v5996
      %v6025 = vadd.f32 %v5433, %v5999
      %v6026 = vadd.f32 %v5434, %v6004
      %v6027 = vadd.f32 %v5435, %v6007
      %v6028 = vadd.f32 %v5436, %v6012
      %v6029 = vadd.f32 %v5437, %v6015
      %6030 = vst.msk [vmem:[%s656] sm:$0xff] %vm809, %v6018
      %6031 = vst.msk [vmem:[%s656 + $0x8] sm:$0xff] %vm809, %v6019
      %6032 = vst.msk [vmem:[%s656 + $0x10] sm:$0xff] %vm809, %v6020
      %6033 = vst.msk [vmem:[%s656 + $0x18] sm:$0xff] %vm809, %v6021
      %6034 = vst.msk [vmem:[%s656 + $0x20] sm:$0xff] %vm809, %v6022
      %6035 = vst.msk [vmem:[%s656 + $0x28] sm:$0xff] %vm809, %v6023
      %6036 = vst.msk [vmem:[%s656 + $0x30] sm:$0xff] %vm809, %v6024
      %6037 = vst.msk [vmem:[%s656 + $0x38] sm:$0xff] %vm809, %v6025
      %6038 = vst.msk [vmem:[%s656 + $0x40] sm:$0xff] %vm809, %v6026
      %6039 = vst.msk [vmem:[%s656 + $0x48] sm:$0xff] %vm809, %v6027
      %6040 = vst.msk [vmem:[%s656 + $0x50] sm:$0xff] %vm809, %v6028
      %6041 = vst.msk [vmem:[%s656 + $0x58] sm:$0xff] %vm809, %v6029
      %p6042 = scmp.lt.s32.totalorder %s32, 1
      %s6043 = scalar_select %p6042, %s32, 1
      %s6044 = smul.addr %s6043, 12
      %s6045 = smul.addr %s6044, 8
      %s6046 = scalar_lea.vmem %s21, %s6045
      // Predicated region
      $region105: #{cvt_forward.2} parent=103 // pred_check
        %p6047 = pneg %p496
      $region106: #{cvt_forward.2} parent=103 // pred_check_branch
        %6049 = sbr.rel (%p6047) target = $region108
      $region107: #{cvt_forward.2} parent=103 // pred_region
        _
      $region108: #{cvt_forward.2} parent=103 // pred_fallthru
        _
    $region104: #{cvt_forward.2} parent=5 // pred_fallthru
      _
    %p6050 = scmp.le.s32.totalorder 2, %s27
    // Predicated region
    $region109: #{cvt_forward.2} parent=5 // pred_check
      %p6051 = pneg %p6050
    $region110: #{cvt_forward.2} parent=5 // pred_check_branch
      %6053 = sbr.rel (%p6051) target = $region112
    $region111: #{cvt_forward.2} parent=5 // pred_region
      %s6054 = ssub.s32 %s27, 2
      // Predicated region
      $region113: #{cvt_forward.2} parent=111 // pred_check
        %p6055 = pneg %p502
      $region114: #{cvt_forward.2} parent=111 // pred_check_branch
        %6057 = sbr.rel (%p6055) target = $region116
      $region115: #{cvt_forward.2} parent=111 // pred_region
        %p6058 = scmp.lt.s32.totalorder %s33, 1
        %s6059 = scalar_select %p6058, %s33, 1
        %s6060 = smul.addr %s6059, 12
        %s6061 = smul.addr %s6060, 8
        %s6062 = scalar_lea.vmem %s21, %s6061
      $region116: #{cvt_forward.2} parent=111 // pred_fallthru
        _
    $region112: #{cvt_forward.2} parent=5 // pred_fallthru
      _
  $region6: #{cvt_forward.2} parent=0 // loop_footer
    %s31 = sadd.s32 1, %s27
  $region7: #{cvt_forward.2} parent=0 // loop_footer_branch
    %26 = sbr.rel target = $region3
  $region8: #{cvt_forward.2} parent=0 // loop_exit
    _

</llo_original>
